<compile_context>
chip_gen: v6e
topology: v6e:2x2x1
jax: 0.10.0
libtpu: 0.0.40
codegen_flags: <defaults>
</compile_context>

<pallas_src>
import functools

import jax
import jax.numpy as jnp
from jax.experimental import pallas as pl
from jax.experimental.pallas import tpu as pltpu

LANE = 128


def _round_up(n, m):
    return (n + m - 1) // m * m


def _pick_bblk(batch, hw, target_m=256):
    """Largest divisor of `batch` with bblk*hw <= target_m, while keeping at
    least two grid blocks when batch >= 2 (two TensorCores on v7x)."""
    cap = max(1, target_m // max(hw, 1))
    if batch >= 2:
        cap = min(cap, batch // 2)
    cap = max(cap, 1)
    best = 1
    for d in range(1, batch + 1):
        if batch % d == 0 and d <= cap:
            best = d
    return best


# ---------------------------------------------------------------- kernels ----
def _mm_bias_relu_kernel(x_ref, w_ref, b_ref, o_ref):
    """Full-im2col conv layer: o = relu(x @ w + b), single MXU matmul.

    x: (Bblk, M, Kpad) bf16   w: (Kpad, Cout) bf16   b: (1, Cout) f32
    o: (Bblk, M, Cout) bf16
    """
    bblk, m, kpad = x_ref.shape
    cout = w_ref.shape[-1]
    if bblk == 1:
        x = x_ref[0]
    else:
        x = x_ref[...].reshape(bblk * m, kpad)
    act = jnp.maximum(
        jnp.dot(x, w_ref[...], preferred_element_type=jnp.float32) + b_ref[...],
        0.0)
    if bblk == 1:
        o_ref[0] = act.astype(o_ref.dtype)
    else:
        o_ref[...] = act.reshape(bblk, m, cout).astype(o_ref.dtype)


def _conv_acc(xg_ref, w_ref, *, ksize, stride, hout, wout):
    """Sum of per-row-tap MXU matmuls; f32 accumulation kept in vregs.

    xg_ref: (Bblk, stride, hph*wout, Kpad) bf16, kw taps folded into K.
    w_ref : (ksize, Kpad, Cout) bf16 (one K-folded weight slab per kh).
    Returns (Bblk*hout*wout, Cout) f32.
    """
    bblk, _, _, kpad = xg_ref.shape
    hw = hout * wout
    acc = None
    for kh in range(ksize):
        hp, a = kh % stride, kh // stride
        if bblk == 1:
            patch = xg_ref[0, hp, a * wout:(a + hout) * wout, :]
        else:
            patch = xg_ref[:, hp, a * wout:(a + hout) * wout, :].reshape(
                bblk * hw, kpad)
        part = jnp.dot(patch, w_ref[kh], preferred_element_type=jnp.float32)
        acc = part if acc is None else acc + part
    return acc


def _conv_relu_kernel(xg_ref, w_ref, b_ref, o_ref, *, ksize, stride, hout, wout):
    """Phase-gathered conv + bias + ReLU; un-padded Cout store (f32 epilogue)."""
    bblk = xg_ref.shape[0]
    hw = hout * wout
    cout = w_ref.shape[-1]
    acc = _conv_acc(xg_ref, w_ref, ksize=ksize, stride=stride, hout=hout, wout=wout)
    act = jnp.maximum(acc + b_ref[...], 0.0)
    if bblk == 1:
        o_ref[0] = act.astype(o_ref.dtype)
    else:
        o_ref[...] = act.reshape(bblk, hw, cout).astype(o_ref.dtype)


def _conv_relu_pool_fc_kernel(xg_ref, w_ref, b_ref, cw_ref, cb_ref, o_ref, *,
                              ksize, stride, hout, wout):
    """Last conv + ReLU fused with global mean-pool + linear classifier head."""
    bblk = xg_ref.shape[0]
    hw = hout * wout
    cout = w_ref.shape[-1]
    acc = _conv_acc(xg_ref, w_ref, ksize=ksize, stride=stride, hout=hout, wout=wout)
    feat = jnp.maximum(acc + b_ref[...], 0.0)                 # (Bblk*hw, C) f32
    if bblk == 1:
        pooled = jnp.mean(feat, axis=0, keepdims=True)        # (1, C) f32
    else:
        pooled = jnp.mean(feat.reshape(bblk, hw, cout), axis=1)
    logits = jnp.dot(pooled.astype(cw_ref.dtype), cw_ref[...],
                     preferred_element_type=jnp.float32) + cb_ref[...]
    o_ref[...] = logits.reshape(bblk, 1, -1).astype(o_ref.dtype)


# ------------------------------------------------------------------- glue ----
def _im2col(x, ksize, stride, pad, hout, wout):
    """Full im2col (layer-1 only): (B, H, W, C) -> (B, hout*wout, ksize*ksize*C)."""
    B, H, W, C = x.shape
    for k in range(ksize):
        assert (H + 2 * pad - 1 - k) // stride + 1 >= hout
        assert (W + 2 * pad - 1 - k) // stride + 1 >= wout
    xp = jnp.pad(x, ((0, 0), (pad, pad), (pad, pad), (0, 0)))
    cols = []
    for kh in range(ksize):
        for kw in range(ksize):
            cols.append(xp[:, kh::stride, kw::stride, :][:, :hout, :wout, :])
    patches = jnp.concatenate(cols, axis=-1)       # (B, hout, wout, k*k*C)
    return patches.reshape(B, hout * wout, ksize * ksize * C)


def _phase_gather_folded(x, ksize, stride, pad, hout, wout):
    """(B, H, W, C) -> (B, stride, hph*wout, ksize*C) with kw taps folded into
    the channel (K) axis.  Tap (kh, kw) of output pixel (ho, wo) lives at
    [b, kh % stride, (kh // stride + ho)*wout + wo, kw*C:(kw+1)*C]."""
    B, H, W, C = x.shape
    hph = hout + (ksize - 1) // stride
    # Correctness guard (review): any zero filler rows appended below must be
    # unreachable by the kernel's (kh // stride + ho) row addressing.
    for hp in range(stride):
        khs = [kh for kh in range(ksize) if kh % stride == hp]
        if not khs:
            continue
        need = hout + max(kh // stride for kh in khs)
        avail = (H + 2 * pad - 1 - hp) // stride + 1
        assert avail >= need, f"row phase {hp}: {avail} rows < {need} required"
    for kw in range(ksize):
        avail = (W + 2 * pad - 1 - kw) // stride + 1
        assert avail >= wout, f"col tap {kw}: {avail} cols < {wout} required"

    xp = jnp.pad(x, ((0, 0), (pad, pad), (pad, pad), (0, 0)))
    phases = []
    for hp in range(stride):
        xh = xp[:, hp::stride, :, :][:, :hph, :, :]
        if xh.shape[1] < hph:                       # filler rows, never read
            xh = jnp.pad(xh, ((0, 0), (0, hph - xh.shape[1]), (0, 0), (0, 0)))
        taps = [xh[:, :, kw::stride, :][:, :, :wout, :] for kw in range(ksize)]
        phases.append(jnp.concatenate(taps, axis=-1))   # (B, hph, wout, ksize*C)
    xg = jnp.stack(phases, axis=1)                      # (B, stride, hph, wout, K)
    return xg.reshape(B, stride, hph * wout, ksize * C)


def conv2d_relu_pallas(x_nhwc, w_hwio, b, *, stride, padding, cls=None):
    """One conv+ReLU layer (optionally fused with mean-pool + linear head).

    x_nhwc : (B, H, W, Cin) bf16 activations (real channel count, un-padded)
    w_hwio : (K, K, Cin, Cout) f32 weights
    b      : (Cout,) f32 bias
    cls    : optional (cls_w, cls_b) -> return (B, n_out) f32 logits; otherwise
             return (B, Hout, Wout, Cout) bf16.
    """
    B, H, W, cin = x_nhwc.shape
    ksize, _, cin_w, cout = w_hwio.shape
    assert cin == cin_w
    hout = (H + 2 * padding - ksize) // stride + 1
    wout = (W + 2 * padding - ksize) // stride + 1
    hw = hout * wout
    bblk = _pick_bblk(B, hw)
    grid = (B // bblk,)
    cparams = pltpu.CompilerParams(dimension_semantics=("parallel",))
    b2 = b.reshape(1, cout).astype(jnp.float32)

    if cin * ksize * ksize <= LANE and cls is None:
        # Cheap-channel first layer: full im2col, one lane-dense matmul.
        k_raw = ksize * ksize * cin
        kpad = _round_up(k_raw, LANE)
        lhs = _im2col(x_nhwc, ksize, stride, padding, hout, wout)
        lhs = jnp.pad(lhs, ((0, 0), (0, 0), (0, kpad - k_raw))).astype(jnp.bfloat16)
        w = jnp.zeros((kpad, cout), jnp.float32).at[:k_raw, :].set(
            w_hwio.reshape(k_raw, cout)).astype(jnp.bfloat16)
        out = pl.pallas_call(
            _mm_bias_relu_kernel,
            grid=grid,
            in_specs=[
                pl.BlockSpec((bblk, hw, kpad), lambda bb: (bb, 0, 0)),
                pl.BlockSpec((kpad, cout), lambda bb: (0, 0)),
                pl.BlockSpec((1, cout), lambda bb: (0, 0)),
            ],
            out_specs=pl.BlockSpec((bblk, hw, cout), lambda bb: (bb, 0, 0)),
            out_shape=jax.ShapeDtypeStruct((B, hw, cout), jnp.bfloat16),
            compiler_params=cparams,
        )(lhs, w, b2)
        return out.reshape(B, hout, wout, cout)

    # Phase-gathered layers: kw taps folded into K, one matmul per kh.
    k_raw = ksize * cin
    kpad = _round_up(k_raw, LANE)
    xg = _phase_gather_folded(x_nhwc, ksize, stride, padding, hout, wout)
    xg = jnp.pad(xg, ((0, 0), (0, 0), (0, 0), (0, kpad - k_raw))).astype(jnp.bfloat16)
    hphw = xg.shape[2]

    w_taps = jnp.zeros((ksize, kpad, cout), jnp.float32)
    w_taps = w_taps.at[:, :k_raw, :].set(w_hwio.reshape(ksize, k_raw, cout))
    w_taps = w_taps.astype(jnp.bfloat16)

    common = dict(ksize=ksize, stride=stride, hout=hout, wout=wout)
    in_specs = [
        pl.BlockSpec((bblk, stride, hphw, kpad), lambda bb: (bb, 0, 0, 0)),
        pl.BlockSpec((ksize, kpad, cout), lambda bb: (0, 0, 0)),
        pl.BlockSpec((1, cout), lambda bb: (0, 0)),
    ]

    if cls is None:
        out = pl.pallas_call(
            functools.partial(_conv_relu_kernel, **common),
            grid=grid,
            in_specs=in_specs,
            out_specs=pl.BlockSpec((bblk, hw, cout), lambda bb: (bb, 0, 0)),
            out_shape=jax.ShapeDtypeStruct((B, hw, cout), jnp.bfloat16),
            compiler_params=cparams,
        )(xg, w_taps, b2)
        return out.reshape(B, hout, wout, cout)

    cls_w, cls_b = cls
    n_out = cls_w.shape[1]
    nout_pad = _round_up(n_out, LANE)
    cw = jnp.zeros((cout, nout_pad), jnp.float32).at[:, :n_out].set(cls_w)
    cw = cw.astype(jnp.bfloat16)
    cb = jnp.zeros((1, nout_pad), jnp.float32).at[0, :n_out].set(cls_b)
    in_specs = in_specs + [
        pl.BlockSpec((cout, nout_pad), lambda bb: (0, 0)),
        pl.BlockSpec((1, nout_pad), lambda bb: (0, 0)),
    ]
    out = pl.pallas_call(
        functools.partial(_conv_relu_pool_fc_kernel, **common),
        grid=grid,
        in_specs=in_specs,
        out_specs=pl.BlockSpec((bblk, 1, nout_pad), lambda bb: (bb, 0, 0)),
        out_shape=jax.ShapeDtypeStruct((B, 1, nout_pad), jnp.float32),
        compiler_params=cparams,
    )(xg, w_taps, b2, cw, cb)
    return out.reshape(B, nout_pad)[:, :n_out]


# ------------------------------------------------------------- parameters ----
def init_params(key, layers=(16, 32, 64, 128), n_in=3, n_out=6, kernel_size=5):
    """Deterministic synthetic init (uniform fan-in scaling, like torch defaults)."""
    params = {"convs": []}
    c = n_in
    for l in layers:
        key, kw_, kb_ = jax.random.split(key, 3)
        fan_in = c * kernel_size * kernel_size
        bound = 1.0 / (fan_in ** 0.5)
        w = jax.random.uniform(kw_, (kernel_size, kernel_size, c, l),
                               jnp.float32, -bound, bound)  # HWIO
        bb = jax.random.uniform(kb_, (l,), jnp.float32, -bound, bound)
        params["convs"].append((w, bb))
        c = l
    key, kw_, kb_ = jax.random.split(key, 3)
    bound = 1.0 / (c ** 0.5)
    params["cls_w"] = jax.random.uniform(kw_, (c, n_out), jnp.float32, -bound, bound)
    params["cls_b"] = jax.random.uniform(kb_, (n_out,), jnp.float32, -bound, bound)
    return params


# ---------------------------------------------------------------- forward ----
@functools.partial(jax.jit, static_argnames=("kernel_size",))
def cnn_classifier_forward(params, x_nchw, kernel_size=5):
    """x_nchw: (B, n_in, H, W) like PyTorch; returns (B, n_out) logits."""
    x = jnp.transpose(x_nchw, (0, 2, 3, 1)).astype(jnp.bfloat16)  # NCHW -> NHWC
    n_layers = len(params["convs"])
    pad = kernel_size // 2
    for idx, (w, b) in enumerate(params["convs"]):
        cls = (params["cls_w"], params["cls_b"]) if idx == n_layers - 1 else None
        x = conv2d_relu_pallas(x, w, b, stride=2, padding=pad, cls=cls)
    return x


def reference_forward(params, x_nchw, kernel_size=5):
    """Pure-JAX f32 reference for correctness checking."""
    x = jnp.transpose(x_nchw, (0, 2, 3, 1)).astype(jnp.float32)
    p = kernel_size // 2
    for w, b in params["convs"]:
        x = jax.lax.conv_general_dilated(
            x, w, window_strides=(2, 2), padding=[(p, p), (p, p)],
            dimension_numbers=("NHWC", "HWIO", "NHWC"))
        x = jnp.maximum(x + b, 0.0)
    pooled = jnp.mean(x, axis=(1, 2))
    return pooled @ params["cls_w"] + params["cls_b"]


if __name__ == "__main__":
    key = jax.random.PRNGKey(0)
    kp, kx = jax.random.split(key)
    params = init_params(kp)
    # Input consistent with the module docstring: (B, 3, 64, 64), small batch.
    x = jax.random.normal(kx, (2, 3, 64, 64), jnp.float32)

    out = jax.block_until_ready(cnn_classifier_forward(params, x))
    ref = reference_forward(params, x)

    assert out.shape == (2, 6), out.shape
    # MXU operands are bf16; accumulation/epilogue are f32, so compare against
    # the f32 reference with a bf16-appropriate tolerance.
    assert jnp.allclose(out, ref, atol=5e-2, rtol=5e-2), (out, ref)
    print("KERNEL_OK")
</pallas_src>

<mosaic_0001>
module attributes {stable_mosaic.version = 11 : i64} {
  func.func @_mm_bias_relu_kernel(%arg0: i32, %arg1: memref<1x1024x128xbf16, #tpu.memory_space<vmem>>, %arg2: memref<128x16xbf16, #tpu.memory_space<vmem>>, %arg3: memref<1x16xf32, #tpu.memory_space<vmem>>, %arg4: memref<1x1024x16xbf16, #tpu.memory_space<vmem>>) attributes {dimension_semantics = [#tpu.dimension_semantics<parallel>], iteration_bounds = array<i64: 2>, scalar_prefetch = 0 : i64, scratch_operands = 0 : i64, tpu.core_type = #tpu.core_type<tc>, window_params = [{transform_indices = @transform_0, window_bounds = array<i64: 1, 1024, 128>}, {pipeline_mode = #tpu.pipeline_mode<synchronous>, transform_indices = @transform_1, window_bounds = array<i64: 128, 16>}, {pipeline_mode = #tpu.pipeline_mode<synchronous>, transform_indices = @transform_2, window_bounds = array<i64: 1, 16>}, {transform_indices = @transform_3, window_bounds = array<i64: 1, 1024, 16>}]} {
    %c0 = arith.constant 0 : index
    %c0_0 = arith.constant 0 : index
    %c0_1 = arith.constant 0 : index
    %0 = vector.load %arg1[%c0, %c0_0, %c0_1] : memref<1x1024x128xbf16, #tpu.memory_space<vmem>>, vector<1x1024x128xbf16>
    %1 = vector.shape_cast %0 : vector<1x1024x128xbf16> to vector<1024x128xbf16>
    %c0_2 = arith.constant 0 : index
    %c0_3 = arith.constant 0 : index
    %2 = vector.load %arg2[%c0_2, %c0_3] : memref<128x16xbf16, #tpu.memory_space<vmem>>, vector<128x16xbf16>
    %cst = arith.constant dense<0.000000e+00> : vector<1024x16xf32>
    %3 = tpu.matmul %1, %2, %cst {dimension_numbers = #tpu.dot_dimension_numbers<[1], [0], [0], [1], [0, 0, 1, 1], [], []>} : vector<1024x128xbf16>, vector<128x16xbf16>, vector<1024x16xf32> -> vector<1024x16xf32>
    %c0_4 = arith.constant 0 : index
    %c0_5 = arith.constant 0 : index
    %4 = vector.load %arg3[%c0_4, %c0_5] : memref<1x16xf32, #tpu.memory_space<vmem>>, vector<1x16xf32>
    %5 = vector.broadcast %4 : vector<1x16xf32> to vector<1024x16xf32>
    %6 = arith.addf %3, %5 : vector<1024x16xf32>
    %cst_6 = arith.constant 0.000000e+00 : f32
    %7 = vector.broadcast %cst_6 : f32 to vector<1024x16xf32>
    %8 = arith.maximumf %6, %7 : vector<1024x16xf32>
    %9 = arith.truncf %8 : vector<1024x16xf32> to vector<1024x16xbf16>
    %c0_7 = arith.constant 0 : index
    %c0_8 = arith.constant 0 : index
    %c0_9 = arith.constant 0 : index
    %10 = vector.load %arg4[%c0_7, %c0_8, %c0_9] : memref<1x1024x16xbf16, #tpu.memory_space<vmem>>, vector<1x1024x16xbf16>
    %11 = vector.shape_cast %10 : vector<1x1024x16xbf16> to vector<1024x16xbf16>
    %12 = vector.shape_cast %9 : vector<1024x16xbf16> to vector<1x1024x16xbf16>
    tpu.vector_store %arg4[%c0_7, %c0_8, %c0_9], %12 {strides = array<i32>} : memref<1x1024x16xbf16, #tpu.memory_space<vmem>>, vector<1x1024x16xbf16>,
    return
  }
  func.func @transform_0(%arg0: i32) -> (i32, i32, i32) {
    %c0_i32 = arith.constant 0 : i32
    %c0_i32_0 = arith.constant 0 : i32
    %c0_i32_1 = arith.constant 0 : i32
    return %arg0, %c0_i32, %c0_i32_0 : i32, i32, i32
  }
  func.func @transform_1(%arg0: i32) -> (i32, i32) {
    %c0_i32 = arith.constant 0 : i32
    %c0_i32_0 = arith.constant 0 : i32
    %c0_i32_1 = arith.constant 0 : i32
    return %c0_i32, %c0_i32_0 : i32, i32
  }
  func.func @transform_2(%arg0: i32) -> (i32, i32) {
    %c0_i32 = arith.constant 0 : i32
    %c0_i32_0 = arith.constant 0 : i32
    %c0_i32_1 = arith.constant 0 : i32
    return %c0_i32, %c0_i32_0 : i32, i32
  }
  func.func @transform_3(%arg0: i32) -> (i32, i32, i32) {
    %c0_i32 = arith.constant 0 : i32
    %c0_i32_0 = arith.constant 0 : i32
    %c0_i32_1 = arith.constant 0 : i32
    return %arg0, %c0_i32, %c0_i32_0 : i32, i32, i32
  }
}

module attributes {stable_mosaic.version = 11 : i64} {
  func.func @_conv_relu_kernel(%arg0: i32, %arg1: memref<1x2x288x128xbf16, #tpu.memory_space<vmem>>, %arg2: memref<5x128x32xbf16, #tpu.memory_space<vmem>>, %arg3: memref<1x32xf32, #tpu.memory_space<vmem>>, %arg4: memref<1x256x32xbf16, #tpu.memory_space<vmem>>) attributes {dimension_semantics = [#tpu.dimension_semantics<parallel>], iteration_bounds = array<i64: 2>, scalar_prefetch = 0 : i64, scratch_operands = 0 : i64, tpu.core_type = #tpu.core_type<tc>, window_params = [{transform_indices = @transform_0, window_bounds = array<i64: 1, 2, 288, 128>}, {pipeline_mode = #tpu.pipeline_mode<synchronous>, transform_indices = @transform_1, window_bounds = array<i64: 5, 128, 32>}, {pipeline_mode = #tpu.pipeline_mode<synchronous>, transform_indices = @transform_2, window_bounds = array<i64: 1, 32>}, {transform_indices = @transform_3, window_bounds = array<i64: 1, 256, 32>}]} {
    %c0 = arith.constant 0 : index
    %c0_0 = arith.constant 0 : index
    %c0_1 = arith.constant 0 : index
    %c0_2 = arith.constant 0 : index
    %0 = vector.load %arg1[%c0, %c0_0, %c0_1, %c0_2] : memref<1x2x288x128xbf16, #tpu.memory_space<vmem>>, vector<1x1x256x128xbf16>
    %1 = vector.shape_cast %0 : vector<1x1x256x128xbf16> to vector<256x128xbf16>
    %c0_3 = arith.constant 0 : index
    %c0_4 = arith.constant 0 : index
    %c0_5 = arith.constant 0 : index
    %2 = vector.load %arg2[%c0_3, %c0_4, %c0_5] : memref<5x128x32xbf16, #tpu.memory_space<vmem>>, vector<1x128x32xbf16>
    %3 = vector.shape_cast %2 : vector<1x128x32xbf16> to vector<128x32xbf16>
    %cst = arith.constant dense<0.000000e+00> : vector<256x32xf32>
    %4 = tpu.matmul %1, %3, %cst {dimension_numbers = #tpu.dot_dimension_numbers<[1], [0], [0], [1], [0, 0, 1, 1], [], []>} : vector<256x128xbf16>, vector<128x32xbf16>, vector<256x32xf32> -> vector<256x32xf32>
    %c0_6 = arith.constant 0 : index
    %c1 = arith.constant 1 : index
    %c0_7 = arith.constant 0 : index
    %c0_8 = arith.constant 0 : index
    %5 = vector.load %arg1[%c0_6, %c1, %c0_7, %c0_8] : memref<1x2x288x128xbf16, #tpu.memory_space<vmem>>, vector<1x1x256x128xbf16>
    %6 = vector.shape_cast %5 : vector<1x1x256x128xbf16> to vector<256x128xbf16>
    %c1_9 = arith.constant 1 : index
    %c0_10 = arith.constant 0 : index
    %c0_11 = arith.constant 0 : index
    %7 = vector.load %arg2[%c1_9, %c0_10, %c0_11] : memref<5x128x32xbf16, #tpu.memory_space<vmem>>, vector<1x128x32xbf16>
    %8 = vector.shape_cast %7 : vector<1x128x32xbf16> to vector<128x32xbf16>
    %cst_12 = arith.constant dense<0.000000e+00> : vector<256x32xf32>
    %9 = tpu.matmul %6, %8, %cst_12 {dimension_numbers = #tpu.dot_dimension_numbers<[1], [0], [0], [1], [0, 0, 1, 1], [], []>} : vector<256x128xbf16>, vector<128x32xbf16>, vector<256x32xf32> -> vector<256x32xf32>
    %10 = arith.addf %4, %9 : vector<256x32xf32>
    %c0_13 = arith.constant 0 : index
    %c0_14 = arith.constant 0 : index
    %c16 = arith.constant 16 : index
    %c0_15 = arith.constant 0 : index
    %11 = vector.load %arg1[%c0_13, %c0_14, %c16, %c0_15] : memref<1x2x288x128xbf16, #tpu.memory_space<vmem>>, vector<1x1x256x128xbf16>
    %12 = vector.shape_cast %11 : vector<1x1x256x128xbf16> to vector<256x128xbf16>
    %c2 = arith.constant 2 : index
    %c0_16 = arith.constant 0 : index
    %c0_17 = arith.constant 0 : index
    %13 = vector.load %arg2[%c2, %c0_16, %c0_17] : memref<5x128x32xbf16, #tpu.memory_space<vmem>>, vector<1x128x32xbf16>
    %14 = vector.shape_cast %13 : vector<1x128x32xbf16> to vector<128x32xbf16>
    %cst_18 = arith.constant dense<0.000000e+00> : vector<256x32xf32>
    %15 = tpu.matmul %12, %14, %cst_18 {dimension_numbers = #tpu.dot_dimension_numbers<[1], [0], [0], [1], [0, 0, 1, 1], [], []>} : vector<256x128xbf16>, vector<128x32xbf16>, vector<256x32xf32> -> vector<256x32xf32>
    %16 = arith.addf %10, %15 : vector<256x32xf32>
    %c0_19 = arith.constant 0 : index
    %c1_20 = arith.constant 1 : index
    %c16_21 = arith.constant 16 : index
    %c0_22 = arith.constant 0 : index
    %17 = vector.load %arg1[%c0_19, %c1_20, %c16_21, %c0_22] : memref<1x2x288x128xbf16, #tpu.memory_space<vmem>>, vector<1x1x256x128xbf16>
    %18 = vector.shape_cast %17 : vector<1x1x256x128xbf16> to vector<256x128xbf16>
    %c3 = arith.constant 3 : index
    %c0_23 = arith.constant 0 : index
    %c0_24 = arith.constant 0 : index
    %19 = vector.load %arg2[%c3, %c0_23, %c0_24] : memref<5x128x32xbf16, #tpu.memory_space<vmem>>, vector<1x128x32xbf16>
    %20 = vector.shape_cast %19 : vector<1x128x32xbf16> to vector<128x32xbf16>
    %cst_25 = arith.constant dense<0.000000e+00> : vector<256x32xf32>
    %21 = tpu.matmul %18, %20, %cst_25 {dimension_numbers = #tpu.dot_dimension_numbers<[1], [0], [0], [1], [0, 0, 1, 1], [], []>} : vector<256x128xbf16>, vector<128x32xbf16>, vector<256x32xf32> -> vector<256x32xf32>
    %22 = arith.addf %16, %21 : vector<256x32xf32>
    %c0_26 = arith.constant 0 : index
    %c0_27 = arith.constant 0 : index
    %c32 = arith.constant 32 : index
    %c0_28 = arith.constant 0 : index
    %23 = vector.load %arg1[%c0_26, %c0_27, %c32, %c0_28] : memref<1x2x288x128xbf16, #tpu.memory_space<vmem>>, vector<1x1x256x128xbf16>
    %24 = vector.shape_cast %23 : vector<1x1x256x128xbf16> to vector<256x128xbf16>
    %c4 = arith.constant 4 : index
    %c0_29 = arith.constant 0 : index
    %c0_30 = arith.constant 0 : index
    %25 = vector.load %arg2[%c4, %c0_29, %c0_30] : memref<5x128x32xbf16, #tpu.memory_space<vmem>>, vector<1x128x32xbf16>
    %26 = vector.shape_cast %25 : vector<1x128x32xbf16> to vector<128x32xbf16>
    %cst_31 = arith.constant dense<0.000000e+00> : vector<256x32xf32>
    %27 = tpu.matmul %24, %26, %cst_31 {dimension_numbers = #tpu.dot_dimension_numbers<[1], [0], [0], [1], [0, 0, 1, 1], [], []>} : vector<256x128xbf16>, vector<128x32xbf16>, vector<256x32xf32> -> vector<256x32xf32>
    %28 = arith.addf %22, %27 : vector<256x32xf32>
    %c0_32 = arith.constant 0 : index
    %c0_33 = arith.constant 0 : index
    %29 = vector.load %arg3[%c0_32, %c0_33] : memref<1x32xf32, #tpu.memory_space<vmem>>, vector<1x32xf32>
    %30 = vector.broadcast %29 : vector<1x32xf32> to vector<256x32xf32>
    %31 = arith.addf %28, %30 : vector<256x32xf32>
    %cst_34 = arith.constant 0.000000e+00 : f32
    %32 = vector.broadcast %cst_34 : f32 to vector<256x32xf32>
    %33 = arith.maximumf %31, %32 : vector<256x32xf32>
    %34 = arith.truncf %33 : vector<256x32xf32> to vector<256x32xbf16>
    %c0_35 = arith.constant 0 : index
    %c0_36 = arith.constant 0 : index
    %c0_37 = arith.constant 0 : index
    %35 = vector.load %arg4[%c0_35, %c0_36, %c0_37] : memref<1x256x32xbf16, #tpu.memory_space<vmem>>, vector<1x256x32xbf16>
    %36 = vector.shape_cast %35 : vector<1x256x32xbf16> to vector<256x32xbf16>
    %37 = vector.shape_cast %34 : vector<256x32xbf16> to vector<1x256x32xbf16>
    tpu.vector_store %arg4[%c0_35, %c0_36, %c0_37], %37 {strides = array<i32>} : memref<1x256x32xbf16, #tpu.memory_space<vmem>>, vector<1x256x32xbf16>,
    return
  }
  func.func @transform_0(%arg0: i32) -> (i32, i32, i32, i32) {
    %c0_i32 = arith.constant 0 : i32
    %c0_i32_0 = arith.constant 0 : i32
    %c0_i32_1 = arith.constant 0 : i32
    %c0_i32_2 = arith.constant 0 : i32
    return %arg0, %c0_i32, %c0_i32_0, %c0_i32_1 : i32, i32, i32, i32
  }
  func.func @transform_1(%arg0: i32) -> (i32, i32, i32) {
    %c0_i32 = arith.constant 0 : i32
    %c0_i32_0 = arith.constant 0 : i32
    %c0_i32_1 = arith.constant 0 : i32
    %c0_i32_2 = arith.constant 0 : i32
    return %c0_i32, %c0_i32_0, %c0_i32_1 : i32, i32, i32
  }
  func.func @transform_2(%arg0: i32) -> (i32, i32) {
    %c0_i32 = arith.constant 0 : i32
    %c0_i32_0 = arith.constant 0 : i32
    %c0_i32_1 = arith.constant 0 : i32
    return %c0_i32, %c0_i32_0 : i32, i32
  }
  func.func @transform_3(%arg0: i32) -> (i32, i32, i32) {
    %c0_i32 = arith.constant 0 : i32
    %c0_i32_0 = arith.constant 0 : i32
    %c0_i32_1 = arith.constant 0 : i32
    return %arg0, %c0_i32, %c0_i32_0 : i32, i32, i32
  }
}

module attributes {stable_mosaic.version = 11 : i64} {
  func.func @_conv_relu_kernel(%arg0: i32, %arg1: memref<1x2x80x256xbf16, #tpu.memory_space<vmem>>, %arg2: memref<5x256x64xbf16, #tpu.memory_space<vmem>>, %arg3: memref<1x64xf32, #tpu.memory_space<vmem>>, %arg4: memref<1x64x64xbf16, #tpu.memory_space<vmem>>) attributes {dimension_semantics = [#tpu.dimension_semantics<parallel>], iteration_bounds = array<i64: 2>, scalar_prefetch = 0 : i64, scratch_operands = 0 : i64, tpu.core_type = #tpu.core_type<tc>, window_params = [{transform_indices = @transform_0, window_bounds = array<i64: 1, 2, 80, 256>}, {pipeline_mode = #tpu.pipeline_mode<synchronous>, transform_indices = @transform_1, window_bounds = array<i64: 5, 256, 64>}, {pipeline_mode = #tpu.pipeline_mode<synchronous>, transform_indices = @transform_2, window_bounds = array<i64: 1, 64>}, {transform_indices = @transform_3, window_bounds = array<i64: 1, 64, 64>}]} {
    %c0 = arith.constant 0 : index
    %c0_0 = arith.constant 0 : index
    %c0_1 = arith.constant 0 : index
    %c0_2 = arith.constant 0 : index
    %0 = vector.load %arg1[%c0, %c0_0, %c0_1, %c0_2] : memref<1x2x80x256xbf16, #tpu.memory_space<vmem>>, vector<1x1x64x256xbf16>
    %1 = vector.shape_cast %0 : vector<1x1x64x256xbf16> to vector<64x256xbf16>
    %c0_3 = arith.constant 0 : index
    %c0_4 = arith.constant 0 : index
    %c0_5 = arith.constant 0 : index
    %2 = vector.load %arg2[%c0_3, %c0_4, %c0_5] : memref<5x256x64xbf16, #tpu.memory_space<vmem>>, vector<1x256x64xbf16>
    %3 = vector.shape_cast %2 : vector<1x256x64xbf16> to vector<256x64xbf16>
    %cst = arith.constant dense<0.000000e+00> : vector<64x64xf32>
    %4 = tpu.matmul %1, %3, %cst {dimension_numbers = #tpu.dot_dimension_numbers<[1], [0], [0], [1], [0, 0, 1, 1], [], []>} : vector<64x256xbf16>, vector<256x64xbf16>, vector<64x64xf32> -> vector<64x64xf32>
    %c0_6 = arith.constant 0 : index
    %c1 = arith.constant 1 : index
    %c0_7 = arith.constant 0 : index
    %c0_8 = arith.constant 0 : index
    %5 = vector.load %arg1[%c0_6, %c1, %c0_7, %c0_8] : memref<1x2x80x256xbf16, #tpu.memory_space<vmem>>, vector<1x1x64x256xbf16>
    %6 = vector.shape_cast %5 : vector<1x1x64x256xbf16> to vector<64x256xbf16>
    %c1_9 = arith.constant 1 : index
    %c0_10 = arith.constant 0 : index
    %c0_11 = arith.constant 0 : index
    %7 = vector.load %arg2[%c1_9, %c0_10, %c0_11] : memref<5x256x64xbf16, #tpu.memory_space<vmem>>, vector<1x256x64xbf16>
    %8 = vector.shape_cast %7 : vector<1x256x64xbf16> to vector<256x64xbf16>
    %cst_12 = arith.constant dense<0.000000e+00> : vector<64x64xf32>
    %9 = tpu.matmul %6, %8, %cst_12 {dimension_numbers = #tpu.dot_dimension_numbers<[1], [0], [0], [1], [0, 0, 1, 1], [], []>} : vector<64x256xbf16>, vector<256x64xbf16>, vector<64x64xf32> -> vector<64x64xf32>
    %10 = arith.addf %4, %9 : vector<64x64xf32>
    %c0_13 = arith.constant 0 : index
    %c0_14 = arith.constant 0 : index
    %c8 = arith.constant 8 : index
    %c0_15 = arith.constant 0 : index
    %11 = vector.load %arg1[%c0_13, %c0_14, %c8, %c0_15] : memref<1x2x80x256xbf16, #tpu.memory_space<vmem>>, vector<1x1x64x256xbf16>
    %12 = vector.shape_cast %11 : vector<1x1x64x256xbf16> to vector<64x256xbf16>
    %c2 = arith.constant 2 : index
    %c0_16 = arith.constant 0 : index
    %c0_17 = arith.constant 0 : index
    %13 = vector.load %arg2[%c2, %c0_16, %c0_17] : memref<5x256x64xbf16, #tpu.memory_space<vmem>>, vector<1x256x64xbf16>
    %14 = vector.shape_cast %13 : vector<1x256x64xbf16> to vector<256x64xbf16>
    %cst_18 = arith.constant dense<0.000000e+00> : vector<64x64xf32>
    %15 = tpu.matmul %12, %14, %cst_18 {dimension_numbers = #tpu.dot_dimension_numbers<[1], [0], [0], [1], [0, 0, 1, 1], [], []>} : vector<64x256xbf16>, vector<256x64xbf16>, vector<64x64xf32> -> vector<64x64xf32>
    %16 = arith.addf %10, %15 : vector<64x64xf32>
    %c0_19 = arith.constant 0 : index
    %c1_20 = arith.constant 1 : index
    %c8_21 = arith.constant 8 : index
    %c0_22 = arith.constant 0 : index
    %17 = vector.load %arg1[%c0_19, %c1_20, %c8_21, %c0_22] : memref<1x2x80x256xbf16, #tpu.memory_space<vmem>>, vector<1x1x64x256xbf16>
    %18 = vector.shape_cast %17 : vector<1x1x64x256xbf16> to vector<64x256xbf16>
    %c3 = arith.constant 3 : index
    %c0_23 = arith.constant 0 : index
    %c0_24 = arith.constant 0 : index
    %19 = vector.load %arg2[%c3, %c0_23, %c0_24] : memref<5x256x64xbf16, #tpu.memory_space<vmem>>, vector<1x256x64xbf16>
    %20 = vector.shape_cast %19 : vector<1x256x64xbf16> to vector<256x64xbf16>
    %cst_25 = arith.constant dense<0.000000e+00> : vector<64x64xf32>
    %21 = tpu.matmul %18, %20, %cst_25 {dimension_numbers = #tpu.dot_dimension_numbers<[1], [0], [0], [1], [0, 0, 1, 1], [], []>} : vector<64x256xbf16>, vector<256x64xbf16>, vector<64x64xf32> -> vector<64x64xf32>
    %22 = arith.addf %16, %21 : vector<64x64xf32>
    %c0_26 = arith.constant 0 : index
    %c0_27 = arith.constant 0 : index
    %c16 = arith.constant 16 : index
    %c0_28 = arith.constant 0 : index
    %23 = vector.load %arg1[%c0_26, %c0_27, %c16, %c0_28] : memref<1x2x80x256xbf16, #tpu.memory_space<vmem>>, vector<1x1x64x256xbf16>
    %24 = vector.shape_cast %23 : vector<1x1x64x256xbf16> to vector<64x256xbf16>
    %c4 = arith.constant 4 : index
    %c0_29 = arith.constant 0 : index
    %c0_30 = arith.constant 0 : index
    %25 = vector.load %arg2[%c4, %c0_29, %c0_30] : memref<5x256x64xbf16, #tpu.memory_space<vmem>>, vector<1x256x64xbf16>
    %26 = vector.shape_cast %25 : vector<1x256x64xbf16> to vector<256x64xbf16>
    %cst_31 = arith.constant dense<0.000000e+00> : vector<64x64xf32>
    %27 = tpu.matmul %24, %26, %cst_31 {dimension_numbers = #tpu.dot_dimension_numbers<[1], [0], [0], [1], [0, 0, 1, 1], [], []>} : vector<64x256xbf16>, vector<256x64xbf16>, vector<64x64xf32> -> vector<64x64xf32>
    %28 = arith.addf %22, %27 : vector<64x64xf32>
    %c0_32 = arith.constant 0 : index
    %c0_33 = arith.constant 0 : index
    %29 = vector.load %arg3[%c0_32, %c0_33] : memref<1x64xf32, #tpu.memory_space<vmem>>, vector<1x64xf32>
    %30 = vector.broadcast %29 : vector<1x64xf32> to vector<64x64xf32>
    %31 = arith.addf %28, %30 : vector<64x64xf32>
    %cst_34 = arith.constant 0.000000e+00 : f32
    %32 = vector.broadcast %cst_34 : f32 to vector<64x64xf32>
    %33 = arith.maximumf %31, %32 : vector<64x64xf32>
    %34 = arith.truncf %33 : vector<64x64xf32> to vector<64x64xbf16>
    %c0_35 = arith.constant 0 : index
    %c0_36 = arith.constant 0 : index
    %c0_37 = arith.constant 0 : index
    %35 = vector.load %arg4[%c0_35, %c0_36, %c0_37] : memref<1x64x64xbf16, #tpu.memory_space<vmem>>, vector<1x64x64xbf16>
    %36 = vector.shape_cast %35 : vector<1x64x64xbf16> to vector<64x64xbf16>
    %37 = vector.shape_cast %34 : vector<64x64xbf16> to vector<1x64x64xbf16>
    tpu.vector_store %arg4[%c0_35, %c0_36, %c0_37], %37 {strides = array<i32>} : memref<1x64x64xbf16, #tpu.memory_space<vmem>>, vector<1x64x64xbf16>,
    return
  }
  func.func @transform_0(%arg0: i32) -> (i32, i32, i32, i32) {
    %c0_i32 = arith.constant 0 : i32
    %c0_i32_0 = arith.constant 0 : i32
    %c0_i32_1 = arith.constant 0 : i32
    %c0_i32_2 = arith.constant 0 : i32
    return %arg0, %c0_i32, %c0_i32_0, %c0_i32_1 : i32, i32, i32, i32
  }
  func.func @transform_1(%arg0: i32) -> (i32, i32, i32) {
    %c0_i32 = arith.constant 0 : i32
    %c0_i32_0 = arith.constant 0 : i32
    %c0_i32_1 = arith.constant 0 : i32
    %c0_i32_2 = arith.constant 0 : i32
    return %c0_i32, %c0_i32_0, %c0_i32_1 : i32, i32, i32
  }
  func.func @transform_2(%arg0: i32) -> (i32, i32) {
    %c0_i32 = arith.constant 0 : i32
    %c0_i32_0 = arith.constant 0 : i32
    %c0_i32_1 = arith.constant 0 : i32
    return %c0_i32, %c0_i32_0 : i32, i32
  }
  func.func @transform_3(%arg0: i32) -> (i32, i32, i32) {
    %c0_i32 = arith.constant 0 : i32
    %c0_i32_0 = arith.constant 0 : i32
    %c0_i32_1 = arith.constant 0 : i32
    return %arg0, %c0_i32, %c0_i32_0 : i32, i32, i32
  }
}

module attributes {stable_mosaic.version = 11 : i64} {
  func.func @_conv_relu_pool_fc_kernel(%arg0: i32, %arg1: memref<1x2x24x384xbf16, #tpu.memory_space<vmem>>, %arg2: memref<5x384x128xbf16, #tpu.memory_space<vmem>>, %arg3: memref<1x128xf32, #tpu.memory_space<vmem>>, %arg4: memref<128x128xbf16, #tpu.memory_space<vmem>>, %arg5: memref<1x128xf32, #tpu.memory_space<vmem>>, %arg6: memref<1x1x128xf32, #tpu.memory_space<vmem>>) attributes {dimension_semantics = [#tpu.dimension_semantics<parallel>], iteration_bounds = array<i64: 2>, scalar_prefetch = 0 : i64, scratch_operands = 0 : i64, tpu.core_type = #tpu.core_type<tc>, window_params = [{transform_indices = @transform_0, window_bounds = array<i64: 1, 2, 24, 384>}, {pipeline_mode = #tpu.pipeline_mode<synchronous>, transform_indices = @transform_1, window_bounds = array<i64: 5, 384, 128>}, {pipeline_mode = #tpu.pipeline_mode<synchronous>, transform_indices = @transform_2, window_bounds = array<i64: 1, 128>}, {pipeline_mode = #tpu.pipeline_mode<synchronous>, transform_indices = @transform_3, window_bounds = array<i64: 128, 128>}, {pipeline_mode = #tpu.pipeline_mode<synchronous>, transform_indices = @transform_4, window_bounds = array<i64: 1, 128>}, {transform_indices = @transform_5, window_bounds = array<i64: 1, 1, 128>}]} {
    %c0 = arith.constant 0 : index
    %c0_0 = arith.constant 0 : index
    %c0_1 = arith.constant 0 : index
    %c0_2 = arith.constant 0 : index
    %0 = vector.load %arg1[%c0, %c0_0, %c0_1, %c0_2] : memref<1x2x24x384xbf16, #tpu.memory_space<vmem>>, vector<1x1x16x384xbf16>
    %1 = vector.shape_cast %0 : vector<1x1x16x384xbf16> to vector<16x384xbf16>
    %c0_3 = arith.constant 0 : index
    %c0_4 = arith.constant 0 : index
    %c0_5 = arith.constant 0 : index
    %2 = vector.load %arg2[%c0_3, %c0_4, %c0_5] : memref<5x384x128xbf16, #tpu.memory_space<vmem>>, vector<1x384x128xbf16>
    %3 = vector.shape_cast %2 : vector<1x384x128xbf16> to vector<384x128xbf16>
    %cst = arith.constant dense<0.000000e+00> : vector<16x128xf32>
    %4 = tpu.matmul %1, %3, %cst {dimension_numbers = #tpu.dot_dimension_numbers<[1], [0], [0], [1], [0, 0, 1, 1], [], []>} : vector<16x384xbf16>, vector<384x128xbf16>, vector<16x128xf32> -> vector<16x128xf32>
    %c0_6 = arith.constant 0 : index
    %c1 = arith.constant 1 : index
    %c0_7 = arith.constant 0 : index
    %c0_8 = arith.constant 0 : index
    %5 = vector.load %arg1[%c0_6, %c1, %c0_7, %c0_8] : memref<1x2x24x384xbf16, #tpu.memory_space<vmem>>, vector<1x1x16x384xbf16>
    %6 = vector.shape_cast %5 : vector<1x1x16x384xbf16> to vector<16x384xbf16>
    %c1_9 = arith.constant 1 : index
    %c0_10 = arith.constant 0 : index
    %c0_11 = arith.constant 0 : index
    %7 = vector.load %arg2[%c1_9, %c0_10, %c0_11] : memref<5x384x128xbf16, #tpu.memory_space<vmem>>, vector<1x384x128xbf16>
    %8 = vector.shape_cast %7 : vector<1x384x128xbf16> to vector<384x128xbf16>
    %cst_12 = arith.constant dense<0.000000e+00> : vector<16x128xf32>
    %9 = tpu.matmul %6, %8, %cst_12 {dimension_numbers = #tpu.dot_dimension_numbers<[1], [0], [0], [1], [0, 0, 1, 1], [], []>} : vector<16x384xbf16>, vector<384x128xbf16>, vector<16x128xf32> -> vector<16x128xf32>
    %10 = arith.addf %4, %9 : vector<16x128xf32>
    %c0_13 = arith.constant 0 : index
    %c0_14 = arith.constant 0 : index
    %c4 = arith.constant 4 : index
    %c0_15 = arith.constant 0 : index
    %11 = vector.load %arg1[%c0_13, %c0_14, %c4, %c0_15] : memref<1x2x24x384xbf16, #tpu.memory_space<vmem>>, vector<1x1x16x384xbf16>
    %12 = vector.shape_cast %11 : vector<1x1x16x384xbf16> to vector<16x384xbf16>
    %c2 = arith.constant 2 : index
    %c0_16 = arith.constant 0 : index
    %c0_17 = arith.constant 0 : index
    %13 = vector.load %arg2[%c2, %c0_16, %c0_17] : memref<5x384x128xbf16, #tpu.memory_space<vmem>>, vector<1x384x128xbf16>
    %14 = vector.shape_cast %13 : vector<1x384x128xbf16> to vector<384x128xbf16>
    %cst_18 = arith.constant dense<0.000000e+00> : vector<16x128xf32>
    %15 = tpu.matmul %12, %14, %cst_18 {dimension_numbers = #tpu.dot_dimension_numbers<[1], [0], [0], [1], [0, 0, 1, 1], [], []>} : vector<16x384xbf16>, vector<384x128xbf16>, vector<16x128xf32> -> vector<16x128xf32>
    %16 = arith.addf %10, %15 : vector<16x128xf32>
    %c0_19 = arith.constant 0 : index
    %c1_20 = arith.constant 1 : index
    %c4_21 = arith.constant 4 : index
    %c0_22 = arith.constant 0 : index
    %17 = vector.load %arg1[%c0_19, %c1_20, %c4_21, %c0_22] : memref<1x2x24x384xbf16, #tpu.memory_space<vmem>>, vector<1x1x16x384xbf16>
    %18 = vector.shape_cast %17 : vector<1x1x16x384xbf16> to vector<16x384xbf16>
    %c3 = arith.constant 3 : index
    %c0_23 = arith.constant 0 : index
    %c0_24 = arith.constant 0 : index
    %19 = vector.load %arg2[%c3, %c0_23, %c0_24] : memref<5x384x128xbf16, #tpu.memory_space<vmem>>, vector<1x384x128xbf16>
    %20 = vector.shape_cast %19 : vector<1x384x128xbf16> to vector<384x128xbf16>
    %cst_25 = arith.constant dense<0.000000e+00> : vector<16x128xf32>
    %21 = tpu.matmul %18, %20, %cst_25 {dimension_numbers = #tpu.dot_dimension_numbers<[1], [0], [0], [1], [0, 0, 1, 1], [], []>} : vector<16x384xbf16>, vector<384x128xbf16>, vector<16x128xf32> -> vector<16x128xf32>
    %22 = arith.addf %16, %21 : vector<16x128xf32>
    %c0_26 = arith.constant 0 : index
    %c0_27 = arith.constant 0 : index
    %c8 = arith.constant 8 : index
    %c0_28 = arith.constant 0 : index
    %23 = vector.load %arg1[%c0_26, %c0_27, %c8, %c0_28] : memref<1x2x24x384xbf16, #tpu.memory_space<vmem>>, vector<1x1x16x384xbf16>
    %24 = vector.shape_cast %23 : vector<1x1x16x384xbf16> to vector<16x384xbf16>
    %c4_29 = arith.constant 4 : index
    %c0_30 = arith.constant 0 : index
    %c0_31 = arith.constant 0 : index
    %25 = vector.load %arg2[%c4_29, %c0_30, %c0_31] : memref<5x384x128xbf16, #tpu.memory_space<vmem>>, vector<1x384x128xbf16>
    %26 = vector.shape_cast %25 : vector<1x384x128xbf16> to vector<384x128xbf16>
    %cst_32 = arith.constant dense<0.000000e+00> : vector<16x128xf32>
    %27 = tpu.matmul %24, %26, %cst_32 {dimension_numbers = #tpu.dot_dimension_numbers<[1], [0], [0], [1], [0, 0, 1, 1], [], []>} : vector<16x384xbf16>, vector<384x128xbf16>, vector<16x128xf32> -> vector<16x128xf32>
    %28 = arith.addf %22, %27 : vector<16x128xf32>
    %c0_33 = arith.constant 0 : index
    %c0_34 = arith.constant 0 : index
    %29 = vector.load %arg3[%c0_33, %c0_34] : memref<1x128xf32, #tpu.memory_space<vmem>>, vector<1x128xf32>
    %30 = vector.broadcast %29 : vector<1x128xf32> to vector<16x128xf32>
    %31 = arith.addf %28, %30 : vector<16x128xf32>
    %cst_35 = arith.constant 0.000000e+00 : f32
    %32 = vector.broadcast %cst_35 : f32 to vector<16x128xf32>
    %33 = arith.maximumf %31, %32 : vector<16x128xf32>
    %cst_36 = arith.constant dense<0.000000e+00> : vector<128xf32>
    %34 = vector.multi_reduction <add>, %33, %cst_36 [0] : vector<16x128xf32> to vector<128xf32>
    %35 = vector.shape_cast %34 : vector<128xf32> to vector<1x128xf32>
    %cst_37 = arith.constant 1.600000e+01 : f32
    %36 = vector.broadcast %cst_37 : f32 to vector<1x128xf32>
    %37 = arith.divf %35, %36 : vector<1x128xf32>
    %38 = arith.truncf %37 : vector<1x128xf32> to vector<1x128xbf16>
    %c0_38 = arith.constant 0 : index
    %c0_39 = arith.constant 0 : index
    %39 = vector.load %arg4[%c0_38, %c0_39] : memref<128x128xbf16, #tpu.memory_space<vmem>>, vector<128x128xbf16>
    %cst_40 = arith.constant dense<0.000000e+00> : vector<1x128xf32>
    %40 = tpu.matmul %38, %39, %cst_40 {dimension_numbers = #tpu.dot_dimension_numbers<[1], [0], [0], [1], [0, 0, 1, 1], [], []>} : vector<1x128xbf16>, vector<128x128xbf16>, vector<1x128xf32> -> vector<1x128xf32>
    %c0_41 = arith.constant 0 : index
    %c0_42 = arith.constant 0 : index
    %41 = vector.load %arg5[%c0_41, %c0_42] : memref<1x128xf32, #tpu.memory_space<vmem>>, vector<1x128xf32>
    %42 = arith.addf %40, %41 : vector<1x128xf32>
    %43 = vector.shape_cast %42 : vector<1x128xf32> to vector<1x1x128xf32>
    %c0_43 = arith.constant 0 : index
    %c0_44 = arith.constant 0 : index
    %c0_45 = arith.constant 0 : index
    %44 = vector.load %arg6[%c0_43, %c0_44, %c0_45] : memref<1x1x128xf32, #tpu.memory_space<vmem>>, vector<1x1x128xf32>
    tpu.vector_store %arg6[%c0_43, %c0_44, %c0_45], %43 {strides = array<i32>} : memref<1x1x128xf32, #tpu.memory_space<vmem>>, vector<1x1x128xf32>,
    return
  }
  func.func @transform_0(%arg0: i32) -> (i32, i32, i32, i32) {
    %c0_i32 = arith.constant 0 : i32
    %c0_i32_0 = arith.constant 0 : i32
    %c0_i32_1 = arith.constant 0 : i32
    %c0_i32_2 = arith.constant 0 : i32
    return %arg0, %c0_i32, %c0_i32_0, %c0_i32_1 : i32, i32, i32, i32
  }
  func.func @transform_1(%arg0: i32) -> (i32, i32, i32) {
    %c0_i32 = arith.constant 0 : i32
    %c0_i32_0 = arith.constant 0 : i32
    %c0_i32_1 = arith.constant 0 : i32
    %c0_i32_2 = arith.constant 0 : i32
    return %c0_i32, %c0_i32_0, %c0_i32_1 : i32, i32, i32
  }
  func.func @transform_2(%arg0: i32) -> (i32, i32) {
    %c0_i32 = arith.constant 0 : i32
    %c0_i32_0 = arith.constant 0 : i32
    %c0_i32_1 = arith.constant 0 : i32
    return %c0_i32, %c0_i32_0 : i32, i32
  }
  func.func @transform_3(%arg0: i32) -> (i32, i32) {
    %c0_i32 = arith.constant 0 : i32
    %c0_i32_0 = arith.constant 0 : i32
    %c0_i32_1 = arith.constant 0 : i32
    return %c0_i32, %c0_i32_0 : i32, i32
  }
  func.func @transform_4(%arg0: i32) -> (i32, i32) {
    %c0_i32 = arith.constant 0 : i32
    %c0_i32_0 = arith.constant 0 : i32
    %c0_i32_1 = arith.constant 0 : i32
    return %c0_i32, %c0_i32_0 : i32, i32
  }
  func.func @transform_5(%arg0: i32) -> (i32, i32, i32) {
    %c0_i32 = arith.constant 0 : i32
    %c0_i32_0 = arith.constant 0 : i32
    %c0_i32_1 = arith.constant 0 : i32
    return %arg0, %c0_i32, %c0_i32_0 : i32, i32, i32
  }
}

</mosaic_0001>

<llo_original>
// kernel: cnn_classifier_forward.4
$region0: #{cnn_classifier_forward.4}
  #allocation0 [shape = 'u32[]', space=smem, size = 0x4, offset = 0x4, fixed_abs, tag = 'smem constant byte address 0x4 - core index']
  #allocation1 [shape = 'u32[144,128]{1,0:T(1,128)}', space=vmem, size = 0x12000, scoped, tag = 'internal scratch']
  %s0 = inlined_call_operand.vmem [shape: bf16[2,1024,128], index: 0, kind: input, shape index: {}]
  %s1 = inlined_call_operand.vmem [shape: bf16[128,16], index: 1, kind: input, shape index: {}]
  %s2 = inlined_call_operand.vmem [shape: f32[1,16], index: 2, kind: input, shape index: {}]
  %s3 = inlined_call_operand.vmem [shape: bf16[2,1024,16], index: 3, kind: output, shape index: {}]
  %s4 = sld [smem:[#allocation0]]
  $region45: #{cnn_classifier_forward.4} parent=0
    _
  %s6 = ssub.s32 1, %s4
  %s7 = scalar_select 0, %s6, %s4
  loop: start=0, step=1, limit=4
  $region2: #{cnn_classifier_forward.4} parent=0 // loop_pre_header
    _
  $region3: #{cnn_classifier_forward.4} parent=0 // loop_header
    %s9 = sphi 0, %s13
    %p10 = scmp.ge.s32.totalorder %s9, 4
    %s19 = sphi 0, %s21
    %s22 = sphi 0, %s19
    %s23 = sphi 0, %s22
    %s39 = sphi 0, %s23
    %s43 = sphi 0, %s43
    %s45 = sphi 0, %s43
    %s46 = sphi 0, %s45
    %s60 = sphi 0, %s46
    %s64 = sphi 0, %s64
    %s66 = sphi 0, %s64
    %s67 = sphi 0, %s66
    %s81 = sphi 0, %s67
    %s87 = sphi 0, %s89
    %s90 = sphi 0, %s87
    %s91 = sphi 0, %s90
    %s107 = sphi 0, %s91
  $region4: #{cnn_classifier_forward.4} parent=0 // loop_header_branch
    %12 = sbr.rel (%p10) target = $region8
  $region5: #{cnn_classifier_forward.4} parent=0 // loop_body
    %s14 = ssub.s32 %s9, 1
    %s15 = ssub.s32 %s9, 2
    %s16 = sadd.s32 %s9, 1
    %s17 = ssub.s32 %s9, %s16
    %p18 = scmp.eq.s32.totalorder %s17, 0
    %s20 = sadd.s32 %s19, 1
    %s21 = scalar_select %p18, %s19, %s20
    %p24 = pneg %p18
    %p25 = scmp.eq.s32.totalorder %s9, 1
    %p26 = por %p24, %p25
    %p27 = scmp.ne.s32.totalorder %s19, %s22
    %p28 = scmp.eq.s32.totalorder %s9, 0
    %p29 = por %p27, %p28
    %p30 = scmp.ne.s32.totalorder %s19, %s22
    %p31 = scmp.eq.s32.totalorder %s14, 1
    %p32 = por %p30, %p31
    %p33 = scmp.ne.s32.totalorder %s22, %s23
    %p34 = scmp.eq.s32.totalorder %s14, 0
    %p35 = por %p33, %p34
    %p36 = scmp.ne.s32.totalorder %s22, %s23
    %p37 = scmp.eq.s32.totalorder %s15, 1
    %p38 = por %p36, %p37
    %p40 = scmp.ne.s32.totalorder %s23, %s39
    %p41 = scmp.eq.s32.totalorder %s15, 0
    %p42 = por %p40, %p41
    %s44 = sadd.s32 %s43, 1
    %p47 = scmp.eq.s32.totalorder %s9, 1
    %p48 = scmp.ne.s32.totalorder %s43, %s45
    %p49 = scmp.eq.s32.totalorder %s9, 0
    %p50 = por %p48, %p49
    %p51 = scmp.ne.s32.totalorder %s43, %s45
    %p52 = scmp.eq.s32.totalorder %s14, 1
    %p53 = por %p51, %p52
    %p54 = scmp.ne.s32.totalorder %s45, %s46
    %p55 = scmp.eq.s32.totalorder %s14, 0
    %p56 = por %p54, %p55
    %p57 = scmp.ne.s32.totalorder %s45, %s46
    %p58 = scmp.eq.s32.totalorder %s15, 1
    %p59 = por %p57, %p58
    %p61 = scmp.ne.s32.totalorder %s46, %s60
    %p62 = scmp.eq.s32.totalorder %s15, 0
    %p63 = por %p61, %p62
    %s65 = sadd.s32 %s64, 1
    %p68 = scmp.eq.s32.totalorder %s9, 1
    %p69 = scmp.ne.s32.totalorder %s64, %s66
    %p70 = scmp.eq.s32.totalorder %s9, 0
    %p71 = por %p69, %p70
    %p72 = scmp.ne.s32.totalorder %s64, %s66
    %p73 = scmp.eq.s32.totalorder %s14, 1
    %p74 = por %p72, %p73
    %p75 = scmp.ne.s32.totalorder %s66, %s67
    %p76 = scmp.eq.s32.totalorder %s14, 0
    %p77 = por %p75, %p76
    %p78 = scmp.ne.s32.totalorder %s66, %s67
    %p79 = scmp.eq.s32.totalorder %s15, 1
    %p80 = por %p78, %p79
    %p82 = scmp.ne.s32.totalorder %s67, %s81
    %p83 = scmp.eq.s32.totalorder %s15, 0
    %p84 = por %p82, %p83
    %s85 = ssub.s32 %s9, %s16
    %p86 = scmp.eq.s32.totalorder %s85, 0
    %s88 = sadd.s32 %s87, 1
    %s89 = scalar_select %p86, %s87, %s88
    %p92 = pneg %p86
    %p93 = scmp.eq.s32.totalorder %s9, 1
    %p94 = por %p92, %p93
    %p95 = scmp.ne.s32.totalorder %s87, %s90
    %p96 = scmp.eq.s32.totalorder %s9, 0
    %p97 = por %p95, %p96
    %p98 = scmp.ne.s32.totalorder %s87, %s90
    %p99 = scmp.eq.s32.totalorder %s14, 1
    %p100 = por %p98, %p99
    %p101 = scmp.ne.s32.totalorder %s90, %s91
    %p102 = scmp.eq.s32.totalorder %s14, 0
    %p103 = por %p101, %p102
    %p104 = scmp.ne.s32.totalorder %s90, %s91
    %p105 = scmp.eq.s32.totalorder %s15, 1
    %p106 = por %p104, %p105
    %p108 = scmp.ne.s32.totalorder %s91, %s107
    %p109 = scmp.eq.s32.totalorder %s15, 0
    %p110 = por %p108, %p109
    %p111 = scmp.le.s32.totalorder 1, %s9
    %p112 = scmp.lt.s32.totalorder %s9, 3
    %p113 = pnand %p111, %p112
    %p114 = pneg %p113
    // Predicated region
    $region9: #{cnn_classifier_forward.4} parent=5 // pred_check
      _
    $region10: #{cnn_classifier_forward.4} parent=5 // pred_check_branch
      %116 = sbr.rel (%p113) target = $region12
    $region11: #{cnn_classifier_forward.4} parent=5 // pred_region
      %s117 = ssub.s32 %s9, 1
      // Predicated region
      $region13: #{cnn_classifier_forward.4} parent=11 // pred_check
        %p118 = pneg %p56
      $region14: #{cnn_classifier_forward.4} parent=11 // pred_check_branch
        %120 = sbr.rel (%p118) target = $region16
      $region15: #{cnn_classifier_forward.4} parent=11 // pred_region
        _
      $region16: #{cnn_classifier_forward.4} parent=11 // pred_fallthru
        _
      // Predicated region
      $region17: #{cnn_classifier_forward.4} parent=11 // pred_check
        %p121 = pneg %p77
      $region18: #{cnn_classifier_forward.4} parent=11 // pred_check_branch
        %123 = sbr.rel (%p121) target = $region20
      $region19: #{cnn_classifier_forward.4} parent=11 // pred_region
        _
      $region20: #{cnn_classifier_forward.4} parent=11 // pred_fallthru
        _
    $region12: #{cnn_classifier_forward.4} parent=5 // pred_fallthru
      _
    %p124 = scmp.lt.s32.totalorder %s9, 2
    // Predicated region
    $region21: #{cnn_classifier_forward.4} parent=5 // pred_check
      %p125 = pneg %p124
    $region22: #{cnn_classifier_forward.4} parent=5 // pred_check_branch
      %127 = sbr.rel (%p125) target = $region24
    $region23: #{cnn_classifier_forward.4} parent=5 // pred_region
      // Predicated region
      $region25: #{cnn_classifier_forward.4} parent=23 // pred_check
        %p128 = pneg %p29
      $region26: #{cnn_classifier_forward.4} parent=23 // pred_check_branch
        %130 = sbr.rel (%p128) target = $region28
      $region27: #{cnn_classifier_forward.4} parent=23 // pred_region
        %p131 = scmp.lt.s32.totalorder %s9, 1
        %s132 = scalar_select %p131, %s9, 1
        %s133 = smul.addr %s132, 128
        %s134 = smul.addr %s133, 4
        %s135 = scalar_lea.vmem %s0, %s134
      $region28: #{cnn_classifier_forward.4} parent=23 // pred_fallthru
        _
    $region24: #{cnn_classifier_forward.4} parent=5 // pred_fallthru
      _
    %p136 = scmp.le.s32.totalorder 1, %s9
    %p137 = scmp.lt.s32.totalorder %s9, 3
    %p138 = pnand %p136, %p137
    %p139 = pneg %p138
    // Predicated region
    $region29: #{cnn_classifier_forward.4} parent=5 // pred_check
      _
    $region30: #{cnn_classifier_forward.4} parent=5 // pred_check_branch
      %141 = sbr.rel (%p138) target = $region32
    $region31: #{cnn_classifier_forward.4} parent=5 // pred_region
      %s142 = ssub.s32 %s9, 1
      %p143 = scmp.lt.s32.totalorder %s14, 1
      %s144 = scalar_select %p143, %s14, 1
      %s145 = smul.addr %s144, 128
      %s146 = smul.addr %s145, 4
      %s147 = scalar_lea.vmem %s0, %s146
      %p148 = pneg %p35
      %p149 = pneg %p32
      %p150 = pneg %p56
      %p151 = pneg %p53
      %p152 = pneg %p77
      %p153 = pneg %p74
      %p154 = pneg %p103
      %p155 = pneg %p100
      %p156 = scmp.lt.s32.totalorder %s14, 1
      %s157 = scalar_select %p156, %s14, 1
      %s158 = smul.addr %s157, 128
      %s159 = smul.addr %s158, 4
      %s160 = scalar_lea.vmem %s3, %s159
      %p161 = scmp.lt.s32.totalorder %s14, 1
      %s162 = scalar_select %p161, %s14, 1
      %s163 = smul.addr %s162, 128
      %s164 = smul.addr %s163, 4
      %s165 = scalar_lea.vmem %s0, %s164
      %p166 = scmp.lt.s32.totalorder %s14, 1
      %s167 = scalar_select %p166, %s14, 1
      %s168 = smul.addr %s167, 128
      %s169 = smul.addr %s168, 4
      %s170 = scalar_lea.vmem %s3, %s169
      %v172 = vld [vmem:[%s165] sm:$0xf]
      %v173 = vld [vmem:[%s165 + $0x4] sm:$0xf]
      %v174 = vld [vmem:[%s165 + $0x8] sm:$0xf]
      %v175 = vld [vmem:[%s165 + $0xc] sm:$0xf]
      %v176 = vld [vmem:[%s165 + $0x10] sm:$0xf]
      %v177 = vld [vmem:[%s165 + $0x14] sm:$0xf]
      %v178 = vld [vmem:[%s165 + $0x18] sm:$0xf]
      %v179 = vld [vmem:[%s165 + $0x1c] sm:$0xf]
      %v180 = vld [vmem:[%s165 + $0x20] sm:$0xf]
      %v181 = vld [vmem:[%s165 + $0x24] sm:$0xf]
      %v182 = vld [vmem:[%s165 + $0x28] sm:$0xf]
      %v183 = vld [vmem:[%s165 + $0x2c] sm:$0xf]
      %v184 = vld [vmem:[%s165 + $0x30] sm:$0xf]
      %v185 = vld [vmem:[%s165 + $0x34] sm:$0xf]
      %v186 = vld [vmem:[%s165 + $0x38] sm:$0xf]
      %v187 = vld [vmem:[%s165 + $0x3c] sm:$0xf]
      %v188 = vld [vmem:[%s165 + $0x40] sm:$0xf]
      %v189 = vld [vmem:[%s165 + $0x44] sm:$0xf]
      %v190 = vld [vmem:[%s165 + $0x48] sm:$0xf]
      %v191 = vld [vmem:[%s165 + $0x4c] sm:$0xf]
      %v192 = vld [vmem:[%s165 + $0x50] sm:$0xf]
      %v193 = vld [vmem:[%s165 + $0x54] sm:$0xf]
      %v194 = vld [vmem:[%s165 + $0x58] sm:$0xf]
      %v195 = vld [vmem:[%s165 + $0x5c] sm:$0xf]
      %v196 = vld [vmem:[%s165 + $0x60] sm:$0xf]
      %v197 = vld [vmem:[%s165 + $0x64] sm:$0xf]
      %v198 = vld [vmem:[%s165 + $0x68] sm:$0xf]
      %v199 = vld [vmem:[%s165 + $0x6c] sm:$0xf]
      %v200 = vld [vmem:[%s165 + $0x70] sm:$0xf]
      %v201 = vld [vmem:[%s165 + $0x74] sm:$0xf]
      %v202 = vld [vmem:[%s165 + $0x78] sm:$0xf]
      %v203 = vld [vmem:[%s165 + $0x7c] sm:$0xf]
      %v204 = vld [vmem:[%s165 + $0x80] sm:$0xf]
      %v205 = vld [vmem:[%s165 + $0x84] sm:$0xf]
      %v206 = vld [vmem:[%s165 + $0x88] sm:$0xf]
      %v207 = vld [vmem:[%s165 + $0x8c] sm:$0xf]
      %v208 = vld [vmem:[%s165 + $0x90] sm:$0xf]
      %v209 = vld [vmem:[%s165 + $0x94] sm:$0xf]
      %v210 = vld [vmem:[%s165 + $0x98] sm:$0xf]
      %v211 = vld [vmem:[%s165 + $0x9c] sm:$0xf]
      %v212 = vld [vmem:[%s165 + $0xa0] sm:$0xf]
      %v213 = vld [vmem:[%s165 + $0xa4] sm:$0xf]
      %v214 = vld [vmem:[%s165 + $0xa8] sm:$0xf]
      %v215 = vld [vmem:[%s165 + $0xac] sm:$0xf]
      %v216 = vld [vmem:[%s165 + $0xb0] sm:$0xf]
      %v217 = vld [vmem:[%s165 + $0xb4] sm:$0xf]
      %v218 = vld [vmem:[%s165 + $0xb8] sm:$0xf]
      %v219 = vld [vmem:[%s165 + $0xbc] sm:$0xf]
      %v220 = vld [vmem:[%s165 + $0xc0] sm:$0xf]
      %v221 = vld [vmem:[%s165 + $0xc4] sm:$0xf]
      %v222 = vld [vmem:[%s165 + $0xc8] sm:$0xf]
      %v223 = vld [vmem:[%s165 + $0xcc] sm:$0xf]
      %v224 = vld [vmem:[%s165 + $0xd0] sm:$0xf]
      %v225 = vld [vmem:[%s165 + $0xd4] sm:$0xf]
      %v226 = vld [vmem:[%s165 + $0xd8] sm:$0xf]
      %v227 = vld [vmem:[%s165 + $0xdc] sm:$0xf]
      %v228 = vld [vmem:[%s165 + $0xe0] sm:$0xf]
      %v229 = vld [vmem:[%s165 + $0xe4] sm:$0xf]
      %v230 = vld [vmem:[%s165 + $0xe8] sm:$0xf]
      %v231 = vld [vmem:[%s165 + $0xec] sm:$0xf]
      %v232 = vld [vmem:[%s165 + $0xf0] sm:$0xf]
      %v233 = vld [vmem:[%s165 + $0xf4] sm:$0xf]
      %v234 = vld [vmem:[%s165 + $0xf8] sm:$0xf]
      %v235 = vld [vmem:[%s165 + $0xfc] sm:$0xf]
      %v236 = vld [vmem:[%s165 + $0x100] sm:$0xf]
      %v237 = vld [vmem:[%s165 + $0x104] sm:$0xf]
      %v238 = vld [vmem:[%s165 + $0x108] sm:$0xf]
      %v239 = vld [vmem:[%s165 + $0x10c] sm:$0xf]
      %v240 = vld [vmem:[%s165 + $0x110] sm:$0xf]
      %v241 = vld [vmem:[%s165 + $0x114] sm:$0xf]
      %v242 = vld [vmem:[%s165 + $0x118] sm:$0xf]
      %v243 = vld [vmem:[%s165 + $0x11c] sm:$0xf]
      %v244 = vld [vmem:[%s165 + $0x120] sm:$0xf]
      %v245 = vld [vmem:[%s165 + $0x124] sm:$0xf]
      %v246 = vld [vmem:[%s165 + $0x128] sm:$0xf]
      %v247 = vld [vmem:[%s165 + $0x12c] sm:$0xf]
      %v248 = vld [vmem:[%s165 + $0x130] sm:$0xf]
      %v249 = vld [vmem:[%s165 + $0x134] sm:$0xf]
      %v250 = vld [vmem:[%s165 + $0x138] sm:$0xf]
      %v251 = vld [vmem:[%s165 + $0x13c] sm:$0xf]
      %v252 = vld [vmem:[%s165 + $0x140] sm:$0xf]
      %v253 = vld [vmem:[%s165 + $0x144] sm:$0xf]
      %v254 = vld [vmem:[%s165 + $0x148] sm:$0xf]
      %v255 = vld [vmem:[%s165 + $0x14c] sm:$0xf]
      %v256 = vld [vmem:[%s165 + $0x150] sm:$0xf]
      %v257 = vld [vmem:[%s165 + $0x154] sm:$0xf]
      %v258 = vld [vmem:[%s165 + $0x158] sm:$0xf]
      %v259 = vld [vmem:[%s165 + $0x15c] sm:$0xf]
      %v260 = vld [vmem:[%s165 + $0x160] sm:$0xf]
      %v261 = vld [vmem:[%s165 + $0x164] sm:$0xf]
      %v262 = vld [vmem:[%s165 + $0x168] sm:$0xf]
      %v263 = vld [vmem:[%s165 + $0x16c] sm:$0xf]
      %v264 = vld [vmem:[%s165 + $0x170] sm:$0xf]
      %v265 = vld [vmem:[%s165 + $0x174] sm:$0xf]
      %v266 = vld [vmem:[%s165 + $0x178] sm:$0xf]
      %v267 = vld [vmem:[%s165 + $0x17c] sm:$0xf]
      %v268 = vld [vmem:[%s165 + $0x180] sm:$0xf]
      %v269 = vld [vmem:[%s165 + $0x184] sm:$0xf]
      %v270 = vld [vmem:[%s165 + $0x188] sm:$0xf]
      %v271 = vld [vmem:[%s165 + $0x18c] sm:$0xf]
      %v272 = vld [vmem:[%s165 + $0x190] sm:$0xf]
      %v273 = vld [vmem:[%s165 + $0x194] sm:$0xf]
      %v274 = vld [vmem:[%s165 + $0x198] sm:$0xf]
      %v275 = vld [vmem:[%s165 + $0x19c] sm:$0xf]
      %v276 = vld [vmem:[%s165 + $0x1a0] sm:$0xf]
      %v277 = vld [vmem:[%s165 + $0x1a4] sm:$0xf]
      %v278 = vld [vmem:[%s165 + $0x1a8] sm:$0xf]
      %v279 = vld [vmem:[%s165 + $0x1ac] sm:$0xf]
      %v280 = vld [vmem:[%s165 + $0x1b0] sm:$0xf]
      %v281 = vld [vmem:[%s165 + $0x1b4] sm:$0xf]
      %v282 = vld [vmem:[%s165 + $0x1b8] sm:$0xf]
      %v283 = vld [vmem:[%s165 + $0x1bc] sm:$0xf]
      %v284 = vld [vmem:[%s165 + $0x1c0] sm:$0xf]
      %v285 = vld [vmem:[%s165 + $0x1c4] sm:$0xf]
      %v286 = vld [vmem:[%s165 + $0x1c8] sm:$0xf]
      %v287 = vld [vmem:[%s165 + $0x1cc] sm:$0xf]
      %v288 = vld [vmem:[%s165 + $0x1d0] sm:$0xf]
      %v289 = vld [vmem:[%s165 + $0x1d4] sm:$0xf]
      %v290 = vld [vmem:[%s165 + $0x1d8] sm:$0xf]
      %v291 = vld [vmem:[%s165 + $0x1dc] sm:$0xf]
      %v292 = vld [vmem:[%s165 + $0x1e0] sm:$0xf]
      %v293 = vld [vmem:[%s165 + $0x1e4] sm:$0xf]
      %v294 = vld [vmem:[%s165 + $0x1e8] sm:$0xf]
      %v295 = vld [vmem:[%s165 + $0x1ec] sm:$0xf]
      %v296 = vld [vmem:[%s165 + $0x1f0] sm:$0xf]
      %v297 = vld [vmem:[%s165 + $0x1f4] sm:$0xf]
      %v298 = vld [vmem:[%s165 + $0x1f8] sm:$0xf]
      %v299 = vld [vmem:[%s165 + $0x1fc] sm:$0xf]
      %v300 = vld [vmem:[%s1] sm:$0xf]
      %v301 = vld [vmem:[%s1 + $0x4] sm:$0xf]
      %v302 = vld [vmem:[%s1 + $0x8] sm:$0xf]
      %v303 = vld [vmem:[%s1 + $0xc] sm:$0xf]
      %v304 = vld [vmem:[%s1 + $0x10] sm:$0xf]
      %v305 = vld [vmem:[%s1 + $0x14] sm:$0xf]
      %v306 = vld [vmem:[%s1 + $0x18] sm:$0xf]
      %v307 = vld [vmem:[%s1 + $0x1c] sm:$0xf]
      %v308 = vld [vmem:[%s1 + $0x20] sm:$0xf]
      %v309 = vld [vmem:[%s1 + $0x24] sm:$0xf]
      %v310 = vld [vmem:[%s1 + $0x28] sm:$0xf]
      %v311 = vld [vmem:[%s1 + $0x2c] sm:$0xf]
      %v312 = vld [vmem:[%s1 + $0x30] sm:$0xf]
      %v313 = vld [vmem:[%s1 + $0x34] sm:$0xf]
      %v314 = vld [vmem:[%s1 + $0x38] sm:$0xf]
      %v315 = vld [vmem:[%s1 + $0x3c] sm:$0xf]
      %v316 = vld [vmem:[%s2] sm:$0x1]
      %v318 = vlaneseq
      %v319 = vshrl.u32 %v318, 7
      %v320 = vsub.s32 0, %v319
      %v321 = vrot.slane %v316, %v320
      %v451 = vunpack.c.l.b16 %v172
      %v452 = vunpack.c.l.b16 %v173
      %v453 = vunpack.c.l.b16 %v174
      %v454 = vunpack.c.l.b16 %v175
      %v455 = vunpack.c.l.b16 %v176
      %v456 = vunpack.c.l.b16 %v177
      %v457 = vunpack.c.l.b16 %v178
      %v458 = vunpack.c.l.b16 %v179
      %v459 = vunpack.c.l.b16 %v180
      %v460 = vunpack.c.l.b16 %v181
      %v461 = vunpack.c.l.b16 %v182
      %v462 = vunpack.c.l.b16 %v183
      %v463 = vunpack.c.l.b16 %v184
      %v464 = vunpack.c.l.b16 %v185
      %v465 = vunpack.c.l.b16 %v186
      %v466 = vunpack.c.l.b16 %v187
      %v467 = vunpack.c.l.b16 %v188
      %v468 = vunpack.c.l.b16 %v189
      %v469 = vunpack.c.l.b16 %v190
      %v470 = vunpack.c.l.b16 %v191
      %v471 = vunpack.c.l.b16 %v192
      %v472 = vunpack.c.l.b16 %v193
      %v473 = vunpack.c.l.b16 %v194
      %v474 = vunpack.c.l.b16 %v195
      %v475 = vunpack.c.l.b16 %v196
      %v476 = vunpack.c.l.b16 %v197
      %v477 = vunpack.c.l.b16 %v198
      %v478 = vunpack.c.l.b16 %v199
      %v479 = vunpack.c.l.b16 %v200
      %v480 = vunpack.c.l.b16 %v201
      %v481 = vunpack.c.l.b16 %v202
      %v482 = vunpack.c.l.b16 %v203
      %v483 = vunpack.c.l.b16 %v204
      %v484 = vunpack.c.l.b16 %v205
      %v485 = vunpack.c.l.b16 %v206
      %v486 = vunpack.c.l.b16 %v207
      %v487 = vunpack.c.l.b16 %v208
      %v488 = vunpack.c.l.b16 %v209
      %v489 = vunpack.c.l.b16 %v210
      %v490 = vunpack.c.l.b16 %v211
      %v491 = vunpack.c.l.b16 %v212
      %v492 = vunpack.c.l.b16 %v213
      %v493 = vunpack.c.l.b16 %v214
      %v494 = vunpack.c.l.b16 %v215
      %v495 = vunpack.c.l.b16 %v216
      %v496 = vunpack.c.l.b16 %v217
      %v497 = vunpack.c.l.b16 %v218
      %v498 = vunpack.c.l.b16 %v219
      %v499 = vunpack.c.l.b16 %v220
      %v500 = vunpack.c.l.b16 %v221
      %v501 = vunpack.c.l.b16 %v222
      %v502 = vunpack.c.l.b16 %v223
      %v503 = vunpack.c.l.b16 %v224
      %v504 = vunpack.c.l.b16 %v225
      %v505 = vunpack.c.l.b16 %v226
      %v506 = vunpack.c.l.b16 %v227
      %v507 = vunpack.c.l.b16 %v228
      %v508 = vunpack.c.l.b16 %v229
      %v509 = vunpack.c.l.b16 %v230
      %v510 = vunpack.c.l.b16 %v231
      %v511 = vunpack.c.l.b16 %v232
      %v512 = vunpack.c.l.b16 %v233
      %v513 = vunpack.c.l.b16 %v234
      %v514 = vunpack.c.l.b16 %v235
      %v515 = vunpack.c.l.b16 %v236
      %v516 = vunpack.c.l.b16 %v237
      %v517 = vunpack.c.l.b16 %v238
      %v518 = vunpack.c.l.b16 %v239
      %v519 = vunpack.c.l.b16 %v240
      %v520 = vunpack.c.l.b16 %v241
      %v521 = vunpack.c.l.b16 %v242
      %v522 = vunpack.c.l.b16 %v243
      %v523 = vunpack.c.l.b16 %v244
      %v524 = vunpack.c.l.b16 %v245
      %v525 = vunpack.c.l.b16 %v246
      %v526 = vunpack.c.l.b16 %v247
      %v527 = vunpack.c.l.b16 %v248
      %v528 = vunpack.c.l.b16 %v249
      %v529 = vunpack.c.l.b16 %v250
      %v530 = vunpack.c.l.b16 %v251
      %v531 = vunpack.c.l.b16 %v252
      %v532 = vunpack.c.l.b16 %v253
      %v533 = vunpack.c.l.b16 %v254
      %v534 = vunpack.c.l.b16 %v255
      %v535 = vunpack.c.l.b16 %v256
      %v536 = vunpack.c.l.b16 %v257
      %v537 = vunpack.c.l.b16 %v258
      %v538 = vunpack.c.l.b16 %v259
      %v539 = vunpack.c.l.b16 %v260
      %v540 = vunpack.c.l.b16 %v261
      %v541 = vunpack.c.l.b16 %v262
      %v542 = vunpack.c.l.b16 %v263
      %v543 = vunpack.c.l.b16 %v264
      %v544 = vunpack.c.l.b16 %v265
      %v545 = vunpack.c.l.b16 %v266
      %v546 = vunpack.c.l.b16 %v267
      %v547 = vunpack.c.l.b16 %v268
      %v548 = vunpack.c.l.b16 %v269
      %v549 = vunpack.c.l.b16 %v270
      %v550 = vunpack.c.l.b16 %v271
      %v551 = vunpack.c.l.b16 %v272
      %v552 = vunpack.c.l.b16 %v273
      %v553 = vunpack.c.l.b16 %v274
      %v554 = vunpack.c.l.b16 %v275
      %v555 = vunpack.c.l.b16 %v276
      %v556 = vunpack.c.l.b16 %v277
      %v557 = vunpack.c.l.b16 %v278
      %v558 = vunpack.c.l.b16 %v279
      %v559 = vunpack.c.l.b16 %v280
      %v560 = vunpack.c.l.b16 %v281
      %v561 = vunpack.c.l.b16 %v282
      %v562 = vunpack.c.l.b16 %v283
      %v563 = vunpack.c.l.b16 %v284
      %v564 = vunpack.c.l.b16 %v285
      %v565 = vunpack.c.l.b16 %v286
      %v566 = vunpack.c.l.b16 %v287
      %v567 = vunpack.c.l.b16 %v288
      %v568 = vunpack.c.l.b16 %v289
      %v569 = vunpack.c.l.b16 %v290
      %v570 = vunpack.c.l.b16 %v291
      %v571 = vunpack.c.l.b16 %v292
      %v572 = vunpack.c.l.b16 %v293
      %v573 = vunpack.c.l.b16 %v294
      %v574 = vunpack.c.l.b16 %v295
      %v575 = vunpack.c.l.b16 %v296
      %v576 = vunpack.c.l.b16 %v297
      %v577 = vunpack.c.l.b16 %v298
      %v578 = vunpack.c.l.b16 %v299
      %v579 = vpack.c.b16 %v452, %v451
      %v580 = vpack.c.b16 %v454, %v453
      %v581 = vpack.c.b16 %v456, %v455
      %v582 = vpack.c.b16 %v458, %v457
      %v583 = vpack.c.b16 %v460, %v459
      %v584 = vpack.c.b16 %v462, %v461
      %v585 = vpack.c.b16 %v464, %v463
      %v586 = vpack.c.b16 %v466, %v465
      %v587 = vpack.c.b16 %v468, %v467
      %v588 = vpack.c.b16 %v470, %v469
      %v589 = vpack.c.b16 %v472, %v471
      %v590 = vpack.c.b16 %v474, %v473
      %v591 = vpack.c.b16 %v476, %v475
      %v592 = vpack.c.b16 %v478, %v477
      %v593 = vpack.c.b16 %v480, %v479
      %v594 = vpack.c.b16 %v482, %v481
      %v595 = vpack.c.b16 %v484, %v483
      %v596 = vpack.c.b16 %v486, %v485
      %v597 = vpack.c.b16 %v488, %v487
      %v598 = vpack.c.b16 %v490, %v489
      %v599 = vpack.c.b16 %v492, %v491
      %v600 = vpack.c.b16 %v494, %v493
      %v601 = vpack.c.b16 %v496, %v495
      %v602 = vpack.c.b16 %v498, %v497
      %v603 = vpack.c.b16 %v500, %v499
      %v604 = vpack.c.b16 %v502, %v501
      %v605 = vpack.c.b16 %v504, %v503
      %v606 = vpack.c.b16 %v506, %v505
      %v607 = vpack.c.b16 %v508, %v507
      %v608 = vpack.c.b16 %v510, %v509
      %v609 = vpack.c.b16 %v512, %v511
      %v610 = vpack.c.b16 %v514, %v513
      %v611 = vpack.c.b16 %v516, %v515
      %v612 = vpack.c.b16 %v518, %v517
      %v613 = vpack.c.b16 %v520, %v519
      %v614 = vpack.c.b16 %v522, %v521
      %v615 = vpack.c.b16 %v524, %v523
      %v616 = vpack.c.b16 %v526, %v525
      %v617 = vpack.c.b16 %v528, %v527
      %v618 = vpack.c.b16 %v530, %v529
      %v619 = vpack.c.b16 %v532, %v531
      %v620 = vpack.c.b16 %v534, %v533
      %v621 = vpack.c.b16 %v536, %v535
      %v622 = vpack.c.b16 %v538, %v537
      %v623 = vpack.c.b16 %v540, %v539
      %v624 = vpack.c.b16 %v542, %v541
      %v625 = vpack.c.b16 %v544, %v543
      %v626 = vpack.c.b16 %v546, %v545
      %v627 = vpack.c.b16 %v548, %v547
      %v628 = vpack.c.b16 %v550, %v549
      %v629 = vpack.c.b16 %v552, %v551
      %v630 = vpack.c.b16 %v554, %v553
      %v631 = vpack.c.b16 %v556, %v555
      %v632 = vpack.c.b16 %v558, %v557
      %v633 = vpack.c.b16 %v560, %v559
      %v634 = vpack.c.b16 %v562, %v561
      %v635 = vpack.c.b16 %v564, %v563
      %v636 = vpack.c.b16 %v566, %v565
      %v637 = vpack.c.b16 %v568, %v567
      %v638 = vpack.c.b16 %v570, %v569
      %v639 = vpack.c.b16 %v572, %v571
      %v640 = vpack.c.b16 %v574, %v573
      %v641 = vpack.c.b16 %v576, %v575
      %v642 = vpack.c.b16 %v578, %v577
      %v723 = vunpack.c.l.b16 %v300
      %v724 = vunpack.c.l.b16 %v301
      %v725 = vunpack.c.l.b16 %v302
      %v726 = vunpack.c.l.b16 %v303
      %v727 = vunpack.c.l.b16 %v304
      %v728 = vunpack.c.l.b16 %v305
      %v729 = vunpack.c.l.b16 %v306
      %v730 = vunpack.c.l.b16 %v307
      %v731 = vunpack.c.l.b16 %v308
      %v732 = vunpack.c.l.b16 %v309
      %v733 = vunpack.c.l.b16 %v310
      %v734 = vunpack.c.l.b16 %v311
      %v735 = vunpack.c.l.b16 %v312
      %v736 = vunpack.c.l.b16 %v313
      %v737 = vunpack.c.l.b16 %v314
      %v738 = vunpack.c.l.b16 %v315
      %v739 = vpack.c.b16 %v724, %v723
      %v740 = vpack.c.b16 %v726, %v725
      %v741 = vpack.c.b16 %v728, %v727
      %v742 = vpack.c.b16 %v730, %v729
      %v743 = vpack.c.b16 %v732, %v731
      %v744 = vpack.c.b16 %v734, %v733
      %v745 = vpack.c.b16 %v736, %v735
      %v746 = vpack.c.b16 %v738, %v737
      %755 = vmatprep.subr.bf16.mxu0 0
      %756 = vmatpush1.bf16.msra.mxu0 %v746
      %757 = vmatprep.subr.bf16.mxu0 0
      %758 = vmatpush1.bf16.msra.mxu0 %v745
      %759 = vmatprep.subr.bf16.mxu0 0
      %760 = vmatpush1.bf16.msra.mxu0 %v744
      %761 = vmatprep.subr.bf16.mxu0 0
      %762 = vmatpush1.bf16.msra.mxu0 %v743
      %763 = vmatprep.subr.bf16.mxu0 0
      %764 = vmatpush1.bf16.msra.mxu0 %v742
      %765 = vmatprep.subr.bf16.mxu0 0
      %766 = vmatpush1.bf16.msra.mxu0 %v741
      %767 = vmatprep.subr.bf16.mxu0 0
      %768 = vmatpush1.bf16.msra.mxu0 %v740
      %769 = vmatprep.subr.bf16.mxu0 0
      %770 = vmatpush1.bf16.msra.mxu0 %v739
      %771 = vmatprep.subr.bf16.mxu0 0
      %772 = vmatpush2.bf16.msra.mxu0 0
      %773 = vmatprep.subr.bf16.mxu0 0
      %774 = vmatpush2.bf16.msra.mxu0 0
      %775 = vmatprep.subr.bf16.mxu0 0
      %776 = vmatpush2.bf16.msra.mxu0 0
      %777 = vmatprep.subr.bf16.mxu0 0
      %778 = vmatpush2.bf16.msra.mxu0 0
      %779 = vmatprep.subr.bf16.mxu0 0
      %780 = vmatpush2.bf16.msra.mxu0 0
      %781 = vmatprep.subr.bf16.mxu0 0
      %782 = vmatpush2.bf16.msra.mxu0 0
      %783 = vmatprep.subr.bf16.mxu0 0
      %784 = vmatpush2.bf16.msra.mxu0 0
      %785 = vmatprep.subr.bf16.mxu0 0
      %786 = vmatpush2.bf16.msra.mxu0 0
      %787 = vmatprep.mubr.bf16.mxu0 0
      %788 = vmatmul.mubr.bf16.gmra.mxu0 %v579
      %v789 = vpop.f32.mrf.mxu0
      %v790 = vadd.f32 %v321, %v789
      %v791 = vpop.f32.mrf.mxu0
      %v792 = vpop.f32.mrf.mxu0
      %v793 = vadd.f32 %v321, %v792
      %v794 = vpop.f32.mrf.mxu0
      %795 = vmatprep.mubr.bf16.mxu0 0
      %796 = vmatmul.mubr.bf16.gmra.mxu0 %v580
      %v797 = vpop.f32.mrf.mxu0
      %v798 = vadd.f32 %v321, %v797
      %v799 = vpop.f32.mrf.mxu0
      %v800 = vpop.f32.mrf.mxu0
      %v801 = vadd.f32 %v321, %v800
      %v802 = vpop.f32.mrf.mxu0
      %803 = vmatprep.mubr.bf16.mxu0 0
      %804 = vmatmul.mubr.bf16.gmra.mxu0 %v581
      %v805 = vpop.f32.mrf.mxu0
      %v806 = vadd.f32 %v321, %v805
      %v807 = vpop.f32.mrf.mxu0
      %v808 = vpop.f32.mrf.mxu0
      %v809 = vadd.f32 %v321, %v808
      %v810 = vpop.f32.mrf.mxu0
      %811 = vmatprep.mubr.bf16.mxu0 0
      %812 = vmatmul.mubr.bf16.gmra.mxu0 %v582
      %v813 = vpop.f32.mrf.mxu0
      %v814 = vadd.f32 %v321, %v813
      %v815 = vpop.f32.mrf.mxu0
      %v816 = vpop.f32.mrf.mxu0
      %v817 = vadd.f32 %v321, %v816
      %v818 = vpop.f32.mrf.mxu0
      %819 = vmatprep.mubr.bf16.mxu0 0
      %820 = vmatmul.mubr.bf16.gmra.mxu0 %v583
      %v821 = vpop.f32.mrf.mxu0
      %v822 = vadd.f32 %v321, %v821
      %v823 = vpop.f32.mrf.mxu0
      %v824 = vpop.f32.mrf.mxu0
      %v825 = vadd.f32 %v321, %v824
      %v826 = vpop.f32.mrf.mxu0
      %827 = vmatprep.mubr.bf16.mxu0 0
      %828 = vmatmul.mubr.bf16.gmra.mxu0 %v584
      %v829 = vpop.f32.mrf.mxu0
      %v830 = vadd.f32 %v321, %v829
      %v831 = vpop.f32.mrf.mxu0
      %v832 = vpop.f32.mrf.mxu0
      %v833 = vadd.f32 %v321, %v832
      %v834 = vpop.f32.mrf.mxu0
      %835 = vmatprep.mubr.bf16.mxu0 0
      %836 = vmatmul.mubr.bf16.gmra.mxu0 %v585
      %v837 = vpop.f32.mrf.mxu0
      %v838 = vadd.f32 %v321, %v837
      %v839 = vpop.f32.mrf.mxu0
      %v840 = vpop.f32.mrf.mxu0
      %v841 = vadd.f32 %v321, %v840
      %v842 = vpop.f32.mrf.mxu0
      %843 = vmatprep.mubr.bf16.mxu0 0
      %844 = vmatmul.mubr.bf16.gmra.mxu0 %v586
      %v845 = vpop.f32.mrf.mxu0
      %v846 = vadd.f32 %v321, %v845
      %v847 = vpop.f32.mrf.mxu0
      %v848 = vpop.f32.mrf.mxu0
      %v849 = vadd.f32 %v321, %v848
      %v850 = vpop.f32.mrf.mxu0
      %851 = vmatprep.mubr.bf16.mxu0 0
      %852 = vmatmul.mubr.bf16.gmra.mxu0 %v587
      %v853 = vpop.f32.mrf.mxu0
      %v854 = vadd.f32 %v321, %v853
      %v855 = vpop.f32.mrf.mxu0
      %v856 = vpop.f32.mrf.mxu0
      %v857 = vadd.f32 %v321, %v856
      %v858 = vpop.f32.mrf.mxu0
      %859 = vmatprep.mubr.bf16.mxu0 0
      %860 = vmatmul.mubr.bf16.gmra.mxu0 %v588
      %v861 = vpop.f32.mrf.mxu0
      %v862 = vadd.f32 %v321, %v861
      %v863 = vpop.f32.mrf.mxu0
      %v864 = vpop.f32.mrf.mxu0
      %v865 = vadd.f32 %v321, %v864
      %v866 = vpop.f32.mrf.mxu0
      %867 = vmatprep.mubr.bf16.mxu0 0
      %868 = vmatmul.mubr.bf16.gmra.mxu0 %v589
      %v869 = vpop.f32.mrf.mxu0
      %v870 = vadd.f32 %v321, %v869
      %v871 = vpop.f32.mrf.mxu0
      %v872 = vpop.f32.mrf.mxu0
      %v873 = vadd.f32 %v321, %v872
      %v874 = vpop.f32.mrf.mxu0
      %875 = vmatprep.mubr.bf16.mxu0 0
      %876 = vmatmul.mubr.bf16.gmra.mxu0 %v590
      %v877 = vpop.f32.mrf.mxu0
      %v878 = vadd.f32 %v321, %v877
      %v879 = vpop.f32.mrf.mxu0
      %v880 = vpop.f32.mrf.mxu0
      %v881 = vadd.f32 %v321, %v880
      %v882 = vpop.f32.mrf.mxu0
      %883 = vmatprep.mubr.bf16.mxu0 0
      %884 = vmatmul.mubr.bf16.gmra.mxu0 %v591
      %v885 = vpop.f32.mrf.mxu0
      %v886 = vadd.f32 %v321, %v885
      %v887 = vpop.f32.mrf.mxu0
      %v888 = vpop.f32.mrf.mxu0
      %v889 = vadd.f32 %v321, %v888
      %v890 = vpop.f32.mrf.mxu0
      %891 = vmatprep.mubr.bf16.mxu0 0
      %892 = vmatmul.mubr.bf16.gmra.mxu0 %v592
      %v893 = vpop.f32.mrf.mxu0
      %v894 = vadd.f32 %v321, %v893
      %v895 = vpop.f32.mrf.mxu0
      %v896 = vpop.f32.mrf.mxu0
      %v897 = vadd.f32 %v321, %v896
      %v898 = vpop.f32.mrf.mxu0
      %899 = vmatprep.mubr.bf16.mxu0 0
      %900 = vmatmul.mubr.bf16.gmra.mxu0 %v593
      %v901 = vpop.f32.mrf.mxu0
      %v902 = vadd.f32 %v321, %v901
      %v903 = vpop.f32.mrf.mxu0
      %v904 = vpop.f32.mrf.mxu0
      %v905 = vadd.f32 %v321, %v904
      %v906 = vpop.f32.mrf.mxu0
      %907 = vmatprep.mubr.bf16.mxu0 0
      %908 = vmatmul.mubr.bf16.gmra.mxu0 %v594
      %v909 = vpop.f32.mrf.mxu0
      %v910 = vadd.f32 %v321, %v909
      %v911 = vpop.f32.mrf.mxu0
      %v912 = vpop.f32.mrf.mxu0
      %v913 = vadd.f32 %v321, %v912
      %v914 = vpop.f32.mrf.mxu0
      %915 = vmatprep.mubr.bf16.mxu0 0
      %916 = vmatmul.mubr.bf16.gmra.mxu0 %v595
      %v917 = vpop.f32.mrf.mxu0
      %v918 = vadd.f32 %v321, %v917
      %v919 = vpop.f32.mrf.mxu0
      %v920 = vpop.f32.mrf.mxu0
      %v921 = vadd.f32 %v321, %v920
      %v922 = vpop.f32.mrf.mxu0
      %923 = vmatprep.mubr.bf16.mxu0 0
      %924 = vmatmul.mubr.bf16.gmra.mxu0 %v596
      %v925 = vpop.f32.mrf.mxu0
      %v926 = vadd.f32 %v321, %v925
      %v927 = vpop.f32.mrf.mxu0
      %v928 = vpop.f32.mrf.mxu0
      %v929 = vadd.f32 %v321, %v928
      %v930 = vpop.f32.mrf.mxu0
      %931 = vmatprep.mubr.bf16.mxu0 0
      %932 = vmatmul.mubr.bf16.gmra.mxu0 %v597
      %v933 = vpop.f32.mrf.mxu0
      %v934 = vadd.f32 %v321, %v933
      %v935 = vpop.f32.mrf.mxu0
      %v936 = vpop.f32.mrf.mxu0
      %v937 = vadd.f32 %v321, %v936
      %v938 = vpop.f32.mrf.mxu0
      %939 = vmatprep.mubr.bf16.mxu0 0
      %940 = vmatmul.mubr.bf16.gmra.mxu0 %v598
      %v941 = vpop.f32.mrf.mxu0
      %v942 = vadd.f32 %v321, %v941
      %v943 = vpop.f32.mrf.mxu0
      %v944 = vpop.f32.mrf.mxu0
      %v945 = vadd.f32 %v321, %v944
      %v946 = vpop.f32.mrf.mxu0
      %947 = vmatprep.mubr.bf16.mxu0 0
      %948 = vmatmul.mubr.bf16.gmra.mxu0 %v599
      %v949 = vpop.f32.mrf.mxu0
      %v950 = vadd.f32 %v321, %v949
      %v951 = vpop.f32.mrf.mxu0
      %v952 = vpop.f32.mrf.mxu0
      %v953 = vadd.f32 %v321, %v952
      %v954 = vpop.f32.mrf.mxu0
      %955 = vmatprep.mubr.bf16.mxu0 0
      %956 = vmatmul.mubr.bf16.gmra.mxu0 %v600
      %v957 = vpop.f32.mrf.mxu0
      %v958 = vadd.f32 %v321, %v957
      %v959 = vpop.f32.mrf.mxu0
      %v960 = vpop.f32.mrf.mxu0
      %v961 = vadd.f32 %v321, %v960
      %v962 = vpop.f32.mrf.mxu0
      %963 = vmatprep.mubr.bf16.mxu0 0
      %964 = vmatmul.mubr.bf16.gmra.mxu0 %v601
      %v965 = vpop.f32.mrf.mxu0
      %v966 = vadd.f32 %v321, %v965
      %v967 = vpop.f32.mrf.mxu0
      %v968 = vpop.f32.mrf.mxu0
      %v969 = vadd.f32 %v321, %v968
      %v970 = vpop.f32.mrf.mxu0
      %971 = vmatprep.mubr.bf16.mxu0 0
      %972 = vmatmul.mubr.bf16.gmra.mxu0 %v602
      %v973 = vpop.f32.mrf.mxu0
      %v974 = vadd.f32 %v321, %v973
      %v975 = vpop.f32.mrf.mxu0
      %v976 = vpop.f32.mrf.mxu0
      %v977 = vadd.f32 %v321, %v976
      %v978 = vpop.f32.mrf.mxu0
      %979 = vmatprep.mubr.bf16.mxu0 0
      %980 = vmatmul.mubr.bf16.gmra.mxu0 %v603
      %v981 = vpop.f32.mrf.mxu0
      %v982 = vadd.f32 %v321, %v981
      %v983 = vpop.f32.mrf.mxu0
      %v984 = vpop.f32.mrf.mxu0
      %v985 = vadd.f32 %v321, %v984
      %v986 = vpop.f32.mrf.mxu0
      %987 = vmatprep.mubr.bf16.mxu0 0
      %988 = vmatmul.mubr.bf16.gmra.mxu0 %v604
      %v989 = vpop.f32.mrf.mxu0
      %v990 = vadd.f32 %v321, %v989
      %v991 = vpop.f32.mrf.mxu0
      %v992 = vpop.f32.mrf.mxu0
      %v993 = vadd.f32 %v321, %v992
      %v994 = vpop.f32.mrf.mxu0
      %995 = vmatprep.mubr.bf16.mxu0 0
      %996 = vmatmul.mubr.bf16.gmra.mxu0 %v605
      %v997 = vpop.f32.mrf.mxu0
      %v998 = vadd.f32 %v321, %v997
      %v999 = vpop.f32.mrf.mxu0
      %v1000 = vpop.f32.mrf.mxu0
      %v1001 = vadd.f32 %v321, %v1000
      %v1002 = vpop.f32.mrf.mxu0
      %1003 = vmatprep.mubr.bf16.mxu0 0
      %1004 = vmatmul.mubr.bf16.gmra.mxu0 %v606
      %v1005 = vpop.f32.mrf.mxu0
      %v1006 = vadd.f32 %v321, %v1005
      %v1007 = vpop.f32.mrf.mxu0
      %v1008 = vpop.f32.mrf.mxu0
      %v1009 = vadd.f32 %v321, %v1008
      %v1010 = vpop.f32.mrf.mxu0
      %1011 = vmatprep.mubr.bf16.mxu0 0
      %1012 = vmatmul.mubr.bf16.gmra.mxu0 %v607
      %v1013 = vpop.f32.mrf.mxu0
      %v1014 = vadd.f32 %v321, %v1013
      %v1015 = vpop.f32.mrf.mxu0
      %v1016 = vpop.f32.mrf.mxu0
      %v1017 = vadd.f32 %v321, %v1016
      %v1018 = vpop.f32.mrf.mxu0
      %1019 = vmatprep.mubr.bf16.mxu0 0
      %1020 = vmatmul.mubr.bf16.gmra.mxu0 %v608
      %v1021 = vpop.f32.mrf.mxu0
      %v1022 = vadd.f32 %v321, %v1021
      %v1023 = vpop.f32.mrf.mxu0
      %v1024 = vpop.f32.mrf.mxu0
      %v1025 = vadd.f32 %v321, %v1024
      %v1026 = vpop.f32.mrf.mxu0
      %1027 = vmatprep.mubr.bf16.mxu0 0
      %1028 = vmatmul.mubr.bf16.gmra.mxu0 %v609
      %v1029 = vpop.f32.mrf.mxu0
      %v1030 = vadd.f32 %v321, %v1029
      %v1031 = vpop.f32.mrf.mxu0
      %v1032 = vpop.f32.mrf.mxu0
      %v1033 = vadd.f32 %v321, %v1032
      %v1034 = vpop.f32.mrf.mxu0
      %1035 = vmatprep.mubr.bf16.mxu0 0
      %1036 = vmatmul.mubr.bf16.gmra.mxu0 %v610
      %v1037 = vpop.f32.mrf.mxu0
      %v1038 = vadd.f32 %v321, %v1037
      %v1039 = vpop.f32.mrf.mxu0
      %v1040 = vpop.f32.mrf.mxu0
      %v1041 = vadd.f32 %v321, %v1040
      %v1042 = vpop.f32.mrf.mxu0
      %1043 = vmatprep.mubr.bf16.mxu0 0
      %1044 = vmatmul.mubr.bf16.gmra.mxu0 %v611
      %v1045 = vpop.f32.mrf.mxu0
      %v1046 = vadd.f32 %v321, %v1045
      %v1047 = vpop.f32.mrf.mxu0
      %v1048 = vpop.f32.mrf.mxu0
      %v1049 = vadd.f32 %v321, %v1048
      %v1050 = vpop.f32.mrf.mxu0
      %1051 = vmatprep.mubr.bf16.mxu0 0
      %1052 = vmatmul.mubr.bf16.gmra.mxu0 %v612
      %v1053 = vpop.f32.mrf.mxu0
      %v1054 = vadd.f32 %v321, %v1053
      %v1055 = vpop.f32.mrf.mxu0
      %v1056 = vpop.f32.mrf.mxu0
      %v1057 = vadd.f32 %v321, %v1056
      %v1058 = vpop.f32.mrf.mxu0
      %1059 = vmatprep.mubr.bf16.mxu0 0
      %1060 = vmatmul.mubr.bf16.gmra.mxu0 %v613
      %v1061 = vpop.f32.mrf.mxu0
      %v1062 = vadd.f32 %v321, %v1061
      %v1063 = vpop.f32.mrf.mxu0
      %v1064 = vpop.f32.mrf.mxu0
      %v1065 = vadd.f32 %v321, %v1064
      %v1066 = vpop.f32.mrf.mxu0
      %1067 = vmatprep.mubr.bf16.mxu0 0
      %1068 = vmatmul.mubr.bf16.gmra.mxu0 %v614
      %v1069 = vpop.f32.mrf.mxu0
      %v1070 = vadd.f32 %v321, %v1069
      %v1071 = vpop.f32.mrf.mxu0
      %v1072 = vpop.f32.mrf.mxu0
      %v1073 = vadd.f32 %v321, %v1072
      %v1074 = vpop.f32.mrf.mxu0
      %1075 = vmatprep.mubr.bf16.mxu0 0
      %1076 = vmatmul.mubr.bf16.gmra.mxu0 %v615
      %v1077 = vpop.f32.mrf.mxu0
      %v1078 = vadd.f32 %v321, %v1077
      %v1079 = vpop.f32.mrf.mxu0
      %v1080 = vpop.f32.mrf.mxu0
      %v1081 = vadd.f32 %v321, %v1080
      %v1082 = vpop.f32.mrf.mxu0
      %1083 = vmatprep.mubr.bf16.mxu0 0
      %1084 = vmatmul.mubr.bf16.gmra.mxu0 %v616
      %v1085 = vpop.f32.mrf.mxu0
      %v1086 = vadd.f32 %v321, %v1085
      %v1087 = vpop.f32.mrf.mxu0
      %v1088 = vpop.f32.mrf.mxu0
      %v1089 = vadd.f32 %v321, %v1088
      %v1090 = vpop.f32.mrf.mxu0
      %1091 = vmatprep.mubr.bf16.mxu0 0
      %1092 = vmatmul.mubr.bf16.gmra.mxu0 %v617
      %v1093 = vpop.f32.mrf.mxu0
      %v1094 = vadd.f32 %v321, %v1093
      %v1095 = vpop.f32.mrf.mxu0
      %v1096 = vpop.f32.mrf.mxu0
      %v1097 = vadd.f32 %v321, %v1096
      %v1098 = vpop.f32.mrf.mxu0
      %1099 = vmatprep.mubr.bf16.mxu0 0
      %1100 = vmatmul.mubr.bf16.gmra.mxu0 %v618
      %v1101 = vpop.f32.mrf.mxu0
      %v1102 = vadd.f32 %v321, %v1101
      %v1103 = vpop.f32.mrf.mxu0
      %v1104 = vpop.f32.mrf.mxu0
      %v1105 = vadd.f32 %v321, %v1104
      %v1106 = vpop.f32.mrf.mxu0
      %1107 = vmatprep.mubr.bf16.mxu0 0
      %1108 = vmatmul.mubr.bf16.gmra.mxu0 %v619
      %v1109 = vpop.f32.mrf.mxu0
      %v1110 = vadd.f32 %v321, %v1109
      %v1111 = vpop.f32.mrf.mxu0
      %v1112 = vpop.f32.mrf.mxu0
      %v1113 = vadd.f32 %v321, %v1112
      %v1114 = vpop.f32.mrf.mxu0
      %1115 = vmatprep.mubr.bf16.mxu0 0
      %1116 = vmatmul.mubr.bf16.gmra.mxu0 %v620
      %v1117 = vpop.f32.mrf.mxu0
      %v1118 = vadd.f32 %v321, %v1117
      %v1119 = vpop.f32.mrf.mxu0
      %v1120 = vpop.f32.mrf.mxu0
      %v1121 = vadd.f32 %v321, %v1120
      %v1122 = vpop.f32.mrf.mxu0
      %1123 = vmatprep.mubr.bf16.mxu0 0
      %1124 = vmatmul.mubr.bf16.gmra.mxu0 %v621
      %v1125 = vpop.f32.mrf.mxu0
      %v1126 = vadd.f32 %v321, %v1125
      %v1127 = vpop.f32.mrf.mxu0
      %v1128 = vpop.f32.mrf.mxu0
      %v1129 = vadd.f32 %v321, %v1128
      %v1130 = vpop.f32.mrf.mxu0
      %1131 = vmatprep.mubr.bf16.mxu0 0
      %1132 = vmatmul.mubr.bf16.gmra.mxu0 %v622
      %v1133 = vpop.f32.mrf.mxu0
      %v1134 = vadd.f32 %v321, %v1133
      %v1135 = vpop.f32.mrf.mxu0
      %v1136 = vpop.f32.mrf.mxu0
      %v1137 = vadd.f32 %v321, %v1136
      %v1138 = vpop.f32.mrf.mxu0
      %1139 = vmatprep.mubr.bf16.mxu0 0
      %1140 = vmatmul.mubr.bf16.gmra.mxu0 %v623
      %v1141 = vpop.f32.mrf.mxu0
      %v1142 = vadd.f32 %v321, %v1141
      %v1143 = vpop.f32.mrf.mxu0
      %v1144 = vpop.f32.mrf.mxu0
      %v1145 = vadd.f32 %v321, %v1144
      %v1146 = vpop.f32.mrf.mxu0
      %1147 = vmatprep.mubr.bf16.mxu0 0
      %1148 = vmatmul.mubr.bf16.gmra.mxu0 %v624
      %v1149 = vpop.f32.mrf.mxu0
      %v1150 = vadd.f32 %v321, %v1149
      %v1151 = vpop.f32.mrf.mxu0
      %v1152 = vpop.f32.mrf.mxu0
      %v1153 = vadd.f32 %v321, %v1152
      %v1154 = vpop.f32.mrf.mxu0
      %1155 = vmatprep.mubr.bf16.mxu0 0
      %1156 = vmatmul.mubr.bf16.gmra.mxu0 %v625
      %v1157 = vpop.f32.mrf.mxu0
      %v1158 = vadd.f32 %v321, %v1157
      %v1159 = vpop.f32.mrf.mxu0
      %v1160 = vpop.f32.mrf.mxu0
      %v1161 = vadd.f32 %v321, %v1160
      %v1162 = vpop.f32.mrf.mxu0
      %1163 = vmatprep.mubr.bf16.mxu0 0
      %1164 = vmatmul.mubr.bf16.gmra.mxu0 %v626
      %v1165 = vpop.f32.mrf.mxu0
      %v1166 = vadd.f32 %v321, %v1165
      %v1167 = vpop.f32.mrf.mxu0
      %v1168 = vpop.f32.mrf.mxu0
      %v1169 = vadd.f32 %v321, %v1168
      %v1170 = vpop.f32.mrf.mxu0
      %1171 = vmatprep.mubr.bf16.mxu0 0
      %1172 = vmatmul.mubr.bf16.gmra.mxu0 %v627
      %v1173 = vpop.f32.mrf.mxu0
      %v1174 = vadd.f32 %v321, %v1173
      %v1175 = vpop.f32.mrf.mxu0
      %v1176 = vpop.f32.mrf.mxu0
      %v1177 = vadd.f32 %v321, %v1176
      %v1178 = vpop.f32.mrf.mxu0
      %1179 = vmatprep.mubr.bf16.mxu0 0
      %1180 = vmatmul.mubr.bf16.gmra.mxu0 %v628
      %v1181 = vpop.f32.mrf.mxu0
      %v1182 = vadd.f32 %v321, %v1181
      %v1183 = vpop.f32.mrf.mxu0
      %v1184 = vpop.f32.mrf.mxu0
      %v1185 = vadd.f32 %v321, %v1184
      %v1186 = vpop.f32.mrf.mxu0
      %1187 = vmatprep.mubr.bf16.mxu0 0
      %1188 = vmatmul.mubr.bf16.gmra.mxu0 %v629
      %v1189 = vpop.f32.mrf.mxu0
      %v1190 = vadd.f32 %v321, %v1189
      %v1191 = vpop.f32.mrf.mxu0
      %v1192 = vpop.f32.mrf.mxu0
      %v1193 = vadd.f32 %v321, %v1192
      %v1194 = vpop.f32.mrf.mxu0
      %1195 = vmatprep.mubr.bf16.mxu0 0
      %1196 = vmatmul.mubr.bf16.gmra.mxu0 %v630
      %v1197 = vpop.f32.mrf.mxu0
      %v1198 = vadd.f32 %v321, %v1197
      %v1199 = vpop.f32.mrf.mxu0
      %v1200 = vpop.f32.mrf.mxu0
      %v1201 = vadd.f32 %v321, %v1200
      %v1202 = vpop.f32.mrf.mxu0
      %1203 = vmatprep.mubr.bf16.mxu0 0
      %1204 = vmatmul.mubr.bf16.gmra.mxu0 %v631
      %v1205 = vpop.f32.mrf.mxu0
      %v1206 = vadd.f32 %v321, %v1205
      %v1207 = vpop.f32.mrf.mxu0
      %v1208 = vpop.f32.mrf.mxu0
      %v1209 = vadd.f32 %v321, %v1208
      %v1210 = vpop.f32.mrf.mxu0
      %1211 = vmatprep.mubr.bf16.mxu0 0
      %1212 = vmatmul.mubr.bf16.gmra.mxu0 %v632
      %v1213 = vpop.f32.mrf.mxu0
      %v1214 = vadd.f32 %v321, %v1213
      %v1215 = vpop.f32.mrf.mxu0
      %v1216 = vpop.f32.mrf.mxu0
      %v1217 = vadd.f32 %v321, %v1216
      %v1218 = vpop.f32.mrf.mxu0
      %1219 = vmatprep.mubr.bf16.mxu0 0
      %1220 = vmatmul.mubr.bf16.gmra.mxu0 %v633
      %v1221 = vpop.f32.mrf.mxu0
      %v1222 = vadd.f32 %v321, %v1221
      %v1223 = vpop.f32.mrf.mxu0
      %v1224 = vpop.f32.mrf.mxu0
      %v1225 = vadd.f32 %v321, %v1224
      %v1226 = vpop.f32.mrf.mxu0
      %1227 = vmatprep.mubr.bf16.mxu0 0
      %1228 = vmatmul.mubr.bf16.gmra.mxu0 %v634
      %v1229 = vpop.f32.mrf.mxu0
      %v1230 = vadd.f32 %v321, %v1229
      %v1231 = vpop.f32.mrf.mxu0
      %v1232 = vpop.f32.mrf.mxu0
      %v1233 = vadd.f32 %v321, %v1232
      %v1234 = vpop.f32.mrf.mxu0
      %1235 = vmatprep.mubr.bf16.mxu0 0
      %1236 = vmatmul.mubr.bf16.gmra.mxu0 %v635
      %v1237 = vpop.f32.mrf.mxu0
      %v1238 = vadd.f32 %v321, %v1237
      %v1239 = vpop.f32.mrf.mxu0
      %v1240 = vpop.f32.mrf.mxu0
      %v1241 = vadd.f32 %v321, %v1240
      %v1242 = vpop.f32.mrf.mxu0
      %1243 = vmatprep.mubr.bf16.mxu0 0
      %1244 = vmatmul.mubr.bf16.gmra.mxu0 %v636
      %v1245 = vpop.f32.mrf.mxu0
      %v1246 = vadd.f32 %v321, %v1245
      %v1247 = vpop.f32.mrf.mxu0
      %v1248 = vpop.f32.mrf.mxu0
      %v1249 = vadd.f32 %v321, %v1248
      %v1250 = vpop.f32.mrf.mxu0
      %1251 = vmatprep.mubr.bf16.mxu0 0
      %1252 = vmatmul.mubr.bf16.gmra.mxu0 %v637
      %v1253 = vpop.f32.mrf.mxu0
      %v1254 = vadd.f32 %v321, %v1253
      %v1255 = vpop.f32.mrf.mxu0
      %v1256 = vpop.f32.mrf.mxu0
      %v1257 = vadd.f32 %v321, %v1256
      %v1258 = vpop.f32.mrf.mxu0
      %1259 = vmatprep.mubr.bf16.mxu0 0
      %1260 = vmatmul.mubr.bf16.gmra.mxu0 %v638
      %v1261 = vpop.f32.mrf.mxu0
      %v1262 = vadd.f32 %v321, %v1261
      %v1263 = vpop.f32.mrf.mxu0
      %v1264 = vpop.f32.mrf.mxu0
      %v1265 = vadd.f32 %v321, %v1264
      %v1266 = vpop.f32.mrf.mxu0
      %1267 = vmatprep.mubr.bf16.mxu0 0
      %1268 = vmatmul.mubr.bf16.gmra.mxu0 %v639
      %v1269 = vpop.f32.mrf.mxu0
      %v1270 = vadd.f32 %v321, %v1269
      %v1271 = vpop.f32.mrf.mxu0
      %v1272 = vpop.f32.mrf.mxu0
      %v1273 = vadd.f32 %v321, %v1272
      %v1274 = vpop.f32.mrf.mxu0
      %1275 = vmatprep.mubr.bf16.mxu0 0
      %1276 = vmatmul.mubr.bf16.gmra.mxu0 %v640
      %v1277 = vpop.f32.mrf.mxu0
      %v1278 = vadd.f32 %v321, %v1277
      %v1279 = vpop.f32.mrf.mxu0
      %v1280 = vpop.f32.mrf.mxu0
      %v1281 = vadd.f32 %v321, %v1280
      %v1282 = vpop.f32.mrf.mxu0
      %1283 = vmatprep.mubr.bf16.mxu0 0
      %1284 = vmatmul.mubr.bf16.gmra.mxu0 %v641
      %v1285 = vpop.f32.mrf.mxu0
      %v1286 = vadd.f32 %v321, %v1285
      %v1287 = vpop.f32.mrf.mxu0
      %v1288 = vpop.f32.mrf.mxu0
      %v1289 = vadd.f32 %v321, %v1288
      %v1290 = vpop.f32.mrf.mxu0
      %1291 = vmatprep.mubr.bf16.mxu0 0
      %1292 = vmatmul.mubr.bf16.gmra.mxu0 %v642
      %v1293 = vpop.f32.mrf.mxu0
      %v1294 = vadd.f32 %v321, %v1293
      %v1295 = vpop.f32.mrf.mxu0
      %v1296 = vpop.f32.mrf.mxu0
      %v1297 = vadd.f32 %v321, %v1296
      %v1298 = vpop.f32.mrf.mxu0
      %1299 = vdwg.mxu0
      %v1300 = vmax.f32 %v790, 0.0
      %v1301 = vmax.f32 %v793, 0.0
      %v1302 = vmax.f32 %v798, 0.0
      %v1303 = vmax.f32 %v801, 0.0
      %v1304 = vmax.f32 %v806, 0.0
      %v1305 = vmax.f32 %v809, 0.0
      %v1306 = vmax.f32 %v814, 0.0
      %v1307 = vmax.f32 %v817, 0.0
      %v1308 = vmax.f32 %v822, 0.0
      %v1309 = vmax.f32 %v825, 0.0
      %v1310 = vmax.f32 %v830, 0.0
      %v1311 = vmax.f32 %v833, 0.0
      %v1312 = vmax.f32 %v838, 0.0
      %v1313 = vmax.f32 %v841, 0.0
      %v1314 = vmax.f32 %v846, 0.0
      %v1315 = vmax.f32 %v849, 0.0
      %v1316 = vmax.f32 %v854, 0.0
      %v1317 = vmax.f32 %v857, 0.0
      %v1318 = vmax.f32 %v862, 0.0
      %v1319 = vmax.f32 %v865, 0.0
      %v1320 = vmax.f32 %v870, 0.0
      %v1321 = vmax.f32 %v873, 0.0
      %v1322 = vmax.f32 %v878, 0.0
      %v1323 = vmax.f32 %v881, 0.0
      %v1324 = vmax.f32 %v886, 0.0
      %v1325 = vmax.f32 %v889, 0.0
      %v1326 = vmax.f32 %v894, 0.0
      %v1327 = vmax.f32 %v897, 0.0
      %v1328 = vmax.f32 %v902, 0.0
      %v1329 = vmax.f32 %v905, 0.0
      %v1330 = vmax.f32 %v910, 0.0
      %v1331 = vmax.f32 %v913, 0.0
      %v1332 = vmax.f32 %v918, 0.0
      %v1333 = vmax.f32 %v921, 0.0
      %v1334 = vmax.f32 %v926, 0.0
      %v1335 = vmax.f32 %v929, 0.0
      %v1336 = vmax.f32 %v934, 0.0
      %v1337 = vmax.f32 %v937, 0.0
      %v1338 = vmax.f32 %v942, 0.0
      %v1339 = vmax.f32 %v945, 0.0
      %v1340 = vmax.f32 %v950, 0.0
      %v1341 = vmax.f32 %v953, 0.0
      %v1342 = vmax.f32 %v958, 0.0
      %v1343 = vmax.f32 %v961, 0.0
      %v1344 = vmax.f32 %v966, 0.0
      %v1345 = vmax.f32 %v969, 0.0
      %v1346 = vmax.f32 %v974, 0.0
      %v1347 = vmax.f32 %v977, 0.0
      %v1348 = vmax.f32 %v982, 0.0
      %v1349 = vmax.f32 %v985, 0.0
      %v1350 = vmax.f32 %v990, 0.0
      %v1351 = vmax.f32 %v993, 0.0
      %v1352 = vmax.f32 %v998, 0.0
      %v1353 = vmax.f32 %v1001, 0.0
      %v1354 = vmax.f32 %v1006, 0.0
      %v1355 = vmax.f32 %v1009, 0.0
      %v1356 = vmax.f32 %v1014, 0.0
      %v1357 = vmax.f32 %v1017, 0.0
      %v1358 = vmax.f32 %v1022, 0.0
      %v1359 = vmax.f32 %v1025, 0.0
      %v1360 = vmax.f32 %v1030, 0.0
      %v1361 = vmax.f32 %v1033, 0.0
      %v1362 = vmax.f32 %v1038, 0.0
      %v1363 = vmax.f32 %v1041, 0.0
      %v1364 = vmax.f32 %v1046, 0.0
      %v1365 = vmax.f32 %v1049, 0.0
      %v1366 = vmax.f32 %v1054, 0.0
      %v1367 = vmax.f32 %v1057, 0.0
      %v1368 = vmax.f32 %v1062, 0.0
      %v1369 = vmax.f32 %v1065, 0.0
      %v1370 = vmax.f32 %v1070, 0.0
      %v1371 = vmax.f32 %v1073, 0.0
      %v1372 = vmax.f32 %v1078, 0.0
      %v1373 = vmax.f32 %v1081, 0.0
      %v1374 = vmax.f32 %v1086, 0.0
      %v1375 = vmax.f32 %v1089, 0.0
      %v1376 = vmax.f32 %v1094, 0.0
      %v1377 = vmax.f32 %v1097, 0.0
      %v1378 = vmax.f32 %v1102, 0.0
      %v1379 = vmax.f32 %v1105, 0.0
      %v1380 = vmax.f32 %v1110, 0.0
      %v1381 = vmax.f32 %v1113, 0.0
      %v1382 = vmax.f32 %v1118, 0.0
      %v1383 = vmax.f32 %v1121, 0.0
      %v1384 = vmax.f32 %v1126, 0.0
      %v1385 = vmax.f32 %v1129, 0.0
      %v1386 = vmax.f32 %v1134, 0.0
      %v1387 = vmax.f32 %v1137, 0.0
      %v1388 = vmax.f32 %v1142, 0.0
      %v1389 = vmax.f32 %v1145, 0.0
      %v1390 = vmax.f32 %v1150, 0.0
      %v1391 = vmax.f32 %v1153, 0.0
      %v1392 = vmax.f32 %v1158, 0.0
      %v1393 = vmax.f32 %v1161, 0.0
      %v1394 = vmax.f32 %v1166, 0.0
      %v1395 = vmax.f32 %v1169, 0.0
      %v1396 = vmax.f32 %v1174, 0.0
      %v1397 = vmax.f32 %v1177, 0.0
      %v1398 = vmax.f32 %v1182, 0.0
      %v1399 = vmax.f32 %v1185, 0.0
      %v1400 = vmax.f32 %v1190, 0.0
      %v1401 = vmax.f32 %v1193, 0.0
      %v1402 = vmax.f32 %v1198, 0.0
      %v1403 = vmax.f32 %v1201, 0.0
      %v1404 = vmax.f32 %v1206, 0.0
      %v1405 = vmax.f32 %v1209, 0.0
      %v1406 = vmax.f32 %v1214, 0.0
      %v1407 = vmax.f32 %v1217, 0.0
      %v1408 = vmax.f32 %v1222, 0.0
      %v1409 = vmax.f32 %v1225, 0.0
      %v1410 = vmax.f32 %v1230, 0.0
      %v1411 = vmax.f32 %v1233, 0.0
      %v1412 = vmax.f32 %v1238, 0.0
      %v1413 = vmax.f32 %v1241, 0.0
      %v1414 = vmax.f32 %v1246, 0.0
      %v1415 = vmax.f32 %v1249, 0.0
      %v1416 = vmax.f32 %v1254, 0.0
      %v1417 = vmax.f32 %v1257, 0.0
      %v1418 = vmax.f32 %v1262, 0.0
      %v1419 = vmax.f32 %v1265, 0.0
      %v1420 = vmax.f32 %v1270, 0.0
      %v1421 = vmax.f32 %v1273, 0.0
      %v1422 = vmax.f32 %v1278, 0.0
      %v1423 = vmax.f32 %v1281, 0.0
      %v1424 = vmax.f32 %v1286, 0.0
      %v1425 = vmax.f32 %v1289, 0.0
      %v1426 = vmax.f32 %v1294, 0.0
      %v1427 = vmax.f32 %v1297, 0.0
      %v1428 = vpack.c.bf16 %v1301, %v1300
      %v1429 = vpack.c.bf16 %v1303, %v1302
      %v1430 = vpack.c.bf16 %v1305, %v1304
      %v1431 = vpack.c.bf16 %v1307, %v1306
      %v1432 = vpack.c.bf16 %v1309, %v1308
      %v1433 = vpack.c.bf16 %v1311, %v1310
      %v1434 = vpack.c.bf16 %v1313, %v1312
      %v1435 = vpack.c.bf16 %v1315, %v1314
      %v1436 = vpack.c.bf16 %v1317, %v1316
      %v1437 = vpack.c.bf16 %v1319, %v1318
      %v1438 = vpack.c.bf16 %v1321, %v1320
      %v1439 = vpack.c.bf16 %v1323, %v1322
      %v1440 = vpack.c.bf16 %v1325, %v1324
      %v1441 = vpack.c.bf16 %v1327, %v1326
      %v1442 = vpack.c.bf16 %v1329, %v1328
      %v1443 = vpack.c.bf16 %v1331, %v1330
      %v1444 = vpack.c.bf16 %v1333, %v1332
      %v1445 = vpack.c.bf16 %v1335, %v1334
      %v1446 = vpack.c.bf16 %v1337, %v1336
      %v1447 = vpack.c.bf16 %v1339, %v1338
      %v1448 = vpack.c.bf16 %v1341, %v1340
      %v1449 = vpack.c.bf16 %v1343, %v1342
      %v1450 = vpack.c.bf16 %v1345, %v1344
      %v1451 = vpack.c.bf16 %v1347, %v1346
      %v1452 = vpack.c.bf16 %v1349, %v1348
      %v1453 = vpack.c.bf16 %v1351, %v1350
      %v1454 = vpack.c.bf16 %v1353, %v1352
      %v1455 = vpack.c.bf16 %v1355, %v1354
      %v1456 = vpack.c.bf16 %v1357, %v1356
      %v1457 = vpack.c.bf16 %v1359, %v1358
      %v1458 = vpack.c.bf16 %v1361, %v1360
      %v1459 = vpack.c.bf16 %v1363, %v1362
      %v1460 = vpack.c.bf16 %v1365, %v1364
      %v1461 = vpack.c.bf16 %v1367, %v1366
      %v1462 = vpack.c.bf16 %v1369, %v1368
      %v1463 = vpack.c.bf16 %v1371, %v1370
      %v1464 = vpack.c.bf16 %v1373, %v1372
      %v1465 = vpack.c.bf16 %v1375, %v1374
      %v1466 = vpack.c.bf16 %v1377, %v1376
      %v1467 = vpack.c.bf16 %v1379, %v1378
      %v1468 = vpack.c.bf16 %v1381, %v1380
      %v1469 = vpack.c.bf16 %v1383, %v1382
      %v1470 = vpack.c.bf16 %v1385, %v1384
      %v1471 = vpack.c.bf16 %v1387, %v1386
      %v1472 = vpack.c.bf16 %v1389, %v1388
      %v1473 = vpack.c.bf16 %v1391, %v1390
      %v1474 = vpack.c.bf16 %v1393, %v1392
      %v1475 = vpack.c.bf16 %v1395, %v1394
      %v1476 = vpack.c.bf16 %v1397, %v1396
      %v1477 = vpack.c.bf16 %v1399, %v1398
      %v1478 = vpack.c.bf16 %v1401, %v1400
      %v1479 = vpack.c.bf16 %v1403, %v1402
      %v1480 = vpack.c.bf16 %v1405, %v1404
      %v1481 = vpack.c.bf16 %v1407, %v1406
      %v1482 = vpack.c.bf16 %v1409, %v1408
      %v1483 = vpack.c.bf16 %v1411, %v1410
      %v1484 = vpack.c.bf16 %v1413, %v1412
      %v1485 = vpack.c.bf16 %v1415, %v1414
      %v1486 = vpack.c.bf16 %v1417, %v1416
      %v1487 = vpack.c.bf16 %v1419, %v1418
      %v1488 = vpack.c.bf16 %v1421, %v1420
      %v1489 = vpack.c.bf16 %v1423, %v1422
      %v1490 = vpack.c.bf16 %v1425, %v1424
      %v1491 = vpack.c.bf16 %v1427, %v1426
      %v1556 = vunpack.c.l.b16 %v1428
      %v1557 = vunpack.c.h.b16 %v1428
      %v1558 = vunpack.c.l.b16 %v1429
      %v1559 = vunpack.c.h.b16 %v1429
      %v1560 = vunpack.c.l.b16 %v1430
      %v1561 = vunpack.c.h.b16 %v1430
      %v1562 = vunpack.c.l.b16 %v1431
      %v1563 = vunpack.c.h.b16 %v1431
      %v1564 = vunpack.c.l.b16 %v1432
      %v1565 = vunpack.c.h.b16 %v1432
      %v1566 = vunpack.c.l.b16 %v1433
      %v1567 = vunpack.c.h.b16 %v1433
      %v1568 = vunpack.c.l.b16 %v1434
      %v1569 = vunpack.c.h.b16 %v1434
      %v1570 = vunpack.c.l.b16 %v1435
      %v1571 = vunpack.c.h.b16 %v1435
      %v1572 = vunpack.c.l.b16 %v1436
      %v1573 = vunpack.c.h.b16 %v1436
      %v1574 = vunpack.c.l.b16 %v1437
      %v1575 = vunpack.c.h.b16 %v1437
      %v1576 = vunpack.c.l.b16 %v1438
      %v1577 = vunpack.c.h.b16 %v1438
      %v1578 = vunpack.c.l.b16 %v1439
      %v1579 = vunpack.c.h.b16 %v1439
      %v1580 = vunpack.c.l.b16 %v1440
      %v1581 = vunpack.c.h.b16 %v1440
      %v1582 = vunpack.c.l.b16 %v1441
      %v1583 = vunpack.c.h.b16 %v1441
      %v1584 = vunpack.c.l.b16 %v1442
      %v1585 = vunpack.c.h.b16 %v1442
      %v1586 = vunpack.c.l.b16 %v1443
      %v1587 = vunpack.c.h.b16 %v1443
      %v1588 = vunpack.c.l.b16 %v1444
      %v1589 = vunpack.c.h.b16 %v1444
      %v1590 = vunpack.c.l.b16 %v1445
      %v1591 = vunpack.c.h.b16 %v1445
      %v1592 = vunpack.c.l.b16 %v1446
      %v1593 = vunpack.c.h.b16 %v1446
      %v1594 = vunpack.c.l.b16 %v1447
      %v1595 = vunpack.c.h.b16 %v1447
      %v1596 = vunpack.c.l.b16 %v1448
      %v1597 = vunpack.c.h.b16 %v1448
      %v1598 = vunpack.c.l.b16 %v1449
      %v1599 = vunpack.c.h.b16 %v1449
      %v1600 = vunpack.c.l.b16 %v1450
      %v1601 = vunpack.c.h.b16 %v1450
      %v1602 = vunpack.c.l.b16 %v1451
      %v1603 = vunpack.c.h.b16 %v1451
      %v1604 = vunpack.c.l.b16 %v1452
      %v1605 = vunpack.c.h.b16 %v1452
      %v1606 = vunpack.c.l.b16 %v1453
      %v1607 = vunpack.c.h.b16 %v1453
      %v1608 = vunpack.c.l.b16 %v1454
      %v1609 = vunpack.c.h.b16 %v1454
      %v1610 = vunpack.c.l.b16 %v1455
      %v1611 = vunpack.c.h.b16 %v1455
      %v1612 = vunpack.c.l.b16 %v1456
      %v1613 = vunpack.c.h.b16 %v1456
      %v1614 = vunpack.c.l.b16 %v1457
      %v1615 = vunpack.c.h.b16 %v1457
      %v1616 = vunpack.c.l.b16 %v1458
      %v1617 = vunpack.c.h.b16 %v1458
      %v1618 = vunpack.c.l.b16 %v1459
      %v1619 = vunpack.c.h.b16 %v1459
      %v1620 = vunpack.c.l.b16 %v1460
      %v1621 = vunpack.c.h.b16 %v1460
      %v1622 = vunpack.c.l.b16 %v1461
      %v1623 = vunpack.c.h.b16 %v1461
      %v1624 = vunpack.c.l.b16 %v1462
      %v1625 = vunpack.c.h.b16 %v1462
      %v1626 = vunpack.c.l.b16 %v1463
      %v1627 = vunpack.c.h.b16 %v1463
      %v1628 = vunpack.c.l.b16 %v1464
      %v1629 = vunpack.c.h.b16 %v1464
      %v1630 = vunpack.c.l.b16 %v1465
      %v1631 = vunpack.c.h.b16 %v1465
      %v1632 = vunpack.c.l.b16 %v1466
      %v1633 = vunpack.c.h.b16 %v1466
      %v1634 = vunpack.c.l.b16 %v1467
      %v1635 = vunpack.c.h.b16 %v1467
      %v1636 = vunpack.c.l.b16 %v1468
      %v1637 = vunpack.c.h.b16 %v1468
      %v1638 = vunpack.c.l.b16 %v1469
      %v1639 = vunpack.c.h.b16 %v1469
      %v1640 = vunpack.c.l.b16 %v1470
      %v1641 = vunpack.c.h.b16 %v1470
      %v1642 = vunpack.c.l.b16 %v1471
      %v1643 = vunpack.c.h.b16 %v1471
      %v1644 = vunpack.c.l.b16 %v1472
      %v1645 = vunpack.c.h.b16 %v1472
      %v1646 = vunpack.c.l.b16 %v1473
      %v1647 = vunpack.c.h.b16 %v1473
      %v1648 = vunpack.c.l.b16 %v1474
      %v1649 = vunpack.c.h.b16 %v1474
      %v1650 = vunpack.c.l.b16 %v1475
      %v1651 = vunpack.c.h.b16 %v1475
      %v1652 = vunpack.c.l.b16 %v1476
      %v1653 = vunpack.c.h.b16 %v1476
      %v1654 = vunpack.c.l.b16 %v1477
      %v1655 = vunpack.c.h.b16 %v1477
      %v1656 = vunpack.c.l.b16 %v1478
      %v1657 = vunpack.c.h.b16 %v1478
      %v1658 = vunpack.c.l.b16 %v1479
      %v1659 = vunpack.c.h.b16 %v1479
      %v1660 = vunpack.c.l.b16 %v1480
      %v1661 = vunpack.c.h.b16 %v1480
      %v1662 = vunpack.c.l.b16 %v1481
      %v1663 = vunpack.c.h.b16 %v1481
      %v1664 = vunpack.c.l.b16 %v1482
      %v1665 = vunpack.c.h.b16 %v1482
      %v1666 = vunpack.c.l.b16 %v1483
      %v1667 = vunpack.c.h.b16 %v1483
      %v1668 = vunpack.c.l.b16 %v1484
      %v1669 = vunpack.c.h.b16 %v1484
      %v1670 = vunpack.c.l.b16 %v1485
      %v1671 = vunpack.c.h.b16 %v1485
      %v1672 = vunpack.c.l.b16 %v1486
      %v1673 = vunpack.c.h.b16 %v1486
      %v1674 = vunpack.c.l.b16 %v1487
      %v1675 = vunpack.c.h.b16 %v1487
      %v1676 = vunpack.c.l.b16 %v1488
      %v1677 = vunpack.c.h.b16 %v1488
      %v1678 = vunpack.c.l.b16 %v1489
      %v1679 = vunpack.c.h.b16 %v1489
      %v1680 = vunpack.c.l.b16 %v1490
      %v1681 = vunpack.c.h.b16 %v1490
      %v1682 = vunpack.c.l.b16 %v1491
      %v1683 = vunpack.c.h.b16 %v1491
      %v1684 = vpack.c.b16 %v1556, %v1556
      %v1685 = vpack.c.b16 %v1557, %v1557
      %v1686 = vpack.c.b16 %v1558, %v1558
      %v1687 = vpack.c.b16 %v1559, %v1559
      %v1688 = vpack.c.b16 %v1560, %v1560
      %v1689 = vpack.c.b16 %v1561, %v1561
      %v1690 = vpack.c.b16 %v1562, %v1562
      %v1691 = vpack.c.b16 %v1563, %v1563
      %v1692 = vpack.c.b16 %v1564, %v1564
      %v1693 = vpack.c.b16 %v1565, %v1565
      %v1694 = vpack.c.b16 %v1566, %v1566
      %v1695 = vpack.c.b16 %v1567, %v1567
      %v1696 = vpack.c.b16 %v1568, %v1568
      %v1697 = vpack.c.b16 %v1569, %v1569
      %v1698 = vpack.c.b16 %v1570, %v1570
      %v1699 = vpack.c.b16 %v1571, %v1571
      %v1700 = vpack.c.b16 %v1572, %v1572
      %v1701 = vpack.c.b16 %v1573, %v1573
      %v1702 = vpack.c.b16 %v1574, %v1574
      %v1703 = vpack.c.b16 %v1575, %v1575
      %v1704 = vpack.c.b16 %v1576, %v1576
      %v1705 = vpack.c.b16 %v1577, %v1577
      %v1706 = vpack.c.b16 %v1578, %v1578
      %v1707 = vpack.c.b16 %v1579, %v1579
      %v1708 = vpack.c.b16 %v1580, %v1580
      %v1709 = vpack.c.b16 %v1581, %v1581
      %v1710 = vpack.c.b16 %v1582, %v1582
      %v1711 = vpack.c.b16 %v1583, %v1583
      %v1712 = vpack.c.b16 %v1584, %v1584
      %v1713 = vpack.c.b16 %v1585, %v1585
      %v1714 = vpack.c.b16 %v1586, %v1586
      %v1715 = vpack.c.b16 %v1587, %v1587
      %v1716 = vpack.c.b16 %v1588, %v1588
      %v1717 = vpack.c.b16 %v1589, %v1589
      %v1718 = vpack.c.b16 %v1590, %v1590
      %v1719 = vpack.c.b16 %v1591, %v1591
      %v1720 = vpack.c.b16 %v1592, %v1592
      %v1721 = vpack.c.b16 %v1593, %v1593
      %v1722 = vpack.c.b16 %v1594, %v1594
      %v1723 = vpack.c.b16 %v1595, %v1595
      %v1724 = vpack.c.b16 %v1596, %v1596
      %v1725 = vpack.c.b16 %v1597, %v1597
      %v1726 = vpack.c.b16 %v1598, %v1598
      %v1727 = vpack.c.b16 %v1599, %v1599
      %v1728 = vpack.c.b16 %v1600, %v1600
      %v1729 = vpack.c.b16 %v1601, %v1601
      %v1730 = vpack.c.b16 %v1602, %v1602
      %v1731 = vpack.c.b16 %v1603, %v1603
      %v1732 = vpack.c.b16 %v1604, %v1604
      %v1733 = vpack.c.b16 %v1605, %v1605
      %v1734 = vpack.c.b16 %v1606, %v1606
      %v1735 = vpack.c.b16 %v1607, %v1607
      %v1736 = vpack.c.b16 %v1608, %v1608
      %v1737 = vpack.c.b16 %v1609, %v1609
      %v1738 = vpack.c.b16 %v1610, %v1610
      %v1739 = vpack.c.b16 %v1611, %v1611
      %v1740 = vpack.c.b16 %v1612, %v1612
      %v1741 = vpack.c.b16 %v1613, %v1613
      %v1742 = vpack.c.b16 %v1614, %v1614
      %v1743 = vpack.c.b16 %v1615, %v1615
      %v1744 = vpack.c.b16 %v1616, %v1616
      %v1745 = vpack.c.b16 %v1617, %v1617
      %v1746 = vpack.c.b16 %v1618, %v1618
      %v1747 = vpack.c.b16 %v1619, %v1619
      %v1748 = vpack.c.b16 %v1620, %v1620
      %v1749 = vpack.c.b16 %v1621, %v1621
      %v1750 = vpack.c.b16 %v1622, %v1622
      %v1751 = vpack.c.b16 %v1623, %v1623
      %v1752 = vpack.c.b16 %v1624, %v1624
      %v1753 = vpack.c.b16 %v1625, %v1625
      %v1754 = vpack.c.b16 %v1626, %v1626
      %v1755 = vpack.c.b16 %v1627, %v1627
      %v1756 = vpack.c.b16 %v1628, %v1628
      %v1757 = vpack.c.b16 %v1629, %v1629
      %v1758 = vpack.c.b16 %v1630, %v1630
      %v1759 = vpack.c.b16 %v1631, %v1631
      %v1760 = vpack.c.b16 %v1632, %v1632
      %v1761 = vpack.c.b16 %v1633, %v1633
      %v1762 = vpack.c.b16 %v1634, %v1634
      %v1763 = vpack.c.b16 %v1635, %v1635
      %v1764 = vpack.c.b16 %v1636, %v1636
      %v1765 = vpack.c.b16 %v1637, %v1637
      %v1766 = vpack.c.b16 %v1638, %v1638
      %v1767 = vpack.c.b16 %v1639, %v1639
      %v1768 = vpack.c.b16 %v1640, %v1640
      %v1769 = vpack.c.b16 %v1641, %v1641
      %v1770 = vpack.c.b16 %v1642, %v1642
      %v1771 = vpack.c.b16 %v1643, %v1643
      %v1772 = vpack.c.b16 %v1644, %v1644
      %v1773 = vpack.c.b16 %v1645, %v1645
      %v1774 = vpack.c.b16 %v1646, %v1646
      %v1775 = vpack.c.b16 %v1647, %v1647
      %v1776 = vpack.c.b16 %v1648, %v1648
      %v1777 = vpack.c.b16 %v1649, %v1649
      %v1778 = vpack.c.b16 %v1650, %v1650
      %v1779 = vpack.c.b16 %v1651, %v1651
      %v1780 = vpack.c.b16 %v1652, %v1652
      %v1781 = vpack.c.b16 %v1653, %v1653
      %v1782 = vpack.c.b16 %v1654, %v1654
      %v1783 = vpack.c.b16 %v1655, %v1655
      %v1784 = vpack.c.b16 %v1656, %v1656
      %v1785 = vpack.c.b16 %v1657, %v1657
      %v1786 = vpack.c.b16 %v1658, %v1658
      %v1787 = vpack.c.b16 %v1659, %v1659
      %v1788 = vpack.c.b16 %v1660, %v1660
      %v1789 = vpack.c.b16 %v1661, %v1661
      %v1790 = vpack.c.b16 %v1662, %v1662
      %v1791 = vpack.c.b16 %v1663, %v1663
      %v1792 = vpack.c.b16 %v1664, %v1664
      %v1793 = vpack.c.b16 %v1665, %v1665
      %v1794 = vpack.c.b16 %v1666, %v1666
      %v1795 = vpack.c.b16 %v1667, %v1667
      %v1796 = vpack.c.b16 %v1668, %v1668
      %v1797 = vpack.c.b16 %v1669, %v1669
      %v1798 = vpack.c.b16 %v1670, %v1670
      %v1799 = vpack.c.b16 %v1671, %v1671
      %v1800 = vpack.c.b16 %v1672, %v1672
      %v1801 = vpack.c.b16 %v1673, %v1673
      %v1802 = vpack.c.b16 %v1674, %v1674
      %v1803 = vpack.c.b16 %v1675, %v1675
      %v1804 = vpack.c.b16 %v1676, %v1676
      %v1805 = vpack.c.b16 %v1677, %v1677
      %v1806 = vpack.c.b16 %v1678, %v1678
      %v1807 = vpack.c.b16 %v1679, %v1679
      %v1808 = vpack.c.b16 %v1680, %v1680
      %v1809 = vpack.c.b16 %v1681, %v1681
      %v1810 = vpack.c.b16 %v1682, %v1682
      %v1811 = vpack.c.b16 %v1683, %v1683
      %vm1940 = vcmask 125952
      %1941 = vst.msk [vmem:[%s170] sm:$0xf] %vm1940, %v1684
      %1942 = vst.msk [vmem:[%s170 + $0x4] sm:$0xf] %vm1940, %v1685
      %1943 = vst.msk [vmem:[%s170 + $0x8] sm:$0xf] %vm1940, %v1686
      %1944 = vst.msk [vmem:[%s170 + $0xc] sm:$0xf] %vm1940, %v1687
      %1945 = vst.msk [vmem:[%s170 + $0x10] sm:$0xf] %vm1940, %v1688
      %1946 = vst.msk [vmem:[%s170 + $0x14] sm:$0xf] %vm1940, %v1689
      %1947 = vst.msk [vmem:[%s170 + $0x18] sm:$0xf] %vm1940, %v1690
      %1948 = vst.msk [vmem:[%s170 + $0x1c] sm:$0xf] %vm1940, %v1691
      %1949 = vst.msk [vmem:[%s170 + $0x20] sm:$0xf] %vm1940, %v1692
      %1950 = vst.msk [vmem:[%s170 + $0x24] sm:$0xf] %vm1940, %v1693
      %1951 = vst.msk [vmem:[%s170 + $0x28] sm:$0xf] %vm1940, %v1694
      %1952 = vst.msk [vmem:[%s170 + $0x2c] sm:$0xf] %vm1940, %v1695
      %1953 = vst.msk [vmem:[%s170 + $0x30] sm:$0xf] %vm1940, %v1696
      %1954 = vst.msk [vmem:[%s170 + $0x34] sm:$0xf] %vm1940, %v1697
      %1955 = vst.msk [vmem:[%s170 + $0x38] sm:$0xf] %vm1940, %v1698
      %1956 = vst.msk [vmem:[%s170 + $0x3c] sm:$0xf] %vm1940, %v1699
      %1957 = vst.msk [vmem:[%s170 + $0x40] sm:$0xf] %vm1940, %v1700
      %1958 = vst.msk [vmem:[%s170 + $0x44] sm:$0xf] %vm1940, %v1701
      %1959 = vst.msk [vmem:[%s170 + $0x48] sm:$0xf] %vm1940, %v1702
      %1960 = vst.msk [vmem:[%s170 + $0x4c] sm:$0xf] %vm1940, %v1703
      %1961 = vst.msk [vmem:[%s170 + $0x50] sm:$0xf] %vm1940, %v1704
      %1962 = vst.msk [vmem:[%s170 + $0x54] sm:$0xf] %vm1940, %v1705
      %1963 = vst.msk [vmem:[%s170 + $0x58] sm:$0xf] %vm1940, %v1706
      %1964 = vst.msk [vmem:[%s170 + $0x5c] sm:$0xf] %vm1940, %v1707
      %1965 = vst.msk [vmem:[%s170 + $0x60] sm:$0xf] %vm1940, %v1708
      %1966 = vst.msk [vmem:[%s170 + $0x64] sm:$0xf] %vm1940, %v1709
      %1967 = vst.msk [vmem:[%s170 + $0x68] sm:$0xf] %vm1940, %v1710
      %1968 = vst.msk [vmem:[%s170 + $0x6c] sm:$0xf] %vm1940, %v1711
      %1969 = vst.msk [vmem:[%s170 + $0x70] sm:$0xf] %vm1940, %v1712
      %1970 = vst.msk [vmem:[%s170 + $0x74] sm:$0xf] %vm1940, %v1713
      %1971 = vst.msk [vmem:[%s170 + $0x78] sm:$0xf] %vm1940, %v1714
      %1972 = vst.msk [vmem:[%s170 + $0x7c] sm:$0xf] %vm1940, %v1715
      %1973 = vst.msk [vmem:[%s170 + $0x80] sm:$0xf] %vm1940, %v1716
      %1974 = vst.msk [vmem:[%s170 + $0x84] sm:$0xf] %vm1940, %v1717
      %1975 = vst.msk [vmem:[%s170 + $0x88] sm:$0xf] %vm1940, %v1718
      %1976 = vst.msk [vmem:[%s170 + $0x8c] sm:$0xf] %vm1940, %v1719
      %1977 = vst.msk [vmem:[%s170 + $0x90] sm:$0xf] %vm1940, %v1720
      %1978 = vst.msk [vmem:[%s170 + $0x94] sm:$0xf] %vm1940, %v1721
      %1979 = vst.msk [vmem:[%s170 + $0x98] sm:$0xf] %vm1940, %v1722
      %1980 = vst.msk [vmem:[%s170 + $0x9c] sm:$0xf] %vm1940, %v1723
      %1981 = vst.msk [vmem:[%s170 + $0xa0] sm:$0xf] %vm1940, %v1724
      %1982 = vst.msk [vmem:[%s170 + $0xa4] sm:$0xf] %vm1940, %v1725
      %1983 = vst.msk [vmem:[%s170 + $0xa8] sm:$0xf] %vm1940, %v1726
      %1984 = vst.msk [vmem:[%s170 + $0xac] sm:$0xf] %vm1940, %v1727
      %1985 = vst.msk [vmem:[%s170 + $0xb0] sm:$0xf] %vm1940, %v1728
      %1986 = vst.msk [vmem:[%s170 + $0xb4] sm:$0xf] %vm1940, %v1729
      %1987 = vst.msk [vmem:[%s170 + $0xb8] sm:$0xf] %vm1940, %v1730
      %1988 = vst.msk [vmem:[%s170 + $0xbc] sm:$0xf] %vm1940, %v1731
      %1989 = vst.msk [vmem:[%s170 + $0xc0] sm:$0xf] %vm1940, %v1732
      %1990 = vst.msk [vmem:[%s170 + $0xc4] sm:$0xf] %vm1940, %v1733
      %1991 = vst.msk [vmem:[%s170 + $0xc8] sm:$0xf] %vm1940, %v1734
      %1992 = vst.msk [vmem:[%s170 + $0xcc] sm:$0xf] %vm1940, %v1735
      %1993 = vst.msk [vmem:[%s170 + $0xd0] sm:$0xf] %vm1940, %v1736
      %1994 = vst.msk [vmem:[%s170 + $0xd4] sm:$0xf] %vm1940, %v1737
      %1995 = vst.msk [vmem:[%s170 + $0xd8] sm:$0xf] %vm1940, %v1738
      %1996 = vst.msk [vmem:[%s170 + $0xdc] sm:$0xf] %vm1940, %v1739
      %1997 = vst.msk [vmem:[%s170 + $0xe0] sm:$0xf] %vm1940, %v1740
      %1998 = vst.msk [vmem:[%s170 + $0xe4] sm:$0xf] %vm1940, %v1741
      %1999 = vst.msk [vmem:[%s170 + $0xe8] sm:$0xf] %vm1940, %v1742
      %2000 = vst.msk [vmem:[%s170 + $0xec] sm:$0xf] %vm1940, %v1743
      %2001 = vst.msk [vmem:[%s170 + $0xf0] sm:$0xf] %vm1940, %v1744
      %2002 = vst.msk [vmem:[%s170 + $0xf4] sm:$0xf] %vm1940, %v1745
      %2003 = vst.msk [vmem:[%s170 + $0xf8] sm:$0xf] %vm1940, %v1746
      %2004 = vst.msk [vmem:[%s170 + $0xfc] sm:$0xf] %vm1940, %v1747
      %2005 = vst.msk [vmem:[%s170 + $0x100] sm:$0xf] %vm1940, %v1748
      %2006 = vst.msk [vmem:[%s170 + $0x104] sm:$0xf] %vm1940, %v1749
      %2007 = vst.msk [vmem:[%s170 + $0x108] sm:$0xf] %vm1940, %v1750
      %2008 = vst.msk [vmem:[%s170 + $0x10c] sm:$0xf] %vm1940, %v1751
      %2009 = vst.msk [vmem:[%s170 + $0x110] sm:$0xf] %vm1940, %v1752
      %2010 = vst.msk [vmem:[%s170 + $0x114] sm:$0xf] %vm1940, %v1753
      %2011 = vst.msk [vmem:[%s170 + $0x118] sm:$0xf] %vm1940, %v1754
      %2012 = vst.msk [vmem:[%s170 + $0x11c] sm:$0xf] %vm1940, %v1755
      %2013 = vst.msk [vmem:[%s170 + $0x120] sm:$0xf] %vm1940, %v1756
      %2014 = vst.msk [vmem:[%s170 + $0x124] sm:$0xf] %vm1940, %v1757
      %2015 = vst.msk [vmem:[%s170 + $0x128] sm:$0xf] %vm1940, %v1758
      %2016 = vst.msk [vmem:[%s170 + $0x12c] sm:$0xf] %vm1940, %v1759
      %2017 = vst.msk [vmem:[%s170 + $0x130] sm:$0xf] %vm1940, %v1760
      %2018 = vst.msk [vmem:[%s170 + $0x134] sm:$0xf] %vm1940, %v1761
      %2019 = vst.msk [vmem:[%s170 + $0x138] sm:$0xf] %vm1940, %v1762
      %2020 = vst.msk [vmem:[%s170 + $0x13c] sm:$0xf] %vm1940, %v1763
      %2021 = vst.msk [vmem:[%s170 + $0x140] sm:$0xf] %vm1940, %v1764
      %2022 = vst.msk [vmem:[%s170 + $0x144] sm:$0xf] %vm1940, %v1765
      %2023 = vst.msk [vmem:[%s170 + $0x148] sm:$0xf] %vm1940, %v1766
      %2024 = vst.msk [vmem:[%s170 + $0x14c] sm:$0xf] %vm1940, %v1767
      %2025 = vst.msk [vmem:[%s170 + $0x150] sm:$0xf] %vm1940, %v1768
      %2026 = vst.msk [vmem:[%s170 + $0x154] sm:$0xf] %vm1940, %v1769
      %2027 = vst.msk [vmem:[%s170 + $0x158] sm:$0xf] %vm1940, %v1770
      %2028 = vst.msk [vmem:[%s170 + $0x15c] sm:$0xf] %vm1940, %v1771
      %2029 = vst.msk [vmem:[%s170 + $0x160] sm:$0xf] %vm1940, %v1772
      %2030 = vst.msk [vmem:[%s170 + $0x164] sm:$0xf] %vm1940, %v1773
      %2031 = vst.msk [vmem:[%s170 + $0x168] sm:$0xf] %vm1940, %v1774
      %2032 = vst.msk [vmem:[%s170 + $0x16c] sm:$0xf] %vm1940, %v1775
      %2033 = vst.msk [vmem:[%s170 + $0x170] sm:$0xf] %vm1940, %v1776
      %2034 = vst.msk [vmem:[%s170 + $0x174] sm:$0xf] %vm1940, %v1777
      %2035 = vst.msk [vmem:[%s170 + $0x178] sm:$0xf] %vm1940, %v1778
      %2036 = vst.msk [vmem:[%s170 + $0x17c] sm:$0xf] %vm1940, %v1779
      %2037 = vst.msk [vmem:[%s170 + $0x180] sm:$0xf] %vm1940, %v1780
      %2038 = vst.msk [vmem:[%s170 + $0x184] sm:$0xf] %vm1940, %v1781
      %2039 = vst.msk [vmem:[%s170 + $0x188] sm:$0xf] %vm1940, %v1782
      %2040 = vst.msk [vmem:[%s170 + $0x18c] sm:$0xf] %vm1940, %v1783
      %2041 = vst.msk [vmem:[%s170 + $0x190] sm:$0xf] %vm1940, %v1784
      %2042 = vst.msk [vmem:[%s170 + $0x194] sm:$0xf] %vm1940, %v1785
      %2043 = vst.msk [vmem:[%s170 + $0x198] sm:$0xf] %vm1940, %v1786
      %2044 = vst.msk [vmem:[%s170 + $0x19c] sm:$0xf] %vm1940, %v1787
      %2045 = vst.msk [vmem:[%s170 + $0x1a0] sm:$0xf] %vm1940, %v1788
      %2046 = vst.msk [vmem:[%s170 + $0x1a4] sm:$0xf] %vm1940, %v1789
      %2047 = vst.msk [vmem:[%s170 + $0x1a8] sm:$0xf] %vm1940, %v1790
      %2048 = vst.msk [vmem:[%s170 + $0x1ac] sm:$0xf] %vm1940, %v1791
      %2049 = vst.msk [vmem:[%s170 + $0x1b0] sm:$0xf] %vm1940, %v1792
      %2050 = vst.msk [vmem:[%s170 + $0x1b4] sm:$0xf] %vm1940, %v1793
      %2051 = vst.msk [vmem:[%s170 + $0x1b8] sm:$0xf] %vm1940, %v1794
      %2052 = vst.msk [vmem:[%s170 + $0x1bc] sm:$0xf] %vm1940, %v1795
      %2053 = vst.msk [vmem:[%s170 + $0x1c0] sm:$0xf] %vm1940, %v1796
      %2054 = vst.msk [vmem:[%s170 + $0x1c4] sm:$0xf] %vm1940, %v1797
      %2055 = vst.msk [vmem:[%s170 + $0x1c8] sm:$0xf] %vm1940, %v1798
      %2056 = vst.msk [vmem:[%s170 + $0x1cc] sm:$0xf] %vm1940, %v1799
      %2057 = vst.msk [vmem:[%s170 + $0x1d0] sm:$0xf] %vm1940, %v1800
      %2058 = vst.msk [vmem:[%s170 + $0x1d4] sm:$0xf] %vm1940, %v1801
      %2059 = vst.msk [vmem:[%s170 + $0x1d8] sm:$0xf] %vm1940, %v1802
      %2060 = vst.msk [vmem:[%s170 + $0x1dc] sm:$0xf] %vm1940, %v1803
      %2061 = vst.msk [vmem:[%s170 + $0x1e0] sm:$0xf] %vm1940, %v1804
      %2062 = vst.msk [vmem:[%s170 + $0x1e4] sm:$0xf] %vm1940, %v1805
      %2063 = vst.msk [vmem:[%s170 + $0x1e8] sm:$0xf] %vm1940, %v1806
      %2064 = vst.msk [vmem:[%s170 + $0x1ec] sm:$0xf] %vm1940, %v1807
      %2065 = vst.msk [vmem:[%s170 + $0x1f0] sm:$0xf] %vm1940, %v1808
      %2066 = vst.msk [vmem:[%s170 + $0x1f4] sm:$0xf] %vm1940, %v1809
      %2067 = vst.msk [vmem:[%s170 + $0x1f8] sm:$0xf] %vm1940, %v1810
      %2068 = vst.msk [vmem:[%s170 + $0x1fc] sm:$0xf] %vm1940, %v1811
      %p2069 = scmp.lt.s32.totalorder %s14, 1
      %s2070 = scalar_select %p2069, %s14, 1
      %s2071 = smul.addr %s2070, 128
      %s2072 = smul.addr %s2071, 4
      %s2073 = scalar_lea.vmem %s3, %s2072
      // Predicated region
      $region33: #{cnn_classifier_forward.4} parent=31 // pred_check
        %p2074 = pneg %p100
      $region34: #{cnn_classifier_forward.4} parent=31 // pred_check_branch
        %2076 = sbr.rel (%p2074) target = $region36
      $region35: #{cnn_classifier_forward.4} parent=31 // pred_region
        _
      $region36: #{cnn_classifier_forward.4} parent=31 // pred_fallthru
        _
    $region32: #{cnn_classifier_forward.4} parent=5 // pred_fallthru
      _
    %p2077 = scmp.le.s32.totalorder 2, %s9
    // Predicated region
    $region37: #{cnn_classifier_forward.4} parent=5 // pred_check
      %p2078 = pneg %p2077
    $region38: #{cnn_classifier_forward.4} parent=5 // pred_check_branch
      %2080 = sbr.rel (%p2078) target = $region40
    $region39: #{cnn_classifier_forward.4} parent=5 // pred_region
      %s2081 = ssub.s32 %s9, 2
      // Predicated region
      $region41: #{cnn_classifier_forward.4} parent=39 // pred_check
        %p2082 = pneg %p106
      $region42: #{cnn_classifier_forward.4} parent=39 // pred_check_branch
        %2084 = sbr.rel (%p2082) target = $region44
      $region43: #{cnn_classifier_forward.4} parent=39 // pred_region
        %p2085 = scmp.lt.s32.totalorder %s15, 1
        %s2086 = scalar_select %p2085, %s15, 1
        %s2087 = smul.addr %s2086, 128
        %s2088 = smul.addr %s2087, 4
        %s2089 = scalar_lea.vmem %s3, %s2088
      $region44: #{cnn_classifier_forward.4} parent=39 // pred_fallthru
        _
    $region40: #{cnn_classifier_forward.4} parent=5 // pred_fallthru
      _
  $region6: #{cnn_classifier_forward.4} parent=0 // loop_footer
    %s13 = sadd.s32 1, %s9
  $region7: #{cnn_classifier_forward.4} parent=0 // loop_footer_branch
    %8 = sbr.rel target = $region3
  $region8: #{cnn_classifier_forward.4} parent=0 // loop_exit
    _

// kernel: cnn_classifier_forward.5
$region0: #{cnn_classifier_forward.5}
  #allocation0 [shape = 'u32[]', space=smem, size = 0x4, offset = 0x4, fixed_abs, tag = 'smem constant byte address 0x4 - core index']
  #allocation1 [shape = 'u32[144,128]{1,0:T(1,128)}', space=vmem, size = 0x12000, scoped, tag = 'internal scratch']
  %s0 = inlined_call_operand.vmem [shape: bf16[2,2,288,128], index: 0, kind: input, shape index: {}]
  %s1 = inlined_call_operand.vmem [shape: bf16[5,128,32], index: 1, kind: input, shape index: {}]
  %s2 = inlined_call_operand.vmem [shape: f32[1,32], index: 2, kind: input, shape index: {}]
  %s3 = inlined_call_operand.vmem [shape: bf16[2,256,32], index: 3, kind: output, shape index: {}]
  %s4 = sld [smem:[#allocation0]]
  $region45: #{cnn_classifier_forward.5} parent=0
    _
  %s6 = ssub.s32 1, %s4
  %s7 = scalar_select 0, %s6, %s4
  loop: start=0, step=1, limit=4
  $region2: #{cnn_classifier_forward.5} parent=0 // loop_pre_header
    _
  $region3: #{cnn_classifier_forward.5} parent=0 // loop_header
    %s9 = sphi 0, %s13
    %p10 = scmp.ge.s32.totalorder %s9, 4
    %s19 = sphi 0, %s21
    %s22 = sphi 0, %s19
    %s23 = sphi 0, %s22
    %s39 = sphi 0, %s23
    %s43 = sphi 0, %s43
    %s45 = sphi 0, %s43
    %s46 = sphi 0, %s45
    %s60 = sphi 0, %s46
    %s64 = sphi 0, %s64
    %s66 = sphi 0, %s64
    %s67 = sphi 0, %s66
    %s81 = sphi 0, %s67
    %s87 = sphi 0, %s89
    %s90 = sphi 0, %s87
    %s91 = sphi 0, %s90
    %s107 = sphi 0, %s91
  $region4: #{cnn_classifier_forward.5} parent=0 // loop_header_branch
    %12 = sbr.rel (%p10) target = $region8
  $region5: #{cnn_classifier_forward.5} parent=0 // loop_body
    %s14 = ssub.s32 %s9, 1
    %s15 = ssub.s32 %s9, 2
    %s16 = sadd.s32 %s9, 1
    %s17 = ssub.s32 %s9, %s16
    %p18 = scmp.eq.s32.totalorder %s17, 0
    %s20 = sadd.s32 %s19, 1
    %s21 = scalar_select %p18, %s19, %s20
    %p24 = pneg %p18
    %p25 = scmp.eq.s32.totalorder %s9, 1
    %p26 = por %p24, %p25
    %p27 = scmp.ne.s32.totalorder %s19, %s22
    %p28 = scmp.eq.s32.totalorder %s9, 0
    %p29 = por %p27, %p28
    %p30 = scmp.ne.s32.totalorder %s19, %s22
    %p31 = scmp.eq.s32.totalorder %s14, 1
    %p32 = por %p30, %p31
    %p33 = scmp.ne.s32.totalorder %s22, %s23
    %p34 = scmp.eq.s32.totalorder %s14, 0
    %p35 = por %p33, %p34
    %p36 = scmp.ne.s32.totalorder %s22, %s23
    %p37 = scmp.eq.s32.totalorder %s15, 1
    %p38 = por %p36, %p37
    %p40 = scmp.ne.s32.totalorder %s23, %s39
    %p41 = scmp.eq.s32.totalorder %s15, 0
    %p42 = por %p40, %p41
    %s44 = sadd.s32 %s43, 1
    %p47 = scmp.eq.s32.totalorder %s9, 1
    %p48 = scmp.ne.s32.totalorder %s43, %s45
    %p49 = scmp.eq.s32.totalorder %s9, 0
    %p50 = por %p48, %p49
    %p51 = scmp.ne.s32.totalorder %s43, %s45
    %p52 = scmp.eq.s32.totalorder %s14, 1
    %p53 = por %p51, %p52
    %p54 = scmp.ne.s32.totalorder %s45, %s46
    %p55 = scmp.eq.s32.totalorder %s14, 0
    %p56 = por %p54, %p55
    %p57 = scmp.ne.s32.totalorder %s45, %s46
    %p58 = scmp.eq.s32.totalorder %s15, 1
    %p59 = por %p57, %p58
    %p61 = scmp.ne.s32.totalorder %s46, %s60
    %p62 = scmp.eq.s32.totalorder %s15, 0
    %p63 = por %p61, %p62
    %s65 = sadd.s32 %s64, 1
    %p68 = scmp.eq.s32.totalorder %s9, 1
    %p69 = scmp.ne.s32.totalorder %s64, %s66
    %p70 = scmp.eq.s32.totalorder %s9, 0
    %p71 = por %p69, %p70
    %p72 = scmp.ne.s32.totalorder %s64, %s66
    %p73 = scmp.eq.s32.totalorder %s14, 1
    %p74 = por %p72, %p73
    %p75 = scmp.ne.s32.totalorder %s66, %s67
    %p76 = scmp.eq.s32.totalorder %s14, 0
    %p77 = por %p75, %p76
    %p78 = scmp.ne.s32.totalorder %s66, %s67
    %p79 = scmp.eq.s32.totalorder %s15, 1
    %p80 = por %p78, %p79
    %p82 = scmp.ne.s32.totalorder %s67, %s81
    %p83 = scmp.eq.s32.totalorder %s15, 0
    %p84 = por %p82, %p83
    %s85 = ssub.s32 %s9, %s16
    %p86 = scmp.eq.s32.totalorder %s85, 0
    %s88 = sadd.s32 %s87, 1
    %s89 = scalar_select %p86, %s87, %s88
    %p92 = pneg %p86
    %p93 = scmp.eq.s32.totalorder %s9, 1
    %p94 = por %p92, %p93
    %p95 = scmp.ne.s32.totalorder %s87, %s90
    %p96 = scmp.eq.s32.totalorder %s9, 0
    %p97 = por %p95, %p96
    %p98 = scmp.ne.s32.totalorder %s87, %s90
    %p99 = scmp.eq.s32.totalorder %s14, 1
    %p100 = por %p98, %p99
    %p101 = scmp.ne.s32.totalorder %s90, %s91
    %p102 = scmp.eq.s32.totalorder %s14, 0
    %p103 = por %p101, %p102
    %p104 = scmp.ne.s32.totalorder %s90, %s91
    %p105 = scmp.eq.s32.totalorder %s15, 1
    %p106 = por %p104, %p105
    %p108 = scmp.ne.s32.totalorder %s91, %s107
    %p109 = scmp.eq.s32.totalorder %s15, 0
    %p110 = por %p108, %p109
    %p111 = scmp.le.s32.totalorder 1, %s9
    %p112 = scmp.lt.s32.totalorder %s9, 3
    %p113 = pnand %p111, %p112
    %p114 = pneg %p113
    // Predicated region
    $region9: #{cnn_classifier_forward.5} parent=5 // pred_check
      _
    $region10: #{cnn_classifier_forward.5} parent=5 // pred_check_branch
      %116 = sbr.rel (%p113) target = $region12
    $region11: #{cnn_classifier_forward.5} parent=5 // pred_region
      %s117 = ssub.s32 %s9, 1
      // Predicated region
      $region13: #{cnn_classifier_forward.5} parent=11 // pred_check
        %p118 = pneg %p56
      $region14: #{cnn_classifier_forward.5} parent=11 // pred_check_branch
        %120 = sbr.rel (%p118) target = $region16
      $region15: #{cnn_classifier_forward.5} parent=11 // pred_region
        _
      $region16: #{cnn_classifier_forward.5} parent=11 // pred_fallthru
        _
      // Predicated region
      $region17: #{cnn_classifier_forward.5} parent=11 // pred_check
        %p121 = pneg %p77
      $region18: #{cnn_classifier_forward.5} parent=11 // pred_check_branch
        %123 = sbr.rel (%p121) target = $region20
      $region19: #{cnn_classifier_forward.5} parent=11 // pred_region
        _
      $region20: #{cnn_classifier_forward.5} parent=11 // pred_fallthru
        _
    $region12: #{cnn_classifier_forward.5} parent=5 // pred_fallthru
      _
    %p124 = scmp.lt.s32.totalorder %s9, 2
    // Predicated region
    $region21: #{cnn_classifier_forward.5} parent=5 // pred_check
      %p125 = pneg %p124
    $region22: #{cnn_classifier_forward.5} parent=5 // pred_check_branch
      %127 = sbr.rel (%p125) target = $region24
    $region23: #{cnn_classifier_forward.5} parent=5 // pred_region
      // Predicated region
      $region25: #{cnn_classifier_forward.5} parent=23 // pred_check
        %p128 = pneg %p29
      $region26: #{cnn_classifier_forward.5} parent=23 // pred_check_branch
        %130 = sbr.rel (%p128) target = $region28
      $region27: #{cnn_classifier_forward.5} parent=23 // pred_region
        %p131 = scmp.lt.s32.totalorder %s9, 1
        %s132 = scalar_select %p131, %s9, 1
        %s133 = smul.addr %s132, 72
        %s134 = smul.addr %s133, 4
        %s135 = scalar_lea.vmem %s0, %s134
      $region28: #{cnn_classifier_forward.5} parent=23 // pred_fallthru
        _
    $region24: #{cnn_classifier_forward.5} parent=5 // pred_fallthru
      _
    %p136 = scmp.le.s32.totalorder 1, %s9
    %p137 = scmp.lt.s32.totalorder %s9, 3
    %p138 = pnand %p136, %p137
    %p139 = pneg %p138
    // Predicated region
    $region29: #{cnn_classifier_forward.5} parent=5 // pred_check
      _
    $region30: #{cnn_classifier_forward.5} parent=5 // pred_check_branch
      %141 = sbr.rel (%p138) target = $region32
    $region31: #{cnn_classifier_forward.5} parent=5 // pred_region
      %s142 = ssub.s32 %s9, 1
      %p143 = scmp.lt.s32.totalorder %s14, 1
      %s144 = scalar_select %p143, %s14, 1
      %s145 = smul.addr %s144, 72
      %s146 = smul.addr %s145, 4
      %s147 = scalar_lea.vmem %s0, %s146
      %p148 = pneg %p35
      %p149 = pneg %p32
      %p150 = pneg %p56
      %p151 = pneg %p53
      %p152 = pneg %p77
      %p153 = pneg %p74
      %p154 = pneg %p103
      %p155 = pneg %p100
      %p156 = scmp.lt.s32.totalorder %s14, 1
      %s157 = scalar_select %p156, %s14, 1
      %s158 = smul.addr %s157, 32
      %s159 = smul.addr %s158, 4
      %s160 = scalar_lea.vmem %s3, %s159
      %p161 = scmp.lt.s32.totalorder %s14, 1
      %s162 = scalar_select %p161, %s14, 1
      %s163 = smul.addr %s162, 72
      %s164 = smul.addr %s163, 4
      %s165 = scalar_lea.vmem %s0, %s164
      %p166 = scmp.lt.s32.totalorder %s14, 1
      %s167 = scalar_select %p166, %s14, 1
      %s168 = smul.addr %s167, 32
      %s169 = smul.addr %s168, 4
      %s170 = scalar_lea.vmem %s3, %s169
      %v172 = vld [vmem:[%s165] sm:$0xf]
      %v173 = vld [vmem:[%s165 + $0x4] sm:$0xf]
      %v174 = vld [vmem:[%s165 + $0x8] sm:$0xf]
      %v175 = vld [vmem:[%s165 + $0xc] sm:$0xf]
      %v176 = vld [vmem:[%s165 + $0x10] sm:$0xf]
      %v177 = vld [vmem:[%s165 + $0x14] sm:$0xf]
      %v178 = vld [vmem:[%s165 + $0x18] sm:$0xf]
      %v179 = vld [vmem:[%s165 + $0x1c] sm:$0xf]
      %v180 = vld [vmem:[%s165 + $0x20] sm:$0xf]
      %v181 = vld [vmem:[%s165 + $0x24] sm:$0xf]
      %v182 = vld [vmem:[%s165 + $0x28] sm:$0xf]
      %v183 = vld [vmem:[%s165 + $0x2c] sm:$0xf]
      %v184 = vld [vmem:[%s165 + $0x30] sm:$0xf]
      %v185 = vld [vmem:[%s165 + $0x34] sm:$0xf]
      %v186 = vld [vmem:[%s165 + $0x38] sm:$0xf]
      %v187 = vld [vmem:[%s165 + $0x3c] sm:$0xf]
      %v188 = vld [vmem:[%s165 + $0x40] sm:$0xf]
      %v189 = vld [vmem:[%s165 + $0x44] sm:$0xf]
      %v190 = vld [vmem:[%s165 + $0x48] sm:$0xf]
      %v191 = vld [vmem:[%s165 + $0x4c] sm:$0xf]
      %v192 = vld [vmem:[%s165 + $0x50] sm:$0xf]
      %v193 = vld [vmem:[%s165 + $0x54] sm:$0xf]
      %v194 = vld [vmem:[%s165 + $0x58] sm:$0xf]
      %v195 = vld [vmem:[%s165 + $0x5c] sm:$0xf]
      %v196 = vld [vmem:[%s165 + $0x60] sm:$0xf]
      %v197 = vld [vmem:[%s165 + $0x64] sm:$0xf]
      %v198 = vld [vmem:[%s165 + $0x68] sm:$0xf]
      %v199 = vld [vmem:[%s165 + $0x6c] sm:$0xf]
      %v200 = vld [vmem:[%s165 + $0x70] sm:$0xf]
      %v201 = vld [vmem:[%s165 + $0x74] sm:$0xf]
      %v202 = vld [vmem:[%s165 + $0x78] sm:$0xf]
      %v203 = vld [vmem:[%s165 + $0x7c] sm:$0xf]
      %v204 = vld [vmem:[%s1] sm:$0xf]
      %v205 = vld [vmem:[%s1 + $0x4] sm:$0xf]
      %v206 = vld [vmem:[%s1 + $0x8] sm:$0xf]
      %v207 = vld [vmem:[%s1 + $0xc] sm:$0xf]
      %v208 = vld [vmem:[%s1 + $0x10] sm:$0xf]
      %v209 = vld [vmem:[%s1 + $0x14] sm:$0xf]
      %v210 = vld [vmem:[%s1 + $0x18] sm:$0xf]
      %v211 = vld [vmem:[%s1 + $0x1c] sm:$0xf]
      %v212 = vld [vmem:[%s1 + $0x20] sm:$0xf]
      %v213 = vld [vmem:[%s1 + $0x24] sm:$0xf]
      %v214 = vld [vmem:[%s1 + $0x28] sm:$0xf]
      %v215 = vld [vmem:[%s1 + $0x2c] sm:$0xf]
      %v216 = vld [vmem:[%s1 + $0x30] sm:$0xf]
      %v217 = vld [vmem:[%s1 + $0x34] sm:$0xf]
      %v218 = vld [vmem:[%s1 + $0x38] sm:$0xf]
      %v219 = vld [vmem:[%s1 + $0x3c] sm:$0xf]
      %s220 = scalar_lea.vmem %s165, 144
      %v221 = vld [vmem:[%s220] sm:$0xf]
      %v222 = vld [vmem:[%s220 + $0x4] sm:$0xf]
      %v223 = vld [vmem:[%s220 + $0x8] sm:$0xf]
      %v224 = vld [vmem:[%s220 + $0xc] sm:$0xf]
      %v225 = vld [vmem:[%s220 + $0x10] sm:$0xf]
      %v226 = vld [vmem:[%s220 + $0x14] sm:$0xf]
      %v227 = vld [vmem:[%s220 + $0x18] sm:$0xf]
      %v228 = vld [vmem:[%s220 + $0x1c] sm:$0xf]
      %v229 = vld [vmem:[%s220 + $0x20] sm:$0xf]
      %v230 = vld [vmem:[%s220 + $0x24] sm:$0xf]
      %v231 = vld [vmem:[%s220 + $0x28] sm:$0xf]
      %v232 = vld [vmem:[%s220 + $0x2c] sm:$0xf]
      %v233 = vld [vmem:[%s220 + $0x30] sm:$0xf]
      %v234 = vld [vmem:[%s220 + $0x34] sm:$0xf]
      %v235 = vld [vmem:[%s220 + $0x38] sm:$0xf]
      %v236 = vld [vmem:[%s220 + $0x3c] sm:$0xf]
      %v237 = vld [vmem:[%s220 + $0x40] sm:$0xf]
      %v238 = vld [vmem:[%s220 + $0x44] sm:$0xf]
      %v239 = vld [vmem:[%s220 + $0x48] sm:$0xf]
      %v240 = vld [vmem:[%s220 + $0x4c] sm:$0xf]
      %v241 = vld [vmem:[%s220 + $0x50] sm:$0xf]
      %v242 = vld [vmem:[%s220 + $0x54] sm:$0xf]
      %v243 = vld [vmem:[%s220 + $0x58] sm:$0xf]
      %v244 = vld [vmem:[%s220 + $0x5c] sm:$0xf]
      %v245 = vld [vmem:[%s220 + $0x60] sm:$0xf]
      %v246 = vld [vmem:[%s220 + $0x64] sm:$0xf]
      %v247 = vld [vmem:[%s220 + $0x68] sm:$0xf]
      %v248 = vld [vmem:[%s220 + $0x6c] sm:$0xf]
      %v249 = vld [vmem:[%s220 + $0x70] sm:$0xf]
      %v250 = vld [vmem:[%s220 + $0x74] sm:$0xf]
      %v251 = vld [vmem:[%s220 + $0x78] sm:$0xf]
      %v252 = vld [vmem:[%s220 + $0x7c] sm:$0xf]
      %s253 = scalar_lea.vmem %s1, 64
      %v254 = vld [vmem:[%s253] sm:$0xf]
      %v255 = vld [vmem:[%s253 + $0x4] sm:$0xf]
      %v256 = vld [vmem:[%s253 + $0x8] sm:$0xf]
      %v257 = vld [vmem:[%s253 + $0xc] sm:$0xf]
      %v258 = vld [vmem:[%s253 + $0x10] sm:$0xf]
      %v259 = vld [vmem:[%s253 + $0x14] sm:$0xf]
      %v260 = vld [vmem:[%s253 + $0x18] sm:$0xf]
      %v261 = vld [vmem:[%s253 + $0x1c] sm:$0xf]
      %v262 = vld [vmem:[%s253 + $0x20] sm:$0xf]
      %v263 = vld [vmem:[%s253 + $0x24] sm:$0xf]
      %v264 = vld [vmem:[%s253 + $0x28] sm:$0xf]
      %v265 = vld [vmem:[%s253 + $0x2c] sm:$0xf]
      %v266 = vld [vmem:[%s253 + $0x30] sm:$0xf]
      %v267 = vld [vmem:[%s253 + $0x34] sm:$0xf]
      %v268 = vld [vmem:[%s253 + $0x38] sm:$0xf]
      %v269 = vld [vmem:[%s253 + $0x3c] sm:$0xf]
      %v302 = vunpack.c.l.b16 %v221
      %v303 = vunpack.c.l.b16 %v222
      %v304 = vunpack.c.l.b16 %v223
      %v305 = vunpack.c.l.b16 %v224
      %v306 = vunpack.c.l.b16 %v225
      %v307 = vunpack.c.l.b16 %v226
      %v308 = vunpack.c.l.b16 %v227
      %v309 = vunpack.c.l.b16 %v228
      %v310 = vunpack.c.l.b16 %v229
      %v311 = vunpack.c.l.b16 %v230
      %v312 = vunpack.c.l.b16 %v231
      %v313 = vunpack.c.l.b16 %v232
      %v314 = vunpack.c.l.b16 %v233
      %v315 = vunpack.c.l.b16 %v234
      %v316 = vunpack.c.l.b16 %v235
      %v317 = vunpack.c.l.b16 %v236
      %v318 = vunpack.c.l.b16 %v237
      %v319 = vunpack.c.l.b16 %v238
      %v320 = vunpack.c.l.b16 %v239
      %v321 = vunpack.c.l.b16 %v240
      %v322 = vunpack.c.l.b16 %v241
      %v323 = vunpack.c.l.b16 %v242
      %v324 = vunpack.c.l.b16 %v243
      %v325 = vunpack.c.l.b16 %v244
      %v326 = vunpack.c.l.b16 %v245
      %v327 = vunpack.c.l.b16 %v246
      %v328 = vunpack.c.l.b16 %v247
      %v329 = vunpack.c.l.b16 %v248
      %v330 = vunpack.c.l.b16 %v249
      %v331 = vunpack.c.l.b16 %v250
      %v332 = vunpack.c.l.b16 %v251
      %v333 = vunpack.c.l.b16 %v252
      %v334 = vpack.c.b16 %v303, %v302
      %v335 = vpack.c.b16 %v305, %v304
      %v336 = vpack.c.b16 %v307, %v306
      %v337 = vpack.c.b16 %v309, %v308
      %v338 = vpack.c.b16 %v311, %v310
      %v339 = vpack.c.b16 %v313, %v312
      %v340 = vpack.c.b16 %v315, %v314
      %v341 = vpack.c.b16 %v317, %v316
      %v342 = vpack.c.b16 %v319, %v318
      %v343 = vpack.c.b16 %v321, %v320
      %v344 = vpack.c.b16 %v323, %v322
      %v345 = vpack.c.b16 %v325, %v324
      %v346 = vpack.c.b16 %v327, %v326
      %v347 = vpack.c.b16 %v329, %v328
      %v348 = vpack.c.b16 %v331, %v330
      %v349 = vpack.c.b16 %v333, %v332
      %v382 = vunpack.c.l.b16 %v254
      %v383 = vunpack.c.l.b16 %v255
      %v384 = vunpack.c.l.b16 %v256
      %v385 = vunpack.c.l.b16 %v257
      %v386 = vunpack.c.l.b16 %v258
      %v387 = vunpack.c.l.b16 %v259
      %v388 = vunpack.c.l.b16 %v260
      %v389 = vunpack.c.l.b16 %v261
      %v390 = vunpack.c.l.b16 %v262
      %v391 = vunpack.c.l.b16 %v263
      %v392 = vunpack.c.l.b16 %v264
      %v393 = vunpack.c.l.b16 %v265
      %v394 = vunpack.c.l.b16 %v266
      %v395 = vunpack.c.l.b16 %v267
      %v396 = vunpack.c.l.b16 %v268
      %v397 = vunpack.c.l.b16 %v269
      %v398 = vpack.c.b16 %v383, %v382
      %v399 = vpack.c.b16 %v385, %v384
      %v400 = vpack.c.b16 %v387, %v386
      %v401 = vpack.c.b16 %v389, %v388
      %v402 = vpack.c.b16 %v391, %v390
      %v403 = vpack.c.b16 %v393, %v392
      %v404 = vpack.c.b16 %v395, %v394
      %v405 = vpack.c.b16 %v397, %v396
      %414 = vmatprep.subr.bf16.mxu0 0
      %415 = vmatpush1.bf16.msra.mxu0 %v405
      %416 = vmatprep.subr.bf16.mxu0 0
      %417 = vmatpush1.bf16.msra.mxu0 %v404
      %418 = vmatprep.subr.bf16.mxu0 0
      %419 = vmatpush1.bf16.msra.mxu0 %v403
      %420 = vmatprep.subr.bf16.mxu0 0
      %421 = vmatpush1.bf16.msra.mxu0 %v402
      %422 = vmatprep.subr.bf16.mxu0 0
      %423 = vmatpush1.bf16.msra.mxu0 %v401
      %424 = vmatprep.subr.bf16.mxu0 0
      %425 = vmatpush1.bf16.msra.mxu0 %v400
      %426 = vmatprep.subr.bf16.mxu0 0
      %427 = vmatpush1.bf16.msra.mxu0 %v399
      %428 = vmatprep.subr.bf16.mxu0 0
      %429 = vmatpush1.bf16.msra.mxu0 %v398
      %430 = vmatprep.subr.bf16.mxu0 0
      %431 = vmatpush2.bf16.msra.mxu0 0
      %432 = vmatprep.subr.bf16.mxu0 0
      %433 = vmatpush2.bf16.msra.mxu0 0
      %434 = vmatprep.subr.bf16.mxu0 0
      %435 = vmatpush2.bf16.msra.mxu0 0
      %436 = vmatprep.subr.bf16.mxu0 0
      %437 = vmatpush2.bf16.msra.mxu0 0
      %438 = vmatprep.subr.bf16.mxu0 0
      %439 = vmatpush2.bf16.msra.mxu0 0
      %440 = vmatprep.subr.bf16.mxu0 0
      %441 = vmatpush2.bf16.msra.mxu0 0
      %442 = vmatprep.subr.bf16.mxu0 0
      %443 = vmatpush2.bf16.msra.mxu0 0
      %444 = vmatprep.subr.bf16.mxu0 0
      %445 = vmatpush2.bf16.msra.mxu0 0
      %446 = vmatprep.mubr.bf16.mxu0 0
      %447 = vmatmul.mubr.bf16.gmra.mxu0 %v334
      %v448 = vpop.f32.mrf.mxu0
      %v449 = vadd.f32 0.0, %v448
      %v450 = vpop.f32.mrf.mxu0
      %v451 = vpop.f32.mrf.mxu0
      %v452 = vadd.f32 0.0, %v451
      %v453 = vpop.f32.mrf.mxu0
      %454 = vmatprep.mubr.bf16.mxu0 0
      %455 = vmatmul.mubr.bf16.gmra.mxu0 %v335
      %v456 = vpop.f32.mrf.mxu0
      %v457 = vadd.f32 0.0, %v456
      %v458 = vpop.f32.mrf.mxu0
      %v459 = vpop.f32.mrf.mxu0
      %v460 = vadd.f32 0.0, %v459
      %v461 = vpop.f32.mrf.mxu0
      %462 = vmatprep.mubr.bf16.mxu0 0
      %463 = vmatmul.mubr.bf16.gmra.mxu0 %v336
      %v464 = vpop.f32.mrf.mxu0
      %v465 = vadd.f32 0.0, %v464
      %v466 = vpop.f32.mrf.mxu0
      %v467 = vpop.f32.mrf.mxu0
      %v468 = vadd.f32 0.0, %v467
      %v469 = vpop.f32.mrf.mxu0
      %470 = vmatprep.mubr.bf16.mxu0 0
      %471 = vmatmul.mubr.bf16.gmra.mxu0 %v337
      %v472 = vpop.f32.mrf.mxu0
      %v473 = vadd.f32 0.0, %v472
      %v474 = vpop.f32.mrf.mxu0
      %v475 = vpop.f32.mrf.mxu0
      %v476 = vadd.f32 0.0, %v475
      %v477 = vpop.f32.mrf.mxu0
      %478 = vmatprep.mubr.bf16.mxu0 0
      %479 = vmatmul.mubr.bf16.gmra.mxu0 %v338
      %v480 = vpop.f32.mrf.mxu0
      %v481 = vadd.f32 0.0, %v480
      %v482 = vpop.f32.mrf.mxu0
      %v483 = vpop.f32.mrf.mxu0
      %v484 = vadd.f32 0.0, %v483
      %v485 = vpop.f32.mrf.mxu0
      %486 = vmatprep.mubr.bf16.mxu0 0
      %487 = vmatmul.mubr.bf16.gmra.mxu0 %v339
      %v488 = vpop.f32.mrf.mxu0
      %v489 = vadd.f32 0.0, %v488
      %v490 = vpop.f32.mrf.mxu0
      %v491 = vpop.f32.mrf.mxu0
      %v492 = vadd.f32 0.0, %v491
      %v493 = vpop.f32.mrf.mxu0
      %494 = vmatprep.mubr.bf16.mxu0 0
      %495 = vmatmul.mubr.bf16.gmra.mxu0 %v340
      %v496 = vpop.f32.mrf.mxu0
      %v497 = vadd.f32 0.0, %v496
      %v498 = vpop.f32.mrf.mxu0
      %v499 = vpop.f32.mrf.mxu0
      %v500 = vadd.f32 0.0, %v499
      %v501 = vpop.f32.mrf.mxu0
      %502 = vmatprep.mubr.bf16.mxu0 0
      %503 = vmatmul.mubr.bf16.gmra.mxu0 %v341
      %v504 = vpop.f32.mrf.mxu0
      %v505 = vadd.f32 0.0, %v504
      %v506 = vpop.f32.mrf.mxu0
      %v507 = vpop.f32.mrf.mxu0
      %v508 = vadd.f32 0.0, %v507
      %v509 = vpop.f32.mrf.mxu0
      %510 = vmatprep.mubr.bf16.mxu0 0
      %511 = vmatmul.mubr.bf16.gmra.mxu0 %v342
      %v512 = vpop.f32.mrf.mxu0
      %v513 = vadd.f32 0.0, %v512
      %v514 = vpop.f32.mrf.mxu0
      %v515 = vpop.f32.mrf.mxu0
      %v516 = vadd.f32 0.0, %v515
      %v517 = vpop.f32.mrf.mxu0
      %518 = vmatprep.mubr.bf16.mxu0 0
      %519 = vmatmul.mubr.bf16.gmra.mxu0 %v343
      %v520 = vpop.f32.mrf.mxu0
      %v521 = vadd.f32 0.0, %v520
      %v522 = vpop.f32.mrf.mxu0
      %v523 = vpop.f32.mrf.mxu0
      %v524 = vadd.f32 0.0, %v523
      %v525 = vpop.f32.mrf.mxu0
      %526 = vmatprep.mubr.bf16.mxu0 0
      %527 = vmatmul.mubr.bf16.gmra.mxu0 %v344
      %v528 = vpop.f32.mrf.mxu0
      %v529 = vadd.f32 0.0, %v528
      %v530 = vpop.f32.mrf.mxu0
      %v531 = vpop.f32.mrf.mxu0
      %v532 = vadd.f32 0.0, %v531
      %v533 = vpop.f32.mrf.mxu0
      %534 = vmatprep.mubr.bf16.mxu0 0
      %535 = vmatmul.mubr.bf16.gmra.mxu0 %v345
      %v536 = vpop.f32.mrf.mxu0
      %v537 = vadd.f32 0.0, %v536
      %v538 = vpop.f32.mrf.mxu0
      %v539 = vpop.f32.mrf.mxu0
      %v540 = vadd.f32 0.0, %v539
      %v541 = vpop.f32.mrf.mxu0
      %542 = vmatprep.mubr.bf16.mxu0 0
      %543 = vmatmul.mubr.bf16.gmra.mxu0 %v346
      %v544 = vpop.f32.mrf.mxu0
      %v545 = vadd.f32 0.0, %v544
      %v546 = vpop.f32.mrf.mxu0
      %v547 = vpop.f32.mrf.mxu0
      %v548 = vadd.f32 0.0, %v547
      %v549 = vpop.f32.mrf.mxu0
      %550 = vmatprep.mubr.bf16.mxu0 0
      %551 = vmatmul.mubr.bf16.gmra.mxu0 %v347
      %v552 = vpop.f32.mrf.mxu0
      %v553 = vadd.f32 0.0, %v552
      %v554 = vpop.f32.mrf.mxu0
      %v555 = vpop.f32.mrf.mxu0
      %v556 = vadd.f32 0.0, %v555
      %v557 = vpop.f32.mrf.mxu0
      %558 = vmatprep.mubr.bf16.mxu0 0
      %559 = vmatmul.mubr.bf16.gmra.mxu0 %v348
      %v560 = vpop.f32.mrf.mxu0
      %v561 = vadd.f32 0.0, %v560
      %v562 = vpop.f32.mrf.mxu0
      %v563 = vpop.f32.mrf.mxu0
      %v564 = vadd.f32 0.0, %v563
      %v565 = vpop.f32.mrf.mxu0
      %566 = vmatprep.mubr.bf16.mxu0 0
      %567 = vmatmul.mubr.bf16.gmra.mxu0 %v349
      %v568 = vpop.f32.mrf.mxu0
      %v569 = vadd.f32 0.0, %v568
      %v570 = vpop.f32.mrf.mxu0
      %v571 = vpop.f32.mrf.mxu0
      %v572 = vadd.f32 0.0, %v571
      %v573 = vpop.f32.mrf.mxu0
      %574 = vdwg.mxu0
      %v607 = vunpack.c.l.b16 %v172
      %v608 = vunpack.c.l.b16 %v173
      %v609 = vunpack.c.l.b16 %v174
      %v610 = vunpack.c.l.b16 %v175
      %v611 = vunpack.c.l.b16 %v176
      %v612 = vunpack.c.l.b16 %v177
      %v613 = vunpack.c.l.b16 %v178
      %v614 = vunpack.c.l.b16 %v179
      %v615 = vunpack.c.l.b16 %v180
      %v616 = vunpack.c.l.b16 %v181
      %v617 = vunpack.c.l.b16 %v182
      %v618 = vunpack.c.l.b16 %v183
      %v619 = vunpack.c.l.b16 %v184
      %v620 = vunpack.c.l.b16 %v185
      %v621 = vunpack.c.l.b16 %v186
      %v622 = vunpack.c.l.b16 %v187
      %v623 = vunpack.c.l.b16 %v188
      %v624 = vunpack.c.l.b16 %v189
      %v625 = vunpack.c.l.b16 %v190
      %v626 = vunpack.c.l.b16 %v191
      %v627 = vunpack.c.l.b16 %v192
      %v628 = vunpack.c.l.b16 %v193
      %v629 = vunpack.c.l.b16 %v194
      %v630 = vunpack.c.l.b16 %v195
      %v631 = vunpack.c.l.b16 %v196
      %v632 = vunpack.c.l.b16 %v197
      %v633 = vunpack.c.l.b16 %v198
      %v634 = vunpack.c.l.b16 %v199
      %v635 = vunpack.c.l.b16 %v200
      %v636 = vunpack.c.l.b16 %v201
      %v637 = vunpack.c.l.b16 %v202
      %v638 = vunpack.c.l.b16 %v203
      %v639 = vpack.c.b16 %v608, %v607
      %v640 = vpack.c.b16 %v610, %v609
      %v641 = vpack.c.b16 %v612, %v611
      %v642 = vpack.c.b16 %v614, %v613
      %v643 = vpack.c.b16 %v616, %v615
      %v644 = vpack.c.b16 %v618, %v617
      %v645 = vpack.c.b16 %v620, %v619
      %v646 = vpack.c.b16 %v622, %v621
      %v647 = vpack.c.b16 %v624, %v623
      %v648 = vpack.c.b16 %v626, %v625
      %v649 = vpack.c.b16 %v628, %v627
      %v650 = vpack.c.b16 %v630, %v629
      %v651 = vpack.c.b16 %v632, %v631
      %v652 = vpack.c.b16 %v634, %v633
      %v653 = vpack.c.b16 %v636, %v635
      %v654 = vpack.c.b16 %v638, %v637
      %v687 = vunpack.c.l.b16 %v204
      %v688 = vunpack.c.l.b16 %v205
      %v689 = vunpack.c.l.b16 %v206
      %v690 = vunpack.c.l.b16 %v207
      %v691 = vunpack.c.l.b16 %v208
      %v692 = vunpack.c.l.b16 %v209
      %v693 = vunpack.c.l.b16 %v210
      %v694 = vunpack.c.l.b16 %v211
      %v695 = vunpack.c.l.b16 %v212
      %v696 = vunpack.c.l.b16 %v213
      %v697 = vunpack.c.l.b16 %v214
      %v698 = vunpack.c.l.b16 %v215
      %v699 = vunpack.c.l.b16 %v216
      %v700 = vunpack.c.l.b16 %v217
      %v701 = vunpack.c.l.b16 %v218
      %v702 = vunpack.c.l.b16 %v219
      %v703 = vpack.c.b16 %v688, %v687
      %v704 = vpack.c.b16 %v690, %v689
      %v705 = vpack.c.b16 %v692, %v691
      %v706 = vpack.c.b16 %v694, %v693
      %v707 = vpack.c.b16 %v696, %v695
      %v708 = vpack.c.b16 %v698, %v697
      %v709 = vpack.c.b16 %v700, %v699
      %v710 = vpack.c.b16 %v702, %v701
      %719 = vmatprep.subr.bf16.mxu0 0
      %720 = vmatpush1.bf16.msra.mxu0 %v710
      %721 = vmatprep.subr.bf16.mxu0 0
      %722 = vmatpush1.bf16.msra.mxu0 %v709
      %723 = vmatprep.subr.bf16.mxu0 0
      %724 = vmatpush1.bf16.msra.mxu0 %v708
      %725 = vmatprep.subr.bf16.mxu0 0
      %726 = vmatpush1.bf16.msra.mxu0 %v707
      %727 = vmatprep.subr.bf16.mxu0 0
      %728 = vmatpush1.bf16.msra.mxu0 %v706
      %729 = vmatprep.subr.bf16.mxu0 0
      %730 = vmatpush1.bf16.msra.mxu0 %v705
      %731 = vmatprep.subr.bf16.mxu0 0
      %732 = vmatpush1.bf16.msra.mxu0 %v704
      %733 = vmatprep.subr.bf16.mxu0 0
      %734 = vmatpush1.bf16.msra.mxu0 %v703
      %735 = vmatprep.subr.bf16.mxu0 0
      %736 = vmatpush2.bf16.msra.mxu0 0
      %737 = vmatprep.subr.bf16.mxu0 0
      %738 = vmatpush2.bf16.msra.mxu0 0
      %739 = vmatprep.subr.bf16.mxu0 0
      %740 = vmatpush2.bf16.msra.mxu0 0
      %741 = vmatprep.subr.bf16.mxu0 0
      %742 = vmatpush2.bf16.msra.mxu0 0
      %743 = vmatprep.subr.bf16.mxu0 0
      %744 = vmatpush2.bf16.msra.mxu0 0
      %745 = vmatprep.subr.bf16.mxu0 0
      %746 = vmatpush2.bf16.msra.mxu0 0
      %747 = vmatprep.subr.bf16.mxu0 0
      %748 = vmatpush2.bf16.msra.mxu0 0
      %749 = vmatprep.subr.bf16.mxu0 0
      %750 = vmatpush2.bf16.msra.mxu0 0
      %751 = vmatprep.mubr.bf16.mxu0 0
      %752 = vmatmul.mubr.bf16.gmra.mxu0 %v639
      %v753 = vpop.f32.mrf.mxu0
      %v754 = vadd.f32 %v449, %v753
      %v755 = vpop.f32.mrf.mxu0
      %v756 = vpop.f32.mrf.mxu0
      %v757 = vadd.f32 %v452, %v756
      %v758 = vpop.f32.mrf.mxu0
      %759 = vmatprep.mubr.bf16.mxu0 0
      %760 = vmatmul.mubr.bf16.gmra.mxu0 %v640
      %v761 = vpop.f32.mrf.mxu0
      %v762 = vadd.f32 %v457, %v761
      %v763 = vpop.f32.mrf.mxu0
      %v764 = vpop.f32.mrf.mxu0
      %v765 = vadd.f32 %v460, %v764
      %v766 = vpop.f32.mrf.mxu0
      %767 = vmatprep.mubr.bf16.mxu0 0
      %768 = vmatmul.mubr.bf16.gmra.mxu0 %v641
      %v769 = vpop.f32.mrf.mxu0
      %v770 = vadd.f32 %v465, %v769
      %v771 = vpop.f32.mrf.mxu0
      %v772 = vpop.f32.mrf.mxu0
      %v773 = vadd.f32 %v468, %v772
      %v774 = vpop.f32.mrf.mxu0
      %775 = vmatprep.mubr.bf16.mxu0 0
      %776 = vmatmul.mubr.bf16.gmra.mxu0 %v642
      %v777 = vpop.f32.mrf.mxu0
      %v778 = vadd.f32 %v473, %v777
      %v779 = vpop.f32.mrf.mxu0
      %v780 = vpop.f32.mrf.mxu0
      %v781 = vadd.f32 %v476, %v780
      %v782 = vpop.f32.mrf.mxu0
      %783 = vmatprep.mubr.bf16.mxu0 0
      %784 = vmatmul.mubr.bf16.gmra.mxu0 %v643
      %v785 = vpop.f32.mrf.mxu0
      %v786 = vadd.f32 %v481, %v785
      %v787 = vpop.f32.mrf.mxu0
      %v788 = vpop.f32.mrf.mxu0
      %v789 = vadd.f32 %v484, %v788
      %v790 = vpop.f32.mrf.mxu0
      %791 = vmatprep.mubr.bf16.mxu0 0
      %792 = vmatmul.mubr.bf16.gmra.mxu0 %v644
      %v793 = vpop.f32.mrf.mxu0
      %v794 = vadd.f32 %v489, %v793
      %v795 = vpop.f32.mrf.mxu0
      %v796 = vpop.f32.mrf.mxu0
      %v797 = vadd.f32 %v492, %v796
      %v798 = vpop.f32.mrf.mxu0
      %799 = vmatprep.mubr.bf16.mxu0 0
      %800 = vmatmul.mubr.bf16.gmra.mxu0 %v645
      %v801 = vpop.f32.mrf.mxu0
      %v802 = vadd.f32 %v497, %v801
      %v803 = vpop.f32.mrf.mxu0
      %v804 = vpop.f32.mrf.mxu0
      %v805 = vadd.f32 %v500, %v804
      %v806 = vpop.f32.mrf.mxu0
      %807 = vmatprep.mubr.bf16.mxu0 0
      %808 = vmatmul.mubr.bf16.gmra.mxu0 %v646
      %v809 = vpop.f32.mrf.mxu0
      %v810 = vadd.f32 %v505, %v809
      %v811 = vpop.f32.mrf.mxu0
      %v812 = vpop.f32.mrf.mxu0
      %v813 = vadd.f32 %v508, %v812
      %v814 = vpop.f32.mrf.mxu0
      %815 = vmatprep.mubr.bf16.mxu0 0
      %816 = vmatmul.mubr.bf16.gmra.mxu0 %v647
      %v817 = vpop.f32.mrf.mxu0
      %v818 = vadd.f32 %v513, %v817
      %v819 = vpop.f32.mrf.mxu0
      %v820 = vpop.f32.mrf.mxu0
      %v821 = vadd.f32 %v516, %v820
      %v822 = vpop.f32.mrf.mxu0
      %823 = vmatprep.mubr.bf16.mxu0 0
      %824 = vmatmul.mubr.bf16.gmra.mxu0 %v648
      %v825 = vpop.f32.mrf.mxu0
      %v826 = vadd.f32 %v521, %v825
      %v827 = vpop.f32.mrf.mxu0
      %v828 = vpop.f32.mrf.mxu0
      %v829 = vadd.f32 %v524, %v828
      %v830 = vpop.f32.mrf.mxu0
      %831 = vmatprep.mubr.bf16.mxu0 0
      %832 = vmatmul.mubr.bf16.gmra.mxu0 %v649
      %v833 = vpop.f32.mrf.mxu0
      %v834 = vadd.f32 %v529, %v833
      %v835 = vpop.f32.mrf.mxu0
      %v836 = vpop.f32.mrf.mxu0
      %v837 = vadd.f32 %v532, %v836
      %v838 = vpop.f32.mrf.mxu0
      %839 = vmatprep.mubr.bf16.mxu0 0
      %840 = vmatmul.mubr.bf16.gmra.mxu0 %v650
      %v841 = vpop.f32.mrf.mxu0
      %v842 = vadd.f32 %v537, %v841
      %v843 = vpop.f32.mrf.mxu0
      %v844 = vpop.f32.mrf.mxu0
      %v845 = vadd.f32 %v540, %v844
      %v846 = vpop.f32.mrf.mxu0
      %847 = vmatprep.mubr.bf16.mxu0 0
      %848 = vmatmul.mubr.bf16.gmra.mxu0 %v651
      %v849 = vpop.f32.mrf.mxu0
      %v850 = vadd.f32 %v545, %v849
      %v851 = vpop.f32.mrf.mxu0
      %v852 = vpop.f32.mrf.mxu0
      %v853 = vadd.f32 %v548, %v852
      %v854 = vpop.f32.mrf.mxu0
      %855 = vmatprep.mubr.bf16.mxu0 0
      %856 = vmatmul.mubr.bf16.gmra.mxu0 %v652
      %v857 = vpop.f32.mrf.mxu0
      %v858 = vadd.f32 %v553, %v857
      %v859 = vpop.f32.mrf.mxu0
      %v860 = vpop.f32.mrf.mxu0
      %v861 = vadd.f32 %v556, %v860
      %v862 = vpop.f32.mrf.mxu0
      %863 = vmatprep.mubr.bf16.mxu0 0
      %864 = vmatmul.mubr.bf16.gmra.mxu0 %v653
      %v865 = vpop.f32.mrf.mxu0
      %v866 = vadd.f32 %v561, %v865
      %v867 = vpop.f32.mrf.mxu0
      %v868 = vpop.f32.mrf.mxu0
      %v869 = vadd.f32 %v564, %v868
      %v870 = vpop.f32.mrf.mxu0
      %871 = vmatprep.mubr.bf16.mxu0 0
      %872 = vmatmul.mubr.bf16.gmra.mxu0 %v654
      %v873 = vpop.f32.mrf.mxu0
      %v874 = vadd.f32 %v569, %v873
      %v875 = vpop.f32.mrf.mxu0
      %v876 = vpop.f32.mrf.mxu0
      %v877 = vadd.f32 %v572, %v876
      %v878 = vpop.f32.mrf.mxu0
      %879 = vdwg.mxu0
      %v880 = vld [vmem:[%s165 + $0x8] sm:$0xf]
      %v881 = vld [vmem:[%s165 + $0xc] sm:$0xf]
      %v882 = vld [vmem:[%s165 + $0x10] sm:$0xf]
      %v883 = vld [vmem:[%s165 + $0x14] sm:$0xf]
      %v884 = vld [vmem:[%s165 + $0x18] sm:$0xf]
      %v885 = vld [vmem:[%s165 + $0x1c] sm:$0xf]
      %v886 = vld [vmem:[%s165 + $0x20] sm:$0xf]
      %v887 = vld [vmem:[%s165 + $0x24] sm:$0xf]
      %v888 = vld [vmem:[%s165 + $0x28] sm:$0xf]
      %v889 = vld [vmem:[%s165 + $0x2c] sm:$0xf]
      %v890 = vld [vmem:[%s165 + $0x30] sm:$0xf]
      %v891 = vld [vmem:[%s165 + $0x34] sm:$0xf]
      %v892 = vld [vmem:[%s165 + $0x38] sm:$0xf]
      %v893 = vld [vmem:[%s165 + $0x3c] sm:$0xf]
      %v894 = vld [vmem:[%s165 + $0x40] sm:$0xf]
      %v895 = vld [vmem:[%s165 + $0x44] sm:$0xf]
      %v896 = vld [vmem:[%s165 + $0x48] sm:$0xf]
      %v897 = vld [vmem:[%s165 + $0x4c] sm:$0xf]
      %v898 = vld [vmem:[%s165 + $0x50] sm:$0xf]
      %v899 = vld [vmem:[%s165 + $0x54] sm:$0xf]
      %v900 = vld [vmem:[%s165 + $0x58] sm:$0xf]
      %v901 = vld [vmem:[%s165 + $0x5c] sm:$0xf]
      %v902 = vld [vmem:[%s165 + $0x60] sm:$0xf]
      %v903 = vld [vmem:[%s165 + $0x64] sm:$0xf]
      %v904 = vld [vmem:[%s165 + $0x68] sm:$0xf]
      %v905 = vld [vmem:[%s165 + $0x6c] sm:$0xf]
      %v906 = vld [vmem:[%s165 + $0x70] sm:$0xf]
      %v907 = vld [vmem:[%s165 + $0x74] sm:$0xf]
      %v908 = vld [vmem:[%s165 + $0x78] sm:$0xf]
      %v909 = vld [vmem:[%s165 + $0x7c] sm:$0xf]
      %v910 = vld [vmem:[%s165 + $0x80] sm:$0xf]
      %v911 = vld [vmem:[%s165 + $0x84] sm:$0xf]
      %s912 = scalar_lea.vmem %s1, 128
      %v913 = vld [vmem:[%s912] sm:$0xf]
      %v914 = vld [vmem:[%s912 + $0x4] sm:$0xf]
      %v915 = vld [vmem:[%s912 + $0x8] sm:$0xf]
      %v916 = vld [vmem:[%s912 + $0xc] sm:$0xf]
      %v917 = vld [vmem:[%s912 + $0x10] sm:$0xf]
      %v918 = vld [vmem:[%s912 + $0x14] sm:$0xf]
      %v919 = vld [vmem:[%s912 + $0x18] sm:$0xf]
      %v920 = vld [vmem:[%s912 + $0x1c] sm:$0xf]
      %v921 = vld [vmem:[%s912 + $0x20] sm:$0xf]
      %v922 = vld [vmem:[%s912 + $0x24] sm:$0xf]
      %v923 = vld [vmem:[%s912 + $0x28] sm:$0xf]
      %v924 = vld [vmem:[%s912 + $0x2c] sm:$0xf]
      %v925 = vld [vmem:[%s912 + $0x30] sm:$0xf]
      %v926 = vld [vmem:[%s912 + $0x34] sm:$0xf]
      %v927 = vld [vmem:[%s912 + $0x38] sm:$0xf]
      %v928 = vld [vmem:[%s912 + $0x3c] sm:$0xf]
      %v961 = vunpack.c.l.b16 %v880
      %v962 = vunpack.c.l.b16 %v881
      %v963 = vunpack.c.l.b16 %v882
      %v964 = vunpack.c.l.b16 %v883
      %v965 = vunpack.c.l.b16 %v884
      %v966 = vunpack.c.l.b16 %v885
      %v967 = vunpack.c.l.b16 %v886
      %v968 = vunpack.c.l.b16 %v887
      %v969 = vunpack.c.l.b16 %v888
      %v970 = vunpack.c.l.b16 %v889
      %v971 = vunpack.c.l.b16 %v890
      %v972 = vunpack.c.l.b16 %v891
      %v973 = vunpack.c.l.b16 %v892
      %v974 = vunpack.c.l.b16 %v893
      %v975 = vunpack.c.l.b16 %v894
      %v976 = vunpack.c.l.b16 %v895
      %v977 = vunpack.c.l.b16 %v896
      %v978 = vunpack.c.l.b16 %v897
      %v979 = vunpack.c.l.b16 %v898
      %v980 = vunpack.c.l.b16 %v899
      %v981 = vunpack.c.l.b16 %v900
      %v982 = vunpack.c.l.b16 %v901
      %v983 = vunpack.c.l.b16 %v902
      %v984 = vunpack.c.l.b16 %v903
      %v985 = vunpack.c.l.b16 %v904
      %v986 = vunpack.c.l.b16 %v905
      %v987 = vunpack.c.l.b16 %v906
      %v988 = vunpack.c.l.b16 %v907
      %v989 = vunpack.c.l.b16 %v908
      %v990 = vunpack.c.l.b16 %v909
      %v991 = vunpack.c.l.b16 %v910
      %v992 = vunpack.c.l.b16 %v911
      %v993 = vpack.c.b16 %v962, %v961
      %v994 = vpack.c.b16 %v964, %v963
      %v995 = vpack.c.b16 %v966, %v965
      %v996 = vpack.c.b16 %v968, %v967
      %v997 = vpack.c.b16 %v970, %v969
      %v998 = vpack.c.b16 %v972, %v971
      %v999 = vpack.c.b16 %v974, %v973
      %v1000 = vpack.c.b16 %v976, %v975
      %v1001 = vpack.c.b16 %v978, %v977
      %v1002 = vpack.c.b16 %v980, %v979
      %v1003 = vpack.c.b16 %v982, %v981
      %v1004 = vpack.c.b16 %v984, %v983
      %v1005 = vpack.c.b16 %v986, %v985
      %v1006 = vpack.c.b16 %v988, %v987
      %v1007 = vpack.c.b16 %v990, %v989
      %v1008 = vpack.c.b16 %v992, %v991
      %v1041 = vunpack.c.l.b16 %v913
      %v1042 = vunpack.c.l.b16 %v914
      %v1043 = vunpack.c.l.b16 %v915
      %v1044 = vunpack.c.l.b16 %v916
      %v1045 = vunpack.c.l.b16 %v917
      %v1046 = vunpack.c.l.b16 %v918
      %v1047 = vunpack.c.l.b16 %v919
      %v1048 = vunpack.c.l.b16 %v920
      %v1049 = vunpack.c.l.b16 %v921
      %v1050 = vunpack.c.l.b16 %v922
      %v1051 = vunpack.c.l.b16 %v923
      %v1052 = vunpack.c.l.b16 %v924
      %v1053 = vunpack.c.l.b16 %v925
      %v1054 = vunpack.c.l.b16 %v926
      %v1055 = vunpack.c.l.b16 %v927
      %v1056 = vunpack.c.l.b16 %v928
      %v1057 = vpack.c.b16 %v1042, %v1041
      %v1058 = vpack.c.b16 %v1044, %v1043
      %v1059 = vpack.c.b16 %v1046, %v1045
      %v1060 = vpack.c.b16 %v1048, %v1047
      %v1061 = vpack.c.b16 %v1050, %v1049
      %v1062 = vpack.c.b16 %v1052, %v1051
      %v1063 = vpack.c.b16 %v1054, %v1053
      %v1064 = vpack.c.b16 %v1056, %v1055
      %1073 = vmatprep.subr.bf16.mxu0 0
      %1074 = vmatpush1.bf16.msra.mxu0 %v1064
      %1075 = vmatprep.subr.bf16.mxu0 0
      %1076 = vmatpush1.bf16.msra.mxu0 %v1063
      %1077 = vmatprep.subr.bf16.mxu0 0
      %1078 = vmatpush1.bf16.msra.mxu0 %v1062
      %1079 = vmatprep.subr.bf16.mxu0 0
      %1080 = vmatpush1.bf16.msra.mxu0 %v1061
      %1081 = vmatprep.subr.bf16.mxu0 0
      %1082 = vmatpush1.bf16.msra.mxu0 %v1060
      %1083 = vmatprep.subr.bf16.mxu0 0
      %1084 = vmatpush1.bf16.msra.mxu0 %v1059
      %1085 = vmatprep.subr.bf16.mxu0 0
      %1086 = vmatpush1.bf16.msra.mxu0 %v1058
      %1087 = vmatprep.subr.bf16.mxu0 0
      %1088 = vmatpush1.bf16.msra.mxu0 %v1057
      %1089 = vmatprep.subr.bf16.mxu0 0
      %1090 = vmatpush2.bf16.msra.mxu0 0
      %1091 = vmatprep.subr.bf16.mxu0 0
      %1092 = vmatpush2.bf16.msra.mxu0 0
      %1093 = vmatprep.subr.bf16.mxu0 0
      %1094 = vmatpush2.bf16.msra.mxu0 0
      %1095 = vmatprep.subr.bf16.mxu0 0
      %1096 = vmatpush2.bf16.msra.mxu0 0
      %1097 = vmatprep.subr.bf16.mxu0 0
      %1098 = vmatpush2.bf16.msra.mxu0 0
      %1099 = vmatprep.subr.bf16.mxu0 0
      %1100 = vmatpush2.bf16.msra.mxu0 0
      %1101 = vmatprep.subr.bf16.mxu0 0
      %1102 = vmatpush2.bf16.msra.mxu0 0
      %1103 = vmatprep.subr.bf16.mxu0 0
      %1104 = vmatpush2.bf16.msra.mxu0 0
      %1105 = vmatprep.mubr.bf16.mxu0 0
      %1106 = vmatmul.mubr.bf16.gmra.mxu0 %v993
      %v1107 = vpop.f32.mrf.mxu0
      %v1108 = vadd.f32 0.0, %v1107
      %v1109 = vpop.f32.mrf.mxu0
      %v1110 = vpop.f32.mrf.mxu0
      %v1111 = vadd.f32 0.0, %v1110
      %v1112 = vpop.f32.mrf.mxu0
      %1113 = vmatprep.mubr.bf16.mxu0 0
      %1114 = vmatmul.mubr.bf16.gmra.mxu0 %v994
      %v1115 = vpop.f32.mrf.mxu0
      %v1116 = vadd.f32 0.0, %v1115
      %v1117 = vpop.f32.mrf.mxu0
      %v1118 = vpop.f32.mrf.mxu0
      %v1119 = vadd.f32 0.0, %v1118
      %v1120 = vpop.f32.mrf.mxu0
      %1121 = vmatprep.mubr.bf16.mxu0 0
      %1122 = vmatmul.mubr.bf16.gmra.mxu0 %v995
      %v1123 = vpop.f32.mrf.mxu0
      %v1124 = vadd.f32 0.0, %v1123
      %v1125 = vpop.f32.mrf.mxu0
      %v1126 = vpop.f32.mrf.mxu0
      %v1127 = vadd.f32 0.0, %v1126
      %v1128 = vpop.f32.mrf.mxu0
      %1129 = vmatprep.mubr.bf16.mxu0 0
      %1130 = vmatmul.mubr.bf16.gmra.mxu0 %v996
      %v1131 = vpop.f32.mrf.mxu0
      %v1132 = vadd.f32 0.0, %v1131
      %v1133 = vpop.f32.mrf.mxu0
      %v1134 = vpop.f32.mrf.mxu0
      %v1135 = vadd.f32 0.0, %v1134
      %v1136 = vpop.f32.mrf.mxu0
      %1137 = vmatprep.mubr.bf16.mxu0 0
      %1138 = vmatmul.mubr.bf16.gmra.mxu0 %v997
      %v1139 = vpop.f32.mrf.mxu0
      %v1140 = vadd.f32 0.0, %v1139
      %v1141 = vpop.f32.mrf.mxu0
      %v1142 = vpop.f32.mrf.mxu0
      %v1143 = vadd.f32 0.0, %v1142
      %v1144 = vpop.f32.mrf.mxu0
      %1145 = vmatprep.mubr.bf16.mxu0 0
      %1146 = vmatmul.mubr.bf16.gmra.mxu0 %v998
      %v1147 = vpop.f32.mrf.mxu0
      %v1148 = vadd.f32 0.0, %v1147
      %v1149 = vpop.f32.mrf.mxu0
      %v1150 = vpop.f32.mrf.mxu0
      %v1151 = vadd.f32 0.0, %v1150
      %v1152 = vpop.f32.mrf.mxu0
      %1153 = vmatprep.mubr.bf16.mxu0 0
      %1154 = vmatmul.mubr.bf16.gmra.mxu0 %v999
      %v1155 = vpop.f32.mrf.mxu0
      %v1156 = vadd.f32 0.0, %v1155
      %v1157 = vpop.f32.mrf.mxu0
      %v1158 = vpop.f32.mrf.mxu0
      %v1159 = vadd.f32 0.0, %v1158
      %v1160 = vpop.f32.mrf.mxu0
      %1161 = vmatprep.mubr.bf16.mxu0 0
      %1162 = vmatmul.mubr.bf16.gmra.mxu0 %v1000
      %v1163 = vpop.f32.mrf.mxu0
      %v1164 = vadd.f32 0.0, %v1163
      %v1165 = vpop.f32.mrf.mxu0
      %v1166 = vpop.f32.mrf.mxu0
      %v1167 = vadd.f32 0.0, %v1166
      %v1168 = vpop.f32.mrf.mxu0
      %1169 = vmatprep.mubr.bf16.mxu0 0
      %1170 = vmatmul.mubr.bf16.gmra.mxu0 %v1001
      %v1171 = vpop.f32.mrf.mxu0
      %v1172 = vadd.f32 0.0, %v1171
      %v1173 = vpop.f32.mrf.mxu0
      %v1174 = vpop.f32.mrf.mxu0
      %v1175 = vadd.f32 0.0, %v1174
      %v1176 = vpop.f32.mrf.mxu0
      %1177 = vmatprep.mubr.bf16.mxu0 0
      %1178 = vmatmul.mubr.bf16.gmra.mxu0 %v1002
      %v1179 = vpop.f32.mrf.mxu0
      %v1180 = vadd.f32 0.0, %v1179
      %v1181 = vpop.f32.mrf.mxu0
      %v1182 = vpop.f32.mrf.mxu0
      %v1183 = vadd.f32 0.0, %v1182
      %v1184 = vpop.f32.mrf.mxu0
      %1185 = vmatprep.mubr.bf16.mxu0 0
      %1186 = vmatmul.mubr.bf16.gmra.mxu0 %v1003
      %v1187 = vpop.f32.mrf.mxu0
      %v1188 = vadd.f32 0.0, %v1187
      %v1189 = vpop.f32.mrf.mxu0
      %v1190 = vpop.f32.mrf.mxu0
      %v1191 = vadd.f32 0.0, %v1190
      %v1192 = vpop.f32.mrf.mxu0
      %1193 = vmatprep.mubr.bf16.mxu0 0
      %1194 = vmatmul.mubr.bf16.gmra.mxu0 %v1004
      %v1195 = vpop.f32.mrf.mxu0
      %v1196 = vadd.f32 0.0, %v1195
      %v1197 = vpop.f32.mrf.mxu0
      %v1198 = vpop.f32.mrf.mxu0
      %v1199 = vadd.f32 0.0, %v1198
      %v1200 = vpop.f32.mrf.mxu0
      %1201 = vmatprep.mubr.bf16.mxu0 0
      %1202 = vmatmul.mubr.bf16.gmra.mxu0 %v1005
      %v1203 = vpop.f32.mrf.mxu0
      %v1204 = vadd.f32 0.0, %v1203
      %v1205 = vpop.f32.mrf.mxu0
      %v1206 = vpop.f32.mrf.mxu0
      %v1207 = vadd.f32 0.0, %v1206
      %v1208 = vpop.f32.mrf.mxu0
      %1209 = vmatprep.mubr.bf16.mxu0 0
      %1210 = vmatmul.mubr.bf16.gmra.mxu0 %v1006
      %v1211 = vpop.f32.mrf.mxu0
      %v1212 = vadd.f32 0.0, %v1211
      %v1213 = vpop.f32.mrf.mxu0
      %v1214 = vpop.f32.mrf.mxu0
      %v1215 = vadd.f32 0.0, %v1214
      %v1216 = vpop.f32.mrf.mxu0
      %1217 = vmatprep.mubr.bf16.mxu0 0
      %1218 = vmatmul.mubr.bf16.gmra.mxu0 %v1007
      %v1219 = vpop.f32.mrf.mxu0
      %v1220 = vadd.f32 0.0, %v1219
      %v1221 = vpop.f32.mrf.mxu0
      %v1222 = vpop.f32.mrf.mxu0
      %v1223 = vadd.f32 0.0, %v1222
      %v1224 = vpop.f32.mrf.mxu0
      %1225 = vmatprep.mubr.bf16.mxu0 0
      %1226 = vmatmul.mubr.bf16.gmra.mxu0 %v1008
      %v1227 = vpop.f32.mrf.mxu0
      %v1228 = vadd.f32 0.0, %v1227
      %v1229 = vpop.f32.mrf.mxu0
      %v1230 = vpop.f32.mrf.mxu0
      %v1231 = vadd.f32 0.0, %v1230
      %v1232 = vpop.f32.mrf.mxu0
      %1233 = vdwg.mxu0
      %v1234 = vadd.f32 %v754, %v1108
      %v1235 = vadd.f32 %v757, %v1111
      %v1236 = vadd.f32 %v762, %v1116
      %v1237 = vadd.f32 %v765, %v1119
      %v1238 = vadd.f32 %v770, %v1124
      %v1239 = vadd.f32 %v773, %v1127
      %v1240 = vadd.f32 %v778, %v1132
      %v1241 = vadd.f32 %v781, %v1135
      %v1242 = vadd.f32 %v786, %v1140
      %v1243 = vadd.f32 %v789, %v1143
      %v1244 = vadd.f32 %v794, %v1148
      %v1245 = vadd.f32 %v797, %v1151
      %v1246 = vadd.f32 %v802, %v1156
      %v1247 = vadd.f32 %v805, %v1159
      %v1248 = vadd.f32 %v810, %v1164
      %v1249 = vadd.f32 %v813, %v1167
      %v1250 = vadd.f32 %v818, %v1172
      %v1251 = vadd.f32 %v821, %v1175
      %v1252 = vadd.f32 %v826, %v1180
      %v1253 = vadd.f32 %v829, %v1183
      %v1254 = vadd.f32 %v834, %v1188
      %v1255 = vadd.f32 %v837, %v1191
      %v1256 = vadd.f32 %v842, %v1196
      %v1257 = vadd.f32 %v845, %v1199
      %v1258 = vadd.f32 %v850, %v1204
      %v1259 = vadd.f32 %v853, %v1207
      %v1260 = vadd.f32 %v858, %v1212
      %v1261 = vadd.f32 %v861, %v1215
      %v1262 = vadd.f32 %v866, %v1220
      %v1263 = vadd.f32 %v869, %v1223
      %v1264 = vadd.f32 %v874, %v1228
      %v1265 = vadd.f32 %v877, %v1231
      %v1266 = vld [vmem:[%s220 + $0x8] sm:$0xf]
      %v1267 = vld [vmem:[%s220 + $0xc] sm:$0xf]
      %v1268 = vld [vmem:[%s220 + $0x10] sm:$0xf]
      %v1269 = vld [vmem:[%s220 + $0x14] sm:$0xf]
      %v1270 = vld [vmem:[%s220 + $0x18] sm:$0xf]
      %v1271 = vld [vmem:[%s220 + $0x1c] sm:$0xf]
      %v1272 = vld [vmem:[%s220 + $0x20] sm:$0xf]
      %v1273 = vld [vmem:[%s220 + $0x24] sm:$0xf]
      %v1274 = vld [vmem:[%s220 + $0x28] sm:$0xf]
      %v1275 = vld [vmem:[%s220 + $0x2c] sm:$0xf]
      %v1276 = vld [vmem:[%s220 + $0x30] sm:$0xf]
      %v1277 = vld [vmem:[%s220 + $0x34] sm:$0xf]
      %v1278 = vld [vmem:[%s220 + $0x38] sm:$0xf]
      %v1279 = vld [vmem:[%s220 + $0x3c] sm:$0xf]
      %v1280 = vld [vmem:[%s220 + $0x40] sm:$0xf]
      %v1281 = vld [vmem:[%s220 + $0x44] sm:$0xf]
      %v1282 = vld [vmem:[%s220 + $0x48] sm:$0xf]
      %v1283 = vld [vmem:[%s220 + $0x4c] sm:$0xf]
      %v1284 = vld [vmem:[%s220 + $0x50] sm:$0xf]
      %v1285 = vld [vmem:[%s220 + $0x54] sm:$0xf]
      %v1286 = vld [vmem:[%s220 + $0x58] sm:$0xf]
      %v1287 = vld [vmem:[%s220 + $0x5c] sm:$0xf]
      %v1288 = vld [vmem:[%s220 + $0x60] sm:$0xf]
      %v1289 = vld [vmem:[%s220 + $0x64] sm:$0xf]
      %v1290 = vld [vmem:[%s220 + $0x68] sm:$0xf]
      %v1291 = vld [vmem:[%s220 + $0x6c] sm:$0xf]
      %v1292 = vld [vmem:[%s220 + $0x70] sm:$0xf]
      %v1293 = vld [vmem:[%s220 + $0x74] sm:$0xf]
      %v1294 = vld [vmem:[%s220 + $0x78] sm:$0xf]
      %v1295 = vld [vmem:[%s220 + $0x7c] sm:$0xf]
      %v1296 = vld [vmem:[%s220 + $0x80] sm:$0xf]
      %v1297 = vld [vmem:[%s220 + $0x84] sm:$0xf]
      %s1298 = scalar_lea.vmem %s1, 192
      %v1299 = vld [vmem:[%s1298] sm:$0xf]
      %v1300 = vld [vmem:[%s1298 + $0x4] sm:$0xf]
      %v1301 = vld [vmem:[%s1298 + $0x8] sm:$0xf]
      %v1302 = vld [vmem:[%s1298 + $0xc] sm:$0xf]
      %v1303 = vld [vmem:[%s1298 + $0x10] sm:$0xf]
      %v1304 = vld [vmem:[%s1298 + $0x14] sm:$0xf]
      %v1305 = vld [vmem:[%s1298 + $0x18] sm:$0xf]
      %v1306 = vld [vmem:[%s1298 + $0x1c] sm:$0xf]
      %v1307 = vld [vmem:[%s1298 + $0x20] sm:$0xf]
      %v1308 = vld [vmem:[%s1298 + $0x24] sm:$0xf]
      %v1309 = vld [vmem:[%s1298 + $0x28] sm:$0xf]
      %v1310 = vld [vmem:[%s1298 + $0x2c] sm:$0xf]
      %v1311 = vld [vmem:[%s1298 + $0x30] sm:$0xf]
      %v1312 = vld [vmem:[%s1298 + $0x34] sm:$0xf]
      %v1313 = vld [vmem:[%s1298 + $0x38] sm:$0xf]
      %v1314 = vld [vmem:[%s1298 + $0x3c] sm:$0xf]
      %v1347 = vunpack.c.l.b16 %v1266
      %v1348 = vunpack.c.l.b16 %v1267
      %v1349 = vunpack.c.l.b16 %v1268
      %v1350 = vunpack.c.l.b16 %v1269
      %v1351 = vunpack.c.l.b16 %v1270
      %v1352 = vunpack.c.l.b16 %v1271
      %v1353 = vunpack.c.l.b16 %v1272
      %v1354 = vunpack.c.l.b16 %v1273
      %v1355 = vunpack.c.l.b16 %v1274
      %v1356 = vunpack.c.l.b16 %v1275
      %v1357 = vunpack.c.l.b16 %v1276
      %v1358 = vunpack.c.l.b16 %v1277
      %v1359 = vunpack.c.l.b16 %v1278
      %v1360 = vunpack.c.l.b16 %v1279
      %v1361 = vunpack.c.l.b16 %v1280
      %v1362 = vunpack.c.l.b16 %v1281
      %v1363 = vunpack.c.l.b16 %v1282
      %v1364 = vunpack.c.l.b16 %v1283
      %v1365 = vunpack.c.l.b16 %v1284
      %v1366 = vunpack.c.l.b16 %v1285
      %v1367 = vunpack.c.l.b16 %v1286
      %v1368 = vunpack.c.l.b16 %v1287
      %v1369 = vunpack.c.l.b16 %v1288
      %v1370 = vunpack.c.l.b16 %v1289
      %v1371 = vunpack.c.l.b16 %v1290
      %v1372 = vunpack.c.l.b16 %v1291
      %v1373 = vunpack.c.l.b16 %v1292
      %v1374 = vunpack.c.l.b16 %v1293
      %v1375 = vunpack.c.l.b16 %v1294
      %v1376 = vunpack.c.l.b16 %v1295
      %v1377 = vunpack.c.l.b16 %v1296
      %v1378 = vunpack.c.l.b16 %v1297
      %v1379 = vpack.c.b16 %v1348, %v1347
      %v1380 = vpack.c.b16 %v1350, %v1349
      %v1381 = vpack.c.b16 %v1352, %v1351
      %v1382 = vpack.c.b16 %v1354, %v1353
      %v1383 = vpack.c.b16 %v1356, %v1355
      %v1384 = vpack.c.b16 %v1358, %v1357
      %v1385 = vpack.c.b16 %v1360, %v1359
      %v1386 = vpack.c.b16 %v1362, %v1361
      %v1387 = vpack.c.b16 %v1364, %v1363
      %v1388 = vpack.c.b16 %v1366, %v1365
      %v1389 = vpack.c.b16 %v1368, %v1367
      %v1390 = vpack.c.b16 %v1370, %v1369
      %v1391 = vpack.c.b16 %v1372, %v1371
      %v1392 = vpack.c.b16 %v1374, %v1373
      %v1393 = vpack.c.b16 %v1376, %v1375
      %v1394 = vpack.c.b16 %v1378, %v1377
      %v1427 = vunpack.c.l.b16 %v1299
      %v1428 = vunpack.c.l.b16 %v1300
      %v1429 = vunpack.c.l.b16 %v1301
      %v1430 = vunpack.c.l.b16 %v1302
      %v1431 = vunpack.c.l.b16 %v1303
      %v1432 = vunpack.c.l.b16 %v1304
      %v1433 = vunpack.c.l.b16 %v1305
      %v1434 = vunpack.c.l.b16 %v1306
      %v1435 = vunpack.c.l.b16 %v1307
      %v1436 = vunpack.c.l.b16 %v1308
      %v1437 = vunpack.c.l.b16 %v1309
      %v1438 = vunpack.c.l.b16 %v1310
      %v1439 = vunpack.c.l.b16 %v1311
      %v1440 = vunpack.c.l.b16 %v1312
      %v1441 = vunpack.c.l.b16 %v1313
      %v1442 = vunpack.c.l.b16 %v1314
      %v1443 = vpack.c.b16 %v1428, %v1427
      %v1444 = vpack.c.b16 %v1430, %v1429
      %v1445 = vpack.c.b16 %v1432, %v1431
      %v1446 = vpack.c.b16 %v1434, %v1433
      %v1447 = vpack.c.b16 %v1436, %v1435
      %v1448 = vpack.c.b16 %v1438, %v1437
      %v1449 = vpack.c.b16 %v1440, %v1439
      %v1450 = vpack.c.b16 %v1442, %v1441
      %1459 = vmatprep.subr.bf16.mxu0 0
      %1460 = vmatpush1.bf16.msra.mxu0 %v1450
      %1461 = vmatprep.subr.bf16.mxu0 0
      %1462 = vmatpush1.bf16.msra.mxu0 %v1449
      %1463 = vmatprep.subr.bf16.mxu0 0
      %1464 = vmatpush1.bf16.msra.mxu0 %v1448
      %1465 = vmatprep.subr.bf16.mxu0 0
      %1466 = vmatpush1.bf16.msra.mxu0 %v1447
      %1467 = vmatprep.subr.bf16.mxu0 0
      %1468 = vmatpush1.bf16.msra.mxu0 %v1446
      %1469 = vmatprep.subr.bf16.mxu0 0
      %1470 = vmatpush1.bf16.msra.mxu0 %v1445
      %1471 = vmatprep.subr.bf16.mxu0 0
      %1472 = vmatpush1.bf16.msra.mxu0 %v1444
      %1473 = vmatprep.subr.bf16.mxu0 0
      %1474 = vmatpush1.bf16.msra.mxu0 %v1443
      %1475 = vmatprep.subr.bf16.mxu0 0
      %1476 = vmatpush2.bf16.msra.mxu0 0
      %1477 = vmatprep.subr.bf16.mxu0 0
      %1478 = vmatpush2.bf16.msra.mxu0 0
      %1479 = vmatprep.subr.bf16.mxu0 0
      %1480 = vmatpush2.bf16.msra.mxu0 0
      %1481 = vmatprep.subr.bf16.mxu0 0
      %1482 = vmatpush2.bf16.msra.mxu0 0
      %1483 = vmatprep.subr.bf16.mxu0 0
      %1484 = vmatpush2.bf16.msra.mxu0 0
      %1485 = vmatprep.subr.bf16.mxu0 0
      %1486 = vmatpush2.bf16.msra.mxu0 0
      %1487 = vmatprep.subr.bf16.mxu0 0
      %1488 = vmatpush2.bf16.msra.mxu0 0
      %1489 = vmatprep.subr.bf16.mxu0 0
      %1490 = vmatpush2.bf16.msra.mxu0 0
      %1491 = vmatprep.mubr.bf16.mxu0 0
      %1492 = vmatmul.mubr.bf16.gmra.mxu0 %v1379
      %v1493 = vpop.f32.mrf.mxu0
      %v1494 = vadd.f32 0.0, %v1493
      %v1495 = vpop.f32.mrf.mxu0
      %v1496 = vpop.f32.mrf.mxu0
      %v1497 = vadd.f32 0.0, %v1496
      %v1498 = vpop.f32.mrf.mxu0
      %1499 = vmatprep.mubr.bf16.mxu0 0
      %1500 = vmatmul.mubr.bf16.gmra.mxu0 %v1380
      %v1501 = vpop.f32.mrf.mxu0
      %v1502 = vadd.f32 0.0, %v1501
      %v1503 = vpop.f32.mrf.mxu0
      %v1504 = vpop.f32.mrf.mxu0
      %v1505 = vadd.f32 0.0, %v1504
      %v1506 = vpop.f32.mrf.mxu0
      %1507 = vmatprep.mubr.bf16.mxu0 0
      %1508 = vmatmul.mubr.bf16.gmra.mxu0 %v1381
      %v1509 = vpop.f32.mrf.mxu0
      %v1510 = vadd.f32 0.0, %v1509
      %v1511 = vpop.f32.mrf.mxu0
      %v1512 = vpop.f32.mrf.mxu0
      %v1513 = vadd.f32 0.0, %v1512
      %v1514 = vpop.f32.mrf.mxu0
      %1515 = vmatprep.mubr.bf16.mxu0 0
      %1516 = vmatmul.mubr.bf16.gmra.mxu0 %v1382
      %v1517 = vpop.f32.mrf.mxu0
      %v1518 = vadd.f32 0.0, %v1517
      %v1519 = vpop.f32.mrf.mxu0
      %v1520 = vpop.f32.mrf.mxu0
      %v1521 = vadd.f32 0.0, %v1520
      %v1522 = vpop.f32.mrf.mxu0
      %1523 = vmatprep.mubr.bf16.mxu0 0
      %1524 = vmatmul.mubr.bf16.gmra.mxu0 %v1383
      %v1525 = vpop.f32.mrf.mxu0
      %v1526 = vadd.f32 0.0, %v1525
      %v1527 = vpop.f32.mrf.mxu0
      %v1528 = vpop.f32.mrf.mxu0
      %v1529 = vadd.f32 0.0, %v1528
      %v1530 = vpop.f32.mrf.mxu0
      %1531 = vmatprep.mubr.bf16.mxu0 0
      %1532 = vmatmul.mubr.bf16.gmra.mxu0 %v1384
      %v1533 = vpop.f32.mrf.mxu0
      %v1534 = vadd.f32 0.0, %v1533
      %v1535 = vpop.f32.mrf.mxu0
      %v1536 = vpop.f32.mrf.mxu0
      %v1537 = vadd.f32 0.0, %v1536
      %v1538 = vpop.f32.mrf.mxu0
      %1539 = vmatprep.mubr.bf16.mxu0 0
      %1540 = vmatmul.mubr.bf16.gmra.mxu0 %v1385
      %v1541 = vpop.f32.mrf.mxu0
      %v1542 = vadd.f32 0.0, %v1541
      %v1543 = vpop.f32.mrf.mxu0
      %v1544 = vpop.f32.mrf.mxu0
      %v1545 = vadd.f32 0.0, %v1544
      %v1546 = vpop.f32.mrf.mxu0
      %1547 = vmatprep.mubr.bf16.mxu0 0
      %1548 = vmatmul.mubr.bf16.gmra.mxu0 %v1386
      %v1549 = vpop.f32.mrf.mxu0
      %v1550 = vadd.f32 0.0, %v1549
      %v1551 = vpop.f32.mrf.mxu0
      %v1552 = vpop.f32.mrf.mxu0
      %v1553 = vadd.f32 0.0, %v1552
      %v1554 = vpop.f32.mrf.mxu0
      %1555 = vmatprep.mubr.bf16.mxu0 0
      %1556 = vmatmul.mubr.bf16.gmra.mxu0 %v1387
      %v1557 = vpop.f32.mrf.mxu0
      %v1558 = vadd.f32 0.0, %v1557
      %v1559 = vpop.f32.mrf.mxu0
      %v1560 = vpop.f32.mrf.mxu0
      %v1561 = vadd.f32 0.0, %v1560
      %v1562 = vpop.f32.mrf.mxu0
      %1563 = vmatprep.mubr.bf16.mxu0 0
      %1564 = vmatmul.mubr.bf16.gmra.mxu0 %v1388
      %v1565 = vpop.f32.mrf.mxu0
      %v1566 = vadd.f32 0.0, %v1565
      %v1567 = vpop.f32.mrf.mxu0
      %v1568 = vpop.f32.mrf.mxu0
      %v1569 = vadd.f32 0.0, %v1568
      %v1570 = vpop.f32.mrf.mxu0
      %1571 = vmatprep.mubr.bf16.mxu0 0
      %1572 = vmatmul.mubr.bf16.gmra.mxu0 %v1389
      %v1573 = vpop.f32.mrf.mxu0
      %v1574 = vadd.f32 0.0, %v1573
      %v1575 = vpop.f32.mrf.mxu0
      %v1576 = vpop.f32.mrf.mxu0
      %v1577 = vadd.f32 0.0, %v1576
      %v1578 = vpop.f32.mrf.mxu0
      %1579 = vmatprep.mubr.bf16.mxu0 0
      %1580 = vmatmul.mubr.bf16.gmra.mxu0 %v1390
      %v1581 = vpop.f32.mrf.mxu0
      %v1582 = vadd.f32 0.0, %v1581
      %v1583 = vpop.f32.mrf.mxu0
      %v1584 = vpop.f32.mrf.mxu0
      %v1585 = vadd.f32 0.0, %v1584
      %v1586 = vpop.f32.mrf.mxu0
      %1587 = vmatprep.mubr.bf16.mxu0 0
      %1588 = vmatmul.mubr.bf16.gmra.mxu0 %v1391
      %v1589 = vpop.f32.mrf.mxu0
      %v1590 = vadd.f32 0.0, %v1589
      %v1591 = vpop.f32.mrf.mxu0
      %v1592 = vpop.f32.mrf.mxu0
      %v1593 = vadd.f32 0.0, %v1592
      %v1594 = vpop.f32.mrf.mxu0
      %1595 = vmatprep.mubr.bf16.mxu0 0
      %1596 = vmatmul.mubr.bf16.gmra.mxu0 %v1392
      %v1597 = vpop.f32.mrf.mxu0
      %v1598 = vadd.f32 0.0, %v1597
      %v1599 = vpop.f32.mrf.mxu0
      %v1600 = vpop.f32.mrf.mxu0
      %v1601 = vadd.f32 0.0, %v1600
      %v1602 = vpop.f32.mrf.mxu0
      %1603 = vmatprep.mubr.bf16.mxu0 0
      %1604 = vmatmul.mubr.bf16.gmra.mxu0 %v1393
      %v1605 = vpop.f32.mrf.mxu0
      %v1606 = vadd.f32 0.0, %v1605
      %v1607 = vpop.f32.mrf.mxu0
      %v1608 = vpop.f32.mrf.mxu0
      %v1609 = vadd.f32 0.0, %v1608
      %v1610 = vpop.f32.mrf.mxu0
      %1611 = vmatprep.mubr.bf16.mxu0 0
      %1612 = vmatmul.mubr.bf16.gmra.mxu0 %v1394
      %v1613 = vpop.f32.mrf.mxu0
      %v1614 = vadd.f32 0.0, %v1613
      %v1615 = vpop.f32.mrf.mxu0
      %v1616 = vpop.f32.mrf.mxu0
      %v1617 = vadd.f32 0.0, %v1616
      %v1618 = vpop.f32.mrf.mxu0
      %1619 = vdwg.mxu0
      %v1620 = vadd.f32 %v1234, %v1494
      %v1621 = vadd.f32 %v1235, %v1497
      %v1622 = vadd.f32 %v1236, %v1502
      %v1623 = vadd.f32 %v1237, %v1505
      %v1624 = vadd.f32 %v1238, %v1510
      %v1625 = vadd.f32 %v1239, %v1513
      %v1626 = vadd.f32 %v1240, %v1518
      %v1627 = vadd.f32 %v1241, %v1521
      %v1628 = vadd.f32 %v1242, %v1526
      %v1629 = vadd.f32 %v1243, %v1529
      %v1630 = vadd.f32 %v1244, %v1534
      %v1631 = vadd.f32 %v1245, %v1537
      %v1632 = vadd.f32 %v1246, %v1542
      %v1633 = vadd.f32 %v1247, %v1545
      %v1634 = vadd.f32 %v1248, %v1550
      %v1635 = vadd.f32 %v1249, %v1553
      %v1636 = vadd.f32 %v1250, %v1558
      %v1637 = vadd.f32 %v1251, %v1561
      %v1638 = vadd.f32 %v1252, %v1566
      %v1639 = vadd.f32 %v1253, %v1569
      %v1640 = vadd.f32 %v1254, %v1574
      %v1641 = vadd.f32 %v1255, %v1577
      %v1642 = vadd.f32 %v1256, %v1582
      %v1643 = vadd.f32 %v1257, %v1585
      %v1644 = vadd.f32 %v1258, %v1590
      %v1645 = vadd.f32 %v1259, %v1593
      %v1646 = vadd.f32 %v1260, %v1598
      %v1647 = vadd.f32 %v1261, %v1601
      %v1648 = vadd.f32 %v1262, %v1606
      %v1649 = vadd.f32 %v1263, %v1609
      %v1650 = vadd.f32 %v1264, %v1614
      %v1651 = vadd.f32 %v1265, %v1617
      %v1652 = vld [vmem:[%s165 + $0x10] sm:$0xf]
      %v1653 = vld [vmem:[%s165 + $0x14] sm:$0xf]
      %v1654 = vld [vmem:[%s165 + $0x18] sm:$0xf]
      %v1655 = vld [vmem:[%s165 + $0x1c] sm:$0xf]
      %v1656 = vld [vmem:[%s165 + $0x20] sm:$0xf]
      %v1657 = vld [vmem:[%s165 + $0x24] sm:$0xf]
      %v1658 = vld [vmem:[%s165 + $0x28] sm:$0xf]
      %v1659 = vld [vmem:[%s165 + $0x2c] sm:$0xf]
      %v1660 = vld [vmem:[%s165 + $0x30] sm:$0xf]
      %v1661 = vld [vmem:[%s165 + $0x34] sm:$0xf]
      %v1662 = vld [vmem:[%s165 + $0x38] sm:$0xf]
      %v1663 = vld [vmem:[%s165 + $0x3c] sm:$0xf]
      %v1664 = vld [vmem:[%s165 + $0x40] sm:$0xf]
      %v1665 = vld [vmem:[%s165 + $0x44] sm:$0xf]
      %v1666 = vld [vmem:[%s165 + $0x48] sm:$0xf]
      %v1667 = vld [vmem:[%s165 + $0x4c] sm:$0xf]
      %v1668 = vld [vmem:[%s165 + $0x50] sm:$0xf]
      %v1669 = vld [vmem:[%s165 + $0x54] sm:$0xf]
      %v1670 = vld [vmem:[%s165 + $0x58] sm:$0xf]
      %v1671 = vld [vmem:[%s165 + $0x5c] sm:$0xf]
      %v1672 = vld [vmem:[%s165 + $0x60] sm:$0xf]
      %v1673 = vld [vmem:[%s165 + $0x64] sm:$0xf]
      %v1674 = vld [vmem:[%s165 + $0x68] sm:$0xf]
      %v1675 = vld [vmem:[%s165 + $0x6c] sm:$0xf]
      %v1676 = vld [vmem:[%s165 + $0x70] sm:$0xf]
      %v1677 = vld [vmem:[%s165 + $0x74] sm:$0xf]
      %v1678 = vld [vmem:[%s165 + $0x78] sm:$0xf]
      %v1679 = vld [vmem:[%s165 + $0x7c] sm:$0xf]
      %v1680 = vld [vmem:[%s165 + $0x80] sm:$0xf]
      %v1681 = vld [vmem:[%s165 + $0x84] sm:$0xf]
      %v1682 = vld [vmem:[%s165 + $0x88] sm:$0xf]
      %v1683 = vld [vmem:[%s165 + $0x8c] sm:$0xf]
      %s1684 = scalar_lea.vmem %s1, 256
      %v1685 = vld [vmem:[%s1684] sm:$0xf]
      %v1686 = vld [vmem:[%s1684 + $0x4] sm:$0xf]
      %v1687 = vld [vmem:[%s1684 + $0x8] sm:$0xf]
      %v1688 = vld [vmem:[%s1684 + $0xc] sm:$0xf]
      %v1689 = vld [vmem:[%s1684 + $0x10] sm:$0xf]
      %v1690 = vld [vmem:[%s1684 + $0x14] sm:$0xf]
      %v1691 = vld [vmem:[%s1684 + $0x18] sm:$0xf]
      %v1692 = vld [vmem:[%s1684 + $0x1c] sm:$0xf]
      %v1693 = vld [vmem:[%s1684 + $0x20] sm:$0xf]
      %v1694 = vld [vmem:[%s1684 + $0x24] sm:$0xf]
      %v1695 = vld [vmem:[%s1684 + $0x28] sm:$0xf]
      %v1696 = vld [vmem:[%s1684 + $0x2c] sm:$0xf]
      %v1697 = vld [vmem:[%s1684 + $0x30] sm:$0xf]
      %v1698 = vld [vmem:[%s1684 + $0x34] sm:$0xf]
      %v1699 = vld [vmem:[%s1684 + $0x38] sm:$0xf]
      %v1700 = vld [vmem:[%s1684 + $0x3c] sm:$0xf]
      %v1733 = vunpack.c.l.b16 %v1652
      %v1734 = vunpack.c.l.b16 %v1653
      %v1735 = vunpack.c.l.b16 %v1654
      %v1736 = vunpack.c.l.b16 %v1655
      %v1737 = vunpack.c.l.b16 %v1656
      %v1738 = vunpack.c.l.b16 %v1657
      %v1739 = vunpack.c.l.b16 %v1658
      %v1740 = vunpack.c.l.b16 %v1659
      %v1741 = vunpack.c.l.b16 %v1660
      %v1742 = vunpack.c.l.b16 %v1661
      %v1743 = vunpack.c.l.b16 %v1662
      %v1744 = vunpack.c.l.b16 %v1663
      %v1745 = vunpack.c.l.b16 %v1664
      %v1746 = vunpack.c.l.b16 %v1665
      %v1747 = vunpack.c.l.b16 %v1666
      %v1748 = vunpack.c.l.b16 %v1667
      %v1749 = vunpack.c.l.b16 %v1668
      %v1750 = vunpack.c.l.b16 %v1669
      %v1751 = vunpack.c.l.b16 %v1670
      %v1752 = vunpack.c.l.b16 %v1671
      %v1753 = vunpack.c.l.b16 %v1672
      %v1754 = vunpack.c.l.b16 %v1673
      %v1755 = vunpack.c.l.b16 %v1674
      %v1756 = vunpack.c.l.b16 %v1675
      %v1757 = vunpack.c.l.b16 %v1676
      %v1758 = vunpack.c.l.b16 %v1677
      %v1759 = vunpack.c.l.b16 %v1678
      %v1760 = vunpack.c.l.b16 %v1679
      %v1761 = vunpack.c.l.b16 %v1680
      %v1762 = vunpack.c.l.b16 %v1681
      %v1763 = vunpack.c.l.b16 %v1682
      %v1764 = vunpack.c.l.b16 %v1683
      %v1765 = vpack.c.b16 %v1734, %v1733
      %v1766 = vpack.c.b16 %v1736, %v1735
      %v1767 = vpack.c.b16 %v1738, %v1737
      %v1768 = vpack.c.b16 %v1740, %v1739
      %v1769 = vpack.c.b16 %v1742, %v1741
      %v1770 = vpack.c.b16 %v1744, %v1743
      %v1771 = vpack.c.b16 %v1746, %v1745
      %v1772 = vpack.c.b16 %v1748, %v1747
      %v1773 = vpack.c.b16 %v1750, %v1749
      %v1774 = vpack.c.b16 %v1752, %v1751
      %v1775 = vpack.c.b16 %v1754, %v1753
      %v1776 = vpack.c.b16 %v1756, %v1755
      %v1777 = vpack.c.b16 %v1758, %v1757
      %v1778 = vpack.c.b16 %v1760, %v1759
      %v1779 = vpack.c.b16 %v1762, %v1761
      %v1780 = vpack.c.b16 %v1764, %v1763
      %v1813 = vunpack.c.l.b16 %v1685
      %v1814 = vunpack.c.l.b16 %v1686
      %v1815 = vunpack.c.l.b16 %v1687
      %v1816 = vunpack.c.l.b16 %v1688
      %v1817 = vunpack.c.l.b16 %v1689
      %v1818 = vunpack.c.l.b16 %v1690
      %v1819 = vunpack.c.l.b16 %v1691
      %v1820 = vunpack.c.l.b16 %v1692
      %v1821 = vunpack.c.l.b16 %v1693
      %v1822 = vunpack.c.l.b16 %v1694
      %v1823 = vunpack.c.l.b16 %v1695
      %v1824 = vunpack.c.l.b16 %v1696
      %v1825 = vunpack.c.l.b16 %v1697
      %v1826 = vunpack.c.l.b16 %v1698
      %v1827 = vunpack.c.l.b16 %v1699
      %v1828 = vunpack.c.l.b16 %v1700
      %v1829 = vpack.c.b16 %v1814, %v1813
      %v1830 = vpack.c.b16 %v1816, %v1815
      %v1831 = vpack.c.b16 %v1818, %v1817
      %v1832 = vpack.c.b16 %v1820, %v1819
      %v1833 = vpack.c.b16 %v1822, %v1821
      %v1834 = vpack.c.b16 %v1824, %v1823
      %v1835 = vpack.c.b16 %v1826, %v1825
      %v1836 = vpack.c.b16 %v1828, %v1827
      %1845 = vmatprep.subr.bf16.mxu0 0
      %1846 = vmatpush1.bf16.msra.mxu0 %v1836
      %1847 = vmatprep.subr.bf16.mxu0 0
      %1848 = vmatpush1.bf16.msra.mxu0 %v1835
      %1849 = vmatprep.subr.bf16.mxu0 0
      %1850 = vmatpush1.bf16.msra.mxu0 %v1834
      %1851 = vmatprep.subr.bf16.mxu0 0
      %1852 = vmatpush1.bf16.msra.mxu0 %v1833
      %1853 = vmatprep.subr.bf16.mxu0 0
      %1854 = vmatpush1.bf16.msra.mxu0 %v1832
      %1855 = vmatprep.subr.bf16.mxu0 0
      %1856 = vmatpush1.bf16.msra.mxu0 %v1831
      %1857 = vmatprep.subr.bf16.mxu0 0
      %1858 = vmatpush1.bf16.msra.mxu0 %v1830
      %1859 = vmatprep.subr.bf16.mxu0 0
      %1860 = vmatpush1.bf16.msra.mxu0 %v1829
      %1861 = vmatprep.subr.bf16.mxu0 0
      %1862 = vmatpush2.bf16.msra.mxu0 0
      %1863 = vmatprep.subr.bf16.mxu0 0
      %1864 = vmatpush2.bf16.msra.mxu0 0
      %1865 = vmatprep.subr.bf16.mxu0 0
      %1866 = vmatpush2.bf16.msra.mxu0 0
      %1867 = vmatprep.subr.bf16.mxu0 0
      %1868 = vmatpush2.bf16.msra.mxu0 0
      %1869 = vmatprep.subr.bf16.mxu0 0
      %1870 = vmatpush2.bf16.msra.mxu0 0
      %1871 = vmatprep.subr.bf16.mxu0 0
      %1872 = vmatpush2.bf16.msra.mxu0 0
      %1873 = vmatprep.subr.bf16.mxu0 0
      %1874 = vmatpush2.bf16.msra.mxu0 0
      %1875 = vmatprep.subr.bf16.mxu0 0
      %1876 = vmatpush2.bf16.msra.mxu0 0
      %1877 = vmatprep.mubr.bf16.mxu0 0
      %1878 = vmatmul.mubr.bf16.gmra.mxu0 %v1765
      %v1879 = vpop.f32.mrf.mxu0
      %v1880 = vadd.f32 0.0, %v1879
      %v1881 = vpop.f32.mrf.mxu0
      %v1882 = vpop.f32.mrf.mxu0
      %v1883 = vadd.f32 0.0, %v1882
      %v1884 = vpop.f32.mrf.mxu0
      %1885 = vmatprep.mubr.bf16.mxu0 0
      %1886 = vmatmul.mubr.bf16.gmra.mxu0 %v1766
      %v1887 = vpop.f32.mrf.mxu0
      %v1888 = vadd.f32 0.0, %v1887
      %v1889 = vpop.f32.mrf.mxu0
      %v1890 = vpop.f32.mrf.mxu0
      %v1891 = vadd.f32 0.0, %v1890
      %v1892 = vpop.f32.mrf.mxu0
      %1893 = vmatprep.mubr.bf16.mxu0 0
      %1894 = vmatmul.mubr.bf16.gmra.mxu0 %v1767
      %v1895 = vpop.f32.mrf.mxu0
      %v1896 = vadd.f32 0.0, %v1895
      %v1897 = vpop.f32.mrf.mxu0
      %v1898 = vpop.f32.mrf.mxu0
      %v1899 = vadd.f32 0.0, %v1898
      %v1900 = vpop.f32.mrf.mxu0
      %1901 = vmatprep.mubr.bf16.mxu0 0
      %1902 = vmatmul.mubr.bf16.gmra.mxu0 %v1768
      %v1903 = vpop.f32.mrf.mxu0
      %v1904 = vadd.f32 0.0, %v1903
      %v1905 = vpop.f32.mrf.mxu0
      %v1906 = vpop.f32.mrf.mxu0
      %v1907 = vadd.f32 0.0, %v1906
      %v1908 = vpop.f32.mrf.mxu0
      %1909 = vmatprep.mubr.bf16.mxu0 0
      %1910 = vmatmul.mubr.bf16.gmra.mxu0 %v1769
      %v1911 = vpop.f32.mrf.mxu0
      %v1912 = vadd.f32 0.0, %v1911
      %v1913 = vpop.f32.mrf.mxu0
      %v1914 = vpop.f32.mrf.mxu0
      %v1915 = vadd.f32 0.0, %v1914
      %v1916 = vpop.f32.mrf.mxu0
      %1917 = vmatprep.mubr.bf16.mxu0 0
      %1918 = vmatmul.mubr.bf16.gmra.mxu0 %v1770
      %v1919 = vpop.f32.mrf.mxu0
      %v1920 = vadd.f32 0.0, %v1919
      %v1921 = vpop.f32.mrf.mxu0
      %v1922 = vpop.f32.mrf.mxu0
      %v1923 = vadd.f32 0.0, %v1922
      %v1924 = vpop.f32.mrf.mxu0
      %1925 = vmatprep.mubr.bf16.mxu0 0
      %1926 = vmatmul.mubr.bf16.gmra.mxu0 %v1771
      %v1927 = vpop.f32.mrf.mxu0
      %v1928 = vadd.f32 0.0, %v1927
      %v1929 = vpop.f32.mrf.mxu0
      %v1930 = vpop.f32.mrf.mxu0
      %v1931 = vadd.f32 0.0, %v1930
      %v1932 = vpop.f32.mrf.mxu0
      %1933 = vmatprep.mubr.bf16.mxu0 0
      %1934 = vmatmul.mubr.bf16.gmra.mxu0 %v1772
      %v1935 = vpop.f32.mrf.mxu0
      %v1936 = vadd.f32 0.0, %v1935
      %v1937 = vpop.f32.mrf.mxu0
      %v1938 = vpop.f32.mrf.mxu0
      %v1939 = vadd.f32 0.0, %v1938
      %v1940 = vpop.f32.mrf.mxu0
      %1941 = vmatprep.mubr.bf16.mxu0 0
      %1942 = vmatmul.mubr.bf16.gmra.mxu0 %v1773
      %v1943 = vpop.f32.mrf.mxu0
      %v1944 = vadd.f32 0.0, %v1943
      %v1945 = vpop.f32.mrf.mxu0
      %v1946 = vpop.f32.mrf.mxu0
      %v1947 = vadd.f32 0.0, %v1946
      %v1948 = vpop.f32.mrf.mxu0
      %1949 = vmatprep.mubr.bf16.mxu0 0
      %1950 = vmatmul.mubr.bf16.gmra.mxu0 %v1774
      %v1951 = vpop.f32.mrf.mxu0
      %v1952 = vadd.f32 0.0, %v1951
      %v1953 = vpop.f32.mrf.mxu0
      %v1954 = vpop.f32.mrf.mxu0
      %v1955 = vadd.f32 0.0, %v1954
      %v1956 = vpop.f32.mrf.mxu0
      %1957 = vmatprep.mubr.bf16.mxu0 0
      %1958 = vmatmul.mubr.bf16.gmra.mxu0 %v1775
      %v1959 = vpop.f32.mrf.mxu0
      %v1960 = vadd.f32 0.0, %v1959
      %v1961 = vpop.f32.mrf.mxu0
      %v1962 = vpop.f32.mrf.mxu0
      %v1963 = vadd.f32 0.0, %v1962
      %v1964 = vpop.f32.mrf.mxu0
      %1965 = vmatprep.mubr.bf16.mxu0 0
      %1966 = vmatmul.mubr.bf16.gmra.mxu0 %v1776
      %v1967 = vpop.f32.mrf.mxu0
      %v1968 = vadd.f32 0.0, %v1967
      %v1969 = vpop.f32.mrf.mxu0
      %v1970 = vpop.f32.mrf.mxu0
      %v1971 = vadd.f32 0.0, %v1970
      %v1972 = vpop.f32.mrf.mxu0
      %1973 = vmatprep.mubr.bf16.mxu0 0
      %1974 = vmatmul.mubr.bf16.gmra.mxu0 %v1777
      %v1975 = vpop.f32.mrf.mxu0
      %v1976 = vadd.f32 0.0, %v1975
      %v1977 = vpop.f32.mrf.mxu0
      %v1978 = vpop.f32.mrf.mxu0
      %v1979 = vadd.f32 0.0, %v1978
      %v1980 = vpop.f32.mrf.mxu0
      %1981 = vmatprep.mubr.bf16.mxu0 0
      %1982 = vmatmul.mubr.bf16.gmra.mxu0 %v1778
      %v1983 = vpop.f32.mrf.mxu0
      %v1984 = vadd.f32 0.0, %v1983
      %v1985 = vpop.f32.mrf.mxu0
      %v1986 = vpop.f32.mrf.mxu0
      %v1987 = vadd.f32 0.0, %v1986
      %v1988 = vpop.f32.mrf.mxu0
      %1989 = vmatprep.mubr.bf16.mxu0 0
      %1990 = vmatmul.mubr.bf16.gmra.mxu0 %v1779
      %v1991 = vpop.f32.mrf.mxu0
      %v1992 = vadd.f32 0.0, %v1991
      %v1993 = vpop.f32.mrf.mxu0
      %v1994 = vpop.f32.mrf.mxu0
      %v1995 = vadd.f32 0.0, %v1994
      %v1996 = vpop.f32.mrf.mxu0
      %1997 = vmatprep.mubr.bf16.mxu0 0
      %1998 = vmatmul.mubr.bf16.gmra.mxu0 %v1780
      %v1999 = vpop.f32.mrf.mxu0
      %v2000 = vadd.f32 0.0, %v1999
      %v2001 = vpop.f32.mrf.mxu0
      %v2002 = vpop.f32.mrf.mxu0
      %v2003 = vadd.f32 0.0, %v2002
      %v2004 = vpop.f32.mrf.mxu0
      %2005 = vdwg.mxu0
      %v2006 = vadd.f32 %v1620, %v1880
      %v2007 = vadd.f32 %v1621, %v1883
      %v2008 = vadd.f32 %v1622, %v1888
      %v2009 = vadd.f32 %v1623, %v1891
      %v2010 = vadd.f32 %v1624, %v1896
      %v2011 = vadd.f32 %v1625, %v1899
      %v2012 = vadd.f32 %v1626, %v1904
      %v2013 = vadd.f32 %v1627, %v1907
      %v2014 = vadd.f32 %v1628, %v1912
      %v2015 = vadd.f32 %v1629, %v1915
      %v2016 = vadd.f32 %v1630, %v1920
      %v2017 = vadd.f32 %v1631, %v1923
      %v2018 = vadd.f32 %v1632, %v1928
      %v2019 = vadd.f32 %v1633, %v1931
      %v2020 = vadd.f32 %v1634, %v1936
      %v2021 = vadd.f32 %v1635, %v1939
      %v2022 = vadd.f32 %v1636, %v1944
      %v2023 = vadd.f32 %v1637, %v1947
      %v2024 = vadd.f32 %v1638, %v1952
      %v2025 = vadd.f32 %v1639, %v1955
      %v2026 = vadd.f32 %v1640, %v1960
      %v2027 = vadd.f32 %v1641, %v1963
      %v2028 = vadd.f32 %v1642, %v1968
      %v2029 = vadd.f32 %v1643, %v1971
      %v2030 = vadd.f32 %v1644, %v1976
      %v2031 = vadd.f32 %v1645, %v1979
      %v2032 = vadd.f32 %v1646, %v1984
      %v2033 = vadd.f32 %v1647, %v1987
      %v2034 = vadd.f32 %v1648, %v1992
      %v2035 = vadd.f32 %v1649, %v1995
      %v2036 = vadd.f32 %v1650, %v2000
      %v2037 = vadd.f32 %v1651, %v2003
      %v2038 = vld [vmem:[%s2] sm:$0x1]
      %v2040 = vlaneseq
      %v2041 = vshrl.u32 %v2040, 7
      %v2042 = vsub.s32 0, %v2041
      %v2043 = vrot.slane %v2038, %v2042
      %v2045 = vadd.f32 %v2006, %v2043
      %v2046 = vadd.f32 %v2007, %v2043
      %v2047 = vadd.f32 %v2008, %v2043
      %v2048 = vadd.f32 %v2009, %v2043
      %v2049 = vadd.f32 %v2010, %v2043
      %v2050 = vadd.f32 %v2011, %v2043
      %v2051 = vadd.f32 %v2012, %v2043
      %v2052 = vadd.f32 %v2013, %v2043
      %v2053 = vadd.f32 %v2014, %v2043
      %v2054 = vadd.f32 %v2015, %v2043
      %v2055 = vadd.f32 %v2016, %v2043
      %v2056 = vadd.f32 %v2017, %v2043
      %v2057 = vadd.f32 %v2018, %v2043
      %v2058 = vadd.f32 %v2019, %v2043
      %v2059 = vadd.f32 %v2020, %v2043
      %v2060 = vadd.f32 %v2021, %v2043
      %v2061 = vadd.f32 %v2022, %v2043
      %v2062 = vadd.f32 %v2023, %v2043
      %v2063 = vadd.f32 %v2024, %v2043
      %v2064 = vadd.f32 %v2025, %v2043
      %v2065 = vadd.f32 %v2026, %v2043
      %v2066 = vadd.f32 %v2027, %v2043
      %v2067 = vadd.f32 %v2028, %v2043
      %v2068 = vadd.f32 %v2029, %v2043
      %v2069 = vadd.f32 %v2030, %v2043
      %v2070 = vadd.f32 %v2031, %v2043
      %v2071 = vadd.f32 %v2032, %v2043
      %v2072 = vadd.f32 %v2033, %v2043
      %v2073 = vadd.f32 %v2034, %v2043
      %v2074 = vadd.f32 %v2035, %v2043
      %v2075 = vadd.f32 %v2036, %v2043
      %v2076 = vadd.f32 %v2037, %v2043
      %v2077 = vmax.f32 %v2045, 0.0
      %v2078 = vmax.f32 %v2046, 0.0
      %v2079 = vmax.f32 %v2047, 0.0
      %v2080 = vmax.f32 %v2048, 0.0
      %v2081 = vmax.f32 %v2049, 0.0
      %v2082 = vmax.f32 %v2050, 0.0
      %v2083 = vmax.f32 %v2051, 0.0
      %v2084 = vmax.f32 %v2052, 0.0
      %v2085 = vmax.f32 %v2053, 0.0
      %v2086 = vmax.f32 %v2054, 0.0
      %v2087 = vmax.f32 %v2055, 0.0
      %v2088 = vmax.f32 %v2056, 0.0
      %v2089 = vmax.f32 %v2057, 0.0
      %v2090 = vmax.f32 %v2058, 0.0
      %v2091 = vmax.f32 %v2059, 0.0
      %v2092 = vmax.f32 %v2060, 0.0
      %v2093 = vmax.f32 %v2061, 0.0
      %v2094 = vmax.f32 %v2062, 0.0
      %v2095 = vmax.f32 %v2063, 0.0
      %v2096 = vmax.f32 %v2064, 0.0
      %v2097 = vmax.f32 %v2065, 0.0
      %v2098 = vmax.f32 %v2066, 0.0
      %v2099 = vmax.f32 %v2067, 0.0
      %v2100 = vmax.f32 %v2068, 0.0
      %v2101 = vmax.f32 %v2069, 0.0
      %v2102 = vmax.f32 %v2070, 0.0
      %v2103 = vmax.f32 %v2071, 0.0
      %v2104 = vmax.f32 %v2072, 0.0
      %v2105 = vmax.f32 %v2073, 0.0
      %v2106 = vmax.f32 %v2074, 0.0
      %v2107 = vmax.f32 %v2075, 0.0
      %v2108 = vmax.f32 %v2076, 0.0
      %v2109 = vpack.c.bf16 %v2078, %v2077
      %v2110 = vpack.c.bf16 %v2080, %v2079
      %v2111 = vpack.c.bf16 %v2082, %v2081
      %v2112 = vpack.c.bf16 %v2084, %v2083
      %v2113 = vpack.c.bf16 %v2086, %v2085
      %v2114 = vpack.c.bf16 %v2088, %v2087
      %v2115 = vpack.c.bf16 %v2090, %v2089
      %v2116 = vpack.c.bf16 %v2092, %v2091
      %v2117 = vpack.c.bf16 %v2094, %v2093
      %v2118 = vpack.c.bf16 %v2096, %v2095
      %v2119 = vpack.c.bf16 %v2098, %v2097
      %v2120 = vpack.c.bf16 %v2100, %v2099
      %v2121 = vpack.c.bf16 %v2102, %v2101
      %v2122 = vpack.c.bf16 %v2104, %v2103
      %v2123 = vpack.c.bf16 %v2106, %v2105
      %v2124 = vpack.c.bf16 %v2108, %v2107
      %v2141 = vunpack.c.l.b16 %v2109
      %v2142 = vunpack.c.h.b16 %v2109
      %v2143 = vunpack.c.l.b16 %v2110
      %v2144 = vunpack.c.h.b16 %v2110
      %v2145 = vunpack.c.l.b16 %v2111
      %v2146 = vunpack.c.h.b16 %v2111
      %v2147 = vunpack.c.l.b16 %v2112
      %v2148 = vunpack.c.h.b16 %v2112
      %v2149 = vunpack.c.l.b16 %v2113
      %v2150 = vunpack.c.h.b16 %v2113
      %v2151 = vunpack.c.l.b16 %v2114
      %v2152 = vunpack.c.h.b16 %v2114
      %v2153 = vunpack.c.l.b16 %v2115
      %v2154 = vunpack.c.h.b16 %v2115
      %v2155 = vunpack.c.l.b16 %v2116
      %v2156 = vunpack.c.h.b16 %v2116
      %v2157 = vunpack.c.l.b16 %v2117
      %v2158 = vunpack.c.h.b16 %v2117
      %v2159 = vunpack.c.l.b16 %v2118
      %v2160 = vunpack.c.h.b16 %v2118
      %v2161 = vunpack.c.l.b16 %v2119
      %v2162 = vunpack.c.h.b16 %v2119
      %v2163 = vunpack.c.l.b16 %v2120
      %v2164 = vunpack.c.h.b16 %v2120
      %v2165 = vunpack.c.l.b16 %v2121
      %v2166 = vunpack.c.h.b16 %v2121
      %v2167 = vunpack.c.l.b16 %v2122
      %v2168 = vunpack.c.h.b16 %v2122
      %v2169 = vunpack.c.l.b16 %v2123
      %v2170 = vunpack.c.h.b16 %v2123
      %v2171 = vunpack.c.l.b16 %v2124
      %v2172 = vunpack.c.h.b16 %v2124
      %v2173 = vpack.c.b16 %v2141, %v2141
      %v2174 = vpack.c.b16 %v2142, %v2142
      %v2175 = vpack.c.b16 %v2143, %v2143
      %v2176 = vpack.c.b16 %v2144, %v2144
      %v2177 = vpack.c.b16 %v2145, %v2145
      %v2178 = vpack.c.b16 %v2146, %v2146
      %v2179 = vpack.c.b16 %v2147, %v2147
      %v2180 = vpack.c.b16 %v2148, %v2148
      %v2181 = vpack.c.b16 %v2149, %v2149
      %v2182 = vpack.c.b16 %v2150, %v2150
      %v2183 = vpack.c.b16 %v2151, %v2151
      %v2184 = vpack.c.b16 %v2152, %v2152
      %v2185 = vpack.c.b16 %v2153, %v2153
      %v2186 = vpack.c.b16 %v2154, %v2154
      %v2187 = vpack.c.b16 %v2155, %v2155
      %v2188 = vpack.c.b16 %v2156, %v2156
      %v2189 = vpack.c.b16 %v2157, %v2157
      %v2190 = vpack.c.b16 %v2158, %v2158
      %v2191 = vpack.c.b16 %v2159, %v2159
      %v2192 = vpack.c.b16 %v2160, %v2160
      %v2193 = vpack.c.b16 %v2161, %v2161
      %v2194 = vpack.c.b16 %v2162, %v2162
      %v2195 = vpack.c.b16 %v2163, %v2163
      %v2196 = vpack.c.b16 %v2164, %v2164
      %v2197 = vpack.c.b16 %v2165, %v2165
      %v2198 = vpack.c.b16 %v2166, %v2166
      %v2199 = vpack.c.b16 %v2167, %v2167
      %v2200 = vpack.c.b16 %v2168, %v2168
      %v2201 = vpack.c.b16 %v2169, %v2169
      %v2202 = vpack.c.b16 %v2170, %v2170
      %v2203 = vpack.c.b16 %v2171, %v2171
      %v2204 = vpack.c.b16 %v2172, %v2172
      %vm2237 = vcmask 257024
      %2238 = vst.msk [vmem:[%s170] sm:$0xf] %vm2237, %v2173
      %2239 = vst.msk [vmem:[%s170 + $0x4] sm:$0xf] %vm2237, %v2174
      %2240 = vst.msk [vmem:[%s170 + $0x8] sm:$0xf] %vm2237, %v2175
      %2241 = vst.msk [vmem:[%s170 + $0xc] sm:$0xf] %vm2237, %v2176
      %2242 = vst.msk [vmem:[%s170 + $0x10] sm:$0xf] %vm2237, %v2177
      %2243 = vst.msk [vmem:[%s170 + $0x14] sm:$0xf] %vm2237, %v2178
      %2244 = vst.msk [vmem:[%s170 + $0x18] sm:$0xf] %vm2237, %v2179
      %2245 = vst.msk [vmem:[%s170 + $0x1c] sm:$0xf] %vm2237, %v2180
      %2246 = vst.msk [vmem:[%s170 + $0x20] sm:$0xf] %vm2237, %v2181
      %2247 = vst.msk [vmem:[%s170 + $0x24] sm:$0xf] %vm2237, %v2182
      %2248 = vst.msk [vmem:[%s170 + $0x28] sm:$0xf] %vm2237, %v2183
      %2249 = vst.msk [vmem:[%s170 + $0x2c] sm:$0xf] %vm2237, %v2184
      %2250 = vst.msk [vmem:[%s170 + $0x30] sm:$0xf] %vm2237, %v2185
      %2251 = vst.msk [vmem:[%s170 + $0x34] sm:$0xf] %vm2237, %v2186
      %2252 = vst.msk [vmem:[%s170 + $0x38] sm:$0xf] %vm2237, %v2187
      %2253 = vst.msk [vmem:[%s170 + $0x3c] sm:$0xf] %vm2237, %v2188
      %2254 = vst.msk [vmem:[%s170 + $0x40] sm:$0xf] %vm2237, %v2189
      %2255 = vst.msk [vmem:[%s170 + $0x44] sm:$0xf] %vm2237, %v2190
      %2256 = vst.msk [vmem:[%s170 + $0x48] sm:$0xf] %vm2237, %v2191
      %2257 = vst.msk [vmem:[%s170 + $0x4c] sm:$0xf] %vm2237, %v2192
      %2258 = vst.msk [vmem:[%s170 + $0x50] sm:$0xf] %vm2237, %v2193
      %2259 = vst.msk [vmem:[%s170 + $0x54] sm:$0xf] %vm2237, %v2194
      %2260 = vst.msk [vmem:[%s170 + $0x58] sm:$0xf] %vm2237, %v2195
      %2261 = vst.msk [vmem:[%s170 + $0x5c] sm:$0xf] %vm2237, %v2196
      %2262 = vst.msk [vmem:[%s170 + $0x60] sm:$0xf] %vm2237, %v2197
      %2263 = vst.msk [vmem:[%s170 + $0x64] sm:$0xf] %vm2237, %v2198
      %2264 = vst.msk [vmem:[%s170 + $0x68] sm:$0xf] %vm2237, %v2199
      %2265 = vst.msk [vmem:[%s170 + $0x6c] sm:$0xf] %vm2237, %v2200
      %2266 = vst.msk [vmem:[%s170 + $0x70] sm:$0xf] %vm2237, %v2201
      %2267 = vst.msk [vmem:[%s170 + $0x74] sm:$0xf] %vm2237, %v2202
      %2268 = vst.msk [vmem:[%s170 + $0x78] sm:$0xf] %vm2237, %v2203
      %2269 = vst.msk [vmem:[%s170 + $0x7c] sm:$0xf] %vm2237, %v2204
      %p2270 = scmp.lt.s32.totalorder %s14, 1
      %s2271 = scalar_select %p2270, %s14, 1
      %s2272 = smul.addr %s2271, 32
      %s2273 = smul.addr %s2272, 4
      %s2274 = scalar_lea.vmem %s3, %s2273
      // Predicated region
      $region33: #{cnn_classifier_forward.5} parent=31 // pred_check
        %p2275 = pneg %p100
      $region34: #{cnn_classifier_forward.5} parent=31 // pred_check_branch
        %2277 = sbr.rel (%p2275) target = $region36
      $region35: #{cnn_classifier_forward.5} parent=31 // pred_region
        _
      $region36: #{cnn_classifier_forward.5} parent=31 // pred_fallthru
        _
    $region32: #{cnn_classifier_forward.5} parent=5 // pred_fallthru
      _
    %p2278 = scmp.le.s32.totalorder 2, %s9
    // Predicated region
    $region37: #{cnn_classifier_forward.5} parent=5 // pred_check
      %p2279 = pneg %p2278
    $region38: #{cnn_classifier_forward.5} parent=5 // pred_check_branch
      %2281 = sbr.rel (%p2279) target = $region40
    $region39: #{cnn_classifier_forward.5} parent=5 // pred_region
      %s2282 = ssub.s32 %s9, 2
      // Predicated region
      $region41: #{cnn_classifier_forward.5} parent=39 // pred_check
        %p2283 = pneg %p106
      $region42: #{cnn_classifier_forward.5} parent=39 // pred_check_branch
        %2285 = sbr.rel (%p2283) target = $region44
      $region43: #{cnn_classifier_forward.5} parent=39 // pred_region
        %p2286 = scmp.lt.s32.totalorder %s15, 1
        %s2287 = scalar_select %p2286, %s15, 1
        %s2288 = smul.addr %s2287, 32
        %s2289 = smul.addr %s2288, 4
        %s2290 = scalar_lea.vmem %s3, %s2289
      $region44: #{cnn_classifier_forward.5} parent=39 // pred_fallthru
        _
    $region40: #{cnn_classifier_forward.5} parent=5 // pred_fallthru
      _
  $region6: #{cnn_classifier_forward.5} parent=0 // loop_footer
    %s13 = sadd.s32 1, %s9
  $region7: #{cnn_classifier_forward.5} parent=0 // loop_footer_branch
    %8 = sbr.rel target = $region3
  $region8: #{cnn_classifier_forward.5} parent=0 // loop_exit
    _

// kernel: cnn_classifier_forward.6
$region0: #{cnn_classifier_forward.6}
  #allocation0 [shape = 'u32[]', space=smem, size = 0x4, offset = 0x4, fixed_abs, tag = 'smem constant byte address 0x4 - core index']
  #allocation1 [shape = 'u32[144,128]{1,0:T(1,128)}', space=vmem, size = 0x12000, scoped, tag = 'internal scratch']
  %s0 = inlined_call_operand.vmem [shape: bf16[2,2,80,256], index: 0, kind: input, shape index: {}]
  %s1 = inlined_call_operand.vmem [shape: bf16[5,256,64], index: 1, kind: input, shape index: {}]
  %s2 = inlined_call_operand.vmem [shape: f32[1,64], index: 2, kind: input, shape index: {}]
  %s3 = inlined_call_operand.vmem [shape: bf16[2,64,64], index: 3, kind: output, shape index: {}]
  %s4 = sld [smem:[#allocation0]]
  $region45: #{cnn_classifier_forward.6} parent=0
    _
  %s6 = ssub.s32 1, %s4
  %s7 = scalar_select 0, %s6, %s4
  loop: start=0, step=1, limit=4
  $region2: #{cnn_classifier_forward.6} parent=0 // loop_pre_header
    _
  $region3: #{cnn_classifier_forward.6} parent=0 // loop_header
    %s9 = sphi 0, %s13
    %p10 = scmp.ge.s32.totalorder %s9, 4
    %s19 = sphi 0, %s21
    %s22 = sphi 0, %s19
    %s23 = sphi 0, %s22
    %s39 = sphi 0, %s23
    %s43 = sphi 0, %s43
    %s45 = sphi 0, %s43
    %s46 = sphi 0, %s45
    %s60 = sphi 0, %s46
    %s64 = sphi 0, %s64
    %s66 = sphi 0, %s64
    %s67 = sphi 0, %s66
    %s81 = sphi 0, %s67
    %s87 = sphi 0, %s89
    %s90 = sphi 0, %s87
    %s91 = sphi 0, %s90
    %s107 = sphi 0, %s91
  $region4: #{cnn_classifier_forward.6} parent=0 // loop_header_branch
    %12 = sbr.rel (%p10) target = $region8
  $region5: #{cnn_classifier_forward.6} parent=0 // loop_body
    %s14 = ssub.s32 %s9, 1
    %s15 = ssub.s32 %s9, 2
    %s16 = sadd.s32 %s9, 1
    %s17 = ssub.s32 %s9, %s16
    %p18 = scmp.eq.s32.totalorder %s17, 0
    %s20 = sadd.s32 %s19, 1
    %s21 = scalar_select %p18, %s19, %s20
    %p24 = pneg %p18
    %p25 = scmp.eq.s32.totalorder %s9, 1
    %p26 = por %p24, %p25
    %p27 = scmp.ne.s32.totalorder %s19, %s22
    %p28 = scmp.eq.s32.totalorder %s9, 0
    %p29 = por %p27, %p28
    %p30 = scmp.ne.s32.totalorder %s19, %s22
    %p31 = scmp.eq.s32.totalorder %s14, 1
    %p32 = por %p30, %p31
    %p33 = scmp.ne.s32.totalorder %s22, %s23
    %p34 = scmp.eq.s32.totalorder %s14, 0
    %p35 = por %p33, %p34
    %p36 = scmp.ne.s32.totalorder %s22, %s23
    %p37 = scmp.eq.s32.totalorder %s15, 1
    %p38 = por %p36, %p37
    %p40 = scmp.ne.s32.totalorder %s23, %s39
    %p41 = scmp.eq.s32.totalorder %s15, 0
    %p42 = por %p40, %p41
    %s44 = sadd.s32 %s43, 1
    %p47 = scmp.eq.s32.totalorder %s9, 1
    %p48 = scmp.ne.s32.totalorder %s43, %s45
    %p49 = scmp.eq.s32.totalorder %s9, 0
    %p50 = por %p48, %p49
    %p51 = scmp.ne.s32.totalorder %s43, %s45
    %p52 = scmp.eq.s32.totalorder %s14, 1
    %p53 = por %p51, %p52
    %p54 = scmp.ne.s32.totalorder %s45, %s46
    %p55 = scmp.eq.s32.totalorder %s14, 0
    %p56 = por %p54, %p55
    %p57 = scmp.ne.s32.totalorder %s45, %s46
    %p58 = scmp.eq.s32.totalorder %s15, 1
    %p59 = por %p57, %p58
    %p61 = scmp.ne.s32.totalorder %s46, %s60
    %p62 = scmp.eq.s32.totalorder %s15, 0
    %p63 = por %p61, %p62
    %s65 = sadd.s32 %s64, 1
    %p68 = scmp.eq.s32.totalorder %s9, 1
    %p69 = scmp.ne.s32.totalorder %s64, %s66
    %p70 = scmp.eq.s32.totalorder %s9, 0
    %p71 = por %p69, %p70
    %p72 = scmp.ne.s32.totalorder %s64, %s66
    %p73 = scmp.eq.s32.totalorder %s14, 1
    %p74 = por %p72, %p73
    %p75 = scmp.ne.s32.totalorder %s66, %s67
    %p76 = scmp.eq.s32.totalorder %s14, 0
    %p77 = por %p75, %p76
    %p78 = scmp.ne.s32.totalorder %s66, %s67
    %p79 = scmp.eq.s32.totalorder %s15, 1
    %p80 = por %p78, %p79
    %p82 = scmp.ne.s32.totalorder %s67, %s81
    %p83 = scmp.eq.s32.totalorder %s15, 0
    %p84 = por %p82, %p83
    %s85 = ssub.s32 %s9, %s16
    %p86 = scmp.eq.s32.totalorder %s85, 0
    %s88 = sadd.s32 %s87, 1
    %s89 = scalar_select %p86, %s87, %s88
    %p92 = pneg %p86
    %p93 = scmp.eq.s32.totalorder %s9, 1
    %p94 = por %p92, %p93
    %p95 = scmp.ne.s32.totalorder %s87, %s90
    %p96 = scmp.eq.s32.totalorder %s9, 0
    %p97 = por %p95, %p96
    %p98 = scmp.ne.s32.totalorder %s87, %s90
    %p99 = scmp.eq.s32.totalorder %s14, 1
    %p100 = por %p98, %p99
    %p101 = scmp.ne.s32.totalorder %s90, %s91
    %p102 = scmp.eq.s32.totalorder %s14, 0
    %p103 = por %p101, %p102
    %p104 = scmp.ne.s32.totalorder %s90, %s91
    %p105 = scmp.eq.s32.totalorder %s15, 1
    %p106 = por %p104, %p105
    %p108 = scmp.ne.s32.totalorder %s91, %s107
    %p109 = scmp.eq.s32.totalorder %s15, 0
    %p110 = por %p108, %p109
    %p111 = scmp.le.s32.totalorder 1, %s9
    %p112 = scmp.lt.s32.totalorder %s9, 3
    %p113 = pnand %p111, %p112
    %p114 = pneg %p113
    // Predicated region
    $region9: #{cnn_classifier_forward.6} parent=5 // pred_check
      _
    $region10: #{cnn_classifier_forward.6} parent=5 // pred_check_branch
      %116 = sbr.rel (%p113) target = $region12
    $region11: #{cnn_classifier_forward.6} parent=5 // pred_region
      %s117 = ssub.s32 %s9, 1
      // Predicated region
      $region13: #{cnn_classifier_forward.6} parent=11 // pred_check
        %p118 = pneg %p56
      $region14: #{cnn_classifier_forward.6} parent=11 // pred_check_branch
        %120 = sbr.rel (%p118) target = $region16
      $region15: #{cnn_classifier_forward.6} parent=11 // pred_region
        _
      $region16: #{cnn_classifier_forward.6} parent=11 // pred_fallthru
        _
      // Predicated region
      $region17: #{cnn_classifier_forward.6} parent=11 // pred_check
        %p121 = pneg %p77
      $region18: #{cnn_classifier_forward.6} parent=11 // pred_check_branch
        %123 = sbr.rel (%p121) target = $region20
      $region19: #{cnn_classifier_forward.6} parent=11 // pred_region
        _
      $region20: #{cnn_classifier_forward.6} parent=11 // pred_fallthru
        _
    $region12: #{cnn_classifier_forward.6} parent=5 // pred_fallthru
      _
    %p124 = scmp.lt.s32.totalorder %s9, 2
    // Predicated region
    $region21: #{cnn_classifier_forward.6} parent=5 // pred_check
      %p125 = pneg %p124
    $region22: #{cnn_classifier_forward.6} parent=5 // pred_check_branch
      %127 = sbr.rel (%p125) target = $region24
    $region23: #{cnn_classifier_forward.6} parent=5 // pred_region
      // Predicated region
      $region25: #{cnn_classifier_forward.6} parent=23 // pred_check
        %p128 = pneg %p29
      $region26: #{cnn_classifier_forward.6} parent=23 // pred_check_branch
        %130 = sbr.rel (%p128) target = $region28
      $region27: #{cnn_classifier_forward.6} parent=23 // pred_region
        %p131 = scmp.lt.s32.totalorder %s9, 1
        %s132 = scalar_select %p131, %s9, 1
        %s133 = smul.addr %s132, 40
        %s134 = smul.addr %s133, 4
        %s135 = scalar_lea.vmem %s0, %s134
      $region28: #{cnn_classifier_forward.6} parent=23 // pred_fallthru
        _
    $region24: #{cnn_classifier_forward.6} parent=5 // pred_fallthru
      _
    %p136 = scmp.le.s32.totalorder 1, %s9
    %p137 = scmp.lt.s32.totalorder %s9, 3
    %p138 = pnand %p136, %p137
    %p139 = pneg %p138
    // Predicated region
    $region29: #{cnn_classifier_forward.6} parent=5 // pred_check
      _
    $region30: #{cnn_classifier_forward.6} parent=5 // pred_check_branch
      %141 = sbr.rel (%p138) target = $region32
    $region31: #{cnn_classifier_forward.6} parent=5 // pred_region
      %s142 = ssub.s32 %s9, 1
      %p143 = scmp.lt.s32.totalorder %s14, 1
      %s144 = scalar_select %p143, %s14, 1
      %s145 = smul.addr %s144, 40
      %s146 = smul.addr %s145, 4
      %s147 = scalar_lea.vmem %s0, %s146
      %p148 = pneg %p35
      %p149 = pneg %p32
      %p150 = pneg %p56
      %p151 = pneg %p53
      %p152 = pneg %p77
      %p153 = pneg %p74
      %p154 = pneg %p103
      %p155 = pneg %p100
      %p156 = scmp.lt.s32.totalorder %s14, 1
      %s157 = scalar_select %p156, %s14, 1
      %s158 = smul.addr %s157, 8
      %s159 = smul.addr %s158, 4
      %s160 = scalar_lea.vmem %s3, %s159
      %p161 = scmp.lt.s32.totalorder %s14, 1
      %s162 = scalar_select %p161, %s14, 1
      %s163 = smul.addr %s162, 40
      %s164 = smul.addr %s163, 4
      %s165 = scalar_lea.vmem %s0, %s164
      %p166 = scmp.lt.s32.totalorder %s14, 1
      %s167 = scalar_select %p166, %s14, 1
      %s168 = smul.addr %s167, 8
      %s169 = smul.addr %s168, 4
      %s170 = scalar_lea.vmem %s3, %s169
      %v172 = vld [vmem:[%s165] sm:$0xff]
      %v173 = vld [vmem:[%s165 + $0x8] sm:$0xff]
      %v174 = vld [vmem:[%s165 + $0x10] sm:$0xff]
      %v175 = vld [vmem:[%s165 + $0x18] sm:$0xff]
      %v176 = vld [vmem:[%s165 + $0x20] sm:$0xff]
      %v177 = vld [vmem:[%s165 + $0x28] sm:$0xff]
      %v178 = vld [vmem:[%s165 + $0x30] sm:$0xff]
      %v179 = vld [vmem:[%s165 + $0x38] sm:$0xff]
      %v180 = vld [vmem:[%s1] sm:$0xf]
      %v181 = vld [vmem:[%s1 + $0x4] sm:$0xf]
      %v182 = vld [vmem:[%s1 + $0x8] sm:$0xf]
      %v183 = vld [vmem:[%s1 + $0xc] sm:$0xf]
      %v184 = vld [vmem:[%s1 + $0x10] sm:$0xf]
      %v185 = vld [vmem:[%s1 + $0x14] sm:$0xf]
      %v186 = vld [vmem:[%s1 + $0x18] sm:$0xf]
      %v187 = vld [vmem:[%s1 + $0x1c] sm:$0xf]
      %v188 = vld [vmem:[%s1 + $0x20] sm:$0xf]
      %v189 = vld [vmem:[%s1 + $0x24] sm:$0xf]
      %v190 = vld [vmem:[%s1 + $0x28] sm:$0xf]
      %v191 = vld [vmem:[%s1 + $0x2c] sm:$0xf]
      %v192 = vld [vmem:[%s1 + $0x30] sm:$0xf]
      %v193 = vld [vmem:[%s1 + $0x34] sm:$0xf]
      %v194 = vld [vmem:[%s1 + $0x38] sm:$0xf]
      %v195 = vld [vmem:[%s1 + $0x3c] sm:$0xf]
      %v196 = vld [vmem:[%s1 + $0x40] sm:$0xf]
      %v197 = vld [vmem:[%s1 + $0x44] sm:$0xf]
      %v198 = vld [vmem:[%s1 + $0x48] sm:$0xf]
      %v199 = vld [vmem:[%s1 + $0x4c] sm:$0xf]
      %v200 = vld [vmem:[%s1 + $0x50] sm:$0xf]
      %v201 = vld [vmem:[%s1 + $0x54] sm:$0xf]
      %v202 = vld [vmem:[%s1 + $0x58] sm:$0xf]
      %v203 = vld [vmem:[%s1 + $0x5c] sm:$0xf]
      %v204 = vld [vmem:[%s1 + $0x60] sm:$0xf]
      %v205 = vld [vmem:[%s1 + $0x64] sm:$0xf]
      %v206 = vld [vmem:[%s1 + $0x68] sm:$0xf]
      %v207 = vld [vmem:[%s1 + $0x6c] sm:$0xf]
      %v208 = vld [vmem:[%s1 + $0x70] sm:$0xf]
      %v209 = vld [vmem:[%s1 + $0x74] sm:$0xf]
      %v210 = vld [vmem:[%s1 + $0x78] sm:$0xf]
      %v211 = vld [vmem:[%s1 + $0x7c] sm:$0xf]
      %s212 = scalar_lea.vmem %s165, 80
      %v213 = vld [vmem:[%s212] sm:$0xff]
      %v214 = vld [vmem:[%s212 + $0x8] sm:$0xff]
      %v215 = vld [vmem:[%s212 + $0x10] sm:$0xff]
      %v216 = vld [vmem:[%s212 + $0x18] sm:$0xff]
      %v217 = vld [vmem:[%s212 + $0x20] sm:$0xff]
      %v218 = vld [vmem:[%s212 + $0x28] sm:$0xff]
      %v219 = vld [vmem:[%s212 + $0x30] sm:$0xff]
      %v220 = vld [vmem:[%s212 + $0x38] sm:$0xff]
      %s221 = scalar_lea.vmem %s1, 128
      %v222 = vld [vmem:[%s221] sm:$0xf]
      %v223 = vld [vmem:[%s221 + $0x4] sm:$0xf]
      %v224 = vld [vmem:[%s221 + $0x8] sm:$0xf]
      %v225 = vld [vmem:[%s221 + $0xc] sm:$0xf]
      %v226 = vld [vmem:[%s221 + $0x10] sm:$0xf]
      %v227 = vld [vmem:[%s221 + $0x14] sm:$0xf]
      %v228 = vld [vmem:[%s221 + $0x18] sm:$0xf]
      %v229 = vld [vmem:[%s221 + $0x1c] sm:$0xf]
      %v230 = vld [vmem:[%s221 + $0x20] sm:$0xf]
      %v231 = vld [vmem:[%s221 + $0x24] sm:$0xf]
      %v232 = vld [vmem:[%s221 + $0x28] sm:$0xf]
      %v233 = vld [vmem:[%s221 + $0x2c] sm:$0xf]
      %v234 = vld [vmem:[%s221 + $0x30] sm:$0xf]
      %v235 = vld [vmem:[%s221 + $0x34] sm:$0xf]
      %v236 = vld [vmem:[%s221 + $0x38] sm:$0xf]
      %v237 = vld [vmem:[%s221 + $0x3c] sm:$0xf]
      %v238 = vld [vmem:[%s221 + $0x40] sm:$0xf]
      %v239 = vld [vmem:[%s221 + $0x44] sm:$0xf]
      %v240 = vld [vmem:[%s221 + $0x48] sm:$0xf]
      %v241 = vld [vmem:[%s221 + $0x4c] sm:$0xf]
      %v242 = vld [vmem:[%s221 + $0x50] sm:$0xf]
      %v243 = vld [vmem:[%s221 + $0x54] sm:$0xf]
      %v244 = vld [vmem:[%s221 + $0x58] sm:$0xf]
      %v245 = vld [vmem:[%s221 + $0x5c] sm:$0xf]
      %v246 = vld [vmem:[%s221 + $0x60] sm:$0xf]
      %v247 = vld [vmem:[%s221 + $0x64] sm:$0xf]
      %v248 = vld [vmem:[%s221 + $0x68] sm:$0xf]
      %v249 = vld [vmem:[%s221 + $0x6c] sm:$0xf]
      %v250 = vld [vmem:[%s221 + $0x70] sm:$0xf]
      %v251 = vld [vmem:[%s221 + $0x74] sm:$0xf]
      %v252 = vld [vmem:[%s221 + $0x78] sm:$0xf]
      %v253 = vld [vmem:[%s221 + $0x7c] sm:$0xf]
      %v262 = vunpack.c.l.b16 %v213
      %v263 = vunpack.c.h.b16 %v213
      %v264 = vunpack.c.l.b16 %v214
      %v265 = vunpack.c.h.b16 %v214
      %v266 = vunpack.c.l.b16 %v215
      %v267 = vunpack.c.h.b16 %v215
      %v268 = vunpack.c.l.b16 %v216
      %v269 = vunpack.c.h.b16 %v216
      %v270 = vunpack.c.l.b16 %v217
      %v271 = vunpack.c.h.b16 %v217
      %v272 = vunpack.c.l.b16 %v218
      %v273 = vunpack.c.h.b16 %v218
      %v274 = vunpack.c.l.b16 %v219
      %v275 = vunpack.c.h.b16 %v219
      %v276 = vunpack.c.l.b16 %v220
      %v277 = vunpack.c.h.b16 %v220
      %v278 = vpack.c.b16 %v264, %v262
      %v279 = vpack.c.b16 %v265, %v263
      %v280 = vpack.c.b16 %v268, %v266
      %v281 = vpack.c.b16 %v269, %v267
      %v282 = vpack.c.b16 %v272, %v270
      %v283 = vpack.c.b16 %v273, %v271
      %v284 = vpack.c.b16 %v276, %v274
      %v285 = vpack.c.b16 %v277, %v275
      %v326 = vunpack.c.l.b16 %v222
      %v327 = vunpack.c.l.b16 %v223
      %v328 = vunpack.c.l.b16 %v224
      %v329 = vunpack.c.l.b16 %v225
      %v330 = vunpack.c.l.b16 %v226
      %v331 = vunpack.c.l.b16 %v227
      %v332 = vunpack.c.l.b16 %v228
      %v333 = vunpack.c.l.b16 %v229
      %v334 = vunpack.c.l.b16 %v230
      %v335 = vunpack.c.l.b16 %v231
      %v336 = vunpack.c.l.b16 %v232
      %v337 = vunpack.c.l.b16 %v233
      %v338 = vunpack.c.l.b16 %v234
      %v339 = vunpack.c.l.b16 %v235
      %v340 = vunpack.c.l.b16 %v236
      %v341 = vunpack.c.l.b16 %v237
      %v342 = vunpack.c.l.b16 %v238
      %v343 = vunpack.c.l.b16 %v239
      %v344 = vunpack.c.l.b16 %v240
      %v345 = vunpack.c.l.b16 %v241
      %v346 = vunpack.c.l.b16 %v242
      %v347 = vunpack.c.l.b16 %v243
      %v348 = vunpack.c.l.b16 %v244
      %v349 = vunpack.c.l.b16 %v245
      %v350 = vunpack.c.l.b16 %v246
      %v351 = vunpack.c.l.b16 %v247
      %v352 = vunpack.c.l.b16 %v248
      %v353 = vunpack.c.l.b16 %v249
      %v354 = vunpack.c.l.b16 %v250
      %v355 = vunpack.c.l.b16 %v251
      %v356 = vunpack.c.l.b16 %v252
      %v357 = vunpack.c.l.b16 %v253
      %v358 = vpack.c.b16 %v327, %v326
      %v359 = vpack.c.b16 %v329, %v328
      %v360 = vpack.c.b16 %v331, %v330
      %v361 = vpack.c.b16 %v333, %v332
      %v362 = vpack.c.b16 %v335, %v334
      %v363 = vpack.c.b16 %v337, %v336
      %v364 = vpack.c.b16 %v339, %v338
      %v365 = vpack.c.b16 %v341, %v340
      %v366 = vpack.c.b16 %v343, %v342
      %v367 = vpack.c.b16 %v345, %v344
      %v368 = vpack.c.b16 %v347, %v346
      %v369 = vpack.c.b16 %v349, %v348
      %v370 = vpack.c.b16 %v351, %v350
      %v371 = vpack.c.b16 %v353, %v352
      %v372 = vpack.c.b16 %v355, %v354
      %v373 = vpack.c.b16 %v357, %v356
      %390 = vmatprep.subr.bf16.mxu0 0
      %391 = vmatpush1.bf16.msra.mxu0 %v365
      %392 = vmatprep.subr.bf16.mxu0 0
      %393 = vmatpush1.bf16.msra.mxu0 %v364
      %394 = vmatprep.subr.bf16.mxu0 0
      %395 = vmatpush1.bf16.msra.mxu0 %v363
      %396 = vmatprep.subr.bf16.mxu0 0
      %397 = vmatpush1.bf16.msra.mxu0 %v362
      %398 = vmatprep.subr.bf16.mxu0 0
      %399 = vmatpush1.bf16.msra.mxu0 %v361
      %400 = vmatprep.subr.bf16.mxu0 0
      %401 = vmatpush1.bf16.msra.mxu0 %v360
      %402 = vmatprep.subr.bf16.mxu0 0
      %403 = vmatpush1.bf16.msra.mxu0 %v359
      %404 = vmatprep.subr.bf16.mxu0 0
      %405 = vmatpush1.bf16.msra.mxu0 %v358
      %406 = vmatprep.subr.bf16.mxu0 0
      %407 = vmatpush2.bf16.msra.mxu0 %v373
      %408 = vmatprep.subr.bf16.mxu0 0
      %409 = vmatpush2.bf16.msra.mxu0 %v372
      %410 = vmatprep.subr.bf16.mxu0 0
      %411 = vmatpush2.bf16.msra.mxu0 %v371
      %412 = vmatprep.subr.bf16.mxu0 0
      %413 = vmatpush2.bf16.msra.mxu0 %v370
      %414 = vmatprep.subr.bf16.mxu0 0
      %415 = vmatpush2.bf16.msra.mxu0 %v369
      %416 = vmatprep.subr.bf16.mxu0 0
      %417 = vmatpush2.bf16.msra.mxu0 %v368
      %418 = vmatprep.subr.bf16.mxu0 0
      %419 = vmatpush2.bf16.msra.mxu0 %v367
      %420 = vmatprep.subr.bf16.mxu0 0
      %421 = vmatpush2.bf16.msra.mxu0 %v366
      %422 = vmatprep.mubr.bf16.mxu0 %v279
      %423 = vmatmul.mubr.bf16.gmra.mxu0 %v278
      %v424 = vpop.f32.mrf.mxu0
      %v425 = vadd.f32 0.0, %v424
      %v426 = vpop.f32.mrf.mxu0
      %v427 = vpop.f32.mrf.mxu0
      %v428 = vadd.f32 0.0, %v427
      %v429 = vpop.f32.mrf.mxu0
      %430 = vmatprep.mubr.bf16.mxu0 %v281
      %431 = vmatmul.mubr.bf16.gmra.mxu0 %v280
      %v432 = vpop.f32.mrf.mxu0
      %v433 = vadd.f32 0.0, %v432
      %v434 = vpop.f32.mrf.mxu0
      %v435 = vpop.f32.mrf.mxu0
      %v436 = vadd.f32 0.0, %v435
      %v437 = vpop.f32.mrf.mxu0
      %438 = vmatprep.mubr.bf16.mxu0 %v283
      %439 = vmatmul.mubr.bf16.gmra.mxu0 %v282
      %v440 = vpop.f32.mrf.mxu0
      %v441 = vadd.f32 0.0, %v440
      %v442 = vpop.f32.mrf.mxu0
      %v443 = vpop.f32.mrf.mxu0
      %v444 = vadd.f32 0.0, %v443
      %v445 = vpop.f32.mrf.mxu0
      %446 = vmatprep.mubr.bf16.mxu0 %v285
      %447 = vmatmul.mubr.bf16.gmra.mxu0 %v284
      %v448 = vpop.f32.mrf.mxu0
      %v449 = vadd.f32 0.0, %v448
      %v450 = vpop.f32.mrf.mxu0
      %v451 = vpop.f32.mrf.mxu0
      %v452 = vadd.f32 0.0, %v451
      %v453 = vpop.f32.mrf.mxu0
      %454 = vdwg.mxu0
      %v463 = vunpack.c.l.b16 %v172
      %v464 = vunpack.c.h.b16 %v172
      %v465 = vunpack.c.l.b16 %v173
      %v466 = vunpack.c.h.b16 %v173
      %v467 = vunpack.c.l.b16 %v174
      %v468 = vunpack.c.h.b16 %v174
      %v469 = vunpack.c.l.b16 %v175
      %v470 = vunpack.c.h.b16 %v175
      %v471 = vunpack.c.l.b16 %v176
      %v472 = vunpack.c.h.b16 %v176
      %v473 = vunpack.c.l.b16 %v177
      %v474 = vunpack.c.h.b16 %v177
      %v475 = vunpack.c.l.b16 %v178
      %v476 = vunpack.c.h.b16 %v178
      %v477 = vunpack.c.l.b16 %v179
      %v478 = vunpack.c.h.b16 %v179
      %v479 = vpack.c.b16 %v465, %v463
      %v480 = vpack.c.b16 %v466, %v464
      %v481 = vpack.c.b16 %v469, %v467
      %v482 = vpack.c.b16 %v470, %v468
      %v483 = vpack.c.b16 %v473, %v471
      %v484 = vpack.c.b16 %v474, %v472
      %v485 = vpack.c.b16 %v477, %v475
      %v486 = vpack.c.b16 %v478, %v476
      %v527 = vunpack.c.l.b16 %v180
      %v528 = vunpack.c.l.b16 %v181
      %v529 = vunpack.c.l.b16 %v182
      %v530 = vunpack.c.l.b16 %v183
      %v531 = vunpack.c.l.b16 %v184
      %v532 = vunpack.c.l.b16 %v185
      %v533 = vunpack.c.l.b16 %v186
      %v534 = vunpack.c.l.b16 %v187
      %v535 = vunpack.c.l.b16 %v188
      %v536 = vunpack.c.l.b16 %v189
      %v537 = vunpack.c.l.b16 %v190
      %v538 = vunpack.c.l.b16 %v191
      %v539 = vunpack.c.l.b16 %v192
      %v540 = vunpack.c.l.b16 %v193
      %v541 = vunpack.c.l.b16 %v194
      %v542 = vunpack.c.l.b16 %v195
      %v543 = vunpack.c.l.b16 %v196
      %v544 = vunpack.c.l.b16 %v197
      %v545 = vunpack.c.l.b16 %v198
      %v546 = vunpack.c.l.b16 %v199
      %v547 = vunpack.c.l.b16 %v200
      %v548 = vunpack.c.l.b16 %v201
      %v549 = vunpack.c.l.b16 %v202
      %v550 = vunpack.c.l.b16 %v203
      %v551 = vunpack.c.l.b16 %v204
      %v552 = vunpack.c.l.b16 %v205
      %v553 = vunpack.c.l.b16 %v206
      %v554 = vunpack.c.l.b16 %v207
      %v555 = vunpack.c.l.b16 %v208
      %v556 = vunpack.c.l.b16 %v209
      %v557 = vunpack.c.l.b16 %v210
      %v558 = vunpack.c.l.b16 %v211
      %v559 = vpack.c.b16 %v528, %v527
      %v560 = vpack.c.b16 %v530, %v529
      %v561 = vpack.c.b16 %v532, %v531
      %v562 = vpack.c.b16 %v534, %v533
      %v563 = vpack.c.b16 %v536, %v535
      %v564 = vpack.c.b16 %v538, %v537
      %v565 = vpack.c.b16 %v540, %v539
      %v566 = vpack.c.b16 %v542, %v541
      %v567 = vpack.c.b16 %v544, %v543
      %v568 = vpack.c.b16 %v546, %v545
      %v569 = vpack.c.b16 %v548, %v547
      %v570 = vpack.c.b16 %v550, %v549
      %v571 = vpack.c.b16 %v552, %v551
      %v572 = vpack.c.b16 %v554, %v553
      %v573 = vpack.c.b16 %v556, %v555
      %v574 = vpack.c.b16 %v558, %v557
      %591 = vmatprep.subr.bf16.mxu0 0
      %592 = vmatpush1.bf16.msra.mxu0 %v566
      %593 = vmatprep.subr.bf16.mxu0 0
      %594 = vmatpush1.bf16.msra.mxu0 %v565
      %595 = vmatprep.subr.bf16.mxu0 0
      %596 = vmatpush1.bf16.msra.mxu0 %v564
      %597 = vmatprep.subr.bf16.mxu0 0
      %598 = vmatpush1.bf16.msra.mxu0 %v563
      %599 = vmatprep.subr.bf16.mxu0 0
      %600 = vmatpush1.bf16.msra.mxu0 %v562
      %601 = vmatprep.subr.bf16.mxu0 0
      %602 = vmatpush1.bf16.msra.mxu0 %v561
      %603 = vmatprep.subr.bf16.mxu0 0
      %604 = vmatpush1.bf16.msra.mxu0 %v560
      %605 = vmatprep.subr.bf16.mxu0 0
      %606 = vmatpush1.bf16.msra.mxu0 %v559
      %607 = vmatprep.subr.bf16.mxu0 0
      %608 = vmatpush2.bf16.msra.mxu0 %v574
      %609 = vmatprep.subr.bf16.mxu0 0
      %610 = vmatpush2.bf16.msra.mxu0 %v573
      %611 = vmatprep.subr.bf16.mxu0 0
      %612 = vmatpush2.bf16.msra.mxu0 %v572
      %613 = vmatprep.subr.bf16.mxu0 0
      %614 = vmatpush2.bf16.msra.mxu0 %v571
      %615 = vmatprep.subr.bf16.mxu0 0
      %616 = vmatpush2.bf16.msra.mxu0 %v570
      %617 = vmatprep.subr.bf16.mxu0 0
      %618 = vmatpush2.bf16.msra.mxu0 %v569
      %619 = vmatprep.subr.bf16.mxu0 0
      %620 = vmatpush2.bf16.msra.mxu0 %v568
      %621 = vmatprep.subr.bf16.mxu0 0
      %622 = vmatpush2.bf16.msra.mxu0 %v567
      %623 = vmatprep.mubr.bf16.mxu0 %v480
      %624 = vmatmul.mubr.bf16.gmra.mxu0 %v479
      %v625 = vpop.f32.mrf.mxu0
      %v626 = vadd.f32 %v425, %v625
      %v627 = vpop.f32.mrf.mxu0
      %v628 = vpop.f32.mrf.mxu0
      %v629 = vadd.f32 %v428, %v628
      %v630 = vpop.f32.mrf.mxu0
      %631 = vmatprep.mubr.bf16.mxu0 %v482
      %632 = vmatmul.mubr.bf16.gmra.mxu0 %v481
      %v633 = vpop.f32.mrf.mxu0
      %v634 = vadd.f32 %v433, %v633
      %v635 = vpop.f32.mrf.mxu0
      %v636 = vpop.f32.mrf.mxu0
      %v637 = vadd.f32 %v436, %v636
      %v638 = vpop.f32.mrf.mxu0
      %639 = vmatprep.mubr.bf16.mxu0 %v484
      %640 = vmatmul.mubr.bf16.gmra.mxu0 %v483
      %v641 = vpop.f32.mrf.mxu0
      %v642 = vadd.f32 %v441, %v641
      %v643 = vpop.f32.mrf.mxu0
      %v644 = vpop.f32.mrf.mxu0
      %v645 = vadd.f32 %v444, %v644
      %v646 = vpop.f32.mrf.mxu0
      %647 = vmatprep.mubr.bf16.mxu0 %v486
      %648 = vmatmul.mubr.bf16.gmra.mxu0 %v485
      %v649 = vpop.f32.mrf.mxu0
      %v650 = vadd.f32 %v449, %v649
      %v651 = vpop.f32.mrf.mxu0
      %v652 = vpop.f32.mrf.mxu0
      %v653 = vadd.f32 %v452, %v652
      %v654 = vpop.f32.mrf.mxu0
      %655 = vdwg.mxu0
      %v656 = vld [vmem:[%s165 + $0x8] sm:$0xff]
      %v657 = vld [vmem:[%s165 + $0x10] sm:$0xff]
      %v658 = vld [vmem:[%s165 + $0x18] sm:$0xff]
      %v659 = vld [vmem:[%s165 + $0x20] sm:$0xff]
      %v660 = vld [vmem:[%s165 + $0x28] sm:$0xff]
      %v661 = vld [vmem:[%s165 + $0x30] sm:$0xff]
      %v662 = vld [vmem:[%s165 + $0x38] sm:$0xff]
      %v663 = vld [vmem:[%s165 + $0x40] sm:$0xff]
      %s664 = scalar_lea.vmem %s1, 256
      %v665 = vld [vmem:[%s664] sm:$0xf]
      %v666 = vld [vmem:[%s664 + $0x4] sm:$0xf]
      %v667 = vld [vmem:[%s664 + $0x8] sm:$0xf]
      %v668 = vld [vmem:[%s664 + $0xc] sm:$0xf]
      %v669 = vld [vmem:[%s664 + $0x10] sm:$0xf]
      %v670 = vld [vmem:[%s664 + $0x14] sm:$0xf]
      %v671 = vld [vmem:[%s664 + $0x18] sm:$0xf]
      %v672 = vld [vmem:[%s664 + $0x1c] sm:$0xf]
      %v673 = vld [vmem:[%s664 + $0x20] sm:$0xf]
      %v674 = vld [vmem:[%s664 + $0x24] sm:$0xf]
      %v675 = vld [vmem:[%s664 + $0x28] sm:$0xf]
      %v676 = vld [vmem:[%s664 + $0x2c] sm:$0xf]
      %v677 = vld [vmem:[%s664 + $0x30] sm:$0xf]
      %v678 = vld [vmem:[%s664 + $0x34] sm:$0xf]
      %v679 = vld [vmem:[%s664 + $0x38] sm:$0xf]
      %v680 = vld [vmem:[%s664 + $0x3c] sm:$0xf]
      %v681 = vld [vmem:[%s664 + $0x40] sm:$0xf]
      %v682 = vld [vmem:[%s664 + $0x44] sm:$0xf]
      %v683 = vld [vmem:[%s664 + $0x48] sm:$0xf]
      %v684 = vld [vmem:[%s664 + $0x4c] sm:$0xf]
      %v685 = vld [vmem:[%s664 + $0x50] sm:$0xf]
      %v686 = vld [vmem:[%s664 + $0x54] sm:$0xf]
      %v687 = vld [vmem:[%s664 + $0x58] sm:$0xf]
      %v688 = vld [vmem:[%s664 + $0x5c] sm:$0xf]
      %v689 = vld [vmem:[%s664 + $0x60] sm:$0xf]
      %v690 = vld [vmem:[%s664 + $0x64] sm:$0xf]
      %v691 = vld [vmem:[%s664 + $0x68] sm:$0xf]
      %v692 = vld [vmem:[%s664 + $0x6c] sm:$0xf]
      %v693 = vld [vmem:[%s664 + $0x70] sm:$0xf]
      %v694 = vld [vmem:[%s664 + $0x74] sm:$0xf]
      %v695 = vld [vmem:[%s664 + $0x78] sm:$0xf]
      %v696 = vld [vmem:[%s664 + $0x7c] sm:$0xf]
      %v705 = vunpack.c.l.b16 %v656
      %v706 = vunpack.c.h.b16 %v656
      %v707 = vunpack.c.l.b16 %v657
      %v708 = vunpack.c.h.b16 %v657
      %v709 = vunpack.c.l.b16 %v658
      %v710 = vunpack.c.h.b16 %v658
      %v711 = vunpack.c.l.b16 %v659
      %v712 = vunpack.c.h.b16 %v659
      %v713 = vunpack.c.l.b16 %v660
      %v714 = vunpack.c.h.b16 %v660
      %v715 = vunpack.c.l.b16 %v661
      %v716 = vunpack.c.h.b16 %v661
      %v717 = vunpack.c.l.b16 %v662
      %v718 = vunpack.c.h.b16 %v662
      %v719 = vunpack.c.l.b16 %v663
      %v720 = vunpack.c.h.b16 %v663
      %v721 = vpack.c.b16 %v707, %v705
      %v722 = vpack.c.b16 %v708, %v706
      %v723 = vpack.c.b16 %v711, %v709
      %v724 = vpack.c.b16 %v712, %v710
      %v725 = vpack.c.b16 %v715, %v713
      %v726 = vpack.c.b16 %v716, %v714
      %v727 = vpack.c.b16 %v719, %v717
      %v728 = vpack.c.b16 %v720, %v718
      %v769 = vunpack.c.l.b16 %v665
      %v770 = vunpack.c.l.b16 %v666
      %v771 = vunpack.c.l.b16 %v667
      %v772 = vunpack.c.l.b16 %v668
      %v773 = vunpack.c.l.b16 %v669
      %v774 = vunpack.c.l.b16 %v670
      %v775 = vunpack.c.l.b16 %v671
      %v776 = vunpack.c.l.b16 %v672
      %v777 = vunpack.c.l.b16 %v673
      %v778 = vunpack.c.l.b16 %v674
      %v779 = vunpack.c.l.b16 %v675
      %v780 = vunpack.c.l.b16 %v676
      %v781 = vunpack.c.l.b16 %v677
      %v782 = vunpack.c.l.b16 %v678
      %v783 = vunpack.c.l.b16 %v679
      %v784 = vunpack.c.l.b16 %v680
      %v785 = vunpack.c.l.b16 %v681
      %v786 = vunpack.c.l.b16 %v682
      %v787 = vunpack.c.l.b16 %v683
      %v788 = vunpack.c.l.b16 %v684
      %v789 = vunpack.c.l.b16 %v685
      %v790 = vunpack.c.l.b16 %v686
      %v791 = vunpack.c.l.b16 %v687
      %v792 = vunpack.c.l.b16 %v688
      %v793 = vunpack.c.l.b16 %v689
      %v794 = vunpack.c.l.b16 %v690
      %v795 = vunpack.c.l.b16 %v691
      %v796 = vunpack.c.l.b16 %v692
      %v797 = vunpack.c.l.b16 %v693
      %v798 = vunpack.c.l.b16 %v694
      %v799 = vunpack.c.l.b16 %v695
      %v800 = vunpack.c.l.b16 %v696
      %v801 = vpack.c.b16 %v770, %v769
      %v802 = vpack.c.b16 %v772, %v771
      %v803 = vpack.c.b16 %v774, %v773
      %v804 = vpack.c.b16 %v776, %v775
      %v805 = vpack.c.b16 %v778, %v777
      %v806 = vpack.c.b16 %v780, %v779
      %v807 = vpack.c.b16 %v782, %v781
      %v808 = vpack.c.b16 %v784, %v783
      %v809 = vpack.c.b16 %v786, %v785
      %v810 = vpack.c.b16 %v788, %v787
      %v811 = vpack.c.b16 %v790, %v789
      %v812 = vpack.c.b16 %v792, %v791
      %v813 = vpack.c.b16 %v794, %v793
      %v814 = vpack.c.b16 %v796, %v795
      %v815 = vpack.c.b16 %v798, %v797
      %v816 = vpack.c.b16 %v800, %v799
      %833 = vmatprep.subr.bf16.mxu0 0
      %834 = vmatpush1.bf16.msra.mxu0 %v808
      %835 = vmatprep.subr.bf16.mxu0 0
      %836 = vmatpush1.bf16.msra.mxu0 %v807
      %837 = vmatprep.subr.bf16.mxu0 0
      %838 = vmatpush1.bf16.msra.mxu0 %v806
      %839 = vmatprep.subr.bf16.mxu0 0
      %840 = vmatpush1.bf16.msra.mxu0 %v805
      %841 = vmatprep.subr.bf16.mxu0 0
      %842 = vmatpush1.bf16.msra.mxu0 %v804
      %843 = vmatprep.subr.bf16.mxu0 0
      %844 = vmatpush1.bf16.msra.mxu0 %v803
      %845 = vmatprep.subr.bf16.mxu0 0
      %846 = vmatpush1.bf16.msra.mxu0 %v802
      %847 = vmatprep.subr.bf16.mxu0 0
      %848 = vmatpush1.bf16.msra.mxu0 %v801
      %849 = vmatprep.subr.bf16.mxu0 0
      %850 = vmatpush2.bf16.msra.mxu0 %v816
      %851 = vmatprep.subr.bf16.mxu0 0
      %852 = vmatpush2.bf16.msra.mxu0 %v815
      %853 = vmatprep.subr.bf16.mxu0 0
      %854 = vmatpush2.bf16.msra.mxu0 %v814
      %855 = vmatprep.subr.bf16.mxu0 0
      %856 = vmatpush2.bf16.msra.mxu0 %v813
      %857 = vmatprep.subr.bf16.mxu0 0
      %858 = vmatpush2.bf16.msra.mxu0 %v812
      %859 = vmatprep.subr.bf16.mxu0 0
      %860 = vmatpush2.bf16.msra.mxu0 %v811
      %861 = vmatprep.subr.bf16.mxu0 0
      %862 = vmatpush2.bf16.msra.mxu0 %v810
      %863 = vmatprep.subr.bf16.mxu0 0
      %864 = vmatpush2.bf16.msra.mxu0 %v809
      %865 = vmatprep.mubr.bf16.mxu0 %v722
      %866 = vmatmul.mubr.bf16.gmra.mxu0 %v721
      %v867 = vpop.f32.mrf.mxu0
      %v868 = vadd.f32 0.0, %v867
      %v869 = vpop.f32.mrf.mxu0
      %v870 = vpop.f32.mrf.mxu0
      %v871 = vadd.f32 0.0, %v870
      %v872 = vpop.f32.mrf.mxu0
      %873 = vmatprep.mubr.bf16.mxu0 %v724
      %874 = vmatmul.mubr.bf16.gmra.mxu0 %v723
      %v875 = vpop.f32.mrf.mxu0
      %v876 = vadd.f32 0.0, %v875
      %v877 = vpop.f32.mrf.mxu0
      %v878 = vpop.f32.mrf.mxu0
      %v879 = vadd.f32 0.0, %v878
      %v880 = vpop.f32.mrf.mxu0
      %881 = vmatprep.mubr.bf16.mxu0 %v726
      %882 = vmatmul.mubr.bf16.gmra.mxu0 %v725
      %v883 = vpop.f32.mrf.mxu0
      %v884 = vadd.f32 0.0, %v883
      %v885 = vpop.f32.mrf.mxu0
      %v886 = vpop.f32.mrf.mxu0
      %v887 = vadd.f32 0.0, %v886
      %v888 = vpop.f32.mrf.mxu0
      %889 = vmatprep.mubr.bf16.mxu0 %v728
      %890 = vmatmul.mubr.bf16.gmra.mxu0 %v727
      %v891 = vpop.f32.mrf.mxu0
      %v892 = vadd.f32 0.0, %v891
      %v893 = vpop.f32.mrf.mxu0
      %v894 = vpop.f32.mrf.mxu0
      %v895 = vadd.f32 0.0, %v894
      %v896 = vpop.f32.mrf.mxu0
      %897 = vdwg.mxu0
      %v898 = vadd.f32 %v626, %v868
      %v899 = vadd.f32 %v629, %v871
      %v900 = vadd.f32 %v634, %v876
      %v901 = vadd.f32 %v637, %v879
      %v902 = vadd.f32 %v642, %v884
      %v903 = vadd.f32 %v645, %v887
      %v904 = vadd.f32 %v650, %v892
      %v905 = vadd.f32 %v653, %v895
      %v906 = vld [vmem:[%s212 + $0x8] sm:$0xff]
      %v907 = vld [vmem:[%s212 + $0x10] sm:$0xff]
      %v908 = vld [vmem:[%s212 + $0x18] sm:$0xff]
      %v909 = vld [vmem:[%s212 + $0x20] sm:$0xff]
      %v910 = vld [vmem:[%s212 + $0x28] sm:$0xff]
      %v911 = vld [vmem:[%s212 + $0x30] sm:$0xff]
      %v912 = vld [vmem:[%s212 + $0x38] sm:$0xff]
      %v913 = vld [vmem:[%s212 + $0x40] sm:$0xff]
      %s914 = scalar_lea.vmem %s1, 384
      %v915 = vld [vmem:[%s914] sm:$0xf]
      %v916 = vld [vmem:[%s914 + $0x4] sm:$0xf]
      %v917 = vld [vmem:[%s914 + $0x8] sm:$0xf]
      %v918 = vld [vmem:[%s914 + $0xc] sm:$0xf]
      %v919 = vld [vmem:[%s914 + $0x10] sm:$0xf]
      %v920 = vld [vmem:[%s914 + $0x14] sm:$0xf]
      %v921 = vld [vmem:[%s914 + $0x18] sm:$0xf]
      %v922 = vld [vmem:[%s914 + $0x1c] sm:$0xf]
      %v923 = vld [vmem:[%s914 + $0x20] sm:$0xf]
      %v924 = vld [vmem:[%s914 + $0x24] sm:$0xf]
      %v925 = vld [vmem:[%s914 + $0x28] sm:$0xf]
      %v926 = vld [vmem:[%s914 + $0x2c] sm:$0xf]
      %v927 = vld [vmem:[%s914 + $0x30] sm:$0xf]
      %v928 = vld [vmem:[%s914 + $0x34] sm:$0xf]
      %v929 = vld [vmem:[%s914 + $0x38] sm:$0xf]
      %v930 = vld [vmem:[%s914 + $0x3c] sm:$0xf]
      %v931 = vld [vmem:[%s914 + $0x40] sm:$0xf]
      %v932 = vld [vmem:[%s914 + $0x44] sm:$0xf]
      %v933 = vld [vmem:[%s914 + $0x48] sm:$0xf]
      %v934 = vld [vmem:[%s914 + $0x4c] sm:$0xf]
      %v935 = vld [vmem:[%s914 + $0x50] sm:$0xf]
      %v936 = vld [vmem:[%s914 + $0x54] sm:$0xf]
      %v937 = vld [vmem:[%s914 + $0x58] sm:$0xf]
      %v938 = vld [vmem:[%s914 + $0x5c] sm:$0xf]
      %v939 = vld [vmem:[%s914 + $0x60] sm:$0xf]
      %v940 = vld [vmem:[%s914 + $0x64] sm:$0xf]
      %v941 = vld [vmem:[%s914 + $0x68] sm:$0xf]
      %v942 = vld [vmem:[%s914 + $0x6c] sm:$0xf]
      %v943 = vld [vmem:[%s914 + $0x70] sm:$0xf]
      %v944 = vld [vmem:[%s914 + $0x74] sm:$0xf]
      %v945 = vld [vmem:[%s914 + $0x78] sm:$0xf]
      %v946 = vld [vmem:[%s914 + $0x7c] sm:$0xf]
      %v955 = vunpack.c.l.b16 %v906
      %v956 = vunpack.c.h.b16 %v906
      %v957 = vunpack.c.l.b16 %v907
      %v958 = vunpack.c.h.b16 %v907
      %v959 = vunpack.c.l.b16 %v908
      %v960 = vunpack.c.h.b16 %v908
      %v961 = vunpack.c.l.b16 %v909
      %v962 = vunpack.c.h.b16 %v909
      %v963 = vunpack.c.l.b16 %v910
      %v964 = vunpack.c.h.b16 %v910
      %v965 = vunpack.c.l.b16 %v911
      %v966 = vunpack.c.h.b16 %v911
      %v967 = vunpack.c.l.b16 %v912
      %v968 = vunpack.c.h.b16 %v912
      %v969 = vunpack.c.l.b16 %v913
      %v970 = vunpack.c.h.b16 %v913
      %v971 = vpack.c.b16 %v957, %v955
      %v972 = vpack.c.b16 %v958, %v956
      %v973 = vpack.c.b16 %v961, %v959
      %v974 = vpack.c.b16 %v962, %v960
      %v975 = vpack.c.b16 %v965, %v963
      %v976 = vpack.c.b16 %v966, %v964
      %v977 = vpack.c.b16 %v969, %v967
      %v978 = vpack.c.b16 %v970, %v968
      %v1019 = vunpack.c.l.b16 %v915
      %v1020 = vunpack.c.l.b16 %v916
      %v1021 = vunpack.c.l.b16 %v917
      %v1022 = vunpack.c.l.b16 %v918
      %v1023 = vunpack.c.l.b16 %v919
      %v1024 = vunpack.c.l.b16 %v920
      %v1025 = vunpack.c.l.b16 %v921
      %v1026 = vunpack.c.l.b16 %v922
      %v1027 = vunpack.c.l.b16 %v923
      %v1028 = vunpack.c.l.b16 %v924
      %v1029 = vunpack.c.l.b16 %v925
      %v1030 = vunpack.c.l.b16 %v926
      %v1031 = vunpack.c.l.b16 %v927
      %v1032 = vunpack.c.l.b16 %v928
      %v1033 = vunpack.c.l.b16 %v929
      %v1034 = vunpack.c.l.b16 %v930
      %v1035 = vunpack.c.l.b16 %v931
      %v1036 = vunpack.c.l.b16 %v932
      %v1037 = vunpack.c.l.b16 %v933
      %v1038 = vunpack.c.l.b16 %v934
      %v1039 = vunpack.c.l.b16 %v935
      %v1040 = vunpack.c.l.b16 %v936
      %v1041 = vunpack.c.l.b16 %v937
      %v1042 = vunpack.c.l.b16 %v938
      %v1043 = vunpack.c.l.b16 %v939
      %v1044 = vunpack.c.l.b16 %v940
      %v1045 = vunpack.c.l.b16 %v941
      %v1046 = vunpack.c.l.b16 %v942
      %v1047 = vunpack.c.l.b16 %v943
      %v1048 = vunpack.c.l.b16 %v944
      %v1049 = vunpack.c.l.b16 %v945
      %v1050 = vunpack.c.l.b16 %v946
      %v1051 = vpack.c.b16 %v1020, %v1019
      %v1052 = vpack.c.b16 %v1022, %v1021
      %v1053 = vpack.c.b16 %v1024, %v1023
      %v1054 = vpack.c.b16 %v1026, %v1025
      %v1055 = vpack.c.b16 %v1028, %v1027
      %v1056 = vpack.c.b16 %v1030, %v1029
      %v1057 = vpack.c.b16 %v1032, %v1031
      %v1058 = vpack.c.b16 %v1034, %v1033
      %v1059 = vpack.c.b16 %v1036, %v1035
      %v1060 = vpack.c.b16 %v1038, %v1037
      %v1061 = vpack.c.b16 %v1040, %v1039
      %v1062 = vpack.c.b16 %v1042, %v1041
      %v1063 = vpack.c.b16 %v1044, %v1043
      %v1064 = vpack.c.b16 %v1046, %v1045
      %v1065 = vpack.c.b16 %v1048, %v1047
      %v1066 = vpack.c.b16 %v1050, %v1049
      %1083 = vmatprep.subr.bf16.mxu0 0
      %1084 = vmatpush1.bf16.msra.mxu0 %v1058
      %1085 = vmatprep.subr.bf16.mxu0 0
      %1086 = vmatpush1.bf16.msra.mxu0 %v1057
      %1087 = vmatprep.subr.bf16.mxu0 0
      %1088 = vmatpush1.bf16.msra.mxu0 %v1056
      %1089 = vmatprep.subr.bf16.mxu0 0
      %1090 = vmatpush1.bf16.msra.mxu0 %v1055
      %1091 = vmatprep.subr.bf16.mxu0 0
      %1092 = vmatpush1.bf16.msra.mxu0 %v1054
      %1093 = vmatprep.subr.bf16.mxu0 0
      %1094 = vmatpush1.bf16.msra.mxu0 %v1053
      %1095 = vmatprep.subr.bf16.mxu0 0
      %1096 = vmatpush1.bf16.msra.mxu0 %v1052
      %1097 = vmatprep.subr.bf16.mxu0 0
      %1098 = vmatpush1.bf16.msra.mxu0 %v1051
      %1099 = vmatprep.subr.bf16.mxu0 0
      %1100 = vmatpush2.bf16.msra.mxu0 %v1066
      %1101 = vmatprep.subr.bf16.mxu0 0
      %1102 = vmatpush2.bf16.msra.mxu0 %v1065
      %1103 = vmatprep.subr.bf16.mxu0 0
      %1104 = vmatpush2.bf16.msra.mxu0 %v1064
      %1105 = vmatprep.subr.bf16.mxu0 0
      %1106 = vmatpush2.bf16.msra.mxu0 %v1063
      %1107 = vmatprep.subr.bf16.mxu0 0
      %1108 = vmatpush2.bf16.msra.mxu0 %v1062
      %1109 = vmatprep.subr.bf16.mxu0 0
      %1110 = vmatpush2.bf16.msra.mxu0 %v1061
      %1111 = vmatprep.subr.bf16.mxu0 0
      %1112 = vmatpush2.bf16.msra.mxu0 %v1060
      %1113 = vmatprep.subr.bf16.mxu0 0
      %1114 = vmatpush2.bf16.msra.mxu0 %v1059
      %1115 = vmatprep.mubr.bf16.mxu0 %v972
      %1116 = vmatmul.mubr.bf16.gmra.mxu0 %v971
      %v1117 = vpop.f32.mrf.mxu0
      %v1118 = vadd.f32 0.0, %v1117
      %v1119 = vpop.f32.mrf.mxu0
      %v1120 = vpop.f32.mrf.mxu0
      %v1121 = vadd.f32 0.0, %v1120
      %v1122 = vpop.f32.mrf.mxu0
      %1123 = vmatprep.mubr.bf16.mxu0 %v974
      %1124 = vmatmul.mubr.bf16.gmra.mxu0 %v973
      %v1125 = vpop.f32.mrf.mxu0
      %v1126 = vadd.f32 0.0, %v1125
      %v1127 = vpop.f32.mrf.mxu0
      %v1128 = vpop.f32.mrf.mxu0
      %v1129 = vadd.f32 0.0, %v1128
      %v1130 = vpop.f32.mrf.mxu0
      %1131 = vmatprep.mubr.bf16.mxu0 %v976
      %1132 = vmatmul.mubr.bf16.gmra.mxu0 %v975
      %v1133 = vpop.f32.mrf.mxu0
      %v1134 = vadd.f32 0.0, %v1133
      %v1135 = vpop.f32.mrf.mxu0
      %v1136 = vpop.f32.mrf.mxu0
      %v1137 = vadd.f32 0.0, %v1136
      %v1138 = vpop.f32.mrf.mxu0
      %1139 = vmatprep.mubr.bf16.mxu0 %v978
      %1140 = vmatmul.mubr.bf16.gmra.mxu0 %v977
      %v1141 = vpop.f32.mrf.mxu0
      %v1142 = vadd.f32 0.0, %v1141
      %v1143 = vpop.f32.mrf.mxu0
      %v1144 = vpop.f32.mrf.mxu0
      %v1145 = vadd.f32 0.0, %v1144
      %v1146 = vpop.f32.mrf.mxu0
      %1147 = vdwg.mxu0
      %v1148 = vadd.f32 %v898, %v1118
      %v1149 = vadd.f32 %v899, %v1121
      %v1150 = vadd.f32 %v900, %v1126
      %v1151 = vadd.f32 %v901, %v1129
      %v1152 = vadd.f32 %v902, %v1134
      %v1153 = vadd.f32 %v903, %v1137
      %v1154 = vadd.f32 %v904, %v1142
      %v1155 = vadd.f32 %v905, %v1145
      %v1156 = vld [vmem:[%s165 + $0x10] sm:$0xff]
      %v1157 = vld [vmem:[%s165 + $0x18] sm:$0xff]
      %v1158 = vld [vmem:[%s165 + $0x20] sm:$0xff]
      %v1159 = vld [vmem:[%s165 + $0x28] sm:$0xff]
      %v1160 = vld [vmem:[%s165 + $0x30] sm:$0xff]
      %v1161 = vld [vmem:[%s165 + $0x38] sm:$0xff]
      %v1162 = vld [vmem:[%s165 + $0x40] sm:$0xff]
      %v1163 = vld [vmem:[%s165 + $0x48] sm:$0xff]
      %s1164 = scalar_lea.vmem %s1, 512
      %v1165 = vld [vmem:[%s1164] sm:$0xf]
      %v1166 = vld [vmem:[%s1164 + $0x4] sm:$0xf]
      %v1167 = vld [vmem:[%s1164 + $0x8] sm:$0xf]
      %v1168 = vld [vmem:[%s1164 + $0xc] sm:$0xf]
      %v1169 = vld [vmem:[%s1164 + $0x10] sm:$0xf]
      %v1170 = vld [vmem:[%s1164 + $0x14] sm:$0xf]
      %v1171 = vld [vmem:[%s1164 + $0x18] sm:$0xf]
      %v1172 = vld [vmem:[%s1164 + $0x1c] sm:$0xf]
      %v1173 = vld [vmem:[%s1164 + $0x20] sm:$0xf]
      %v1174 = vld [vmem:[%s1164 + $0x24] sm:$0xf]
      %v1175 = vld [vmem:[%s1164 + $0x28] sm:$0xf]
      %v1176 = vld [vmem:[%s1164 + $0x2c] sm:$0xf]
      %v1177 = vld [vmem:[%s1164 + $0x30] sm:$0xf]
      %v1178 = vld [vmem:[%s1164 + $0x34] sm:$0xf]
      %v1179 = vld [vmem:[%s1164 + $0x38] sm:$0xf]
      %v1180 = vld [vmem:[%s1164 + $0x3c] sm:$0xf]
      %v1181 = vld [vmem:[%s1164 + $0x40] sm:$0xf]
      %v1182 = vld [vmem:[%s1164 + $0x44] sm:$0xf]
      %v1183 = vld [vmem:[%s1164 + $0x48] sm:$0xf]
      %v1184 = vld [vmem:[%s1164 + $0x4c] sm:$0xf]
      %v1185 = vld [vmem:[%s1164 + $0x50] sm:$0xf]
      %v1186 = vld [vmem:[%s1164 + $0x54] sm:$0xf]
      %v1187 = vld [vmem:[%s1164 + $0x58] sm:$0xf]
      %v1188 = vld [vmem:[%s1164 + $0x5c] sm:$0xf]
      %v1189 = vld [vmem:[%s1164 + $0x60] sm:$0xf]
      %v1190 = vld [vmem:[%s1164 + $0x64] sm:$0xf]
      %v1191 = vld [vmem:[%s1164 + $0x68] sm:$0xf]
      %v1192 = vld [vmem:[%s1164 + $0x6c] sm:$0xf]
      %v1193 = vld [vmem:[%s1164 + $0x70] sm:$0xf]
      %v1194 = vld [vmem:[%s1164 + $0x74] sm:$0xf]
      %v1195 = vld [vmem:[%s1164 + $0x78] sm:$0xf]
      %v1196 = vld [vmem:[%s1164 + $0x7c] sm:$0xf]
      %v1205 = vunpack.c.l.b16 %v1156
      %v1206 = vunpack.c.h.b16 %v1156
      %v1207 = vunpack.c.l.b16 %v1157
      %v1208 = vunpack.c.h.b16 %v1157
      %v1209 = vunpack.c.l.b16 %v1158
      %v1210 = vunpack.c.h.b16 %v1158
      %v1211 = vunpack.c.l.b16 %v1159
      %v1212 = vunpack.c.h.b16 %v1159
      %v1213 = vunpack.c.l.b16 %v1160
      %v1214 = vunpack.c.h.b16 %v1160
      %v1215 = vunpack.c.l.b16 %v1161
      %v1216 = vunpack.c.h.b16 %v1161
      %v1217 = vunpack.c.l.b16 %v1162
      %v1218 = vunpack.c.h.b16 %v1162
      %v1219 = vunpack.c.l.b16 %v1163
      %v1220 = vunpack.c.h.b16 %v1163
      %v1221 = vpack.c.b16 %v1207, %v1205
      %v1222 = vpack.c.b16 %v1208, %v1206
      %v1223 = vpack.c.b16 %v1211, %v1209
      %v1224 = vpack.c.b16 %v1212, %v1210
      %v1225 = vpack.c.b16 %v1215, %v1213
      %v1226 = vpack.c.b16 %v1216, %v1214
      %v1227 = vpack.c.b16 %v1219, %v1217
      %v1228 = vpack.c.b16 %v1220, %v1218
      %v1269 = vunpack.c.l.b16 %v1165
      %v1270 = vunpack.c.l.b16 %v1166
      %v1271 = vunpack.c.l.b16 %v1167
      %v1272 = vunpack.c.l.b16 %v1168
      %v1273 = vunpack.c.l.b16 %v1169
      %v1274 = vunpack.c.l.b16 %v1170
      %v1275 = vunpack.c.l.b16 %v1171
      %v1276 = vunpack.c.l.b16 %v1172
      %v1277 = vunpack.c.l.b16 %v1173
      %v1278 = vunpack.c.l.b16 %v1174
      %v1279 = vunpack.c.l.b16 %v1175
      %v1280 = vunpack.c.l.b16 %v1176
      %v1281 = vunpack.c.l.b16 %v1177
      %v1282 = vunpack.c.l.b16 %v1178
      %v1283 = vunpack.c.l.b16 %v1179
      %v1284 = vunpack.c.l.b16 %v1180
      %v1285 = vunpack.c.l.b16 %v1181
      %v1286 = vunpack.c.l.b16 %v1182
      %v1287 = vunpack.c.l.b16 %v1183
      %v1288 = vunpack.c.l.b16 %v1184
      %v1289 = vunpack.c.l.b16 %v1185
      %v1290 = vunpack.c.l.b16 %v1186
      %v1291 = vunpack.c.l.b16 %v1187
      %v1292 = vunpack.c.l.b16 %v1188
      %v1293 = vunpack.c.l.b16 %v1189
      %v1294 = vunpack.c.l.b16 %v1190
      %v1295 = vunpack.c.l.b16 %v1191
      %v1296 = vunpack.c.l.b16 %v1192
      %v1297 = vunpack.c.l.b16 %v1193
      %v1298 = vunpack.c.l.b16 %v1194
      %v1299 = vunpack.c.l.b16 %v1195
      %v1300 = vunpack.c.l.b16 %v1196
      %v1301 = vpack.c.b16 %v1270, %v1269
      %v1302 = vpack.c.b16 %v1272, %v1271
      %v1303 = vpack.c.b16 %v1274, %v1273
      %v1304 = vpack.c.b16 %v1276, %v1275
      %v1305 = vpack.c.b16 %v1278, %v1277
      %v1306 = vpack.c.b16 %v1280, %v1279
      %v1307 = vpack.c.b16 %v1282, %v1281
      %v1308 = vpack.c.b16 %v1284, %v1283
      %v1309 = vpack.c.b16 %v1286, %v1285
      %v1310 = vpack.c.b16 %v1288, %v1287
      %v1311 = vpack.c.b16 %v1290, %v1289
      %v1312 = vpack.c.b16 %v1292, %v1291
      %v1313 = vpack.c.b16 %v1294, %v1293
      %v1314 = vpack.c.b16 %v1296, %v1295
      %v1315 = vpack.c.b16 %v1298, %v1297
      %v1316 = vpack.c.b16 %v1300, %v1299
      %1333 = vmatprep.subr.bf16.mxu0 0
      %1334 = vmatpush1.bf16.msra.mxu0 %v1308
      %1335 = vmatprep.subr.bf16.mxu0 0
      %1336 = vmatpush1.bf16.msra.mxu0 %v1307
      %1337 = vmatprep.subr.bf16.mxu0 0
      %1338 = vmatpush1.bf16.msra.mxu0 %v1306
      %1339 = vmatprep.subr.bf16.mxu0 0
      %1340 = vmatpush1.bf16.msra.mxu0 %v1305
      %1341 = vmatprep.subr.bf16.mxu0 0
      %1342 = vmatpush1.bf16.msra.mxu0 %v1304
      %1343 = vmatprep.subr.bf16.mxu0 0
      %1344 = vmatpush1.bf16.msra.mxu0 %v1303
      %1345 = vmatprep.subr.bf16.mxu0 0
      %1346 = vmatpush1.bf16.msra.mxu0 %v1302
      %1347 = vmatprep.subr.bf16.mxu0 0
      %1348 = vmatpush1.bf16.msra.mxu0 %v1301
      %1349 = vmatprep.subr.bf16.mxu0 0
      %1350 = vmatpush2.bf16.msra.mxu0 %v1316
      %1351 = vmatprep.subr.bf16.mxu0 0
      %1352 = vmatpush2.bf16.msra.mxu0 %v1315
      %1353 = vmatprep.subr.bf16.mxu0 0
      %1354 = vmatpush2.bf16.msra.mxu0 %v1314
      %1355 = vmatprep.subr.bf16.mxu0 0
      %1356 = vmatpush2.bf16.msra.mxu0 %v1313
      %1357 = vmatprep.subr.bf16.mxu0 0
      %1358 = vmatpush2.bf16.msra.mxu0 %v1312
      %1359 = vmatprep.subr.bf16.mxu0 0
      %1360 = vmatpush2.bf16.msra.mxu0 %v1311
      %1361 = vmatprep.subr.bf16.mxu0 0
      %1362 = vmatpush2.bf16.msra.mxu0 %v1310
      %1363 = vmatprep.subr.bf16.mxu0 0
      %1364 = vmatpush2.bf16.msra.mxu0 %v1309
      %1365 = vmatprep.mubr.bf16.mxu0 %v1222
      %1366 = vmatmul.mubr.bf16.gmra.mxu0 %v1221
      %v1367 = vpop.f32.mrf.mxu0
      %v1368 = vadd.f32 0.0, %v1367
      %v1369 = vpop.f32.mrf.mxu0
      %v1370 = vpop.f32.mrf.mxu0
      %v1371 = vadd.f32 0.0, %v1370
      %v1372 = vpop.f32.mrf.mxu0
      %1373 = vmatprep.mubr.bf16.mxu0 %v1224
      %1374 = vmatmul.mubr.bf16.gmra.mxu0 %v1223
      %v1375 = vpop.f32.mrf.mxu0
      %v1376 = vadd.f32 0.0, %v1375
      %v1377 = vpop.f32.mrf.mxu0
      %v1378 = vpop.f32.mrf.mxu0
      %v1379 = vadd.f32 0.0, %v1378
      %v1380 = vpop.f32.mrf.mxu0
      %1381 = vmatprep.mubr.bf16.mxu0 %v1226
      %1382 = vmatmul.mubr.bf16.gmra.mxu0 %v1225
      %v1383 = vpop.f32.mrf.mxu0
      %v1384 = vadd.f32 0.0, %v1383
      %v1385 = vpop.f32.mrf.mxu0
      %v1386 = vpop.f32.mrf.mxu0
      %v1387 = vadd.f32 0.0, %v1386
      %v1388 = vpop.f32.mrf.mxu0
      %1389 = vmatprep.mubr.bf16.mxu0 %v1228
      %1390 = vmatmul.mubr.bf16.gmra.mxu0 %v1227
      %v1391 = vpop.f32.mrf.mxu0
      %v1392 = vadd.f32 0.0, %v1391
      %v1393 = vpop.f32.mrf.mxu0
      %v1394 = vpop.f32.mrf.mxu0
      %v1395 = vadd.f32 0.0, %v1394
      %v1396 = vpop.f32.mrf.mxu0
      %1397 = vdwg.mxu0
      %v1398 = vadd.f32 %v1148, %v1368
      %v1399 = vadd.f32 %v1149, %v1371
      %v1400 = vadd.f32 %v1150, %v1376
      %v1401 = vadd.f32 %v1151, %v1379
      %v1402 = vadd.f32 %v1152, %v1384
      %v1403 = vadd.f32 %v1153, %v1387
      %v1404 = vadd.f32 %v1154, %v1392
      %v1405 = vadd.f32 %v1155, %v1395
      %v1406 = vld [vmem:[%s2] sm:$0x1]
      %v1408 = vlaneseq
      %v1409 = vshrl.u32 %v1408, 7
      %v1410 = vsub.s32 0, %v1409
      %v1411 = vrot.slane %v1406, %v1410
      %v1413 = vadd.f32 %v1398, %v1411
      %v1414 = vadd.f32 %v1399, %v1411
      %v1415 = vadd.f32 %v1400, %v1411
      %v1416 = vadd.f32 %v1401, %v1411
      %v1417 = vadd.f32 %v1402, %v1411
      %v1418 = vadd.f32 %v1403, %v1411
      %v1419 = vadd.f32 %v1404, %v1411
      %v1420 = vadd.f32 %v1405, %v1411
      %v1421 = vmax.f32 %v1413, 0.0
      %v1422 = vmax.f32 %v1414, 0.0
      %v1423 = vmax.f32 %v1415, 0.0
      %v1424 = vmax.f32 %v1416, 0.0
      %v1425 = vmax.f32 %v1417, 0.0
      %v1426 = vmax.f32 %v1418, 0.0
      %v1427 = vmax.f32 %v1419, 0.0
      %v1428 = vmax.f32 %v1420, 0.0
      %v1429 = vpack.c.bf16 %v1422, %v1421
      %v1430 = vpack.c.bf16 %v1424, %v1423
      %v1431 = vpack.c.bf16 %v1426, %v1425
      %v1432 = vpack.c.bf16 %v1428, %v1427
      %v1437 = vunpack.c.l.b16 %v1429
      %v1438 = vunpack.c.h.b16 %v1429
      %v1439 = vunpack.c.l.b16 %v1430
      %v1440 = vunpack.c.h.b16 %v1430
      %v1441 = vunpack.c.l.b16 %v1431
      %v1442 = vunpack.c.h.b16 %v1431
      %v1443 = vunpack.c.l.b16 %v1432
      %v1444 = vunpack.c.h.b16 %v1432
      %v1445 = vpack.c.b16 %v1437, %v1437
      %v1446 = vpack.c.b16 %v1438, %v1438
      %v1447 = vpack.c.b16 %v1439, %v1439
      %v1448 = vpack.c.b16 %v1440, %v1440
      %v1449 = vpack.c.b16 %v1441, %v1441
      %v1450 = vpack.c.b16 %v1442, %v1442
      %v1451 = vpack.c.b16 %v1443, %v1443
      %v1452 = vpack.c.b16 %v1444, %v1444
      %vm1461 = vcmask 519168
      %1462 = vst.msk [vmem:[%s170] sm:$0xf] %vm1461, %v1445
      %1463 = vst.msk [vmem:[%s170 + $0x4] sm:$0xf] %vm1461, %v1446
      %1464 = vst.msk [vmem:[%s170 + $0x8] sm:$0xf] %vm1461, %v1447
      %1465 = vst.msk [vmem:[%s170 + $0xc] sm:$0xf] %vm1461, %v1448
      %1466 = vst.msk [vmem:[%s170 + $0x10] sm:$0xf] %vm1461, %v1449
      %1467 = vst.msk [vmem:[%s170 + $0x14] sm:$0xf] %vm1461, %v1450
      %1468 = vst.msk [vmem:[%s170 + $0x18] sm:$0xf] %vm1461, %v1451
      %1469 = vst.msk [vmem:[%s170 + $0x1c] sm:$0xf] %vm1461, %v1452
      %p1470 = scmp.lt.s32.totalorder %s14, 1
      %s1471 = scalar_select %p1470, %s14, 1
      %s1472 = smul.addr %s1471, 8
      %s1473 = smul.addr %s1472, 4
      %s1474 = scalar_lea.vmem %s3, %s1473
      // Predicated region
      $region33: #{cnn_classifier_forward.6} parent=31 // pred_check
        %p1475 = pneg %p100
      $region34: #{cnn_classifier_forward.6} parent=31 // pred_check_branch
        %1477 = sbr.rel (%p1475) target = $region36
      $region35: #{cnn_classifier_forward.6} parent=31 // pred_region
        _
      $region36: #{cnn_classifier_forward.6} parent=31 // pred_fallthru
        _
    $region32: #{cnn_classifier_forward.6} parent=5 // pred_fallthru
      _
    %p1478 = scmp.le.s32.totalorder 2, %s9
    // Predicated region
    $region37: #{cnn_classifier_forward.6} parent=5 // pred_check
      %p1479 = pneg %p1478
    $region38: #{cnn_classifier_forward.6} parent=5 // pred_check_branch
      %1481 = sbr.rel (%p1479) target = $region40
    $region39: #{cnn_classifier_forward.6} parent=5 // pred_region
      %s1482 = ssub.s32 %s9, 2
      // Predicated region
      $region41: #{cnn_classifier_forward.6} parent=39 // pred_check
        %p1483 = pneg %p106
      $region42: #{cnn_classifier_forward.6} parent=39 // pred_check_branch
        %1485 = sbr.rel (%p1483) target = $region44
      $region43: #{cnn_classifier_forward.6} parent=39 // pred_region
        %p1486 = scmp.lt.s32.totalorder %s15, 1
        %s1487 = scalar_select %p1486, %s15, 1
        %s1488 = smul.addr %s1487, 8
        %s1489 = smul.addr %s1488, 4
        %s1490 = scalar_lea.vmem %s3, %s1489
      $region44: #{cnn_classifier_forward.6} parent=39 // pred_fallthru
        _
    $region40: #{cnn_classifier_forward.6} parent=5 // pred_fallthru
      _
  $region6: #{cnn_classifier_forward.6} parent=0 // loop_footer
    %s13 = sadd.s32 1, %s9
  $region7: #{cnn_classifier_forward.6} parent=0 // loop_footer_branch
    %8 = sbr.rel target = $region3
  $region8: #{cnn_classifier_forward.6} parent=0 // loop_exit
    _

// kernel: cnn_classifier_forward.7
$region0: #{cnn_classifier_forward.7}
  #allocation0 [shape = 'u32[]', space=smem, size = 0x4, offset = 0x4, fixed_abs, tag = 'smem constant byte address 0x4 - core index']
  #allocation1 [shape = 'u32[144,128]{1,0:T(1,128)}', space=vmem, size = 0x12000, scoped, tag = 'internal scratch']
  %s0 = inlined_call_operand.vmem [shape: bf16[2,2,24,384], index: 0, kind: input, shape index: {}]
  %s1 = inlined_call_operand.vmem [shape: bf16[5,384,128], index: 1, kind: input, shape index: {}]
  %s2 = inlined_call_operand.vmem [shape: f32[1,128], index: 2, kind: input, shape index: {}]
  %s3 = inlined_call_operand.vmem [shape: bf16[128,128], index: 3, kind: input, shape index: {}]
  %s4 = inlined_call_operand.vmem [shape: f32[1,128], index: 4, kind: input, shape index: {}]
  %s5 = inlined_call_operand.hbm [shape: f32[2,1,128], index: 5, kind: output, shape index: {}]
  %s6 = sld [smem:[#allocation0]]
  $region53: #{cnn_classifier_forward.7} parent=0
    _
  %s8 = ssub.s32 1, %s6
  %s9 = scalar_select 0, %s8, %s6
  $region1: #{cnn_classifier_forward.7} parent=0
    #allocation2 [shape = 'u8[1024]{0}', space=vmem, size = 0x400, scoped, tag = 'output window, operand 0']
    #allocation3 [shape = 's32[2]{0}', space=sflag, size = 0x8, scoped, tag = 'scoped memory for cnn_classifier_forward.7']
    %10 = vsyncpa [#allocation3], 0
    %s11 = scalar_lea.sflag [#allocation3], 1
    %12 = vsyncpa %s11, 0
    loop: start=0, step=1, limit=4
    $region2: #{cnn_classifier_forward.7} parent=1 // loop_pre_header
      _
    $region3: #{cnn_classifier_forward.7} parent=1 // loop_header
      %s14 = sphi 0, %s18
      %p15 = scmp.ge.s32.totalorder %s14, 4
      %s24 = sphi 0, %s26
      %s27 = sphi 0, %s24
      %s28 = sphi 0, %s27
      %s44 = sphi 0, %s28
      %s48 = sphi 0, %s48
      %s50 = sphi 0, %s48
      %s51 = sphi 0, %s50
      %s65 = sphi 0, %s51
      %s69 = sphi 0, %s69
      %s71 = sphi 0, %s69
      %s72 = sphi 0, %s71
      %s86 = sphi 0, %s72
      %s90 = sphi 0, %s90
      %s92 = sphi 0, %s90
      %s93 = sphi 0, %s92
      %s107 = sphi 0, %s93
      %s111 = sphi 0, %s111
      %s113 = sphi 0, %s111
      %s114 = sphi 0, %s113
      %s128 = sphi 0, %s114
      %s134 = sphi 0, %s136
      %s137 = sphi 0, %s134
      %s138 = sphi 0, %s137
      %s154 = sphi 0, %s138
    $region4: #{cnn_classifier_forward.7} parent=1 // loop_header_branch
      %17 = sbr.rel (%p15) target = $region8
    $region5: #{cnn_classifier_forward.7} parent=1 // loop_body
      %s19 = ssub.s32 %s14, 1
      %s20 = ssub.s32 %s14, 2
      %s21 = sadd.s32 %s14, 1
      %s22 = ssub.s32 %s14, %s21
      %p23 = scmp.eq.s32.totalorder %s22, 0
      %s25 = sadd.s32 %s24, 1
      %s26 = scalar_select %p23, %s24, %s25
      %p29 = pneg %p23
      %p30 = scmp.eq.s32.totalorder %s14, 1
      %p31 = por %p29, %p30
      %p32 = scmp.ne.s32.totalorder %s24, %s27
      %p33 = scmp.eq.s32.totalorder %s14, 0
      %p34 = por %p32, %p33
      %p35 = scmp.ne.s32.totalorder %s24, %s27
      %p36 = scmp.eq.s32.totalorder %s19, 1
      %p37 = por %p35, %p36
      %p38 = scmp.ne.s32.totalorder %s27, %s28
      %p39 = scmp.eq.s32.totalorder %s19, 0
      %p40 = por %p38, %p39
      %p41 = scmp.ne.s32.totalorder %s27, %s28
      %p42 = scmp.eq.s32.totalorder %s20, 1
      %p43 = por %p41, %p42
      %p45 = scmp.ne.s32.totalorder %s28, %s44
      %p46 = scmp.eq.s32.totalorder %s20, 0
      %p47 = por %p45, %p46
      %s49 = sadd.s32 %s48, 1
      %p52 = scmp.eq.s32.totalorder %s14, 1
      %p53 = scmp.ne.s32.totalorder %s48, %s50
      %p54 = scmp.eq.s32.totalorder %s14, 0
      %p55 = por %p53, %p54
      %p56 = scmp.ne.s32.totalorder %s48, %s50
      %p57 = scmp.eq.s32.totalorder %s19, 1
      %p58 = por %p56, %p57
      %p59 = scmp.ne.s32.totalorder %s50, %s51
      %p60 = scmp.eq.s32.totalorder %s19, 0
      %p61 = por %p59, %p60
      %p62 = scmp.ne.s32.totalorder %s50, %s51
      %p63 = scmp.eq.s32.totalorder %s20, 1
      %p64 = por %p62, %p63
      %p66 = scmp.ne.s32.totalorder %s51, %s65
      %p67 = scmp.eq.s32.totalorder %s20, 0
      %p68 = por %p66, %p67
      %s70 = sadd.s32 %s69, 1
      %p73 = scmp.eq.s32.totalorder %s14, 1
      %p74 = scmp.ne.s32.totalorder %s69, %s71
      %p75 = scmp.eq.s32.totalorder %s14, 0
      %p76 = por %p74, %p75
      %p77 = scmp.ne.s32.totalorder %s69, %s71
      %p78 = scmp.eq.s32.totalorder %s19, 1
      %p79 = por %p77, %p78
      %p80 = scmp.ne.s32.totalorder %s71, %s72
      %p81 = scmp.eq.s32.totalorder %s19, 0
      %p82 = por %p80, %p81
      %p83 = scmp.ne.s32.totalorder %s71, %s72
      %p84 = scmp.eq.s32.totalorder %s20, 1
      %p85 = por %p83, %p84
      %p87 = scmp.ne.s32.totalorder %s72, %s86
      %p88 = scmp.eq.s32.totalorder %s20, 0
      %p89 = por %p87, %p88
      %s91 = sadd.s32 %s90, 1
      %p94 = scmp.eq.s32.totalorder %s14, 1
      %p95 = scmp.ne.s32.totalorder %s90, %s92
      %p96 = scmp.eq.s32.totalorder %s14, 0
      %p97 = por %p95, %p96
      %p98 = scmp.ne.s32.totalorder %s90, %s92
      %p99 = scmp.eq.s32.totalorder %s19, 1
      %p100 = por %p98, %p99
      %p101 = scmp.ne.s32.totalorder %s92, %s93
      %p102 = scmp.eq.s32.totalorder %s19, 0
      %p103 = por %p101, %p102
      %p104 = scmp.ne.s32.totalorder %s92, %s93
      %p105 = scmp.eq.s32.totalorder %s20, 1
      %p106 = por %p104, %p105
      %p108 = scmp.ne.s32.totalorder %s93, %s107
      %p109 = scmp.eq.s32.totalorder %s20, 0
      %p110 = por %p108, %p109
      %s112 = sadd.s32 %s111, 1
      %p115 = scmp.eq.s32.totalorder %s14, 1
      %p116 = scmp.ne.s32.totalorder %s111, %s113
      %p117 = scmp.eq.s32.totalorder %s14, 0
      %p118 = por %p116, %p117
      %p119 = scmp.ne.s32.totalorder %s111, %s113
      %p120 = scmp.eq.s32.totalorder %s19, 1
      %p121 = por %p119, %p120
      %p122 = scmp.ne.s32.totalorder %s113, %s114
      %p123 = scmp.eq.s32.totalorder %s19, 0
      %p124 = por %p122, %p123
      %p125 = scmp.ne.s32.totalorder %s113, %s114
      %p126 = scmp.eq.s32.totalorder %s20, 1
      %p127 = por %p125, %p126
      %p129 = scmp.ne.s32.totalorder %s114, %s128
      %p130 = scmp.eq.s32.totalorder %s20, 0
      %p131 = por %p129, %p130
      %s132 = ssub.s32 %s14, %s21
      %p133 = scmp.eq.s32.totalorder %s132, 0
      %s135 = sadd.s32 %s134, 1
      %s136 = scalar_select %p133, %s134, %s135
      %p139 = pneg %p133
      %p140 = scmp.eq.s32.totalorder %s14, 1
      %p141 = por %p139, %p140
      %p142 = scmp.ne.s32.totalorder %s134, %s137
      %p143 = scmp.eq.s32.totalorder %s14, 0
      %p144 = por %p142, %p143
      %p145 = scmp.ne.s32.totalorder %s134, %s137
      %p146 = scmp.eq.s32.totalorder %s19, 1
      %p147 = por %p145, %p146
      %p148 = scmp.ne.s32.totalorder %s137, %s138
      %p149 = scmp.eq.s32.totalorder %s19, 0
      %p150 = por %p148, %p149
      %p151 = scmp.ne.s32.totalorder %s137, %s138
      %p152 = scmp.eq.s32.totalorder %s20, 1
      %p153 = por %p151, %p152
      %p155 = scmp.ne.s32.totalorder %s138, %s154
      %p156 = scmp.eq.s32.totalorder %s20, 0
      %p157 = por %p155, %p156
      %p158 = scmp.le.s32.totalorder 1, %s14
      %p159 = scmp.lt.s32.totalorder %s14, 3
      %p160 = pnand %p158, %p159
      %p161 = pneg %p160
      // Predicated region
      $region9: #{cnn_classifier_forward.7} parent=5 // pred_check
        _
      $region10: #{cnn_classifier_forward.7} parent=5 // pred_check_branch
        %163 = sbr.rel (%p160) target = $region12
      $region11: #{cnn_classifier_forward.7} parent=5 // pred_region
        %s164 = ssub.s32 %s14, 1
        // Predicated region
        $region13: #{cnn_classifier_forward.7} parent=11 // pred_check
          %p165 = pneg %p61
        $region14: #{cnn_classifier_forward.7} parent=11 // pred_check_branch
          %167 = sbr.rel (%p165) target = $region16
        $region15: #{cnn_classifier_forward.7} parent=11 // pred_region
          _
        $region16: #{cnn_classifier_forward.7} parent=11 // pred_fallthru
          _
        // Predicated region
        $region17: #{cnn_classifier_forward.7} parent=11 // pred_check
          %p168 = pneg %p82
        $region18: #{cnn_classifier_forward.7} parent=11 // pred_check_branch
          %170 = sbr.rel (%p168) target = $region20
        $region19: #{cnn_classifier_forward.7} parent=11 // pred_region
          _
        $region20: #{cnn_classifier_forward.7} parent=11 // pred_fallthru
          _
        // Predicated region
        $region21: #{cnn_classifier_forward.7} parent=11 // pred_check
          %p171 = pneg %p103
        $region22: #{cnn_classifier_forward.7} parent=11 // pred_check_branch
          %173 = sbr.rel (%p171) target = $region24
        $region23: #{cnn_classifier_forward.7} parent=11 // pred_region
          _
        $region24: #{cnn_classifier_forward.7} parent=11 // pred_fallthru
          _
        // Predicated region
        $region25: #{cnn_classifier_forward.7} parent=11 // pred_check
          %p174 = pneg %p124
        $region26: #{cnn_classifier_forward.7} parent=11 // pred_check_branch
          %176 = sbr.rel (%p174) target = $region28
        $region27: #{cnn_classifier_forward.7} parent=11 // pred_region
          _
        $region28: #{cnn_classifier_forward.7} parent=11 // pred_fallthru
          _
      $region12: #{cnn_classifier_forward.7} parent=5 // pred_fallthru
        _
      %p177 = scmp.lt.s32.totalorder %s14, 2
      // Predicated region
      $region29: #{cnn_classifier_forward.7} parent=5 // pred_check
        %p178 = pneg %p177
      $region30: #{cnn_classifier_forward.7} parent=5 // pred_check_branch
        %180 = sbr.rel (%p178) target = $region32
      $region31: #{cnn_classifier_forward.7} parent=5 // pred_region
        // Predicated region
        $region33: #{cnn_classifier_forward.7} parent=31 // pred_check
          %p181 = pneg %p34
        $region34: #{cnn_classifier_forward.7} parent=31 // pred_check_branch
          %183 = sbr.rel (%p181) target = $region36
        $region35: #{cnn_classifier_forward.7} parent=31 // pred_region
          %p184 = scmp.lt.s32.totalorder %s14, 1
          %s185 = scalar_select %p184, %s14, 1
          %s186 = smul.addr %s185, 18
          %s187 = smul.addr %s186, 4
          %s188 = scalar_lea.vmem %s0, %s187
        $region36: #{cnn_classifier_forward.7} parent=31 // pred_fallthru
          _
      $region32: #{cnn_classifier_forward.7} parent=5 // pred_fallthru
        _
      %p189 = scmp.le.s32.totalorder 1, %s14
      %p190 = scmp.lt.s32.totalorder %s14, 3
      %p191 = pnand %p189, %p190
      %p192 = pneg %p191
      // Predicated region
      $region37: #{cnn_classifier_forward.7} parent=5 // pred_check
        _
      $region38: #{cnn_classifier_forward.7} parent=5 // pred_check_branch
        %194 = sbr.rel (%p191) target = $region40
      $region39: #{cnn_classifier_forward.7} parent=5 // pred_region
        %s195 = ssub.s32 %s14, 1
        %p196 = scmp.lt.s32.totalorder %s19, 1
        %s197 = scalar_select %p196, %s19, 1
        %s198 = smul.addr %s197, 18
        %s199 = smul.addr %s198, 4
        %s200 = scalar_lea.vmem %s0, %s199
        %p201 = pneg %p40
        %p202 = pneg %p37
        %p203 = pneg %p61
        %p204 = pneg %p58
        %p205 = pneg %p82
        %p206 = pneg %p79
        %p207 = pneg %p103
        %p208 = pneg %p100
        %p209 = pneg %p124
        %p210 = pneg %p121
        %p211 = pneg %p150
        %p212 = pneg %p147
        %s213 = sand.u32 %s137, 1
        %s214 = scalar_lea.sflag [#allocation3], %s213
        %s215 = sand.u32 %s137, 1
        %s216 = scalar_lea.vmem [#allocation2], %s215
        %p217 = scmp.lt.s32.totalorder %s19, 1
        %s218 = scalar_select %p217, %s19, 1
        %s219 = smul.addr %s218, 18
        %s220 = smul.addr %s219, 4
        %s221 = scalar_lea.vmem %s0, %s220
        %v223 = vld [vmem:[%s221] sm:$0xff]
        %v224 = vld [vmem:[%s221 + $0x8] sm:$0xf]
        %v225 = vld [vmem:[%s221 + $0xc] sm:$0xff]
        %v226 = vld [vmem:[%s221 + $0x14] sm:$0xf]
        %v227 = vld [vmem:[%s1] sm:$0xf]
        %v228 = vld [vmem:[%s1 + $0x4] sm:$0xf]
        %v229 = vld [vmem:[%s1 + $0x8] sm:$0xf]
        %v230 = vld [vmem:[%s1 + $0xc] sm:$0xf]
        %v231 = vld [vmem:[%s1 + $0x10] sm:$0xf]
        %v232 = vld [vmem:[%s1 + $0x14] sm:$0xf]
        %v233 = vld [vmem:[%s1 + $0x18] sm:$0xf]
        %v234 = vld [vmem:[%s1 + $0x1c] sm:$0xf]
        %v235 = vld [vmem:[%s1 + $0x20] sm:$0xf]
        %v236 = vld [vmem:[%s1 + $0x24] sm:$0xf]
        %v237 = vld [vmem:[%s1 + $0x28] sm:$0xf]
        %v238 = vld [vmem:[%s1 + $0x2c] sm:$0xf]
        %v239 = vld [vmem:[%s1 + $0x30] sm:$0xf]
        %v240 = vld [vmem:[%s1 + $0x34] sm:$0xf]
        %v241 = vld [vmem:[%s1 + $0x38] sm:$0xf]
        %v242 = vld [vmem:[%s1 + $0x3c] sm:$0xf]
        %v243 = vld [vmem:[%s1 + $0x40] sm:$0xf]
        %v244 = vld [vmem:[%s1 + $0x44] sm:$0xf]
        %v245 = vld [vmem:[%s1 + $0x48] sm:$0xf]
        %v246 = vld [vmem:[%s1 + $0x4c] sm:$0xf]
        %v247 = vld [vmem:[%s1 + $0x50] sm:$0xf]
        %v248 = vld [vmem:[%s1 + $0x54] sm:$0xf]
        %v249 = vld [vmem:[%s1 + $0x58] sm:$0xf]
        %v250 = vld [vmem:[%s1 + $0x5c] sm:$0xf]
        %v251 = vld [vmem:[%s1 + $0x60] sm:$0xf]
        %v252 = vld [vmem:[%s1 + $0x64] sm:$0xf]
        %v253 = vld [vmem:[%s1 + $0x68] sm:$0xf]
        %v254 = vld [vmem:[%s1 + $0x6c] sm:$0xf]
        %v255 = vld [vmem:[%s1 + $0x70] sm:$0xf]
        %v256 = vld [vmem:[%s1 + $0x74] sm:$0xf]
        %v257 = vld [vmem:[%s1 + $0x78] sm:$0xf]
        %v258 = vld [vmem:[%s1 + $0x7c] sm:$0xf]
        %v259 = vld [vmem:[%s1 + $0x80] sm:$0xf]
        %v260 = vld [vmem:[%s1 + $0x84] sm:$0xf]
        %v261 = vld [vmem:[%s1 + $0x88] sm:$0xf]
        %v262 = vld [vmem:[%s1 + $0x8c] sm:$0xf]
        %v263 = vld [vmem:[%s1 + $0x90] sm:$0xf]
        %v264 = vld [vmem:[%s1 + $0x94] sm:$0xf]
        %v265 = vld [vmem:[%s1 + $0x98] sm:$0xf]
        %v266 = vld [vmem:[%s1 + $0x9c] sm:$0xf]
        %v267 = vld [vmem:[%s1 + $0xa0] sm:$0xf]
        %v268 = vld [vmem:[%s1 + $0xa4] sm:$0xf]
        %v269 = vld [vmem:[%s1 + $0xa8] sm:$0xf]
        %v270 = vld [vmem:[%s1 + $0xac] sm:$0xf]
        %v271 = vld [vmem:[%s1 + $0xb0] sm:$0xf]
        %v272 = vld [vmem:[%s1 + $0xb4] sm:$0xf]
        %v273 = vld [vmem:[%s1 + $0xb8] sm:$0xf]
        %v274 = vld [vmem:[%s1 + $0xbc] sm:$0xf]
        %s275 = scalar_lea.vmem %s221, 36
        %v276 = vld [vmem:[%s275] sm:$0xff]
        %v277 = vld [vmem:[%s275 + $0x8] sm:$0xf]
        %v278 = vld [vmem:[%s275 + $0xc] sm:$0xff]
        %v279 = vld [vmem:[%s275 + $0x14] sm:$0xf]
        %s280 = scalar_lea.vmem %s1, 192
        %v281 = vld [vmem:[%s280] sm:$0xf]
        %v282 = vld [vmem:[%s280 + $0x4] sm:$0xf]
        %v283 = vld [vmem:[%s280 + $0x8] sm:$0xf]
        %v284 = vld [vmem:[%s280 + $0xc] sm:$0xf]
        %v285 = vld [vmem:[%s280 + $0x10] sm:$0xf]
        %v286 = vld [vmem:[%s280 + $0x14] sm:$0xf]
        %v287 = vld [vmem:[%s280 + $0x18] sm:$0xf]
        %v288 = vld [vmem:[%s280 + $0x1c] sm:$0xf]
        %v289 = vld [vmem:[%s280 + $0x20] sm:$0xf]
        %v290 = vld [vmem:[%s280 + $0x24] sm:$0xf]
        %v291 = vld [vmem:[%s280 + $0x28] sm:$0xf]
        %v292 = vld [vmem:[%s280 + $0x2c] sm:$0xf]
        %v293 = vld [vmem:[%s280 + $0x30] sm:$0xf]
        %v294 = vld [vmem:[%s280 + $0x34] sm:$0xf]
        %v295 = vld [vmem:[%s280 + $0x38] sm:$0xf]
        %v296 = vld [vmem:[%s280 + $0x3c] sm:$0xf]
        %v297 = vld [vmem:[%s280 + $0x40] sm:$0xf]
        %v298 = vld [vmem:[%s280 + $0x44] sm:$0xf]
        %v299 = vld [vmem:[%s280 + $0x48] sm:$0xf]
        %v300 = vld [vmem:[%s280 + $0x4c] sm:$0xf]
        %v301 = vld [vmem:[%s280 + $0x50] sm:$0xf]
        %v302 = vld [vmem:[%s280 + $0x54] sm:$0xf]
        %v303 = vld [vmem:[%s280 + $0x58] sm:$0xf]
        %v304 = vld [vmem:[%s280 + $0x5c] sm:$0xf]
        %v305 = vld [vmem:[%s280 + $0x60] sm:$0xf]
        %v306 = vld [vmem:[%s280 + $0x64] sm:$0xf]
        %v307 = vld [vmem:[%s280 + $0x68] sm:$0xf]
        %v308 = vld [vmem:[%s280 + $0x6c] sm:$0xf]
        %v309 = vld [vmem:[%s280 + $0x70] sm:$0xf]
        %v310 = vld [vmem:[%s280 + $0x74] sm:$0xf]
        %v311 = vld [vmem:[%s280 + $0x78] sm:$0xf]
        %v312 = vld [vmem:[%s280 + $0x7c] sm:$0xf]
        %v313 = vld [vmem:[%s280 + $0x80] sm:$0xf]
        %v314 = vld [vmem:[%s280 + $0x84] sm:$0xf]
        %v315 = vld [vmem:[%s280 + $0x88] sm:$0xf]
        %v316 = vld [vmem:[%s280 + $0x8c] sm:$0xf]
        %v317 = vld [vmem:[%s280 + $0x90] sm:$0xf]
        %v318 = vld [vmem:[%s280 + $0x94] sm:$0xf]
        %v319 = vld [vmem:[%s280 + $0x98] sm:$0xf]
        %v320 = vld [vmem:[%s280 + $0x9c] sm:$0xf]
        %v321 = vld [vmem:[%s280 + $0xa0] sm:$0xf]
        %v322 = vld [vmem:[%s280 + $0xa4] sm:$0xf]
        %v323 = vld [vmem:[%s280 + $0xa8] sm:$0xf]
        %v324 = vld [vmem:[%s280 + $0xac] sm:$0xf]
        %v325 = vld [vmem:[%s280 + $0xb0] sm:$0xf]
        %v326 = vld [vmem:[%s280 + $0xb4] sm:$0xf]
        %v327 = vld [vmem:[%s280 + $0xb8] sm:$0xf]
        %v328 = vld [vmem:[%s280 + $0xbc] sm:$0xf]
        %v333 = vunpack.c.l.b16 %v276
        %v334 = vunpack.c.h.b16 %v276
        %v335 = vunpack.c.l.b16 %v277
        %v336 = vunpack.c.l.b16 %v278
        %v337 = vunpack.c.h.b16 %v278
        %v338 = vunpack.c.l.b16 %v279
        %v339 = vpack.c.b16 %v336, %v333
        %v340 = vpack.c.b16 %v337, %v334
        %v341 = vpack.c.b16 %v338, %v335
        %v393 = vunpack.c.l.b16 %v281
        %v394 = vunpack.c.l.b16 %v282
        %v395 = vunpack.c.l.b16 %v283
        %v396 = vunpack.c.l.b16 %v284
        %v397 = vunpack.c.l.b16 %v285
        %v398 = vunpack.c.l.b16 %v286
        %v399 = vunpack.c.l.b16 %v287
        %v400 = vunpack.c.l.b16 %v288
        %v401 = vunpack.c.l.b16 %v289
        %v402 = vunpack.c.l.b16 %v290
        %v403 = vunpack.c.l.b16 %v291
        %v404 = vunpack.c.l.b16 %v292
        %v405 = vunpack.c.l.b16 %v293
        %v406 = vunpack.c.l.b16 %v294
        %v407 = vunpack.c.l.b16 %v295
        %v408 = vunpack.c.l.b16 %v296
        %v409 = vunpack.c.l.b16 %v297
        %v410 = vunpack.c.l.b16 %v298
        %v411 = vunpack.c.l.b16 %v299
        %v412 = vunpack.c.l.b16 %v300
        %v413 = vunpack.c.l.b16 %v301
        %v414 = vunpack.c.l.b16 %v302
        %v415 = vunpack.c.l.b16 %v303
        %v416 = vunpack.c.l.b16 %v304
        %v417 = vunpack.c.l.b16 %v305
        %v418 = vunpack.c.l.b16 %v306
        %v419 = vunpack.c.l.b16 %v307
        %v420 = vunpack.c.l.b16 %v308
        %v421 = vunpack.c.l.b16 %v309
        %v422 = vunpack.c.l.b16 %v310
        %v423 = vunpack.c.l.b16 %v311
        %v424 = vunpack.c.l.b16 %v312
        %v425 = vunpack.c.l.b16 %v313
        %v426 = vunpack.c.l.b16 %v314
        %v427 = vunpack.c.l.b16 %v315
        %v428 = vunpack.c.l.b16 %v316
        %v429 = vunpack.c.l.b16 %v317
        %v430 = vunpack.c.l.b16 %v318
        %v431 = vunpack.c.l.b16 %v319
        %v432 = vunpack.c.l.b16 %v320
        %v433 = vunpack.c.l.b16 %v321
        %v434 = vunpack.c.l.b16 %v322
        %v435 = vunpack.c.l.b16 %v323
        %v436 = vunpack.c.l.b16 %v324
        %v437 = vunpack.c.l.b16 %v325
        %v438 = vunpack.c.l.b16 %v326
        %v439 = vunpack.c.l.b16 %v327
        %v440 = vunpack.c.l.b16 %v328
        %v441 = vpack.c.b16 %v394, %v393
        %v442 = vpack.c.b16 %v396, %v395
        %v443 = vpack.c.b16 %v398, %v397
        %v444 = vpack.c.b16 %v400, %v399
        %v445 = vpack.c.b16 %v402, %v401
        %v446 = vpack.c.b16 %v404, %v403
        %v447 = vpack.c.b16 %v406, %v405
        %v448 = vpack.c.b16 %v408, %v407
        %v449 = vpack.c.b16 %v410, %v409
        %v450 = vpack.c.b16 %v412, %v411
        %v451 = vpack.c.b16 %v414, %v413
        %v452 = vpack.c.b16 %v416, %v415
        %v453 = vpack.c.b16 %v418, %v417
        %v454 = vpack.c.b16 %v420, %v419
        %v455 = vpack.c.b16 %v422, %v421
        %v456 = vpack.c.b16 %v424, %v423
        %v457 = vpack.c.b16 %v426, %v425
        %v458 = vpack.c.b16 %v428, %v427
        %v459 = vpack.c.b16 %v430, %v429
        %v460 = vpack.c.b16 %v432, %v431
        %v461 = vpack.c.b16 %v434, %v433
        %v462 = vpack.c.b16 %v436, %v435
        %v463 = vpack.c.b16 %v438, %v437
        %v464 = vpack.c.b16 %v440, %v439
        %489 = vmatprep.subr.bf16.mxu0 0
        %490 = vmatpush1.bf16.msra.mxu0 %v448
        %491 = vmatprep.subr.bf16.mxu0 0
        %492 = vmatpush1.bf16.msra.mxu0 %v447
        %493 = vmatprep.subr.bf16.mxu0 0
        %494 = vmatpush1.bf16.msra.mxu0 %v446
        %495 = vmatprep.subr.bf16.mxu0 0
        %496 = vmatpush1.bf16.msra.mxu0 %v445
        %497 = vmatprep.subr.bf16.mxu0 0
        %498 = vmatpush1.bf16.msra.mxu0 %v444
        %499 = vmatprep.subr.bf16.mxu0 0
        %500 = vmatpush1.bf16.msra.mxu0 %v443
        %501 = vmatprep.subr.bf16.mxu0 0
        %502 = vmatpush1.bf16.msra.mxu0 %v442
        %503 = vmatprep.subr.bf16.mxu0 0
        %504 = vmatpush1.bf16.msra.mxu0 %v441
        %505 = vmatprep.subr.bf16.mxu0 0
        %506 = vmatpush2.bf16.msra.mxu0 %v456
        %507 = vmatprep.subr.bf16.mxu0 0
        %508 = vmatpush2.bf16.msra.mxu0 %v455
        %509 = vmatprep.subr.bf16.mxu0 0
        %510 = vmatpush2.bf16.msra.mxu0 %v454
        %511 = vmatprep.subr.bf16.mxu0 0
        %512 = vmatpush2.bf16.msra.mxu0 %v453
        %513 = vmatprep.subr.bf16.mxu0 0
        %514 = vmatpush2.bf16.msra.mxu0 %v452
        %515 = vmatprep.subr.bf16.mxu0 0
        %516 = vmatpush2.bf16.msra.mxu0 %v451
        %517 = vmatprep.subr.bf16.mxu0 0
        %518 = vmatpush2.bf16.msra.mxu0 %v450
        %519 = vmatprep.subr.bf16.mxu0 0
        %520 = vmatpush2.bf16.msra.mxu0 %v449
        %521 = vmatprep.mubr.bf16.mxu0 %v340
        %522 = vmatmul.mubr.bf16.gmra.mxu0 %v339
        %v523 = vpop.f32.mrf.mxu0
        %v524 = vadd.f32 0.0, %v523
        %v525 = vpop.f32.mrf.mxu0
        %v526 = vpop.f32.mrf.mxu0
        %v527 = vadd.f32 0.0, %v526
        %v528 = vpop.f32.mrf.mxu0
        %529 = vdwg.mxu0
        %530 = vmatprep.subr.bf16.mxu0 0
        %531 = vmatpush1.bf16.msra.mxu0 %v464
        %532 = vmatprep.subr.bf16.mxu0 0
        %533 = vmatpush1.bf16.msra.mxu0 %v463
        %534 = vmatprep.subr.bf16.mxu0 0
        %535 = vmatpush1.bf16.msra.mxu0 %v462
        %536 = vmatprep.subr.bf16.mxu0 0
        %537 = vmatpush1.bf16.msra.mxu0 %v461
        %538 = vmatprep.subr.bf16.mxu0 0
        %539 = vmatpush1.bf16.msra.mxu0 %v460
        %540 = vmatprep.subr.bf16.mxu0 0
        %541 = vmatpush1.bf16.msra.mxu0 %v459
        %542 = vmatprep.subr.bf16.mxu0 0
        %543 = vmatpush1.bf16.msra.mxu0 %v458
        %544 = vmatprep.subr.bf16.mxu0 0
        %545 = vmatpush1.bf16.msra.mxu0 %v457
        %546 = vmatprep.subr.bf16.mxu0 0
        %547 = vmatpush2.bf16.msra.mxu0 0
        %548 = vmatprep.subr.bf16.mxu0 0
        %549 = vmatpush2.bf16.msra.mxu0 0
        %550 = vmatprep.subr.bf16.mxu0 0
        %551 = vmatpush2.bf16.msra.mxu0 0
        %552 = vmatprep.subr.bf16.mxu0 0
        %553 = vmatpush2.bf16.msra.mxu0 0
        %554 = vmatprep.subr.bf16.mxu0 0
        %555 = vmatpush2.bf16.msra.mxu0 0
        %556 = vmatprep.subr.bf16.mxu0 0
        %557 = vmatpush2.bf16.msra.mxu0 0
        %558 = vmatprep.subr.bf16.mxu0 0
        %559 = vmatpush2.bf16.msra.mxu0 0
        %560 = vmatprep.subr.bf16.mxu0 0
        %561 = vmatpush2.bf16.msra.mxu0 0
        %562 = vmatprep.mubr.bf16.mxu0 0
        %563 = vmatmul.mubr.bf16.gmra.mxu0 %v341
        %v564 = vpop.f32.mrf.mxu0
        %v565 = vadd.f32 %v524, %v564
        %v566 = vpop.f32.mrf.mxu0
        %v567 = vpop.f32.mrf.mxu0
        %v568 = vadd.f32 %v527, %v567
        %v569 = vpop.f32.mrf.mxu0
        %570 = vdwg.mxu0
        %v575 = vunpack.c.l.b16 %v223
        %v576 = vunpack.c.h.b16 %v223
        %v577 = vunpack.c.l.b16 %v224
        %v578 = vunpack.c.l.b16 %v225
        %v579 = vunpack.c.h.b16 %v225
        %v580 = vunpack.c.l.b16 %v226
        %v581 = vpack.c.b16 %v578, %v575
        %v582 = vpack.c.b16 %v579, %v576
        %v583 = vpack.c.b16 %v580, %v577
        %v635 = vunpack.c.l.b16 %v227
        %v636 = vunpack.c.l.b16 %v228
        %v637 = vunpack.c.l.b16 %v229
        %v638 = vunpack.c.l.b16 %v230
        %v639 = vunpack.c.l.b16 %v231
        %v640 = vunpack.c.l.b16 %v232
        %v641 = vunpack.c.l.b16 %v233
        %v642 = vunpack.c.l.b16 %v234
        %v643 = vunpack.c.l.b16 %v235
        %v644 = vunpack.c.l.b16 %v236
        %v645 = vunpack.c.l.b16 %v237
        %v646 = vunpack.c.l.b16 %v238
        %v647 = vunpack.c.l.b16 %v239
        %v648 = vunpack.c.l.b16 %v240
        %v649 = vunpack.c.l.b16 %v241
        %v650 = vunpack.c.l.b16 %v242
        %v651 = vunpack.c.l.b16 %v243
        %v652 = vunpack.c.l.b16 %v244
        %v653 = vunpack.c.l.b16 %v245
        %v654 = vunpack.c.l.b16 %v246
        %v655 = vunpack.c.l.b16 %v247
        %v656 = vunpack.c.l.b16 %v248
        %v657 = vunpack.c.l.b16 %v249
        %v658 = vunpack.c.l.b16 %v250
        %v659 = vunpack.c.l.b16 %v251
        %v660 = vunpack.c.l.b16 %v252
        %v661 = vunpack.c.l.b16 %v253
        %v662 = vunpack.c.l.b16 %v254
        %v663 = vunpack.c.l.b16 %v255
        %v664 = vunpack.c.l.b16 %v256
        %v665 = vunpack.c.l.b16 %v257
        %v666 = vunpack.c.l.b16 %v258
        %v667 = vunpack.c.l.b16 %v259
        %v668 = vunpack.c.l.b16 %v260
        %v669 = vunpack.c.l.b16 %v261
        %v670 = vunpack.c.l.b16 %v262
        %v671 = vunpack.c.l.b16 %v263
        %v672 = vunpack.c.l.b16 %v264
        %v673 = vunpack.c.l.b16 %v265
        %v674 = vunpack.c.l.b16 %v266
        %v675 = vunpack.c.l.b16 %v267
        %v676 = vunpack.c.l.b16 %v268
        %v677 = vunpack.c.l.b16 %v269
        %v678 = vunpack.c.l.b16 %v270
        %v679 = vunpack.c.l.b16 %v271
        %v680 = vunpack.c.l.b16 %v272
        %v681 = vunpack.c.l.b16 %v273
        %v682 = vunpack.c.l.b16 %v274
        %v683 = vpack.c.b16 %v636, %v635
        %v684 = vpack.c.b16 %v638, %v637
        %v685 = vpack.c.b16 %v640, %v639
        %v686 = vpack.c.b16 %v642, %v641
        %v687 = vpack.c.b16 %v644, %v643
        %v688 = vpack.c.b16 %v646, %v645
        %v689 = vpack.c.b16 %v648, %v647
        %v690 = vpack.c.b16 %v650, %v649
        %v691 = vpack.c.b16 %v652, %v651
        %v692 = vpack.c.b16 %v654, %v653
        %v693 = vpack.c.b16 %v656, %v655
        %v694 = vpack.c.b16 %v658, %v657
        %v695 = vpack.c.b16 %v660, %v659
        %v696 = vpack.c.b16 %v662, %v661
        %v697 = vpack.c.b16 %v664, %v663
        %v698 = vpack.c.b16 %v666, %v665
        %v699 = vpack.c.b16 %v668, %v667
        %v700 = vpack.c.b16 %v670, %v669
        %v701 = vpack.c.b16 %v672, %v671
        %v702 = vpack.c.b16 %v674, %v673
        %v703 = vpack.c.b16 %v676, %v675
        %v704 = vpack.c.b16 %v678, %v677
        %v705 = vpack.c.b16 %v680, %v679
        %v706 = vpack.c.b16 %v682, %v681
        %731 = vmatprep.subr.bf16.mxu0 0
        %732 = vmatpush1.bf16.msra.mxu0 %v690
        %733 = vmatprep.subr.bf16.mxu0 0
        %734 = vmatpush1.bf16.msra.mxu0 %v689
        %735 = vmatprep.subr.bf16.mxu0 0
        %736 = vmatpush1.bf16.msra.mxu0 %v688
        %737 = vmatprep.subr.bf16.mxu0 0
        %738 = vmatpush1.bf16.msra.mxu0 %v687
        %739 = vmatprep.subr.bf16.mxu0 0
        %740 = vmatpush1.bf16.msra.mxu0 %v686
        %741 = vmatprep.subr.bf16.mxu0 0
        %742 = vmatpush1.bf16.msra.mxu0 %v685
        %743 = vmatprep.subr.bf16.mxu0 0
        %744 = vmatpush1.bf16.msra.mxu0 %v684
        %745 = vmatprep.subr.bf16.mxu0 0
        %746 = vmatpush1.bf16.msra.mxu0 %v683
        %747 = vmatprep.subr.bf16.mxu0 0
        %748 = vmatpush2.bf16.msra.mxu0 %v698
        %749 = vmatprep.subr.bf16.mxu0 0
        %750 = vmatpush2.bf16.msra.mxu0 %v697
        %751 = vmatprep.subr.bf16.mxu0 0
        %752 = vmatpush2.bf16.msra.mxu0 %v696
        %753 = vmatprep.subr.bf16.mxu0 0
        %754 = vmatpush2.bf16.msra.mxu0 %v695
        %755 = vmatprep.subr.bf16.mxu0 0
        %756 = vmatpush2.bf16.msra.mxu0 %v694
        %757 = vmatprep.subr.bf16.mxu0 0
        %758 = vmatpush2.bf16.msra.mxu0 %v693
        %759 = vmatprep.subr.bf16.mxu0 0
        %760 = vmatpush2.bf16.msra.mxu0 %v692
        %761 = vmatprep.subr.bf16.mxu0 0
        %762 = vmatpush2.bf16.msra.mxu0 %v691
        %763 = vmatprep.mubr.bf16.mxu0 %v582
        %764 = vmatmul.mubr.bf16.gmra.mxu0 %v581
        %v765 = vpop.f32.mrf.mxu0
        %v766 = vadd.f32 %v565, %v765
        %v767 = vpop.f32.mrf.mxu0
        %v768 = vpop.f32.mrf.mxu0
        %v769 = vadd.f32 %v568, %v768
        %v770 = vpop.f32.mrf.mxu0
        %771 = vdwg.mxu0
        %772 = vmatprep.subr.bf16.mxu0 0
        %773 = vmatpush1.bf16.msra.mxu0 %v706
        %774 = vmatprep.subr.bf16.mxu0 0
        %775 = vmatpush1.bf16.msra.mxu0 %v705
        %776 = vmatprep.subr.bf16.mxu0 0
        %777 = vmatpush1.bf16.msra.mxu0 %v704
        %778 = vmatprep.subr.bf16.mxu0 0
        %779 = vmatpush1.bf16.msra.mxu0 %v703
        %780 = vmatprep.subr.bf16.mxu0 0
        %781 = vmatpush1.bf16.msra.mxu0 %v702
        %782 = vmatprep.subr.bf16.mxu0 0
        %783 = vmatpush1.bf16.msra.mxu0 %v701
        %784 = vmatprep.subr.bf16.mxu0 0
        %785 = vmatpush1.bf16.msra.mxu0 %v700
        %786 = vmatprep.subr.bf16.mxu0 0
        %787 = vmatpush1.bf16.msra.mxu0 %v699
        %788 = vmatprep.subr.bf16.mxu0 0
        %789 = vmatpush2.bf16.msra.mxu0 0
        %790 = vmatprep.subr.bf16.mxu0 0
        %791 = vmatpush2.bf16.msra.mxu0 0
        %792 = vmatprep.subr.bf16.mxu0 0
        %793 = vmatpush2.bf16.msra.mxu0 0
        %794 = vmatprep.subr.bf16.mxu0 0
        %795 = vmatpush2.bf16.msra.mxu0 0
        %796 = vmatprep.subr.bf16.mxu0 0
        %797 = vmatpush2.bf16.msra.mxu0 0
        %798 = vmatprep.subr.bf16.mxu0 0
        %799 = vmatpush2.bf16.msra.mxu0 0
        %800 = vmatprep.subr.bf16.mxu0 0
        %801 = vmatpush2.bf16.msra.mxu0 0
        %802 = vmatprep.subr.bf16.mxu0 0
        %803 = vmatpush2.bf16.msra.mxu0 0
        %804 = vmatprep.mubr.bf16.mxu0 0
        %805 = vmatmul.mubr.bf16.gmra.mxu0 %v583
        %v806 = vpop.f32.mrf.mxu0
        %v807 = vadd.f32 %v766, %v806
        %v808 = vpop.f32.mrf.mxu0
        %v809 = vpop.f32.mrf.mxu0
        %v810 = vadd.f32 %v769, %v809
        %v811 = vpop.f32.mrf.mxu0
        %812 = vdwg.mxu0
        %v813 = vld [vmem:[%s221] sm:$0xcc]
        %v814 = vld [vmem:[%s221 + $0x8] sm:$0xc]
        %v815 = vld [vmem:[%s221 + $0xc] sm:$0xff]
        %v816 = vld [vmem:[%s221 + $0x14] sm:$0xf]
        %v817 = vld [vmem:[%s221 + $0x18] sm:$0x33]
        %v818 = vld [vmem:[%s221 + $0x20] sm:$0x3]
        %s819 = scalar_lea.vmem %s1, 384
        %v820 = vld [vmem:[%s819] sm:$0xf]
        %v821 = vld [vmem:[%s819 + $0x4] sm:$0xf]
        %v822 = vld [vmem:[%s819 + $0x8] sm:$0xf]
        %v823 = vld [vmem:[%s819 + $0xc] sm:$0xf]
        %v824 = vld [vmem:[%s819 + $0x10] sm:$0xf]
        %v825 = vld [vmem:[%s819 + $0x14] sm:$0xf]
        %v826 = vld [vmem:[%s819 + $0x18] sm:$0xf]
        %v827 = vld [vmem:[%s819 + $0x1c] sm:$0xf]
        %v828 = vld [vmem:[%s819 + $0x20] sm:$0xf]
        %v829 = vld [vmem:[%s819 + $0x24] sm:$0xf]
        %v830 = vld [vmem:[%s819 + $0x28] sm:$0xf]
        %v831 = vld [vmem:[%s819 + $0x2c] sm:$0xf]
        %v832 = vld [vmem:[%s819 + $0x30] sm:$0xf]
        %v833 = vld [vmem:[%s819 + $0x34] sm:$0xf]
        %v834 = vld [vmem:[%s819 + $0x38] sm:$0xf]
        %v835 = vld [vmem:[%s819 + $0x3c] sm:$0xf]
        %v836 = vld [vmem:[%s819 + $0x40] sm:$0xf]
        %v837 = vld [vmem:[%s819 + $0x44] sm:$0xf]
        %v838 = vld [vmem:[%s819 + $0x48] sm:$0xf]
        %v839 = vld [vmem:[%s819 + $0x4c] sm:$0xf]
        %v840 = vld [vmem:[%s819 + $0x50] sm:$0xf]
        %v841 = vld [vmem:[%s819 + $0x54] sm:$0xf]
        %v842 = vld [vmem:[%s819 + $0x58] sm:$0xf]
        %v843 = vld [vmem:[%s819 + $0x5c] sm:$0xf]
        %v844 = vld [vmem:[%s819 + $0x60] sm:$0xf]
        %v845 = vld [vmem:[%s819 + $0x64] sm:$0xf]
        %v846 = vld [vmem:[%s819 + $0x68] sm:$0xf]
        %v847 = vld [vmem:[%s819 + $0x6c] sm:$0xf]
        %v848 = vld [vmem:[%s819 + $0x70] sm:$0xf]
        %v849 = vld [vmem:[%s819 + $0x74] sm:$0xf]
        %v850 = vld [vmem:[%s819 + $0x78] sm:$0xf]
        %v851 = vld [vmem:[%s819 + $0x7c] sm:$0xf]
        %v852 = vld [vmem:[%s819 + $0x80] sm:$0xf]
        %v853 = vld [vmem:[%s819 + $0x84] sm:$0xf]
        %v854 = vld [vmem:[%s819 + $0x88] sm:$0xf]
        %v855 = vld [vmem:[%s819 + $0x8c] sm:$0xf]
        %v856 = vld [vmem:[%s819 + $0x90] sm:$0xf]
        %v857 = vld [vmem:[%s819 + $0x94] sm:$0xf]
        %v858 = vld [vmem:[%s819 + $0x98] sm:$0xf]
        %v859 = vld [vmem:[%s819 + $0x9c] sm:$0xf]
        %v860 = vld [vmem:[%s819 + $0xa0] sm:$0xf]
        %v861 = vld [vmem:[%s819 + $0xa4] sm:$0xf]
        %v862 = vld [vmem:[%s819 + $0xa8] sm:$0xf]
        %v863 = vld [vmem:[%s819 + $0xac] sm:$0xf]
        %v864 = vld [vmem:[%s819 + $0xb0] sm:$0xf]
        %v865 = vld [vmem:[%s819 + $0xb4] sm:$0xf]
        %v866 = vld [vmem:[%s819 + $0xb8] sm:$0xf]
        %v867 = vld [vmem:[%s819 + $0xbc] sm:$0xf]
        %v874 = vunpack.c.l.b16 %v813
        %v875 = vunpack.c.h.b16 %v813
        %v876 = vunpack.c.l.b16 %v814
        %v877 = vunpack.c.l.b16 %v815
        %v878 = vunpack.c.h.b16 %v815
        %v879 = vunpack.c.l.b16 %v816
        %v880 = vunpack.c.l.b16 %v817
        %v881 = vunpack.c.h.b16 %v817
        %v882 = vunpack.c.l.b16 %v818
        %v883 = vpack.c.b16 %v877, %v874
        %v884 = vpack.c.b16 %v878, %v875
        %v885 = vpack.c.b16 %v879, %v876
        %v886 = vpack.c.b16 %v880, %v880
        %v887 = vpack.c.b16 %v881, %v881
        %v888 = vpack.c.b16 %v882, %v882
        %vm889 = vcmask 1045504
        %v890 = vrot.slane %v883, 2
        %v891 = vrot.slane %v886, 2
        %v892 = vsel %vm889, %v890, %v891
        %v893 = vrot.slane %v884, 2
        %v894 = vrot.slane %v887, 2
        %v895 = vsel %vm889, %v893, %v894
        %v896 = vrot.slane %v885, 2
        %v897 = vrot.slane %v888, 2
        %v898 = vsel %vm889, %v896, %v897
        %v950 = vunpack.c.l.b16 %v820
        %v951 = vunpack.c.l.b16 %v821
        %v952 = vunpack.c.l.b16 %v822
        %v953 = vunpack.c.l.b16 %v823
        %v954 = vunpack.c.l.b16 %v824
        %v955 = vunpack.c.l.b16 %v825
        %v956 = vunpack.c.l.b16 %v826
        %v957 = vunpack.c.l.b16 %v827
        %v958 = vunpack.c.l.b16 %v828
        %v959 = vunpack.c.l.b16 %v829
        %v960 = vunpack.c.l.b16 %v830
        %v961 = vunpack.c.l.b16 %v831
        %v962 = vunpack.c.l.b16 %v832
        %v963 = vunpack.c.l.b16 %v833
        %v964 = vunpack.c.l.b16 %v834
        %v965 = vunpack.c.l.b16 %v835
        %v966 = vunpack.c.l.b16 %v836
        %v967 = vunpack.c.l.b16 %v837
        %v968 = vunpack.c.l.b16 %v838
        %v969 = vunpack.c.l.b16 %v839
        %v970 = vunpack.c.l.b16 %v840
        %v971 = vunpack.c.l.b16 %v841
        %v972 = vunpack.c.l.b16 %v842
        %v973 = vunpack.c.l.b16 %v843
        %v974 = vunpack.c.l.b16 %v844
        %v975 = vunpack.c.l.b16 %v845
        %v976 = vunpack.c.l.b16 %v846
        %v977 = vunpack.c.l.b16 %v847
        %v978 = vunpack.c.l.b16 %v848
        %v979 = vunpack.c.l.b16 %v849
        %v980 = vunpack.c.l.b16 %v850
        %v981 = vunpack.c.l.b16 %v851
        %v982 = vunpack.c.l.b16 %v852
        %v983 = vunpack.c.l.b16 %v853
        %v984 = vunpack.c.l.b16 %v854
        %v985 = vunpack.c.l.b16 %v855
        %v986 = vunpack.c.l.b16 %v856
        %v987 = vunpack.c.l.b16 %v857
        %v988 = vunpack.c.l.b16 %v858
        %v989 = vunpack.c.l.b16 %v859
        %v990 = vunpack.c.l.b16 %v860
        %v991 = vunpack.c.l.b16 %v861
        %v992 = vunpack.c.l.b16 %v862
        %v993 = vunpack.c.l.b16 %v863
        %v994 = vunpack.c.l.b16 %v864
        %v995 = vunpack.c.l.b16 %v865
        %v996 = vunpack.c.l.b16 %v866
        %v997 = vunpack.c.l.b16 %v867
        %v998 = vpack.c.b16 %v951, %v950
        %v999 = vpack.c.b16 %v953, %v952
        %v1000 = vpack.c.b16 %v955, %v954
        %v1001 = vpack.c.b16 %v957, %v956
        %v1002 = vpack.c.b16 %v959, %v958
        %v1003 = vpack.c.b16 %v961, %v960
        %v1004 = vpack.c.b16 %v963, %v962
        %v1005 = vpack.c.b16 %v965, %v964
        %v1006 = vpack.c.b16 %v967, %v966
        %v1007 = vpack.c.b16 %v969, %v968
        %v1008 = vpack.c.b16 %v971, %v970
        %v1009 = vpack.c.b16 %v973, %v972
        %v1010 = vpack.c.b16 %v975, %v974
        %v1011 = vpack.c.b16 %v977, %v976
        %v1012 = vpack.c.b16 %v979, %v978
        %v1013 = vpack.c.b16 %v981, %v980
        %v1014 = vpack.c.b16 %v983, %v982
        %v1015 = vpack.c.b16 %v985, %v984
        %v1016 = vpack.c.b16 %v987, %v986
        %v1017 = vpack.c.b16 %v989, %v988
        %v1018 = vpack.c.b16 %v991, %v990
        %v1019 = vpack.c.b16 %v993, %v992
        %v1020 = vpack.c.b16 %v995, %v994
        %v1021 = vpack.c.b16 %v997, %v996
        %1046 = vmatprep.subr.bf16.mxu0 0
        %1047 = vmatpush1.bf16.msra.mxu0 %v1005
        %1048 = vmatprep.subr.bf16.mxu0 0
        %1049 = vmatpush1.bf16.msra.mxu0 %v1004
        %1050 = vmatprep.subr.bf16.mxu0 0
        %1051 = vmatpush1.bf16.msra.mxu0 %v1003
        %1052 = vmatprep.subr.bf16.mxu0 0
        %1053 = vmatpush1.bf16.msra.mxu0 %v1002
        %1054 = vmatprep.subr.bf16.mxu0 0
        %1055 = vmatpush1.bf16.msra.mxu0 %v1001
        %1056 = vmatprep.subr.bf16.mxu0 0
        %1057 = vmatpush1.bf16.msra.mxu0 %v1000
        %1058 = vmatprep.subr.bf16.mxu0 0
        %1059 = vmatpush1.bf16.msra.mxu0 %v999
        %1060 = vmatprep.subr.bf16.mxu0 0
        %1061 = vmatpush1.bf16.msra.mxu0 %v998
        %1062 = vmatprep.subr.bf16.mxu0 0
        %1063 = vmatpush2.bf16.msra.mxu0 %v1013
        %1064 = vmatprep.subr.bf16.mxu0 0
        %1065 = vmatpush2.bf16.msra.mxu0 %v1012
        %1066 = vmatprep.subr.bf16.mxu0 0
        %1067 = vmatpush2.bf16.msra.mxu0 %v1011
        %1068 = vmatprep.subr.bf16.mxu0 0
        %1069 = vmatpush2.bf16.msra.mxu0 %v1010
        %1070 = vmatprep.subr.bf16.mxu0 0
        %1071 = vmatpush2.bf16.msra.mxu0 %v1009
        %1072 = vmatprep.subr.bf16.mxu0 0
        %1073 = vmatpush2.bf16.msra.mxu0 %v1008
        %1074 = vmatprep.subr.bf16.mxu0 0
        %1075 = vmatpush2.bf16.msra.mxu0 %v1007
        %1076 = vmatprep.subr.bf16.mxu0 0
        %1077 = vmatpush2.bf16.msra.mxu0 %v1006
        %1078 = vmatprep.mubr.bf16.mxu0 %v895
        %1079 = vmatmul.mubr.bf16.gmra.mxu0 %v892
        %v1080 = vpop.f32.mrf.mxu0
        %v1081 = vadd.f32 0.0, %v1080
        %v1082 = vpop.f32.mrf.mxu0
        %v1083 = vpop.f32.mrf.mxu0
        %v1084 = vadd.f32 0.0, %v1083
        %v1085 = vpop.f32.mrf.mxu0
        %1086 = vdwg.mxu0
        %1087 = vmatprep.subr.bf16.mxu0 0
        %1088 = vmatpush1.bf16.msra.mxu0 %v1021
        %1089 = vmatprep.subr.bf16.mxu0 0
        %1090 = vmatpush1.bf16.msra.mxu0 %v1020
        %1091 = vmatprep.subr.bf16.mxu0 0
        %1092 = vmatpush1.bf16.msra.mxu0 %v1019
        %1093 = vmatprep.subr.bf16.mxu0 0
        %1094 = vmatpush1.bf16.msra.mxu0 %v1018
        %1095 = vmatprep.subr.bf16.mxu0 0
        %1096 = vmatpush1.bf16.msra.mxu0 %v1017
        %1097 = vmatprep.subr.bf16.mxu0 0
        %1098 = vmatpush1.bf16.msra.mxu0 %v1016
        %1099 = vmatprep.subr.bf16.mxu0 0
        %1100 = vmatpush1.bf16.msra.mxu0 %v1015
        %1101 = vmatprep.subr.bf16.mxu0 0
        %1102 = vmatpush1.bf16.msra.mxu0 %v1014
        %1103 = vmatprep.subr.bf16.mxu0 0
        %1104 = vmatpush2.bf16.msra.mxu0 0
        %1105 = vmatprep.subr.bf16.mxu0 0
        %1106 = vmatpush2.bf16.msra.mxu0 0
        %1107 = vmatprep.subr.bf16.mxu0 0
        %1108 = vmatpush2.bf16.msra.mxu0 0
        %1109 = vmatprep.subr.bf16.mxu0 0
        %1110 = vmatpush2.bf16.msra.mxu0 0
        %1111 = vmatprep.subr.bf16.mxu0 0
        %1112 = vmatpush2.bf16.msra.mxu0 0
        %1113 = vmatprep.subr.bf16.mxu0 0
        %1114 = vmatpush2.bf16.msra.mxu0 0
        %1115 = vmatprep.subr.bf16.mxu0 0
        %1116 = vmatpush2.bf16.msra.mxu0 0
        %1117 = vmatprep.subr.bf16.mxu0 0
        %1118 = vmatpush2.bf16.msra.mxu0 0
        %1119 = vmatprep.mubr.bf16.mxu0 0
        %1120 = vmatmul.mubr.bf16.gmra.mxu0 %v898
        %v1121 = vpop.f32.mrf.mxu0
        %v1122 = vadd.f32 %v1081, %v1121
        %v1123 = vpop.f32.mrf.mxu0
        %v1124 = vpop.f32.mrf.mxu0
        %v1125 = vadd.f32 %v1084, %v1124
        %v1126 = vpop.f32.mrf.mxu0
        %1127 = vdwg.mxu0
        %v1128 = vadd.f32 %v807, %v1122
        %v1129 = vadd.f32 %v810, %v1125
        %v1130 = vld [vmem:[%s275] sm:$0xcc]
        %v1131 = vld [vmem:[%s275 + $0x8] sm:$0xc]
        %v1132 = vld [vmem:[%s275 + $0xc] sm:$0xff]
        %v1133 = vld [vmem:[%s275 + $0x14] sm:$0xf]
        %v1134 = vld [vmem:[%s275 + $0x18] sm:$0x33]
        %v1135 = vld [vmem:[%s275 + $0x20] sm:$0x3]
        %s1136 = scalar_lea.vmem %s1, 576
        %v1137 = vld [vmem:[%s1136] sm:$0xf]
        %v1138 = vld [vmem:[%s1136 + $0x4] sm:$0xf]
        %v1139 = vld [vmem:[%s1136 + $0x8] sm:$0xf]
        %v1140 = vld [vmem:[%s1136 + $0xc] sm:$0xf]
        %v1141 = vld [vmem:[%s1136 + $0x10] sm:$0xf]
        %v1142 = vld [vmem:[%s1136 + $0x14] sm:$0xf]
        %v1143 = vld [vmem:[%s1136 + $0x18] sm:$0xf]
        %v1144 = vld [vmem:[%s1136 + $0x1c] sm:$0xf]
        %v1145 = vld [vmem:[%s1136 + $0x20] sm:$0xf]
        %v1146 = vld [vmem:[%s1136 + $0x24] sm:$0xf]
        %v1147 = vld [vmem:[%s1136 + $0x28] sm:$0xf]
        %v1148 = vld [vmem:[%s1136 + $0x2c] sm:$0xf]
        %v1149 = vld [vmem:[%s1136 + $0x30] sm:$0xf]
        %v1150 = vld [vmem:[%s1136 + $0x34] sm:$0xf]
        %v1151 = vld [vmem:[%s1136 + $0x38] sm:$0xf]
        %v1152 = vld [vmem:[%s1136 + $0x3c] sm:$0xf]
        %v1153 = vld [vmem:[%s1136 + $0x40] sm:$0xf]
        %v1154 = vld [vmem:[%s1136 + $0x44] sm:$0xf]
        %v1155 = vld [vmem:[%s1136 + $0x48] sm:$0xf]
        %v1156 = vld [vmem:[%s1136 + $0x4c] sm:$0xf]
        %v1157 = vld [vmem:[%s1136 + $0x50] sm:$0xf]
        %v1158 = vld [vmem:[%s1136 + $0x54] sm:$0xf]
        %v1159 = vld [vmem:[%s1136 + $0x58] sm:$0xf]
        %v1160 = vld [vmem:[%s1136 + $0x5c] sm:$0xf]
        %v1161 = vld [vmem:[%s1136 + $0x60] sm:$0xf]
        %v1162 = vld [vmem:[%s1136 + $0x64] sm:$0xf]
        %v1163 = vld [vmem:[%s1136 + $0x68] sm:$0xf]
        %v1164 = vld [vmem:[%s1136 + $0x6c] sm:$0xf]
        %v1165 = vld [vmem:[%s1136 + $0x70] sm:$0xf]
        %v1166 = vld [vmem:[%s1136 + $0x74] sm:$0xf]
        %v1167 = vld [vmem:[%s1136 + $0x78] sm:$0xf]
        %v1168 = vld [vmem:[%s1136 + $0x7c] sm:$0xf]
        %v1169 = vld [vmem:[%s1136 + $0x80] sm:$0xf]
        %v1170 = vld [vmem:[%s1136 + $0x84] sm:$0xf]
        %v1171 = vld [vmem:[%s1136 + $0x88] sm:$0xf]
        %v1172 = vld [vmem:[%s1136 + $0x8c] sm:$0xf]
        %v1173 = vld [vmem:[%s1136 + $0x90] sm:$0xf]
        %v1174 = vld [vmem:[%s1136 + $0x94] sm:$0xf]
        %v1175 = vld [vmem:[%s1136 + $0x98] sm:$0xf]
        %v1176 = vld [vmem:[%s1136 + $0x9c] sm:$0xf]
        %v1177 = vld [vmem:[%s1136 + $0xa0] sm:$0xf]
        %v1178 = vld [vmem:[%s1136 + $0xa4] sm:$0xf]
        %v1179 = vld [vmem:[%s1136 + $0xa8] sm:$0xf]
        %v1180 = vld [vmem:[%s1136 + $0xac] sm:$0xf]
        %v1181 = vld [vmem:[%s1136 + $0xb0] sm:$0xf]
        %v1182 = vld [vmem:[%s1136 + $0xb4] sm:$0xf]
        %v1183 = vld [vmem:[%s1136 + $0xb8] sm:$0xf]
        %v1184 = vld [vmem:[%s1136 + $0xbc] sm:$0xf]
        %v1191 = vunpack.c.l.b16 %v1130
        %v1192 = vunpack.c.h.b16 %v1130
        %v1193 = vunpack.c.l.b16 %v1131
        %v1194 = vunpack.c.l.b16 %v1132
        %v1195 = vunpack.c.h.b16 %v1132
        %v1196 = vunpack.c.l.b16 %v1133
        %v1197 = vunpack.c.l.b16 %v1134
        %v1198 = vunpack.c.h.b16 %v1134
        %v1199 = vunpack.c.l.b16 %v1135
        %v1200 = vpack.c.b16 %v1194, %v1191
        %v1201 = vpack.c.b16 %v1195, %v1192
        %v1202 = vpack.c.b16 %v1196, %v1193
        %v1203 = vpack.c.b16 %v1197, %v1197
        %v1204 = vpack.c.b16 %v1198, %v1198
        %v1205 = vpack.c.b16 %v1199, %v1199
        %v1206 = vrot.slane %v1200, 2
        %v1207 = vrot.slane %v1203, 2
        %v1208 = vsel %vm889, %v1206, %v1207
        %v1209 = vrot.slane %v1201, 2
        %v1210 = vrot.slane %v1204, 2
        %v1211 = vsel %vm889, %v1209, %v1210
        %v1212 = vrot.slane %v1202, 2
        %v1213 = vrot.slane %v1205, 2
        %v1214 = vsel %vm889, %v1212, %v1213
        %v1266 = vunpack.c.l.b16 %v1137
        %v1267 = vunpack.c.l.b16 %v1138
        %v1268 = vunpack.c.l.b16 %v1139
        %v1269 = vunpack.c.l.b16 %v1140
        %v1270 = vunpack.c.l.b16 %v1141
        %v1271 = vunpack.c.l.b16 %v1142
        %v1272 = vunpack.c.l.b16 %v1143
        %v1273 = vunpack.c.l.b16 %v1144
        %v1274 = vunpack.c.l.b16 %v1145
        %v1275 = vunpack.c.l.b16 %v1146
        %v1276 = vunpack.c.l.b16 %v1147
        %v1277 = vunpack.c.l.b16 %v1148
        %v1278 = vunpack.c.l.b16 %v1149
        %v1279 = vunpack.c.l.b16 %v1150
        %v1280 = vunpack.c.l.b16 %v1151
        %v1281 = vunpack.c.l.b16 %v1152
        %v1282 = vunpack.c.l.b16 %v1153
        %v1283 = vunpack.c.l.b16 %v1154
        %v1284 = vunpack.c.l.b16 %v1155
        %v1285 = vunpack.c.l.b16 %v1156
        %v1286 = vunpack.c.l.b16 %v1157
        %v1287 = vunpack.c.l.b16 %v1158
        %v1288 = vunpack.c.l.b16 %v1159
        %v1289 = vunpack.c.l.b16 %v1160
        %v1290 = vunpack.c.l.b16 %v1161
        %v1291 = vunpack.c.l.b16 %v1162
        %v1292 = vunpack.c.l.b16 %v1163
        %v1293 = vunpack.c.l.b16 %v1164
        %v1294 = vunpack.c.l.b16 %v1165
        %v1295 = vunpack.c.l.b16 %v1166
        %v1296 = vunpack.c.l.b16 %v1167
        %v1297 = vunpack.c.l.b16 %v1168
        %v1298 = vunpack.c.l.b16 %v1169
        %v1299 = vunpack.c.l.b16 %v1170
        %v1300 = vunpack.c.l.b16 %v1171
        %v1301 = vunpack.c.l.b16 %v1172
        %v1302 = vunpack.c.l.b16 %v1173
        %v1303 = vunpack.c.l.b16 %v1174
        %v1304 = vunpack.c.l.b16 %v1175
        %v1305 = vunpack.c.l.b16 %v1176
        %v1306 = vunpack.c.l.b16 %v1177
        %v1307 = vunpack.c.l.b16 %v1178
        %v1308 = vunpack.c.l.b16 %v1179
        %v1309 = vunpack.c.l.b16 %v1180
        %v1310 = vunpack.c.l.b16 %v1181
        %v1311 = vunpack.c.l.b16 %v1182
        %v1312 = vunpack.c.l.b16 %v1183
        %v1313 = vunpack.c.l.b16 %v1184
        %v1314 = vpack.c.b16 %v1267, %v1266
        %v1315 = vpack.c.b16 %v1269, %v1268
        %v1316 = vpack.c.b16 %v1271, %v1270
        %v1317 = vpack.c.b16 %v1273, %v1272
        %v1318 = vpack.c.b16 %v1275, %v1274
        %v1319 = vpack.c.b16 %v1277, %v1276
        %v1320 = vpack.c.b16 %v1279, %v1278
        %v1321 = vpack.c.b16 %v1281, %v1280
        %v1322 = vpack.c.b16 %v1283, %v1282
        %v1323 = vpack.c.b16 %v1285, %v1284
        %v1324 = vpack.c.b16 %v1287, %v1286
        %v1325 = vpack.c.b16 %v1289, %v1288
        %v1326 = vpack.c.b16 %v1291, %v1290
        %v1327 = vpack.c.b16 %v1293, %v1292
        %v1328 = vpack.c.b16 %v1295, %v1294
        %v1329 = vpack.c.b16 %v1297, %v1296
        %v1330 = vpack.c.b16 %v1299, %v1298
        %v1331 = vpack.c.b16 %v1301, %v1300
        %v1332 = vpack.c.b16 %v1303, %v1302
        %v1333 = vpack.c.b16 %v1305, %v1304
        %v1334 = vpack.c.b16 %v1307, %v1306
        %v1335 = vpack.c.b16 %v1309, %v1308
        %v1336 = vpack.c.b16 %v1311, %v1310
        %v1337 = vpack.c.b16 %v1313, %v1312
        %1362 = vmatprep.subr.bf16.mxu0 0
        %1363 = vmatpush1.bf16.msra.mxu0 %v1321
        %1364 = vmatprep.subr.bf16.mxu0 0
        %1365 = vmatpush1.bf16.msra.mxu0 %v1320
        %1366 = vmatprep.subr.bf16.mxu0 0
        %1367 = vmatpush1.bf16.msra.mxu0 %v1319
        %1368 = vmatprep.subr.bf16.mxu0 0
        %1369 = vmatpush1.bf16.msra.mxu0 %v1318
        %1370 = vmatprep.subr.bf16.mxu0 0
        %1371 = vmatpush1.bf16.msra.mxu0 %v1317
        %1372 = vmatprep.subr.bf16.mxu0 0
        %1373 = vmatpush1.bf16.msra.mxu0 %v1316
        %1374 = vmatprep.subr.bf16.mxu0 0
        %1375 = vmatpush1.bf16.msra.mxu0 %v1315
        %1376 = vmatprep.subr.bf16.mxu0 0
        %1377 = vmatpush1.bf16.msra.mxu0 %v1314
        %1378 = vmatprep.subr.bf16.mxu0 0
        %1379 = vmatpush2.bf16.msra.mxu0 %v1329
        %1380 = vmatprep.subr.bf16.mxu0 0
        %1381 = vmatpush2.bf16.msra.mxu0 %v1328
        %1382 = vmatprep.subr.bf16.mxu0 0
        %1383 = vmatpush2.bf16.msra.mxu0 %v1327
        %1384 = vmatprep.subr.bf16.mxu0 0
        %1385 = vmatpush2.bf16.msra.mxu0 %v1326
        %1386 = vmatprep.subr.bf16.mxu0 0
        %1387 = vmatpush2.bf16.msra.mxu0 %v1325
        %1388 = vmatprep.subr.bf16.mxu0 0
        %1389 = vmatpush2.bf16.msra.mxu0 %v1324
        %1390 = vmatprep.subr.bf16.mxu0 0
        %1391 = vmatpush2.bf16.msra.mxu0 %v1323
        %1392 = vmatprep.subr.bf16.mxu0 0
        %1393 = vmatpush2.bf16.msra.mxu0 %v1322
        %1394 = vmatprep.mubr.bf16.mxu0 %v1211
        %1395 = vmatmul.mubr.bf16.gmra.mxu0 %v1208
        %v1396 = vpop.f32.mrf.mxu0
        %v1397 = vadd.f32 0.0, %v1396
        %v1398 = vpop.f32.mrf.mxu0
        %v1399 = vpop.f32.mrf.mxu0
        %v1400 = vadd.f32 0.0, %v1399
        %v1401 = vpop.f32.mrf.mxu0
        %1402 = vdwg.mxu0
        %1403 = vmatprep.subr.bf16.mxu0 0
        %1404 = vmatpush1.bf16.msra.mxu0 %v1337
        %1405 = vmatprep.subr.bf16.mxu0 0
        %1406 = vmatpush1.bf16.msra.mxu0 %v1336
        %1407 = vmatprep.subr.bf16.mxu0 0
        %1408 = vmatpush1.bf16.msra.mxu0 %v1335
        %1409 = vmatprep.subr.bf16.mxu0 0
        %1410 = vmatpush1.bf16.msra.mxu0 %v1334
        %1411 = vmatprep.subr.bf16.mxu0 0
        %1412 = vmatpush1.bf16.msra.mxu0 %v1333
        %1413 = vmatprep.subr.bf16.mxu0 0
        %1414 = vmatpush1.bf16.msra.mxu0 %v1332
        %1415 = vmatprep.subr.bf16.mxu0 0
        %1416 = vmatpush1.bf16.msra.mxu0 %v1331
        %1417 = vmatprep.subr.bf16.mxu0 0
        %1418 = vmatpush1.bf16.msra.mxu0 %v1330
        %1419 = vmatprep.subr.bf16.mxu0 0
        %1420 = vmatpush2.bf16.msra.mxu0 0
        %1421 = vmatprep.subr.bf16.mxu0 0
        %1422 = vmatpush2.bf16.msra.mxu0 0
        %1423 = vmatprep.subr.bf16.mxu0 0
        %1424 = vmatpush2.bf16.msra.mxu0 0
        %1425 = vmatprep.subr.bf16.mxu0 0
        %1426 = vmatpush2.bf16.msra.mxu0 0
        %1427 = vmatprep.subr.bf16.mxu0 0
        %1428 = vmatpush2.bf16.msra.mxu0 0
        %1429 = vmatprep.subr.bf16.mxu0 0
        %1430 = vmatpush2.bf16.msra.mxu0 0
        %1431 = vmatprep.subr.bf16.mxu0 0
        %1432 = vmatpush2.bf16.msra.mxu0 0
        %1433 = vmatprep.subr.bf16.mxu0 0
        %1434 = vmatpush2.bf16.msra.mxu0 0
        %1435 = vmatprep.mubr.bf16.mxu0 0
        %1436 = vmatmul.mubr.bf16.gmra.mxu0 %v1214
        %v1437 = vpop.f32.mrf.mxu0
        %v1438 = vadd.f32 %v1397, %v1437
        %v1439 = vpop.f32.mrf.mxu0
        %v1440 = vpop.f32.mrf.mxu0
        %v1441 = vadd.f32 %v1400, %v1440
        %v1442 = vpop.f32.mrf.mxu0
        %1443 = vdwg.mxu0
        %v1444 = vadd.f32 %v1128, %v1438
        %v1445 = vadd.f32 %v1129, %v1441
        %v1446 = vld [vmem:[%s221 + $0x18] sm:$0xff]
        %v1447 = vld [vmem:[%s221 + $0x20] sm:$0xf]
        %s1448 = scalar_lea.vmem %s1, 768
        %v1449 = vld [vmem:[%s1448] sm:$0xf]
        %v1450 = vld [vmem:[%s1448 + $0x4] sm:$0xf]
        %v1451 = vld [vmem:[%s1448 + $0x8] sm:$0xf]
        %v1452 = vld [vmem:[%s1448 + $0xc] sm:$0xf]
        %v1453 = vld [vmem:[%s1448 + $0x10] sm:$0xf]
        %v1454 = vld [vmem:[%s1448 + $0x14] sm:$0xf]
        %v1455 = vld [vmem:[%s1448 + $0x18] sm:$0xf]
        %v1456 = vld [vmem:[%s1448 + $0x1c] sm:$0xf]
        %v1457 = vld [vmem:[%s1448 + $0x20] sm:$0xf]
        %v1458 = vld [vmem:[%s1448 + $0x24] sm:$0xf]
        %v1459 = vld [vmem:[%s1448 + $0x28] sm:$0xf]
        %v1460 = vld [vmem:[%s1448 + $0x2c] sm:$0xf]
        %v1461 = vld [vmem:[%s1448 + $0x30] sm:$0xf]
        %v1462 = vld [vmem:[%s1448 + $0x34] sm:$0xf]
        %v1463 = vld [vmem:[%s1448 + $0x38] sm:$0xf]
        %v1464 = vld [vmem:[%s1448 + $0x3c] sm:$0xf]
        %v1465 = vld [vmem:[%s1448 + $0x40] sm:$0xf]
        %v1466 = vld [vmem:[%s1448 + $0x44] sm:$0xf]
        %v1467 = vld [vmem:[%s1448 + $0x48] sm:$0xf]
        %v1468 = vld [vmem:[%s1448 + $0x4c] sm:$0xf]
        %v1469 = vld [vmem:[%s1448 + $0x50] sm:$0xf]
        %v1470 = vld [vmem:[%s1448 + $0x54] sm:$0xf]
        %v1471 = vld [vmem:[%s1448 + $0x58] sm:$0xf]
        %v1472 = vld [vmem:[%s1448 + $0x5c] sm:$0xf]
        %v1473 = vld [vmem:[%s1448 + $0x60] sm:$0xf]
        %v1474 = vld [vmem:[%s1448 + $0x64] sm:$0xf]
        %v1475 = vld [vmem:[%s1448 + $0x68] sm:$0xf]
        %v1476 = vld [vmem:[%s1448 + $0x6c] sm:$0xf]
        %v1477 = vld [vmem:[%s1448 + $0x70] sm:$0xf]
        %v1478 = vld [vmem:[%s1448 + $0x74] sm:$0xf]
        %v1479 = vld [vmem:[%s1448 + $0x78] sm:$0xf]
        %v1480 = vld [vmem:[%s1448 + $0x7c] sm:$0xf]
        %v1481 = vld [vmem:[%s1448 + $0x80] sm:$0xf]
        %v1482 = vld [vmem:[%s1448 + $0x84] sm:$0xf]
        %v1483 = vld [vmem:[%s1448 + $0x88] sm:$0xf]
        %v1484 = vld [vmem:[%s1448 + $0x8c] sm:$0xf]
        %v1485 = vld [vmem:[%s1448 + $0x90] sm:$0xf]
        %v1486 = vld [vmem:[%s1448 + $0x94] sm:$0xf]
        %v1487 = vld [vmem:[%s1448 + $0x98] sm:$0xf]
        %v1488 = vld [vmem:[%s1448 + $0x9c] sm:$0xf]
        %v1489 = vld [vmem:[%s1448 + $0xa0] sm:$0xf]
        %v1490 = vld [vmem:[%s1448 + $0xa4] sm:$0xf]
        %v1491 = vld [vmem:[%s1448 + $0xa8] sm:$0xf]
        %v1492 = vld [vmem:[%s1448 + $0xac] sm:$0xf]
        %v1493 = vld [vmem:[%s1448 + $0xb0] sm:$0xf]
        %v1494 = vld [vmem:[%s1448 + $0xb4] sm:$0xf]
        %v1495 = vld [vmem:[%s1448 + $0xb8] sm:$0xf]
        %v1496 = vld [vmem:[%s1448 + $0xbc] sm:$0xf]
        %v1499 = vunpack.c.l.b16 %v1446
        %v1500 = vunpack.c.h.b16 %v1446
        %v1501 = vunpack.c.l.b16 %v1447
        %v1502 = vpack.c.b16 %v1499, %v877
        %v1503 = vpack.c.b16 %v1500, %v878
        %v1504 = vpack.c.b16 %v1501, %v879
        %v1556 = vunpack.c.l.b16 %v1449
        %v1557 = vunpack.c.l.b16 %v1450
        %v1558 = vunpack.c.l.b16 %v1451
        %v1559 = vunpack.c.l.b16 %v1452
        %v1560 = vunpack.c.l.b16 %v1453
        %v1561 = vunpack.c.l.b16 %v1454
        %v1562 = vunpack.c.l.b16 %v1455
        %v1563 = vunpack.c.l.b16 %v1456
        %v1564 = vunpack.c.l.b16 %v1457
        %v1565 = vunpack.c.l.b16 %v1458
        %v1566 = vunpack.c.l.b16 %v1459
        %v1567 = vunpack.c.l.b16 %v1460
        %v1568 = vunpack.c.l.b16 %v1461
        %v1569 = vunpack.c.l.b16 %v1462
        %v1570 = vunpack.c.l.b16 %v1463
        %v1571 = vunpack.c.l.b16 %v1464
        %v1572 = vunpack.c.l.b16 %v1465
        %v1573 = vunpack.c.l.b16 %v1466
        %v1574 = vunpack.c.l.b16 %v1467
        %v1575 = vunpack.c.l.b16 %v1468
        %v1576 = vunpack.c.l.b16 %v1469
        %v1577 = vunpack.c.l.b16 %v1470
        %v1578 = vunpack.c.l.b16 %v1471
        %v1579 = vunpack.c.l.b16 %v1472
        %v1580 = vunpack.c.l.b16 %v1473
        %v1581 = vunpack.c.l.b16 %v1474
        %v1582 = vunpack.c.l.b16 %v1475
        %v1583 = vunpack.c.l.b16 %v1476
        %v1584 = vunpack.c.l.b16 %v1477
        %v1585 = vunpack.c.l.b16 %v1478
        %v1586 = vunpack.c.l.b16 %v1479
        %v1587 = vunpack.c.l.b16 %v1480
        %v1588 = vunpack.c.l.b16 %v1481
        %v1589 = vunpack.c.l.b16 %v1482
        %v1590 = vunpack.c.l.b16 %v1483
        %v1591 = vunpack.c.l.b16 %v1484
        %v1592 = vunpack.c.l.b16 %v1485
        %v1593 = vunpack.c.l.b16 %v1486
        %v1594 = vunpack.c.l.b16 %v1487
        %v1595 = vunpack.c.l.b16 %v1488
        %v1596 = vunpack.c.l.b16 %v1489
        %v1597 = vunpack.c.l.b16 %v1490
        %v1598 = vunpack.c.l.b16 %v1491
        %v1599 = vunpack.c.l.b16 %v1492
        %v1600 = vunpack.c.l.b16 %v1493
        %v1601 = vunpack.c.l.b16 %v1494
        %v1602 = vunpack.c.l.b16 %v1495
        %v1603 = vunpack.c.l.b16 %v1496
        %v1604 = vpack.c.b16 %v1557, %v1556
        %v1605 = vpack.c.b16 %v1559, %v1558
        %v1606 = vpack.c.b16 %v1561, %v1560
        %v1607 = vpack.c.b16 %v1563, %v1562
        %v1608 = vpack.c.b16 %v1565, %v1564
        %v1609 = vpack.c.b16 %v1567, %v1566
        %v1610 = vpack.c.b16 %v1569, %v1568
        %v1611 = vpack.c.b16 %v1571, %v1570
        %v1612 = vpack.c.b16 %v1573, %v1572
        %v1613 = vpack.c.b16 %v1575, %v1574
        %v1614 = vpack.c.b16 %v1577, %v1576
        %v1615 = vpack.c.b16 %v1579, %v1578
        %v1616 = vpack.c.b16 %v1581, %v1580
        %v1617 = vpack.c.b16 %v1583, %v1582
        %v1618 = vpack.c.b16 %v1585, %v1584
        %v1619 = vpack.c.b16 %v1587, %v1586
        %v1620 = vpack.c.b16 %v1589, %v1588
        %v1621 = vpack.c.b16 %v1591, %v1590
        %v1622 = vpack.c.b16 %v1593, %v1592
        %v1623 = vpack.c.b16 %v1595, %v1594
        %v1624 = vpack.c.b16 %v1597, %v1596
        %v1625 = vpack.c.b16 %v1599, %v1598
        %v1626 = vpack.c.b16 %v1601, %v1600
        %v1627 = vpack.c.b16 %v1603, %v1602
        %1652 = vmatprep.subr.bf16.mxu0 0
        %1653 = vmatpush1.bf16.msra.mxu0 %v1611
        %1654 = vmatprep.subr.bf16.mxu0 0
        %1655 = vmatpush1.bf16.msra.mxu0 %v1610
        %1656 = vmatprep.subr.bf16.mxu0 0
        %1657 = vmatpush1.bf16.msra.mxu0 %v1609
        %1658 = vmatprep.subr.bf16.mxu0 0
        %1659 = vmatpush1.bf16.msra.mxu0 %v1608
        %1660 = vmatprep.subr.bf16.mxu0 0
        %1661 = vmatpush1.bf16.msra.mxu0 %v1607
        %1662 = vmatprep.subr.bf16.mxu0 0
        %1663 = vmatpush1.bf16.msra.mxu0 %v1606
        %1664 = vmatprep.subr.bf16.mxu0 0
        %1665 = vmatpush1.bf16.msra.mxu0 %v1605
        %1666 = vmatprep.subr.bf16.mxu0 0
        %1667 = vmatpush1.bf16.msra.mxu0 %v1604
        %1668 = vmatprep.subr.bf16.mxu0 0
        %1669 = vmatpush2.bf16.msra.mxu0 %v1619
        %1670 = vmatprep.subr.bf16.mxu0 0
        %1671 = vmatpush2.bf16.msra.mxu0 %v1618
        %1672 = vmatprep.subr.bf16.mxu0 0
        %1673 = vmatpush2.bf16.msra.mxu0 %v1617
        %1674 = vmatprep.subr.bf16.mxu0 0
        %1675 = vmatpush2.bf16.msra.mxu0 %v1616
        %1676 = vmatprep.subr.bf16.mxu0 0
        %1677 = vmatpush2.bf16.msra.mxu0 %v1615
        %1678 = vmatprep.subr.bf16.mxu0 0
        %1679 = vmatpush2.bf16.msra.mxu0 %v1614
        %1680 = vmatprep.subr.bf16.mxu0 0
        %1681 = vmatpush2.bf16.msra.mxu0 %v1613
        %1682 = vmatprep.subr.bf16.mxu0 0
        %1683 = vmatpush2.bf16.msra.mxu0 %v1612
        %1684 = vmatprep.mubr.bf16.mxu0 %v1503
        %1685 = vmatmul.mubr.bf16.gmra.mxu0 %v1502
        %v1686 = vpop.f32.mrf.mxu0
        %v1687 = vadd.f32 0.0, %v1686
        %v1688 = vpop.f32.mrf.mxu0
        %v1689 = vpop.f32.mrf.mxu0
        %v1690 = vadd.f32 0.0, %v1689
        %v1691 = vpop.f32.mrf.mxu0
        %1692 = vdwg.mxu0
        %1693 = vmatprep.subr.bf16.mxu0 0
        %1694 = vmatpush1.bf16.msra.mxu0 %v1627
        %1695 = vmatprep.subr.bf16.mxu0 0
        %1696 = vmatpush1.bf16.msra.mxu0 %v1626
        %1697 = vmatprep.subr.bf16.mxu0 0
        %1698 = vmatpush1.bf16.msra.mxu0 %v1625
        %1699 = vmatprep.subr.bf16.mxu0 0
        %1700 = vmatpush1.bf16.msra.mxu0 %v1624
        %1701 = vmatprep.subr.bf16.mxu0 0
        %1702 = vmatpush1.bf16.msra.mxu0 %v1623
        %1703 = vmatprep.subr.bf16.mxu0 0
        %1704 = vmatpush1.bf16.msra.mxu0 %v1622
        %1705 = vmatprep.subr.bf16.mxu0 0
        %1706 = vmatpush1.bf16.msra.mxu0 %v1621
        %1707 = vmatprep.subr.bf16.mxu0 0
        %1708 = vmatpush1.bf16.msra.mxu0 %v1620
        %1709 = vmatprep.subr.bf16.mxu0 0
        %1710 = vmatpush2.bf16.msra.mxu0 0
        %1711 = vmatprep.subr.bf16.mxu0 0
        %1712 = vmatpush2.bf16.msra.mxu0 0
        %1713 = vmatprep.subr.bf16.mxu0 0
        %1714 = vmatpush2.bf16.msra.mxu0 0
        %1715 = vmatprep.subr.bf16.mxu0 0
        %1716 = vmatpush2.bf16.msra.mxu0 0
        %1717 = vmatprep.subr.bf16.mxu0 0
        %1718 = vmatpush2.bf16.msra.mxu0 0
        %1719 = vmatprep.subr.bf16.mxu0 0
        %1720 = vmatpush2.bf16.msra.mxu0 0
        %1721 = vmatprep.subr.bf16.mxu0 0
        %1722 = vmatpush2.bf16.msra.mxu0 0
        %1723 = vmatprep.subr.bf16.mxu0 0
        %1724 = vmatpush2.bf16.msra.mxu0 0
        %1725 = vmatprep.mubr.bf16.mxu0 0
        %1726 = vmatmul.mubr.bf16.gmra.mxu0 %v1504
        %v1727 = vpop.f32.mrf.mxu0
        %v1728 = vadd.f32 %v1687, %v1727
        %v1729 = vpop.f32.mrf.mxu0
        %v1730 = vpop.f32.mrf.mxu0
        %v1731 = vadd.f32 %v1690, %v1730
        %v1732 = vpop.f32.mrf.mxu0
        %1733 = vdwg.mxu0
        %v1734 = vadd.f32 %v1444, %v1728
        %v1735 = vadd.f32 %v1445, %v1731
        %v1736 = vld [vmem:[%s2] sm:$0x1]
        %v1738 = vlaneseq
        %v1739 = vshrl.u32 %v1738, 7
        %v1740 = vsub.s32 0, %v1739
        %v1741 = vrot.slane %v1736, %v1740
        %v1743 = vadd.f32 %v1734, %v1741
        %v1744 = vadd.f32 %v1735, %v1741
        %v1745 = vmax.f32 %v1743, 0.0
        %v1746 = vmax.f32 %v1744, 0.0
        %v1747 = vadd.f32 %v1745, %v1746
        %v1748 = vrot.slane %v1747, 4
        %v1749 = vadd.f32 %v1747, %v1748
        %v1750 = vrot.slane %v1749, 2
        %v1751 = vadd.f32 %v1749, %v1750
        %v1752 = vrot.slane %v1751, 1
        %v1753 = vadd.f32 %v1751, %v1752
        %v1754 = vrcp.pop 16.0
        %v1755 = vmul.f32 %v1753, %v1754
        %v1756 = vpack.c.bf16 %v1755, %v1755
        %v1757 = vld [vmem:[%s3] sm:$0xf]
        %v1758 = vld [vmem:[%s3 + $0x4] sm:$0xf]
        %v1759 = vld [vmem:[%s3 + $0x8] sm:$0xf]
        %v1760 = vld [vmem:[%s3 + $0xc] sm:$0xf]
        %v1761 = vld [vmem:[%s3 + $0x10] sm:$0xf]
        %v1762 = vld [vmem:[%s3 + $0x14] sm:$0xf]
        %v1763 = vld [vmem:[%s3 + $0x18] sm:$0xf]
        %v1764 = vld [vmem:[%s3 + $0x1c] sm:$0xf]
        %v1765 = vld [vmem:[%s3 + $0x20] sm:$0xf]
        %v1766 = vld [vmem:[%s3 + $0x24] sm:$0xf]
        %v1767 = vld [vmem:[%s3 + $0x28] sm:$0xf]
        %v1768 = vld [vmem:[%s3 + $0x2c] sm:$0xf]
        %v1769 = vld [vmem:[%s3 + $0x30] sm:$0xf]
        %v1770 = vld [vmem:[%s3 + $0x34] sm:$0xf]
        %v1771 = vld [vmem:[%s3 + $0x38] sm:$0xf]
        %v1772 = vld [vmem:[%s3 + $0x3c] sm:$0xf]
        %v1773 = vld [vmem:[%s4] sm:$0x1]
        %v1790 = vunpack.c.l.b16 %v1757
        %v1791 = vunpack.c.l.b16 %v1758
        %v1792 = vunpack.c.l.b16 %v1759
        %v1793 = vunpack.c.l.b16 %v1760
        %v1794 = vunpack.c.l.b16 %v1761
        %v1795 = vunpack.c.l.b16 %v1762
        %v1796 = vunpack.c.l.b16 %v1763
        %v1797 = vunpack.c.l.b16 %v1764
        %v1798 = vunpack.c.l.b16 %v1765
        %v1799 = vunpack.c.l.b16 %v1766
        %v1800 = vunpack.c.l.b16 %v1767
        %v1801 = vunpack.c.l.b16 %v1768
        %v1802 = vunpack.c.l.b16 %v1769
        %v1803 = vunpack.c.l.b16 %v1770
        %v1804 = vunpack.c.l.b16 %v1771
        %v1805 = vunpack.c.l.b16 %v1772
        %v1806 = vpack.c.b16 %v1791, %v1790
        %v1807 = vpack.c.b16 %v1793, %v1792
        %v1808 = vpack.c.b16 %v1795, %v1794
        %v1809 = vpack.c.b16 %v1797, %v1796
        %v1810 = vpack.c.b16 %v1799, %v1798
        %v1811 = vpack.c.b16 %v1801, %v1800
        %v1812 = vpack.c.b16 %v1803, %v1802
        %v1813 = vpack.c.b16 %v1805, %v1804
        %1822 = vmatprep.subr.bf16.mxu0 0
        %1823 = vmatpush1.bf16.msra.mxu0 %v1813
        %1824 = vmatprep.subr.bf16.mxu0 0
        %1825 = vmatpush1.bf16.msra.mxu0 %v1812
        %1826 = vmatprep.subr.bf16.mxu0 0
        %1827 = vmatpush1.bf16.msra.mxu0 %v1811
        %1828 = vmatprep.subr.bf16.mxu0 0
        %1829 = vmatpush1.bf16.msra.mxu0 %v1810
        %1830 = vmatprep.subr.bf16.mxu0 0
        %1831 = vmatpush1.bf16.msra.mxu0 %v1809
        %1832 = vmatprep.subr.bf16.mxu0 0
        %1833 = vmatpush1.bf16.msra.mxu0 %v1808
        %1834 = vmatprep.subr.bf16.mxu0 0
        %1835 = vmatpush1.bf16.msra.mxu0 %v1807
        %1836 = vmatprep.subr.bf16.mxu0 0
        %1837 = vmatpush1.bf16.msra.mxu0 %v1806
        %1838 = vmatprep.subr.bf16.mxu0 0
        %1839 = vmatpush2.bf16.msra.mxu0 0
        %1840 = vmatprep.subr.bf16.mxu0 0
        %1841 = vmatpush2.bf16.msra.mxu0 0
        %1842 = vmatprep.subr.bf16.mxu0 0
        %1843 = vmatpush2.bf16.msra.mxu0 0
        %1844 = vmatprep.subr.bf16.mxu0 0
        %1845 = vmatpush2.bf16.msra.mxu0 0
        %1846 = vmatprep.subr.bf16.mxu0 0
        %1847 = vmatpush2.bf16.msra.mxu0 0
        %1848 = vmatprep.subr.bf16.mxu0 0
        %1849 = vmatpush2.bf16.msra.mxu0 0
        %1850 = vmatprep.subr.bf16.mxu0 0
        %1851 = vmatpush2.bf16.msra.mxu0 0
        %1852 = vmatprep.subr.bf16.mxu0 0
        %1853 = vmatpush2.bf16.msra.mxu0 0
        %1854 = vmatprep.mubr.bf16.mxu0 0
        %1855 = vmatmul.mubr.bf16.gmra.mxu0 %v1756
        %v1856 = vpop.f32.mrf.mxu0
        %v1857 = vadd.f32 %v1773, %v1856
        %v1858 = vpop.f32.mrf.mxu0
        %v1859 = vpop.f32.mrf.mxu0
        %v1860 = vpop.f32.mrf.mxu0
        %1861 = vdwg.mxu0
        %1862 = vst [vmem:[%s216] sm:$0x1] %v1857
        %s1863 = sand.u32 %s137, 1
        %s1864 = scalar_lea.sflag [#allocation3], %s1863
        %s1865 = sand.u32 %s137, 1
        %s1866 = scalar_lea.vmem [#allocation2], %s1865
        // Predicated region
        $region41: #{cnn_classifier_forward.7} parent=39 // pred_check
          %p1867 = pneg %p147
        $region42: #{cnn_classifier_forward.7} parent=39 // pred_check_branch
          %1869 = sbr.rel (%p1867) target = $region44
        $region43: #{cnn_classifier_forward.7} parent=39 // pred_region
          %s1871 = ssub.s32 16, 16
          %1872 = vsyncadd %s1864, %s1871
          %s1873 = smul.addr %s19, 16
          %s1874 = scalar_lea.hbm %s5, %s1873
          %s1876 = sshll.u32 %s1866, 4
          %s1877 = int_to_ptr.vmem [resolvable:$true] %s1876
          %1879 = dma.vmem_to_hbm [thread:$0]  %s1877, 16, %s1874, %s1864
        $region44: #{cnn_classifier_forward.7} parent=39 // pred_fallthru
          _
      $region40: #{cnn_classifier_forward.7} parent=5 // pred_fallthru
        _
      %p1880 = scmp.le.s32.totalorder 2, %s14
      // Predicated region
      $region45: #{cnn_classifier_forward.7} parent=5 // pred_check
        %p1881 = pneg %p1880
      $region46: #{cnn_classifier_forward.7} parent=5 // pred_check_branch
        %1883 = sbr.rel (%p1881) target = $region48
      $region47: #{cnn_classifier_forward.7} parent=5 // pred_region
        %s1884 = ssub.s32 %s14, 2
        // Predicated region
        $region49: #{cnn_classifier_forward.7} parent=47 // pred_check
          %p1885 = pneg %p153
        $region50: #{cnn_classifier_forward.7} parent=47 // pred_check_branch
          %1887 = sbr.rel (%p1885) target = $region52
        $region51: #{cnn_classifier_forward.7} parent=47 // pred_region
          %s1888 = sand.u32 %s138, 1
          %s1889 = scalar_lea.sflag [#allocation3], %s1888
          %s1890 = sand.u32 %s138, 1
          %s1891 = scalar_lea.vmem [#allocation2], %s1890
          %1892 = dma.done %s1889, 16
        $region52: #{cnn_classifier_forward.7} parent=47 // pred_fallthru
          _
      $region48: #{cnn_classifier_forward.7} parent=5 // pred_fallthru
        _
    $region6: #{cnn_classifier_forward.7} parent=1 // loop_footer
      %s18 = sadd.s32 1, %s14
    $region7: #{cnn_classifier_forward.7} parent=1 // loop_footer_branch
      %13 = sbr.rel target = $region3
    $region8: #{cnn_classifier_forward.7} parent=1 // loop_exit
      _
    %1893 = vsyncpa [#allocation3], 1
    %s1894 = scalar_lea.sflag [#allocation3], 1
    %1895 = vsyncpa %s1894, 1

</llo_original>
